<compile_context>
chip_gen: v7x
topology: tpu7x:2x2x1
jax: 0.10.0
libtpu: 0.0.40
codegen_flags: <defaults>
</compile_context>

<pallas_src>
import numpy as np
import jax
import jax.numpy as jnp
from jax.experimental import pallas as pl
from jax.experimental.pallas import tpu as pltpu

N_LATENTS = 18
W_DIMS = 512
Z_DIMS = 8
N_TOTAL = N_LATENTS * W_DIMS          # 9216 flattened head-output columns
TILE_N = 2304                         # divides 9216, multiple of 128 -> 4 grid steps
LRELU_SLOPE = 0.2
LRELU_GAIN = float(np.sqrt(2.0))      # bias_act 'lrelu' def_gain


def _lrelu(x):
    return jnp.where(x >= 0, x, LRELU_SLOPE * x) * LRELU_GAIN


# ---------------------------------------------------------------------------
# Kernel 1: shared 4-layer MLP, computed once (grid of 1, everything in VMEM).
# ---------------------------------------------------------------------------
def mlp_kernel(z_ref, w0_ref, b0_ref, w1_ref, b1_ref, w2_ref, b2_ref,
               w3_ref, b3_ref, x_ref):
    x = _lrelu(jnp.dot(z_ref[...], w0_ref[...],
                       preferred_element_type=jnp.float32) + b0_ref[...])
    x = _lrelu(jnp.dot(x, w1_ref[...],
                       preferred_element_type=jnp.float32) + b1_ref[...])
    x = _lrelu(jnp.dot(x, w2_ref[...],
                       preferred_element_type=jnp.float32) + b2_ref[...])
    x = _lrelu(jnp.dot(x, w3_ref[...],
                       preferred_element_type=jnp.float32) + b3_ref[...])
    x_ref[...] = x


# ---------------------------------------------------------------------------
# Kernel 2: all 18 per-latent heads fused into one column-tiled matmul.
#   x:  (B, 512) f32 (constant block, cast to bf16 for the MXU)
#   wp: (512, TILE_N) bf16 column slab of the fused (512, 18*512) weight
#   bp: (1, TILE_N) f32, w: (B, TILE_N) f32
# ---------------------------------------------------------------------------
def heads_kernel(x_ref, wp_ref, bp_ref, w_ref, new_w_ref, delta_ref):
    x = x_ref[...].astype(jnp.bfloat16)                       # (B, 512)
    d = jnp.dot(x, wp_ref[...],
                preferred_element_type=jnp.float32) + bp_ref[...]
    delta_ref[...] = d
    new_w_ref[...] = w_ref[...] + d


def hair_delta_generator(w, z, kparams, *, tile_n=TILE_N):
    """w: (B, 18, 512), z: (B, 8) -> (new_w, delta), both (B, 18, 512)."""
    (w0, b0), (w1, b1), (w2, b2), (w3, b3), (wp2d, bp2d) = kparams
    B = z.shape[0]
    assert N_TOTAL % tile_n == 0 and tile_n % 128 == 0

    def cs(shape):  # constant (non-moving) block spec
        return pl.BlockSpec(shape, lambda i, _n=len(shape): (0,) * _n)

    # --- shared MLP: one grid step, weights stay f32 (tiny, computed once) ---
    x = pl.pallas_call(
        mlp_kernel,
        out_shape=jax.ShapeDtypeStruct((B, W_DIMS), jnp.float32),
        grid_spec=pltpu.PrefetchScalarGridSpec(
            num_scalar_prefetch=0,
            grid=(1,),
            in_specs=[
                cs((B, Z_DIMS)),
                cs((Z_DIMS, W_DIMS)), cs((1, W_DIMS)),
                cs((W_DIMS, W_DIMS)), cs((1, W_DIMS)),
                cs((W_DIMS, W_DIMS)), cs((1, W_DIMS)),
                cs((W_DIMS, W_DIMS)), cs((1, W_DIMS)),
            ],
            out_specs=cs((B, W_DIMS)),
        ),
        compiler_params=pltpu.CompilerParams(
            dimension_semantics=("arbitrary",)),
    )(z, w0, b0, w1, b1, w2, b2, w3, b3)

    # --- fused heads: flat (B, 18*512) layout, tiled over columns ---
    w2d = w.reshape(B, N_TOTAL)
    col = lambda rows: pl.BlockSpec((rows, tile_n), lambda i: (0, i))

    new_w2d, delta2d = pl.pallas_call(
        heads_kernel,
        out_shape=(jax.ShapeDtypeStruct((B, N_TOTAL), jnp.float32),
                   jax.ShapeDtypeStruct((B, N_TOTAL), jnp.float32)),
        grid_spec=pltpu.PrefetchScalarGridSpec(
            num_scalar_prefetch=0,
            grid=(N_TOTAL // tile_n,),
            in_specs=[
                cs((B, W_DIMS)),                                 # x (constant)
                pl.BlockSpec((W_DIMS, tile_n), lambda i: (0, i)),  # Wp columns
                col(1),                                          # bias columns
                col(B),                                          # w columns
            ],
            out_specs=[col(B), col(B)],
        ),
        compiler_params=pltpu.CompilerParams(
            dimension_semantics=("parallel",)),   # no cross-step deps -> megacore OK
    )(x, wp2d, bp2d, w2d)

    new_w = new_w2d.reshape(B, N_LATENTS, W_DIMS)
    delta = delta2d.reshape(B, N_LATENTS, W_DIMS)
    return new_w, delta


# ---------------------------------------------------------------------------
# Parameters
# ---------------------------------------------------------------------------
def init_params(key):
    """Canonical f32 params, torch layout: weight (out, in) ~ N(0,1), bias (out,)."""
    keys = jax.random.split(key, 10)

    def fc(kw, kb, fan_in, fan_out):
        W = jax.random.normal(kw, (fan_out, fan_in), jnp.float32)
        b = 0.01 * jax.random.normal(kb, (fan_out,), jnp.float32)
        return W, b

    p0 = fc(keys[0], keys[1], Z_DIMS, W_DIMS)
    p1 = fc(keys[2], keys[3], W_DIMS, W_DIMS)
    p2 = fc(keys[4], keys[5], W_DIMS, W_DIMS)
    p3 = fc(keys[6], keys[7], W_DIMS, W_DIMS)
    Wp = jax.random.normal(keys[8], (N_LATENTS, W_DIMS, W_DIMS), jnp.float32)  # (18,out,in)
    bp = 0.01 * jax.random.normal(keys[9], (N_LATENTS, W_DIMS), jnp.float32)
    return p0, p1, p2, p3, (Wp, bp)


def prepare_kernel_params(params):
    """One-time layout conversion (plain JAX, outside the jitted forward):
       MLP weights: fold 1/sqrt(fan_in) gain, transpose to (in, out), keep f32.
       Heads: fold gain, transpose to (in, out), flatten the 18 heads into one
       lane-dense (512, 18*512) column-blocked matrix, stored bf16 (the head
       stage is weight-streaming bound; bf16 halves the HBM bytes)."""
    (W0, b0), (W1, b1), (W2, b2), (W3, b3), (Wp, bp) = params

    def fc(W, b):
        gain = 1.0 / np.sqrt(W.shape[1])
        return jnp.transpose(W * gain), b.reshape(1, -1)

    k0, k1, k2, k3 = fc(W0, b0), fc(W1, b1), fc(W2, b2), fc(W3, b3)
    gain = 1.0 / np.sqrt(W_DIMS)
    wp_io = jnp.transpose(Wp * gain, (0, 2, 1))                     # (18, in, out)
    wp2d = jnp.transpose(wp_io, (1, 0, 2)).reshape(W_DIMS, N_TOTAL)  # (512, 9216)
    wp2d = wp2d.astype(jnp.bfloat16)
    bp2d = bp.reshape(1, N_TOTAL)
    return k0, k1, k2, k3, (wp2d, bp2d)


def reference(w, z, params):
    """Pure f32 reference matching the PyTorch module."""
    (W0, b0), (W1, b1), (W2, b2), (W3, b3), (Wp, bp) = params

    def fc(x, W, b):
        return _lrelu((x @ W.T) * (1.0 / np.sqrt(W.shape[1])) + b)

    x = fc(z, W0, b0)
    x = fc(x, W1, b1)
    x = fc(x, W2, b2)
    x = fc(x, W3, b3)
    delta = jnp.einsum('bk,lok->blo', x, Wp) * (1.0 / np.sqrt(W_DIMS)) + bp[None]
    return w + delta, delta


if __name__ == "__main__":
    key = jax.random.PRNGKey(0)
    kp, kz, kw = jax.random.split(key, 3)

    B = 2
    params = init_params(kp)
    kparams = prepare_kernel_params(params)
    z = jax.random.normal(kz, (B, Z_DIMS), jnp.float32)
    w = jax.random.normal(kw, (B, N_LATENTS, W_DIMS), jnp.float32)

    fwd = jax.jit(hair_delta_generator)
    new_w, delta = fwd(w, z, kparams)
    jax.block_until_ready((new_w, delta))

    ref_new_w, ref_delta = reference(w, z, params)
    assert new_w.shape == (B, N_LATENTS, W_DIMS)
    assert delta.shape == (B, N_LATENTS, W_DIMS)
    # Tolerance accounts for bf16 quantization of the streamed per-latent
    # head weights (f32 everywhere else).
    np.testing.assert_allclose(np.asarray(delta), np.asarray(ref_delta),
                               rtol=2e-2, atol=2e-2)
    np.testing.assert_allclose(np.asarray(new_w), np.asarray(ref_new_w),
                               rtol=2e-2, atol=2e-2)
    print("KERNEL_OK")
</pallas_src>

<mosaic_0001>
module attributes {stable_mosaic.version = 11 : i64} {
  func.func @heads_kernel(%arg0: i32, %arg1: memref<2x512xf32, #tpu.memory_space<vmem>>, %arg2: memref<512x2304xbf16, #tpu.memory_space<vmem>>, %arg3: memref<1x2304xf32, #tpu.memory_space<vmem>>, %arg4: memref<2x2304xf32, #tpu.memory_space<vmem>>, %arg5: memref<2x2304xf32, #tpu.memory_space<vmem>>, %arg6: memref<2x2304xf32, #tpu.memory_space<vmem>>) attributes {dimension_semantics = [#tpu.dimension_semantics<parallel>], iteration_bounds = array<i64: 4>, scalar_prefetch = 0 : i64, scratch_operands = 0 : i64, tpu.core_type = #tpu.core_type<tc>, window_params = [{pipeline_mode = #tpu.pipeline_mode<synchronous>, transform_indices = @transform_0, window_bounds = array<i64: 2, 512>}, {transform_indices = @transform_1, window_bounds = array<i64: 512, 2304>}, {transform_indices = @transform_2, window_bounds = array<i64: 1, 2304>}, {transform_indices = @transform_3, window_bounds = array<i64: 2, 2304>}, {transform_indices = @transform_4, window_bounds = array<i64: 2, 2304>}, {transform_indices = @transform_5, window_bounds = array<i64: 2, 2304>}]} {
    %c0 = arith.constant 0 : index
    %c0_0 = arith.constant 0 : index
    %0 = vector.load %arg1[%c0, %c0_0] : memref<2x512xf32, #tpu.memory_space<vmem>>, vector<2x512xf32>
    %1 = arith.truncf %0 : vector<2x512xf32> to vector<2x512xbf16>
    %c0_1 = arith.constant 0 : index
    %c0_2 = arith.constant 0 : index
    %2 = vector.load %arg2[%c0_1, %c0_2] : memref<512x2304xbf16, #tpu.memory_space<vmem>>, vector<512x2304xbf16>
    %cst = arith.constant dense<0.000000e+00> : vector<2x2304xf32>
    %3 = tpu.matmul %1, %2, %cst {dimension_numbers = #tpu.dot_dimension_numbers<[1], [0], [0], [1], [0, 0, 1, 1], [], []>} : vector<2x512xbf16>, vector<512x2304xbf16>, vector<2x2304xf32> -> vector<2x2304xf32>
    %c0_3 = arith.constant 0 : index
    %c0_4 = arith.constant 0 : index
    %4 = vector.load %arg3[%c0_3, %c0_4] : memref<1x2304xf32, #tpu.memory_space<vmem>>, vector<1x2304xf32>
    %5 = vector.broadcast %4 : vector<1x2304xf32> to vector<2x2304xf32>
    %6 = arith.addf %3, %5 : vector<2x2304xf32>
    %c0_5 = arith.constant 0 : index
    %c0_6 = arith.constant 0 : index
    %7 = vector.load %arg6[%c0_5, %c0_6] : memref<2x2304xf32, #tpu.memory_space<vmem>>, vector<2x2304xf32>
    tpu.vector_store %arg6[%c0_5, %c0_6], %6 {strides = array<i32>} : memref<2x2304xf32, #tpu.memory_space<vmem>>, vector<2x2304xf32>,
    %c0_7 = arith.constant 0 : index
    %c0_8 = arith.constant 0 : index
    %8 = vector.load %arg4[%c0_7, %c0_8] : memref<2x2304xf32, #tpu.memory_space<vmem>>, vector<2x2304xf32>
    %9 = arith.addf %8, %6 : vector<2x2304xf32>
    %c0_9 = arith.constant 0 : index
    %c0_10 = arith.constant 0 : index
    %10 = vector.load %arg5[%c0_9, %c0_10] : memref<2x2304xf32, #tpu.memory_space<vmem>>, vector<2x2304xf32>
    tpu.vector_store %arg5[%c0_9, %c0_10], %9 {strides = array<i32>} : memref<2x2304xf32, #tpu.memory_space<vmem>>, vector<2x2304xf32>,
    return
  }
  func.func @transform_0(%arg0: i32) -> (i32, i32) {
    %c0_i32 = arith.constant 0 : i32
    %c0_i32_0 = arith.constant 0 : i32
    %c0_i32_1 = arith.constant 0 : i32
    return %c0_i32, %c0_i32_0 : i32, i32
  }
  func.func @transform_1(%arg0: i32) -> (i32, i32) {
    %c0_i32 = arith.constant 0 : i32
    %c0_i32_0 = arith.constant 0 : i32
    return %c0_i32, %arg0 : i32, i32
  }
  func.func @transform_2(%arg0: i32) -> (i32, i32) {
    %c0_i32 = arith.constant 0 : i32
    %c0_i32_0 = arith.constant 0 : i32
    return %c0_i32, %arg0 : i32, i32
  }
  func.func @transform_3(%arg0: i32) -> (i32, i32) {
    %c0_i32 = arith.constant 0 : i32
    %c0_i32_0 = arith.constant 0 : i32
    return %c0_i32, %arg0 : i32, i32
  }
  func.func @transform_4(%arg0: i32) -> (i32, i32) {
    %c0_i32 = arith.constant 0 : i32
    %c0_i32_0 = arith.constant 0 : i32
    return %c0_i32, %arg0 : i32, i32
  }
  func.func @transform_5(%arg0: i32) -> (i32, i32) {
    %c0_i32 = arith.constant 0 : i32
    %c0_i32_0 = arith.constant 0 : i32
    return %c0_i32, %arg0 : i32, i32
  }
}

module attributes {stable_mosaic.version = 11 : i64} {
  func.func @mlp_kernel(%arg0: i32, %arg1: memref<2x8xf32, #tpu.memory_space<vmem>>, %arg2: memref<8x512xf32, #tpu.memory_space<vmem>>, %arg3: memref<1x512xf32, #tpu.memory_space<vmem>>, %arg4: memref<512x512xf32, #tpu.memory_space<vmem>>, %arg5: memref<1x512xf32, #tpu.memory_space<vmem>>, %arg6: memref<512x512xf32, #tpu.memory_space<vmem>>, %arg7: memref<1x512xf32, #tpu.memory_space<vmem>>, %arg8: memref<512x512xf32, #tpu.memory_space<vmem>>, %arg9: memref<1x512xf32, #tpu.memory_space<vmem>>, %arg10: memref<2x512xf32, #tpu.memory_space<vmem>>) attributes {dimension_semantics = [#tpu.dimension_semantics<arbitrary>], iteration_bounds = array<i64: 1>, scalar_prefetch = 0 : i64, scratch_operands = 0 : i64, tpu.core_type = #tpu.core_type<tc>, window_params = [{pipeline_mode = #tpu.pipeline_mode<synchronous>, transform_indices = @transform_0, window_bounds = array<i64: 2, 8>}, {pipeline_mode = #tpu.pipeline_mode<synchronous>, transform_indices = @transform_1, window_bounds = array<i64: 8, 512>}, {pipeline_mode = #tpu.pipeline_mode<synchronous>, transform_indices = @transform_2, window_bounds = array<i64: 1, 512>}, {pipeline_mode = #tpu.pipeline_mode<synchronous>, transform_indices = @transform_3, window_bounds = array<i64: 512, 512>}, {pipeline_mode = #tpu.pipeline_mode<synchronous>, transform_indices = @transform_4, window_bounds = array<i64: 1, 512>}, {pipeline_mode = #tpu.pipeline_mode<synchronous>, transform_indices = @transform_5, window_bounds = array<i64: 512, 512>}, {pipeline_mode = #tpu.pipeline_mode<synchronous>, transform_indices = @transform_6, window_bounds = array<i64: 1, 512>}, {pipeline_mode = #tpu.pipeline_mode<synchronous>, transform_indices = @transform_7, window_bounds = array<i64: 512, 512>}, {pipeline_mode = #tpu.pipeline_mode<synchronous>, transform_indices = @transform_8, window_bounds = array<i64: 1, 512>}, {pipeline_mode = #tpu.pipeline_mode<synchronous>, transform_indices = @transform_9, window_bounds = array<i64: 2, 512>}]} {
    %c0 = arith.constant 0 : index
    %c0_0 = arith.constant 0 : index
    %0 = vector.load %arg1[%c0, %c0_0] : memref<2x8xf32, #tpu.memory_space<vmem>>, vector<2x8xf32>
    %c0_1 = arith.constant 0 : index
    %c0_2 = arith.constant 0 : index
    %1 = vector.load %arg2[%c0_1, %c0_2] : memref<8x512xf32, #tpu.memory_space<vmem>>, vector<8x512xf32>
    %cst = arith.constant dense<0.000000e+00> : vector<2x512xf32>
    %2 = tpu.matmul %0, %1, %cst {dimension_numbers = #tpu.dot_dimension_numbers<[1], [0], [0], [1], [0, 0, 1, 1], [], []>} : vector<2x8xf32>, vector<8x512xf32>, vector<2x512xf32> -> vector<2x512xf32>
    %c0_3 = arith.constant 0 : index
    %c0_4 = arith.constant 0 : index
    %3 = vector.load %arg3[%c0_3, %c0_4] : memref<1x512xf32, #tpu.memory_space<vmem>>, vector<1x512xf32>
    %4 = vector.broadcast %3 : vector<1x512xf32> to vector<2x512xf32>
    %5 = arith.addf %2, %4 : vector<2x512xf32>
    %cst_5 = arith.constant 0.000000e+00 : f32
    %6 = vector.broadcast %cst_5 : f32 to vector<2x512xf32>
    %7 = arith.cmpf oge, %5, %6 : vector<2x512xf32>
    %cst_6 = arith.constant 2.000000e-01 : f32
    %8 = vector.broadcast %cst_6 : f32 to vector<2x512xf32>
    %9 = arith.mulf %8, %5 : vector<2x512xf32>
    %10 = arith.select %7, %5, %9 : vector<2x512xi1>, vector<2x512xf32>
    %cst_7 = arith.constant 1.41421354 : f32
    %11 = vector.broadcast %cst_7 : f32 to vector<2x512xf32>
    %12 = arith.mulf %10, %11 : vector<2x512xf32>
    %c0_8 = arith.constant 0 : index
    %c0_9 = arith.constant 0 : index
    %13 = vector.load %arg4[%c0_8, %c0_9] : memref<512x512xf32, #tpu.memory_space<vmem>>, vector<512x512xf32>
    %cst_10 = arith.constant dense<0.000000e+00> : vector<2x512xf32>
    %14 = tpu.matmul %12, %13, %cst_10 {dimension_numbers = #tpu.dot_dimension_numbers<[1], [0], [0], [1], [0, 0, 1, 1], [], []>} : vector<2x512xf32>, vector<512x512xf32>, vector<2x512xf32> -> vector<2x512xf32>
    %c0_11 = arith.constant 0 : index
    %c0_12 = arith.constant 0 : index
    %15 = vector.load %arg5[%c0_11, %c0_12] : memref<1x512xf32, #tpu.memory_space<vmem>>, vector<1x512xf32>
    %16 = vector.broadcast %15 : vector<1x512xf32> to vector<2x512xf32>
    %17 = arith.addf %14, %16 : vector<2x512xf32>
    %cst_13 = arith.constant 0.000000e+00 : f32
    %18 = vector.broadcast %cst_13 : f32 to vector<2x512xf32>
    %19 = arith.cmpf oge, %17, %18 : vector<2x512xf32>
    %cst_14 = arith.constant 2.000000e-01 : f32
    %20 = vector.broadcast %cst_14 : f32 to vector<2x512xf32>
    %21 = arith.mulf %20, %17 : vector<2x512xf32>
    %22 = arith.select %19, %17, %21 : vector<2x512xi1>, vector<2x512xf32>
    %cst_15 = arith.constant 1.41421354 : f32
    %23 = vector.broadcast %cst_15 : f32 to vector<2x512xf32>
    %24 = arith.mulf %22, %23 : vector<2x512xf32>
    %c0_16 = arith.constant 0 : index
    %c0_17 = arith.constant 0 : index
    %25 = vector.load %arg6[%c0_16, %c0_17] : memref<512x512xf32, #tpu.memory_space<vmem>>, vector<512x512xf32>
    %cst_18 = arith.constant dense<0.000000e+00> : vector<2x512xf32>
    %26 = tpu.matmul %24, %25, %cst_18 {dimension_numbers = #tpu.dot_dimension_numbers<[1], [0], [0], [1], [0, 0, 1, 1], [], []>} : vector<2x512xf32>, vector<512x512xf32>, vector<2x512xf32> -> vector<2x512xf32>
    %c0_19 = arith.constant 0 : index
    %c0_20 = arith.constant 0 : index
    %27 = vector.load %arg7[%c0_19, %c0_20] : memref<1x512xf32, #tpu.memory_space<vmem>>, vector<1x512xf32>
    %28 = vector.broadcast %27 : vector<1x512xf32> to vector<2x512xf32>
    %29 = arith.addf %26, %28 : vector<2x512xf32>
    %cst_21 = arith.constant 0.000000e+00 : f32
    %30 = vector.broadcast %cst_21 : f32 to vector<2x512xf32>
    %31 = arith.cmpf oge, %29, %30 : vector<2x512xf32>
    %cst_22 = arith.constant 2.000000e-01 : f32
    %32 = vector.broadcast %cst_22 : f32 to vector<2x512xf32>
    %33 = arith.mulf %32, %29 : vector<2x512xf32>
    %34 = arith.select %31, %29, %33 : vector<2x512xi1>, vector<2x512xf32>
    %cst_23 = arith.constant 1.41421354 : f32
    %35 = vector.broadcast %cst_23 : f32 to vector<2x512xf32>
    %36 = arith.mulf %34, %35 : vector<2x512xf32>
    %c0_24 = arith.constant 0 : index
    %c0_25 = arith.constant 0 : index
    %37 = vector.load %arg8[%c0_24, %c0_25] : memref<512x512xf32, #tpu.memory_space<vmem>>, vector<512x512xf32>
    %cst_26 = arith.constant dense<0.000000e+00> : vector<2x512xf32>
    %38 = tpu.matmul %36, %37, %cst_26 {dimension_numbers = #tpu.dot_dimension_numbers<[1], [0], [0], [1], [0, 0, 1, 1], [], []>} : vector<2x512xf32>, vector<512x512xf32>, vector<2x512xf32> -> vector<2x512xf32>
    %c0_27 = arith.constant 0 : index
    %c0_28 = arith.constant 0 : index
    %39 = vector.load %arg9[%c0_27, %c0_28] : memref<1x512xf32, #tpu.memory_space<vmem>>, vector<1x512xf32>
    %40 = vector.broadcast %39 : vector<1x512xf32> to vector<2x512xf32>
    %41 = arith.addf %38, %40 : vector<2x512xf32>
    %cst_29 = arith.constant 0.000000e+00 : f32
    %42 = vector.broadcast %cst_29 : f32 to vector<2x512xf32>
    %43 = arith.cmpf oge, %41, %42 : vector<2x512xf32>
    %cst_30 = arith.constant 2.000000e-01 : f32
    %44 = vector.broadcast %cst_30 : f32 to vector<2x512xf32>
    %45 = arith.mulf %44, %41 : vector<2x512xf32>
    %46 = arith.select %43, %41, %45 : vector<2x512xi1>, vector<2x512xf32>
    %cst_31 = arith.constant 1.41421354 : f32
    %47 = vector.broadcast %cst_31 : f32 to vector<2x512xf32>
    %48 = arith.mulf %46, %47 : vector<2x512xf32>
    %c0_32 = arith.constant 0 : index
    %c0_33 = arith.constant 0 : index
    %49 = vector.load %arg10[%c0_32, %c0_33] : memref<2x512xf32, #tpu.memory_space<vmem>>, vector<2x512xf32>
    tpu.vector_store %arg10[%c0_32, %c0_33], %48 {strides = array<i32>} : memref<2x512xf32, #tpu.memory_space<vmem>>, vector<2x512xf32>,
    return
  }
  func.func @transform_0(%arg0: i32) -> (i32, i32) {
    %c0_i32 = arith.constant 0 : i32
    %c0_i32_0 = arith.constant 0 : i32
    %c0_i32_1 = arith.constant 0 : i32
    return %c0_i32, %c0_i32_0 : i32, i32
  }
  func.func @transform_1(%arg0: i32) -> (i32, i32) {
    %c0_i32 = arith.constant 0 : i32
    %c0_i32_0 = arith.constant 0 : i32
    %c0_i32_1 = arith.constant 0 : i32
    return %c0_i32, %c0_i32_0 : i32, i32
  }
  func.func @transform_2(%arg0: i32) -> (i32, i32) {
    %c0_i32 = arith.constant 0 : i32
    %c0_i32_0 = arith.constant 0 : i32
    %c0_i32_1 = arith.constant 0 : i32
    return %c0_i32, %c0_i32_0 : i32, i32
  }
  func.func @transform_3(%arg0: i32) -> (i32, i32) {
    %c0_i32 = arith.constant 0 : i32
    %c0_i32_0 = arith.constant 0 : i32
    %c0_i32_1 = arith.constant 0 : i32
    return %c0_i32, %c0_i32_0 : i32, i32
  }
  func.func @transform_4(%arg0: i32) -> (i32, i32) {
    %c0_i32 = arith.constant 0 : i32
    %c0_i32_0 = arith.constant 0 : i32
    %c0_i32_1 = arith.constant 0 : i32
    return %c0_i32, %c0_i32_0 : i32, i32
  }
  func.func @transform_5(%arg0: i32) -> (i32, i32) {
    %c0_i32 = arith.constant 0 : i32
    %c0_i32_0 = arith.constant 0 : i32
    %c0_i32_1 = arith.constant 0 : i32
    return %c0_i32, %c0_i32_0 : i32, i32
  }
  func.func @transform_6(%arg0: i32) -> (i32, i32) {
    %c0_i32 = arith.constant 0 : i32
    %c0_i32_0 = arith.constant 0 : i32
    %c0_i32_1 = arith.constant 0 : i32
    return %c0_i32, %c0_i32_0 : i32, i32
  }
  func.func @transform_7(%arg0: i32) -> (i32, i32) {
    %c0_i32 = arith.constant 0 : i32
    %c0_i32_0 = arith.constant 0 : i32
    %c0_i32_1 = arith.constant 0 : i32
    return %c0_i32, %c0_i32_0 : i32, i32
  }
  func.func @transform_8(%arg0: i32) -> (i32, i32) {
    %c0_i32 = arith.constant 0 : i32
    %c0_i32_0 = arith.constant 0 : i32
    %c0_i32_1 = arith.constant 0 : i32
    return %c0_i32, %c0_i32_0 : i32, i32
  }
  func.func @transform_9(%arg0: i32) -> (i32, i32) {
    %c0_i32 = arith.constant 0 : i32
    %c0_i32_0 = arith.constant 0 : i32
    %c0_i32_1 = arith.constant 0 : i32
    return %c0_i32, %c0_i32_0 : i32, i32
  }
}

</mosaic_0001>

<llo_original>
// kernel: hair_delta_generator.2
$region0: #{hair_delta_generator.2}
  #allocation0 [shape = 'u32[]', space=smem, size = 0x4, offset = 0x4, fixed_abs, tag = 'smem constant byte address 0x4 - core index']
  #allocation1 [shape = 'u32[144,128]{1,0:T(1,128)}', space=vmem, size = 0x12000, scoped, tag = 'internal scratch']
  %s0 = inlined_call_operand.hbm [shape: f32[2,8], index: 0, kind: input, shape index: {}]
  %s1 = inlined_call_operand.hbm [shape: f32[8,512], index: 1, kind: input, shape index: {}]
  %s2 = inlined_call_operand.hbm [shape: f32[1,512], index: 2, kind: input, shape index: {}]
  %s3 = inlined_call_operand.hbm [shape: f32[512,512], index: 3, kind: input, shape index: {}]
  %s4 = inlined_call_operand.hbm [shape: f32[1,512], index: 4, kind: input, shape index: {}]
  %s5 = inlined_call_operand.hbm [shape: f32[512,512], index: 5, kind: input, shape index: {}]
  %s6 = inlined_call_operand.hbm [shape: f32[1,512], index: 6, kind: input, shape index: {}]
  %s7 = inlined_call_operand.hbm [shape: f32[512,512], index: 7, kind: input, shape index: {}]
  %s8 = inlined_call_operand.hbm [shape: f32[1,512], index: 8, kind: input, shape index: {}]
  %s9 = inlined_call_operand.vmem [shape: f32[2,512], index: 9, kind: output, shape index: {}]
  %s10 = sld [smem:[#allocation0]]
  $region82: #{hair_delta_generator.2} parent=0
    _
  %s12 = ssub.s32 1, %s10
  %s13 = scalar_select 0, %s12, %s10
  $region1: #{hair_delta_generator.2} parent=0
    #allocation2 [shape = 'u8[1024]{0}', space=vmem, size = 0x400, scoped, tag = 'input window, operand 0, single buffered']
    #allocation3 [shape = 's32[1]{0}', space=sflag, size = 0x4, scoped, tag = 'scoped memory for hair_delta_generator.2']
    #allocation4 [shape = 'u8[16384]{0}', space=vmem, size = 0x4000, scoped, tag = 'input window, operand 1, single buffered']
    #allocation5 [shape = 's32[1]{0}', space=sflag, size = 0x4, scoped, tag = 'scoped memory for hair_delta_generator.2']
    #allocation6 [shape = 'u8[2048]{0}', space=vmem, size = 0x800, scoped, tag = 'input window, operand 2, single buffered']
    #allocation7 [shape = 'u8[1048576]{0}', space=vmem, size = 0x100000, scoped, tag = 'input window, operand 3, single buffered']
    #allocation8 [shape = 's32[1]{0}', space=sflag, size = 0x4, scoped, tag = 'scoped memory for hair_delta_generator.2']
    #allocation9 [shape = 'u8[2048]{0}', space=vmem, size = 0x800, scoped, tag = 'input window, operand 4, single buffered']
    #allocation10 [shape = 'u8[1048576]{0}', space=vmem, size = 0x100000, scoped, tag = 'input window, operand 5, single buffered']
    #allocation11 [shape = 's32[1]{0}', space=sflag, size = 0x4, scoped, tag = 'scoped memory for hair_delta_generator.2']
    #allocation12 [shape = 'u8[2048]{0}', space=vmem, size = 0x800, scoped, tag = 'input window, operand 6, single buffered']
    #allocation13 [shape = 'u8[1048576]{0}', space=vmem, size = 0x100000, scoped, tag = 'input window, operand 7, single buffered']
    #allocation14 [shape = 's32[1]{0}', space=sflag, size = 0x4, scoped, tag = 'scoped memory for hair_delta_generator.2']
    #allocation15 [shape = 'u8[2048]{0}', space=vmem, size = 0x800, scoped, tag = 'input window, operand 8, single buffered']
    %14 = vsyncpa [#allocation3], 0
    %15 = vsyncpa [#allocation5], 0
    %16 = vsyncpa [#allocation8], 0
    %17 = vsyncpa [#allocation11], 0
    %18 = vsyncpa [#allocation14], 0
    // Predicated region
    $region2: #{hair_delta_generator.2} parent=1 // pred_check
      _
    $region3: #{hair_delta_generator.2} parent=1 // pred_check_branch
      %20 = sbr.rel (0) target = $region5
    $region4: #{hair_delta_generator.2} parent=1 // pred_region
      %s22 = ssub.s32 32, 32
      %23 = vsyncadd [#allocation3], %s22
      %s25 = sshll.u32 [#allocation2], 4
      %s26 = int_to_ptr.vmem [resolvable:$true] %s25
      %28 = dma.hbm_to_vmem [thread:$0]  %s0, 32, %s26, [#allocation3]
    $region5: #{hair_delta_generator.2} parent=1 // pred_fallthru
      _
    // Predicated region
    $region6: #{hair_delta_generator.2} parent=1 // pred_check
      _
    $region7: #{hair_delta_generator.2} parent=1 // pred_check_branch
      %30 = sbr.rel (0) target = $region9
    $region8: #{hair_delta_generator.2} parent=1 // pred_region
      %s32 = ssub.s32 512, 512
      %33 = vsyncadd [#allocation5], %s32
      %s35 = sshll.u32 [#allocation4], 4
      %s36 = int_to_ptr.vmem [resolvable:$true] %s35
      %38 = dma.hbm_to_vmem [thread:$0]  %s1, 512, %s36, [#allocation5]
    $region9: #{hair_delta_generator.2} parent=1 // pred_fallthru
      _
    // Predicated region
    $region10: #{hair_delta_generator.2} parent=1 // pred_check
      _
    $region11: #{hair_delta_generator.2} parent=1 // pred_check_branch
      %40 = sbr.rel (0) target = $region13
    $region12: #{hair_delta_generator.2} parent=1 // pred_region
      %s42 = ssub.s32 64, 64
      %43 = vsyncadd [#allocation5], %s42
      %s45 = sshll.u32 [#allocation6], 4
      %s46 = int_to_ptr.vmem [resolvable:$true] %s45
      %48 = dma.hbm_to_vmem [thread:$0]  %s2, 64, %s46, [#allocation5]
    $region13: #{hair_delta_generator.2} parent=1 // pred_fallthru
      _
    // Predicated region
    $region14: #{hair_delta_generator.2} parent=1 // pred_check
      _
    $region15: #{hair_delta_generator.2} parent=1 // pred_check_branch
      %50 = sbr.rel (0) target = $region17
    $region16: #{hair_delta_generator.2} parent=1 // pred_region
      %s52 = ssub.s32 32768, 32768
      %53 = vsyncadd [#allocation8], %s52
      %s54 = sshll.u32 [#allocation7], 4
      %s55 = int_to_ptr.vmem [resolvable:$true] %s54
      %60 = dma.hbm_to_vmem [thread:$0]  %s3, 32768, %s55, [#allocation8], 512, 512, 32
    $region17: #{hair_delta_generator.2} parent=1 // pred_fallthru
      _
    // Predicated region
    $region18: #{hair_delta_generator.2} parent=1 // pred_check
      _
    $region19: #{hair_delta_generator.2} parent=1 // pred_check_branch
      %62 = sbr.rel (0) target = $region21
    $region20: #{hair_delta_generator.2} parent=1 // pred_region
      %s64 = ssub.s32 64, 64
      %65 = vsyncadd [#allocation8], %s64
      %s67 = sshll.u32 [#allocation9], 4
      %s68 = int_to_ptr.vmem [resolvable:$true] %s67
      %70 = dma.hbm_to_vmem [thread:$0]  %s4, 64, %s68, [#allocation8]
    $region21: #{hair_delta_generator.2} parent=1 // pred_fallthru
      _
    // Predicated region
    $region22: #{hair_delta_generator.2} parent=1 // pred_check
      _
    $region23: #{hair_delta_generator.2} parent=1 // pred_check_branch
      %72 = sbr.rel (0) target = $region25
    $region24: #{hair_delta_generator.2} parent=1 // pred_region
      %s74 = ssub.s32 32768, 32768
      %75 = vsyncadd [#allocation11], %s74
      %s76 = sshll.u32 [#allocation10], 4
      %s77 = int_to_ptr.vmem [resolvable:$true] %s76
      %82 = dma.hbm_to_vmem [thread:$0]  %s5, 32768, %s77, [#allocation11], 512, 512, 32
    $region25: #{hair_delta_generator.2} parent=1 // pred_fallthru
      _
    // Predicated region
    $region26: #{hair_delta_generator.2} parent=1 // pred_check
      _
    $region27: #{hair_delta_generator.2} parent=1 // pred_check_branch
      %84 = sbr.rel (0) target = $region29
    $region28: #{hair_delta_generator.2} parent=1 // pred_region
      %s86 = ssub.s32 64, 64
      %87 = vsyncadd [#allocation11], %s86
      %s89 = sshll.u32 [#allocation12], 4
      %s90 = int_to_ptr.vmem [resolvable:$true] %s89
      %92 = dma.hbm_to_vmem [thread:$0]  %s6, 64, %s90, [#allocation11]
    $region29: #{hair_delta_generator.2} parent=1 // pred_fallthru
      _
    // Predicated region
    $region30: #{hair_delta_generator.2} parent=1 // pred_check
      _
    $region31: #{hair_delta_generator.2} parent=1 // pred_check_branch
      %94 = sbr.rel (0) target = $region33
    $region32: #{hair_delta_generator.2} parent=1 // pred_region
      %s96 = ssub.s32 32768, 32768
      %97 = vsyncadd [#allocation14], %s96
      %s98 = sshll.u32 [#allocation13], 4
      %s99 = int_to_ptr.vmem [resolvable:$true] %s98
      %104 = dma.hbm_to_vmem [thread:$0]  %s7, 32768, %s99, [#allocation14], 512, 512, 32
    $region33: #{hair_delta_generator.2} parent=1 // pred_fallthru
      _
    // Predicated region
    $region34: #{hair_delta_generator.2} parent=1 // pred_check
      _
    $region35: #{hair_delta_generator.2} parent=1 // pred_check_branch
      %106 = sbr.rel (0) target = $region37
    $region36: #{hair_delta_generator.2} parent=1 // pred_region
      %s108 = ssub.s32 64, 64
      %109 = vsyncadd [#allocation14], %s108
      %s111 = sshll.u32 [#allocation15], 4
      %s112 = int_to_ptr.vmem [resolvable:$true] %s111
      %114 = dma.hbm_to_vmem [thread:$0]  %s8, 64, %s112, [#allocation14]
    $region37: #{hair_delta_generator.2} parent=1 // pred_fallthru
      _
    // Predicated region
    $region38: #{hair_delta_generator.2} parent=1 // pred_check
      _
    $region39: #{hair_delta_generator.2} parent=1 // pred_check_branch
      %116 = sbr.rel (0) target = $region41
    $region40: #{hair_delta_generator.2} parent=1 // pred_region
      %117 = dma.done [#allocation3], 32
    $region41: #{hair_delta_generator.2} parent=1 // pred_fallthru
      _
    // Predicated region
    $region42: #{hair_delta_generator.2} parent=1 // pred_check
      _
    $region43: #{hair_delta_generator.2} parent=1 // pred_check_branch
      %119 = sbr.rel (0) target = $region45
    $region44: #{hair_delta_generator.2} parent=1 // pred_region
      %120 = dma.done [#allocation5], 512
    $region45: #{hair_delta_generator.2} parent=1 // pred_fallthru
      _
    // Predicated region
    $region46: #{hair_delta_generator.2} parent=1 // pred_check
      _
    $region47: #{hair_delta_generator.2} parent=1 // pred_check_branch
      %122 = sbr.rel (0) target = $region49
    $region48: #{hair_delta_generator.2} parent=1 // pred_region
      %123 = dma.done [#allocation5], 64
    $region49: #{hair_delta_generator.2} parent=1 // pred_fallthru
      _
    // Predicated region
    $region50: #{hair_delta_generator.2} parent=1 // pred_check
      _
    $region51: #{hair_delta_generator.2} parent=1 // pred_check_branch
      %125 = sbr.rel (0) target = $region53
    $region52: #{hair_delta_generator.2} parent=1 // pred_region
      %126 = dma.done [#allocation8], 32768
    $region53: #{hair_delta_generator.2} parent=1 // pred_fallthru
      _
    // Predicated region
    $region54: #{hair_delta_generator.2} parent=1 // pred_check
      _
    $region55: #{hair_delta_generator.2} parent=1 // pred_check_branch
      %128 = sbr.rel (0) target = $region57
    $region56: #{hair_delta_generator.2} parent=1 // pred_region
      %129 = dma.done [#allocation8], 64
    $region57: #{hair_delta_generator.2} parent=1 // pred_fallthru
      _
    // Predicated region
    $region58: #{hair_delta_generator.2} parent=1 // pred_check
      _
    $region59: #{hair_delta_generator.2} parent=1 // pred_check_branch
      %131 = sbr.rel (0) target = $region61
    $region60: #{hair_delta_generator.2} parent=1 // pred_region
      %132 = dma.done [#allocation11], 32768
    $region61: #{hair_delta_generator.2} parent=1 // pred_fallthru
      _
    // Predicated region
    $region62: #{hair_delta_generator.2} parent=1 // pred_check
      _
    $region63: #{hair_delta_generator.2} parent=1 // pred_check_branch
      %134 = sbr.rel (0) target = $region65
    $region64: #{hair_delta_generator.2} parent=1 // pred_region
      %135 = dma.done [#allocation11], 64
    $region65: #{hair_delta_generator.2} parent=1 // pred_fallthru
      _
    // Predicated region
    $region66: #{hair_delta_generator.2} parent=1 // pred_check
      _
    $region67: #{hair_delta_generator.2} parent=1 // pred_check_branch
      %137 = sbr.rel (0) target = $region69
    $region68: #{hair_delta_generator.2} parent=1 // pred_region
      %138 = dma.done [#allocation14], 32768
    $region69: #{hair_delta_generator.2} parent=1 // pred_fallthru
      _
    // Predicated region
    $region70: #{hair_delta_generator.2} parent=1 // pred_check
      _
    $region71: #{hair_delta_generator.2} parent=1 // pred_check_branch
      %140 = sbr.rel (0) target = $region73
    $region72: #{hair_delta_generator.2} parent=1 // pred_region
      %141 = dma.done [#allocation14], 64
    $region73: #{hair_delta_generator.2} parent=1 // pred_fallthru
      _
    %v142 = vld [vmem:[#allocation2] sm:$0x3]
    %v143 = vld [vmem:[#allocation4] sm:$0xff]
    %v144 = vld [vmem:[#allocation4 + $0x8] sm:$0xff]
    %v145 = vld [vmem:[#allocation4 + $0x10] sm:$0xff]
    %v146 = vld [vmem:[#allocation4 + $0x18] sm:$0xff]
    %v147 = vld [vmem:[#allocation6] sm:$0xf]
    %v149 = vlaneseq
    %v150 = vshrl.u32 %v149, 7
    %v151 = vsub.s32 0, %v150
    %v152 = vrot.slane %v147, %v151
    %v153 = vlaneseq
    %v154 = vshrl.u32 %v153, 7
    %v155 = vsub.s32 1, %v154
    %v156 = vrot.slane %v147, %v155
    %v157 = vlaneseq
    %v158 = vshrl.u32 %v157, 7
    %v159 = vsub.s32 2, %v158
    %v160 = vrot.slane %v147, %v159
    %v161 = vlaneseq
    %v162 = vshrl.u32 %v161, 7
    %v163 = vsub.s32 3, %v162
    %v164 = vrot.slane %v147, %v163
    %vm169 = vcmask 64512
    %v171 = vsel %vm169, %v142, 0
    %173 = vmatprep.subr.mxu0 %v144
    %174 = vmatpush1.msra.mxu0 %v143
    %175 = vmatprep.subr.mxu0 0.0
    %176 = vmatpush1.msra.mxu0 0.0
    %177 = vmatprep.subr.mxu0 0.0
    %178 = vmatpush1.msra.mxu0 0.0
    %179 = vmatprep.subr.mxu0 0.0
    %180 = vmatpush1.msra.mxu0 0.0
    %181 = vmatprep.subr.mxu0 0.0
    %182 = vmatpush1.msra.mxu0 0.0
    %183 = vmatprep.subr.mxu0 0.0
    %184 = vmatpush1.msra.mxu0 0.0
    %185 = vmatprep.subr.mxu0 0.0
    %186 = vmatpush1.msra.mxu0 0.0
    %187 = vmatprep.subr.mxu0 0.0
    %188 = vmatpush1.msra.mxu0 0.0
    %189 = vmatprep.subr.mxu0 0.0
    %190 = vmatpush1.msra.mxu0 0.0
    %191 = vmatprep.subr.mxu0 0.0
    %192 = vmatpush1.msra.mxu0 0.0
    %193 = vmatprep.subr.mxu0 0.0
    %194 = vmatpush1.msra.mxu0 0.0
    %195 = vmatprep.subr.mxu0 0.0
    %196 = vmatpush1.msra.mxu0 0.0
    %197 = vmatprep.subr.mxu0 0.0
    %198 = vmatpush1.msra.mxu0 0.0
    %199 = vmatprep.subr.mxu0 0.0
    %200 = vmatpush1.msra.mxu0 0.0
    %201 = vmatprep.subr.mxu0 0.0
    %202 = vmatpush1.msra.mxu0 0.0
    %203 = vmatprep.subr.mxu0 0.0
    %204 = vmatpush1.msra.mxu0 0.0
    %205 = vmatprep.subr.mxu0 0.0
    %206 = vmatpush1.msra.mxu0 0.0
    %207 = vmatprep.subr.mxu0 0.0
    %208 = vmatpush1.msra.mxu0 0.0
    %209 = vmatprep.subr.mxu0 0.0
    %210 = vmatpush1.msra.mxu0 0.0
    %211 = vmatprep.subr.mxu0 0.0
    %212 = vmatpush1.msra.mxu0 0.0
    %213 = vmatprep.subr.mxu0 0.0
    %214 = vmatpush1.msra.mxu0 0.0
    %215 = vmatprep.subr.mxu0 0.0
    %216 = vmatpush1.msra.mxu0 0.0
    %217 = vmatprep.subr.mxu0 0.0
    %218 = vmatpush1.msra.mxu0 0.0
    %219 = vmatprep.subr.mxu0 0.0
    %220 = vmatpush1.msra.mxu0 0.0
    %221 = vmatprep.subr.mxu0 0.0
    %222 = vmatpush1.msra.mxu0 0.0
    %223 = vmatprep.subr.mxu0 0.0
    %224 = vmatpush1.msra.mxu0 0.0
    %225 = vmatprep.subr.mxu0 0.0
    %226 = vmatpush1.msra.mxu0 0.0
    %227 = vmatprep.subr.mxu0 0.0
    %228 = vmatpush1.msra.mxu0 0.0
    %229 = vmatprep.subr.mxu0 0.0
    %230 = vmatpush1.msra.mxu0 0.0
    %231 = vmatprep.subr.mxu0 0.0
    %232 = vmatpush1.msra.mxu0 0.0
    %233 = vmatprep.subr.mxu0 0.0
    %234 = vmatpush1.msra.mxu0 0.0
    %235 = vmatprep.subr.mxu0 0.0
    %236 = vmatpush1.msra.mxu0 0.0
    %237 = vmatprep.mubr.f32.mxu0 0.0
    %238 = vmatmul.mubr.f32.gmra.mrb[0].mxu0 %v171
    %v239 = vpop.f32.mrb[0].mxu0
    %v240 = vadd.f32 %v152, %v239
    %v241 = vpop.f32.mrb[0].mxu0
    %v242 = vadd.f32 %v156, %v241
    %243 = vdwg.mxu0
    %244 = vmatprep.subr.mxu0 %v146
    %245 = vmatpush1.msra.mxu0 %v145
    %246 = vmatprep.subr.mxu0 0.0
    %247 = vmatpush1.msra.mxu0 0.0
    %248 = vmatprep.subr.mxu0 0.0
    %249 = vmatpush1.msra.mxu0 0.0
    %250 = vmatprep.subr.mxu0 0.0
    %251 = vmatpush1.msra.mxu0 0.0
    %252 = vmatprep.subr.mxu0 0.0
    %253 = vmatpush1.msra.mxu0 0.0
    %254 = vmatprep.subr.mxu0 0.0
    %255 = vmatpush1.msra.mxu0 0.0
    %256 = vmatprep.subr.mxu0 0.0
    %257 = vmatpush1.msra.mxu0 0.0
    %258 = vmatprep.subr.mxu0 0.0
    %259 = vmatpush1.msra.mxu0 0.0
    %260 = vmatprep.subr.mxu0 0.0
    %261 = vmatpush1.msra.mxu0 0.0
    %262 = vmatprep.subr.mxu0 0.0
    %263 = vmatpush1.msra.mxu0 0.0
    %264 = vmatprep.subr.mxu0 0.0
    %265 = vmatpush1.msra.mxu0 0.0
    %266 = vmatprep.subr.mxu0 0.0
    %267 = vmatpush1.msra.mxu0 0.0
    %268 = vmatprep.subr.mxu0 0.0
    %269 = vmatpush1.msra.mxu0 0.0
    %270 = vmatprep.subr.mxu0 0.0
    %271 = vmatpush1.msra.mxu0 0.0
    %272 = vmatprep.subr.mxu0 0.0
    %273 = vmatpush1.msra.mxu0 0.0
    %274 = vmatprep.subr.mxu0 0.0
    %275 = vmatpush1.msra.mxu0 0.0
    %276 = vmatprep.subr.mxu0 0.0
    %277 = vmatpush1.msra.mxu0 0.0
    %278 = vmatprep.subr.mxu0 0.0
    %279 = vmatpush1.msra.mxu0 0.0
    %280 = vmatprep.subr.mxu0 0.0
    %281 = vmatpush1.msra.mxu0 0.0
    %282 = vmatprep.subr.mxu0 0.0
    %283 = vmatpush1.msra.mxu0 0.0
    %284 = vmatprep.subr.mxu0 0.0
    %285 = vmatpush1.msra.mxu0 0.0
    %286 = vmatprep.subr.mxu0 0.0
    %287 = vmatpush1.msra.mxu0 0.0
    %288 = vmatprep.subr.mxu0 0.0
    %289 = vmatpush1.msra.mxu0 0.0
    %290 = vmatprep.subr.mxu0 0.0
    %291 = vmatpush1.msra.mxu0 0.0
    %292 = vmatprep.subr.mxu0 0.0
    %293 = vmatpush1.msra.mxu0 0.0
    %294 = vmatprep.subr.mxu0 0.0
    %295 = vmatpush1.msra.mxu0 0.0
    %296 = vmatprep.subr.mxu0 0.0
    %297 = vmatpush1.msra.mxu0 0.0
    %298 = vmatprep.subr.mxu0 0.0
    %299 = vmatpush1.msra.mxu0 0.0
    %300 = vmatprep.subr.mxu0 0.0
    %301 = vmatpush1.msra.mxu0 0.0
    %302 = vmatprep.subr.mxu0 0.0
    %303 = vmatpush1.msra.mxu0 0.0
    %304 = vmatprep.subr.mxu0 0.0
    %305 = vmatpush1.msra.mxu0 0.0
    %306 = vmatprep.subr.mxu0 0.0
    %307 = vmatpush1.msra.mxu0 0.0
    %308 = vmatprep.mubr.f32.mxu0 0.0
    %309 = vmatmul.mubr.f32.gmra.mrb[0].mxu0 %v171
    %v310 = vpop.f32.mrb[0].mxu0
    %v311 = vadd.f32 %v160, %v310
    %v312 = vpop.f32.mrb[0].mxu0
    %v313 = vadd.f32 %v164, %v312
    %314 = vdwg.mxu0
    %vm315 = vcmp.ge.f32.partialorder %v240, 0.0
    %vm316 = vcmp.ge.f32.partialorder %v242, 0.0
    %vm317 = vcmp.ge.f32.partialorder %v311, 0.0
    %vm318 = vcmp.ge.f32.partialorder %v313, 0.0
    %v319 = vmul.f32 %v240, 0.2
    %v320 = vmul.f32 %v242, 0.2
    %v321 = vmul.f32 %v311, 0.2
    %v322 = vmul.f32 %v313, 0.2
    %v323 = vsel %vm315, %v240, %v319
    %v324 = vsel %vm316, %v242, %v320
    %v325 = vsel %vm317, %v311, %v321
    %v326 = vsel %vm318, %v313, %v322
    %v327 = vmul.f32 %v323, 1.4142135
    %v328 = vmul.f32 %v324, 1.4142135
    %v329 = vmul.f32 %v325, 1.4142135
    %v330 = vmul.f32 %v326, 1.4142135
    %v331 = vld [vmem:[#allocation7] sm:$0xff]
    %v332 = vld [vmem:[#allocation7 + $0x8] sm:$0xff]
    %v333 = vld [vmem:[#allocation7 + $0x10] sm:$0xff]
    %v334 = vld [vmem:[#allocation7 + $0x18] sm:$0xff]
    %v335 = vld [vmem:[#allocation7 + $0x20] sm:$0xff]
    %v336 = vld [vmem:[#allocation7 + $0x28] sm:$0xff]
    %v337 = vld [vmem:[#allocation7 + $0x30] sm:$0xff]
    %v338 = vld [vmem:[#allocation7 + $0x38] sm:$0xff]
    %v339 = vld [vmem:[#allocation7 + $0x40] sm:$0xff]
    %v340 = vld [vmem:[#allocation7 + $0x48] sm:$0xff]
    %v341 = vld [vmem:[#allocation7 + $0x50] sm:$0xff]
    %v342 = vld [vmem:[#allocation7 + $0x58] sm:$0xff]
    %v343 = vld [vmem:[#allocation7 + $0x60] sm:$0xff]
    %v344 = vld [vmem:[#allocation7 + $0x68] sm:$0xff]
    %v345 = vld [vmem:[#allocation7 + $0x70] sm:$0xff]
    %v346 = vld [vmem:[#allocation7 + $0x78] sm:$0xff]
    %v347 = vld [vmem:[#allocation7 + $0x80] sm:$0xff]
    %v348 = vld [vmem:[#allocation7 + $0x88] sm:$0xff]
    %v349 = vld [vmem:[#allocation7 + $0x90] sm:$0xff]
    %v350 = vld [vmem:[#allocation7 + $0x98] sm:$0xff]
    %v351 = vld [vmem:[#allocation7 + $0xa0] sm:$0xff]
    %v352 = vld [vmem:[#allocation7 + $0xa8] sm:$0xff]
    %v353 = vld [vmem:[#allocation7 + $0xb0] sm:$0xff]
    %v354 = vld [vmem:[#allocation7 + $0xb8] sm:$0xff]
    %v355 = vld [vmem:[#allocation7 + $0xc0] sm:$0xff]
    %v356 = vld [vmem:[#allocation7 + $0xc8] sm:$0xff]
    %v357 = vld [vmem:[#allocation7 + $0xd0] sm:$0xff]
    %v358 = vld [vmem:[#allocation7 + $0xd8] sm:$0xff]
    %v359 = vld [vmem:[#allocation7 + $0xe0] sm:$0xff]
    %v360 = vld [vmem:[#allocation7 + $0xe8] sm:$0xff]
    %v361 = vld [vmem:[#allocation7 + $0xf0] sm:$0xff]
    %v362 = vld [vmem:[#allocation7 + $0xf8] sm:$0xff]
    %v363 = vld [vmem:[#allocation7 + $0x100] sm:$0xff]
    %v364 = vld [vmem:[#allocation7 + $0x108] sm:$0xff]
    %v365 = vld [vmem:[#allocation7 + $0x110] sm:$0xff]
    %v366 = vld [vmem:[#allocation7 + $0x118] sm:$0xff]
    %v367 = vld [vmem:[#allocation7 + $0x120] sm:$0xff]
    %v368 = vld [vmem:[#allocation7 + $0x128] sm:$0xff]
    %v369 = vld [vmem:[#allocation7 + $0x130] sm:$0xff]
    %v370 = vld [vmem:[#allocation7 + $0x138] sm:$0xff]
    %v371 = vld [vmem:[#allocation7 + $0x140] sm:$0xff]
    %v372 = vld [vmem:[#allocation7 + $0x148] sm:$0xff]
    %v373 = vld [vmem:[#allocation7 + $0x150] sm:$0xff]
    %v374 = vld [vmem:[#allocation7 + $0x158] sm:$0xff]
    %v375 = vld [vmem:[#allocation7 + $0x160] sm:$0xff]
    %v376 = vld [vmem:[#allocation7 + $0x168] sm:$0xff]
    %v377 = vld [vmem:[#allocation7 + $0x170] sm:$0xff]
    %v378 = vld [vmem:[#allocation7 + $0x178] sm:$0xff]
    %v379 = vld [vmem:[#allocation7 + $0x180] sm:$0xff]
    %v380 = vld [vmem:[#allocation7 + $0x188] sm:$0xff]
    %v381 = vld [vmem:[#allocation7 + $0x190] sm:$0xff]
    %v382 = vld [vmem:[#allocation7 + $0x198] sm:$0xff]
    %v383 = vld [vmem:[#allocation7 + $0x1a0] sm:$0xff]
    %v384 = vld [vmem:[#allocation7 + $0x1a8] sm:$0xff]
    %v385 = vld [vmem:[#allocation7 + $0x1b0] sm:$0xff]
    %v386 = vld [vmem:[#allocation7 + $0x1b8] sm:$0xff]
    %v387 = vld [vmem:[#allocation7 + $0x1c0] sm:$0xff]
    %v388 = vld [vmem:[#allocation7 + $0x1c8] sm:$0xff]
    %v389 = vld [vmem:[#allocation7 + $0x1d0] sm:$0xff]
    %v390 = vld [vmem:[#allocation7 + $0x1d8] sm:$0xff]
    %v391 = vld [vmem:[#allocation7 + $0x1e0] sm:$0xff]
    %v392 = vld [vmem:[#allocation7 + $0x1e8] sm:$0xff]
    %v393 = vld [vmem:[#allocation7 + $0x1f0] sm:$0xff]
    %v394 = vld [vmem:[#allocation7 + $0x1f8] sm:$0xff]
    %v395 = vld [vmem:[#allocation7 + $0x200] sm:$0xff]
    %v396 = vld [vmem:[#allocation7 + $0x208] sm:$0xff]
    %v397 = vld [vmem:[#allocation7 + $0x210] sm:$0xff]
    %v398 = vld [vmem:[#allocation7 + $0x218] sm:$0xff]
    %v399 = vld [vmem:[#allocation7 + $0x220] sm:$0xff]
    %v400 = vld [vmem:[#allocation7 + $0x228] sm:$0xff]
    %v401 = vld [vmem:[#allocation7 + $0x230] sm:$0xff]
    %v402 = vld [vmem:[#allocation7 + $0x238] sm:$0xff]
    %v403 = vld [vmem:[#allocation7 + $0x240] sm:$0xff]
    %v404 = vld [vmem:[#allocation7 + $0x248] sm:$0xff]
    %v405 = vld [vmem:[#allocation7 + $0x250] sm:$0xff]
    %v406 = vld [vmem:[#allocation7 + $0x258] sm:$0xff]
    %v407 = vld [vmem:[#allocation7 + $0x260] sm:$0xff]
    %v408 = vld [vmem:[#allocation7 + $0x268] sm:$0xff]
    %v409 = vld [vmem:[#allocation7 + $0x270] sm:$0xff]
    %v410 = vld [vmem:[#allocation7 + $0x278] sm:$0xff]
    %v411 = vld [vmem:[#allocation7 + $0x280] sm:$0xff]
    %v412 = vld [vmem:[#allocation7 + $0x288] sm:$0xff]
    %v413 = vld [vmem:[#allocation7 + $0x290] sm:$0xff]
    %v414 = vld [vmem:[#allocation7 + $0x298] sm:$0xff]
    %v415 = vld [vmem:[#allocation7 + $0x2a0] sm:$0xff]
    %v416 = vld [vmem:[#allocation7 + $0x2a8] sm:$0xff]
    %v417 = vld [vmem:[#allocation7 + $0x2b0] sm:$0xff]
    %v418 = vld [vmem:[#allocation7 + $0x2b8] sm:$0xff]
    %v419 = vld [vmem:[#allocation7 + $0x2c0] sm:$0xff]
    %v420 = vld [vmem:[#allocation7 + $0x2c8] sm:$0xff]
    %v421 = vld [vmem:[#allocation7 + $0x2d0] sm:$0xff]
    %v422 = vld [vmem:[#allocation7 + $0x2d8] sm:$0xff]
    %v423 = vld [vmem:[#allocation7 + $0x2e0] sm:$0xff]
    %v424 = vld [vmem:[#allocation7 + $0x2e8] sm:$0xff]
    %v425 = vld [vmem:[#allocation7 + $0x2f0] sm:$0xff]
    %v426 = vld [vmem:[#allocation7 + $0x2f8] sm:$0xff]
    %v427 = vld [vmem:[#allocation7 + $0x300] sm:$0xff]
    %v428 = vld [vmem:[#allocation7 + $0x308] sm:$0xff]
    %v429 = vld [vmem:[#allocation7 + $0x310] sm:$0xff]
    %v430 = vld [vmem:[#allocation7 + $0x318] sm:$0xff]
    %v431 = vld [vmem:[#allocation7 + $0x320] sm:$0xff]
    %v432 = vld [vmem:[#allocation7 + $0x328] sm:$0xff]
    %v433 = vld [vmem:[#allocation7 + $0x330] sm:$0xff]
    %v434 = vld [vmem:[#allocation7 + $0x338] sm:$0xff]
    %v435 = vld [vmem:[#allocation7 + $0x340] sm:$0xff]
    %v436 = vld [vmem:[#allocation7 + $0x348] sm:$0xff]
    %v437 = vld [vmem:[#allocation7 + $0x350] sm:$0xff]
    %v438 = vld [vmem:[#allocation7 + $0x358] sm:$0xff]
    %v439 = vld [vmem:[#allocation7 + $0x360] sm:$0xff]
    %v440 = vld [vmem:[#allocation7 + $0x368] sm:$0xff]
    %v441 = vld [vmem:[#allocation7 + $0x370] sm:$0xff]
    %v442 = vld [vmem:[#allocation7 + $0x378] sm:$0xff]
    %v443 = vld [vmem:[#allocation7 + $0x380] sm:$0xff]
    %v444 = vld [vmem:[#allocation7 + $0x388] sm:$0xff]
    %v445 = vld [vmem:[#allocation7 + $0x390] sm:$0xff]
    %v446 = vld [vmem:[#allocation7 + $0x398] sm:$0xff]
    %v447 = vld [vmem:[#allocation7 + $0x3a0] sm:$0xff]
    %v448 = vld [vmem:[#allocation7 + $0x3a8] sm:$0xff]
    %v449 = vld [vmem:[#allocation7 + $0x3b0] sm:$0xff]
    %v450 = vld [vmem:[#allocation7 + $0x3b8] sm:$0xff]
    %v451 = vld [vmem:[#allocation7 + $0x3c0] sm:$0xff]
    %v452 = vld [vmem:[#allocation7 + $0x3c8] sm:$0xff]
    %v453 = vld [vmem:[#allocation7 + $0x3d0] sm:$0xff]
    %v454 = vld [vmem:[#allocation7 + $0x3d8] sm:$0xff]
    %v455 = vld [vmem:[#allocation7 + $0x3e0] sm:$0xff]
    %v456 = vld [vmem:[#allocation7 + $0x3e8] sm:$0xff]
    %v457 = vld [vmem:[#allocation7 + $0x3f0] sm:$0xff]
    %v458 = vld [vmem:[#allocation7 + $0x3f8] sm:$0xff]
    %v459 = vld [vmem:[#allocation7 + $0x400] sm:$0xff]
    %v460 = vld [vmem:[#allocation7 + $0x408] sm:$0xff]
    %v461 = vld [vmem:[#allocation7 + $0x410] sm:$0xff]
    %v462 = vld [vmem:[#allocation7 + $0x418] sm:$0xff]
    %v463 = vld [vmem:[#allocation7 + $0x420] sm:$0xff]
    %v464 = vld [vmem:[#allocation7 + $0x428] sm:$0xff]
    %v465 = vld [vmem:[#allocation7 + $0x430] sm:$0xff]
    %v466 = vld [vmem:[#allocation7 + $0x438] sm:$0xff]
    %v467 = vld [vmem:[#allocation7 + $0x440] sm:$0xff]
    %v468 = vld [vmem:[#allocation7 + $0x448] sm:$0xff]
    %v469 = vld [vmem:[#allocation7 + $0x450] sm:$0xff]
    %v470 = vld [vmem:[#allocation7 + $0x458] sm:$0xff]
    %v471 = vld [vmem:[#allocation7 + $0x460] sm:$0xff]
    %v472 = vld [vmem:[#allocation7 + $0x468] sm:$0xff]
    %v473 = vld [vmem:[#allocation7 + $0x470] sm:$0xff]
    %v474 = vld [vmem:[#allocation7 + $0x478] sm:$0xff]
    %v475 = vld [vmem:[#allocation7 + $0x480] sm:$0xff]
    %v476 = vld [vmem:[#allocation7 + $0x488] sm:$0xff]
    %v477 = vld [vmem:[#allocation7 + $0x490] sm:$0xff]
    %v478 = vld [vmem:[#allocation7 + $0x498] sm:$0xff]
    %v479 = vld [vmem:[#allocation7 + $0x4a0] sm:$0xff]
    %v480 = vld [vmem:[#allocation7 + $0x4a8] sm:$0xff]
    %v481 = vld [vmem:[#allocation7 + $0x4b0] sm:$0xff]
    %v482 = vld [vmem:[#allocation7 + $0x4b8] sm:$0xff]
    %v483 = vld [vmem:[#allocation7 + $0x4c0] sm:$0xff]
    %v484 = vld [vmem:[#allocation7 + $0x4c8] sm:$0xff]
    %v485 = vld [vmem:[#allocation7 + $0x4d0] sm:$0xff]
    %v486 = vld [vmem:[#allocation7 + $0x4d8] sm:$0xff]
    %v487 = vld [vmem:[#allocation7 + $0x4e0] sm:$0xff]
    %v488 = vld [vmem:[#allocation7 + $0x4e8] sm:$0xff]
    %v489 = vld [vmem:[#allocation7 + $0x4f0] sm:$0xff]
    %v490 = vld [vmem:[#allocation7 + $0x4f8] sm:$0xff]
    %v491 = vld [vmem:[#allocation7 + $0x500] sm:$0xff]
    %v492 = vld [vmem:[#allocation7 + $0x508] sm:$0xff]
    %v493 = vld [vmem:[#allocation7 + $0x510] sm:$0xff]
    %v494 = vld [vmem:[#allocation7 + $0x518] sm:$0xff]
    %v495 = vld [vmem:[#allocation7 + $0x520] sm:$0xff]
    %v496 = vld [vmem:[#allocation7 + $0x528] sm:$0xff]
    %v497 = vld [vmem:[#allocation7 + $0x530] sm:$0xff]
    %v498 = vld [vmem:[#allocation7 + $0x538] sm:$0xff]
    %v499 = vld [vmem:[#allocation7 + $0x540] sm:$0xff]
    %v500 = vld [vmem:[#allocation7 + $0x548] sm:$0xff]
    %v501 = vld [vmem:[#allocation7 + $0x550] sm:$0xff]
    %v502 = vld [vmem:[#allocation7 + $0x558] sm:$0xff]
    %v503 = vld [vmem:[#allocation7 + $0x560] sm:$0xff]
    %v504 = vld [vmem:[#allocation7 + $0x568] sm:$0xff]
    %v505 = vld [vmem:[#allocation7 + $0x570] sm:$0xff]
    %v506 = vld [vmem:[#allocation7 + $0x578] sm:$0xff]
    %v507 = vld [vmem:[#allocation7 + $0x580] sm:$0xff]
    %v508 = vld [vmem:[#allocation7 + $0x588] sm:$0xff]
    %v509 = vld [vmem:[#allocation7 + $0x590] sm:$0xff]
    %v510 = vld [vmem:[#allocation7 + $0x598] sm:$0xff]
    %v511 = vld [vmem:[#allocation7 + $0x5a0] sm:$0xff]
    %v512 = vld [vmem:[#allocation7 + $0x5a8] sm:$0xff]
    %v513 = vld [vmem:[#allocation7 + $0x5b0] sm:$0xff]
    %v514 = vld [vmem:[#allocation7 + $0x5b8] sm:$0xff]
    %v515 = vld [vmem:[#allocation7 + $0x5c0] sm:$0xff]
    %v516 = vld [vmem:[#allocation7 + $0x5c8] sm:$0xff]
    %v517 = vld [vmem:[#allocation7 + $0x5d0] sm:$0xff]
    %v518 = vld [vmem:[#allocation7 + $0x5d8] sm:$0xff]
    %v519 = vld [vmem:[#allocation7 + $0x5e0] sm:$0xff]
    %v520 = vld [vmem:[#allocation7 + $0x5e8] sm:$0xff]
    %v521 = vld [vmem:[#allocation7 + $0x5f0] sm:$0xff]
    %v522 = vld [vmem:[#allocation7 + $0x5f8] sm:$0xff]
    %v523 = vld [vmem:[#allocation7 + $0x600] sm:$0xff]
    %v524 = vld [vmem:[#allocation7 + $0x608] sm:$0xff]
    %v525 = vld [vmem:[#allocation7 + $0x610] sm:$0xff]
    %v526 = vld [vmem:[#allocation7 + $0x618] sm:$0xff]
    %v527 = vld [vmem:[#allocation7 + $0x620] sm:$0xff]
    %v528 = vld [vmem:[#allocation7 + $0x628] sm:$0xff]
    %v529 = vld [vmem:[#allocation7 + $0x630] sm:$0xff]
    %v530 = vld [vmem:[#allocation7 + $0x638] sm:$0xff]
    %v531 = vld [vmem:[#allocation7 + $0x640] sm:$0xff]
    %v532 = vld [vmem:[#allocation7 + $0x648] sm:$0xff]
    %v533 = vld [vmem:[#allocation7 + $0x650] sm:$0xff]
    %v534 = vld [vmem:[#allocation7 + $0x658] sm:$0xff]
    %v535 = vld [vmem:[#allocation7 + $0x660] sm:$0xff]
    %v536 = vld [vmem:[#allocation7 + $0x668] sm:$0xff]
    %v537 = vld [vmem:[#allocation7 + $0x670] sm:$0xff]
    %v538 = vld [vmem:[#allocation7 + $0x678] sm:$0xff]
    %v539 = vld [vmem:[#allocation7 + $0x680] sm:$0xff]
    %v540 = vld [vmem:[#allocation7 + $0x688] sm:$0xff]
    %v541 = vld [vmem:[#allocation7 + $0x690] sm:$0xff]
    %v542 = vld [vmem:[#allocation7 + $0x698] sm:$0xff]
    %v543 = vld [vmem:[#allocation7 + $0x6a0] sm:$0xff]
    %v544 = vld [vmem:[#allocation7 + $0x6a8] sm:$0xff]
    %v545 = vld [vmem:[#allocation7 + $0x6b0] sm:$0xff]
    %v546 = vld [vmem:[#allocation7 + $0x6b8] sm:$0xff]
    %v547 = vld [vmem:[#allocation7 + $0x6c0] sm:$0xff]
    %v548 = vld [vmem:[#allocation7 + $0x6c8] sm:$0xff]
    %v549 = vld [vmem:[#allocation7 + $0x6d0] sm:$0xff]
    %v550 = vld [vmem:[#allocation7 + $0x6d8] sm:$0xff]
    %v551 = vld [vmem:[#allocation7 + $0x6e0] sm:$0xff]
    %v552 = vld [vmem:[#allocation7 + $0x6e8] sm:$0xff]
    %v553 = vld [vmem:[#allocation7 + $0x6f0] sm:$0xff]
    %v554 = vld [vmem:[#allocation7 + $0x6f8] sm:$0xff]
    %v555 = vld [vmem:[#allocation7 + $0x700] sm:$0xff]
    %v556 = vld [vmem:[#allocation7 + $0x708] sm:$0xff]
    %v557 = vld [vmem:[#allocation7 + $0x710] sm:$0xff]
    %v558 = vld [vmem:[#allocation7 + $0x718] sm:$0xff]
    %v559 = vld [vmem:[#allocation7 + $0x720] sm:$0xff]
    %v560 = vld [vmem:[#allocation7 + $0x728] sm:$0xff]
    %v561 = vld [vmem:[#allocation7 + $0x730] sm:$0xff]
    %v562 = vld [vmem:[#allocation7 + $0x738] sm:$0xff]
    %v563 = vld [vmem:[#allocation7 + $0x740] sm:$0xff]
    %v564 = vld [vmem:[#allocation7 + $0x748] sm:$0xff]
    %v565 = vld [vmem:[#allocation7 + $0x750] sm:$0xff]
    %v566 = vld [vmem:[#allocation7 + $0x758] sm:$0xff]
    %v567 = vld [vmem:[#allocation7 + $0x760] sm:$0xff]
    %v568 = vld [vmem:[#allocation7 + $0x768] sm:$0xff]
    %v569 = vld [vmem:[#allocation7 + $0x770] sm:$0xff]
    %v570 = vld [vmem:[#allocation7 + $0x778] sm:$0xff]
    %v571 = vld [vmem:[#allocation7 + $0x780] sm:$0xff]
    %v572 = vld [vmem:[#allocation7 + $0x788] sm:$0xff]
    %v573 = vld [vmem:[#allocation7 + $0x790] sm:$0xff]
    %v574 = vld [vmem:[#allocation7 + $0x798] sm:$0xff]
    %v575 = vld [vmem:[#allocation7 + $0x7a0] sm:$0xff]
    %v576 = vld [vmem:[#allocation7 + $0x7a8] sm:$0xff]
    %v577 = vld [vmem:[#allocation7 + $0x7b0] sm:$0xff]
    %v578 = vld [vmem:[#allocation7 + $0x7b8] sm:$0xff]
    %v579 = vld [vmem:[#allocation7 + $0x7c0] sm:$0xff]
    %v580 = vld [vmem:[#allocation7 + $0x7c8] sm:$0xff]
    %v581 = vld [vmem:[#allocation7 + $0x7d0] sm:$0xff]
    %v582 = vld [vmem:[#allocation7 + $0x7d8] sm:$0xff]
    %v583 = vld [vmem:[#allocation7 + $0x7e0] sm:$0xff]
    %v584 = vld [vmem:[#allocation7 + $0x7e8] sm:$0xff]
    %v585 = vld [vmem:[#allocation7 + $0x7f0] sm:$0xff]
    %v586 = vld [vmem:[#allocation7 + $0x7f8] sm:$0xff]
    %v587 = vld [vmem:[#allocation9] sm:$0xf]
    %v589 = vlaneseq
    %v590 = vshrl.u32 %v589, 7
    %v591 = vsub.s32 0, %v590
    %v592 = vrot.slane %v587, %v591
    %v593 = vlaneseq
    %v594 = vshrl.u32 %v593, 7
    %v595 = vsub.s32 1, %v594
    %v596 = vrot.slane %v587, %v595
    %v597 = vlaneseq
    %v598 = vshrl.u32 %v597, 7
    %v599 = vsub.s32 2, %v598
    %v600 = vrot.slane %v587, %v599
    %v601 = vlaneseq
    %v602 = vshrl.u32 %v601, 7
    %v603 = vsub.s32 3, %v602
    %v604 = vrot.slane %v587, %v603
    %609 = vmatprep.subr.mxu0 %v332
    %610 = vmatpush1.msra.mxu0 %v331
    %611 = vmatprep.subr.mxu0 %v336
    %612 = vmatpush1.msra.mxu0 %v335
    %613 = vmatprep.subr.mxu0 %v340
    %614 = vmatpush1.msra.mxu0 %v339
    %615 = vmatprep.subr.mxu0 %v344
    %616 = vmatpush1.msra.mxu0 %v343
    %617 = vmatprep.subr.mxu0 %v348
    %618 = vmatpush1.msra.mxu0 %v347
    %619 = vmatprep.subr.mxu0 %v352
    %620 = vmatpush1.msra.mxu0 %v351
    %621 = vmatprep.subr.mxu0 %v356
    %622 = vmatpush1.msra.mxu0 %v355
    %623 = vmatprep.subr.mxu0 %v360
    %624 = vmatpush1.msra.mxu0 %v359
    %625 = vmatprep.subr.mxu0 %v364
    %626 = vmatpush1.msra.mxu0 %v363
    %627 = vmatprep.subr.mxu0 %v368
    %628 = vmatpush1.msra.mxu0 %v367
    %629 = vmatprep.subr.mxu0 %v372
    %630 = vmatpush1.msra.mxu0 %v371
    %631 = vmatprep.subr.mxu0 %v376
    %632 = vmatpush1.msra.mxu0 %v375
    %633 = vmatprep.subr.mxu0 %v380
    %634 = vmatpush1.msra.mxu0 %v379
    %635 = vmatprep.subr.mxu0 %v384
    %636 = vmatpush1.msra.mxu0 %v383
    %637 = vmatprep.subr.mxu0 %v388
    %638 = vmatpush1.msra.mxu0 %v387
    %639 = vmatprep.subr.mxu0 %v392
    %640 = vmatpush1.msra.mxu0 %v391
    %641 = vmatprep.subr.mxu0 %v396
    %642 = vmatpush1.msra.mxu0 %v395
    %643 = vmatprep.subr.mxu0 %v400
    %644 = vmatpush1.msra.mxu0 %v399
    %645 = vmatprep.subr.mxu0 %v404
    %646 = vmatpush1.msra.mxu0 %v403
    %647 = vmatprep.subr.mxu0 %v408
    %648 = vmatpush1.msra.mxu0 %v407
    %649 = vmatprep.subr.mxu0 %v412
    %650 = vmatpush1.msra.mxu0 %v411
    %651 = vmatprep.subr.mxu0 %v416
    %652 = vmatpush1.msra.mxu0 %v415
    %653 = vmatprep.subr.mxu0 %v420
    %654 = vmatpush1.msra.mxu0 %v419
    %655 = vmatprep.subr.mxu0 %v424
    %656 = vmatpush1.msra.mxu0 %v423
    %657 = vmatprep.subr.mxu0 %v428
    %658 = vmatpush1.msra.mxu0 %v427
    %659 = vmatprep.subr.mxu0 %v432
    %660 = vmatpush1.msra.mxu0 %v431
    %661 = vmatprep.subr.mxu0 %v436
    %662 = vmatpush1.msra.mxu0 %v435
    %663 = vmatprep.subr.mxu0 %v440
    %664 = vmatpush1.msra.mxu0 %v439
    %665 = vmatprep.subr.mxu0 %v444
    %666 = vmatpush1.msra.mxu0 %v443
    %667 = vmatprep.subr.mxu0 %v448
    %668 = vmatpush1.msra.mxu0 %v447
    %669 = vmatprep.subr.mxu0 %v452
    %670 = vmatpush1.msra.mxu0 %v451
    %671 = vmatprep.subr.mxu0 %v456
    %672 = vmatpush1.msra.mxu0 %v455
    %673 = vmatprep.mubr.f32.mxu0 %v328
    %674 = vmatmul.mubr.f32.gmra.mrb[0].mxu0 %v327
    %v675 = vpop.f32.mrb[0].mxu0
    %v676 = vadd.f32 %v592, %v675
    %v677 = vpop.f32.mrb[0].mxu0
    %v678 = vadd.f32 %v596, %v677
    %679 = vdwg.mxu0
    %680 = vmatprep.subr.mxu0 %v460
    %681 = vmatpush1.msra.mxu0 %v459
    %682 = vmatprep.subr.mxu0 %v464
    %683 = vmatpush1.msra.mxu0 %v463
    %684 = vmatprep.subr.mxu0 %v468
    %685 = vmatpush1.msra.mxu0 %v467
    %686 = vmatprep.subr.mxu0 %v472
    %687 = vmatpush1.msra.mxu0 %v471
    %688 = vmatprep.subr.mxu0 %v476
    %689 = vmatpush1.msra.mxu0 %v475
    %690 = vmatprep.subr.mxu0 %v480
    %691 = vmatpush1.msra.mxu0 %v479
    %692 = vmatprep.subr.mxu0 %v484
    %693 = vmatpush1.msra.mxu0 %v483
    %694 = vmatprep.subr.mxu0 %v488
    %695 = vmatpush1.msra.mxu0 %v487
    %696 = vmatprep.subr.mxu0 %v492
    %697 = vmatpush1.msra.mxu0 %v491
    %698 = vmatprep.subr.mxu0 %v496
    %699 = vmatpush1.msra.mxu0 %v495
    %700 = vmatprep.subr.mxu0 %v500
    %701 = vmatpush1.msra.mxu0 %v499
    %702 = vmatprep.subr.mxu0 %v504
    %703 = vmatpush1.msra.mxu0 %v503
    %704 = vmatprep.subr.mxu0 %v508
    %705 = vmatpush1.msra.mxu0 %v507
    %706 = vmatprep.subr.mxu0 %v512
    %707 = vmatpush1.msra.mxu0 %v511
    %708 = vmatprep.subr.mxu0 %v516
    %709 = vmatpush1.msra.mxu0 %v515
    %710 = vmatprep.subr.mxu0 %v520
    %711 = vmatpush1.msra.mxu0 %v519
    %712 = vmatprep.subr.mxu0 %v524
    %713 = vmatpush1.msra.mxu0 %v523
    %714 = vmatprep.subr.mxu0 %v528
    %715 = vmatpush1.msra.mxu0 %v527
    %716 = vmatprep.subr.mxu0 %v532
    %717 = vmatpush1.msra.mxu0 %v531
    %718 = vmatprep.subr.mxu0 %v536
    %719 = vmatpush1.msra.mxu0 %v535
    %720 = vmatprep.subr.mxu0 %v540
    %721 = vmatpush1.msra.mxu0 %v539
    %722 = vmatprep.subr.mxu0 %v544
    %723 = vmatpush1.msra.mxu0 %v543
    %724 = vmatprep.subr.mxu0 %v548
    %725 = vmatpush1.msra.mxu0 %v547
    %726 = vmatprep.subr.mxu0 %v552
    %727 = vmatpush1.msra.mxu0 %v551
    %728 = vmatprep.subr.mxu0 %v556
    %729 = vmatpush1.msra.mxu0 %v555
    %730 = vmatprep.subr.mxu0 %v560
    %731 = vmatpush1.msra.mxu0 %v559
    %732 = vmatprep.subr.mxu0 %v564
    %733 = vmatpush1.msra.mxu0 %v563
    %734 = vmatprep.subr.mxu0 %v568
    %735 = vmatpush1.msra.mxu0 %v567
    %736 = vmatprep.subr.mxu0 %v572
    %737 = vmatpush1.msra.mxu0 %v571
    %738 = vmatprep.subr.mxu0 %v576
    %739 = vmatpush1.msra.mxu0 %v575
    %740 = vmatprep.subr.mxu0 %v580
    %741 = vmatpush1.msra.mxu0 %v579
    %742 = vmatprep.subr.mxu0 %v584
    %743 = vmatpush1.msra.mxu0 %v583
    %744 = vmatprep.mubr.f32.mxu0 %v330
    %745 = vmatmul.mubr.f32.gmra.mrb[0].mxu0 %v329
    %v746 = vpop.f32.mrb[0].mxu0
    %v747 = vadd.f32 %v676, %v746
    %v748 = vpop.f32.mrb[0].mxu0
    %v749 = vadd.f32 %v678, %v748
    %750 = vdwg.mxu0
    %751 = vmatprep.subr.mxu0 %v334
    %752 = vmatpush1.msra.mxu0 %v333
    %753 = vmatprep.subr.mxu0 %v338
    %754 = vmatpush1.msra.mxu0 %v337
    %755 = vmatprep.subr.mxu0 %v342
    %756 = vmatpush1.msra.mxu0 %v341
    %757 = vmatprep.subr.mxu0 %v346
    %758 = vmatpush1.msra.mxu0 %v345
    %759 = vmatprep.subr.mxu0 %v350
    %760 = vmatpush1.msra.mxu0 %v349
    %761 = vmatprep.subr.mxu0 %v354
    %762 = vmatpush1.msra.mxu0 %v353
    %763 = vmatprep.subr.mxu0 %v358
    %764 = vmatpush1.msra.mxu0 %v357
    %765 = vmatprep.subr.mxu0 %v362
    %766 = vmatpush1.msra.mxu0 %v361
    %767 = vmatprep.subr.mxu0 %v366
    %768 = vmatpush1.msra.mxu0 %v365
    %769 = vmatprep.subr.mxu0 %v370
    %770 = vmatpush1.msra.mxu0 %v369
    %771 = vmatprep.subr.mxu0 %v374
    %772 = vmatpush1.msra.mxu0 %v373
    %773 = vmatprep.subr.mxu0 %v378
    %774 = vmatpush1.msra.mxu0 %v377
    %775 = vmatprep.subr.mxu0 %v382
    %776 = vmatpush1.msra.mxu0 %v381
    %777 = vmatprep.subr.mxu0 %v386
    %778 = vmatpush1.msra.mxu0 %v385
    %779 = vmatprep.subr.mxu0 %v390
    %780 = vmatpush1.msra.mxu0 %v389
    %781 = vmatprep.subr.mxu0 %v394
    %782 = vmatpush1.msra.mxu0 %v393
    %783 = vmatprep.subr.mxu0 %v398
    %784 = vmatpush1.msra.mxu0 %v397
    %785 = vmatprep.subr.mxu0 %v402
    %786 = vmatpush1.msra.mxu0 %v401
    %787 = vmatprep.subr.mxu0 %v406
    %788 = vmatpush1.msra.mxu0 %v405
    %789 = vmatprep.subr.mxu0 %v410
    %790 = vmatpush1.msra.mxu0 %v409
    %791 = vmatprep.subr.mxu0 %v414
    %792 = vmatpush1.msra.mxu0 %v413
    %793 = vmatprep.subr.mxu0 %v418
    %794 = vmatpush1.msra.mxu0 %v417
    %795 = vmatprep.subr.mxu0 %v422
    %796 = vmatpush1.msra.mxu0 %v421
    %797 = vmatprep.subr.mxu0 %v426
    %798 = vmatpush1.msra.mxu0 %v425
    %799 = vmatprep.subr.mxu0 %v430
    %800 = vmatpush1.msra.mxu0 %v429
    %801 = vmatprep.subr.mxu0 %v434
    %802 = vmatpush1.msra.mxu0 %v433
    %803 = vmatprep.subr.mxu0 %v438
    %804 = vmatpush1.msra.mxu0 %v437
    %805 = vmatprep.subr.mxu0 %v442
    %806 = vmatpush1.msra.mxu0 %v441
    %807 = vmatprep.subr.mxu0 %v446
    %808 = vmatpush1.msra.mxu0 %v445
    %809 = vmatprep.subr.mxu0 %v450
    %810 = vmatpush1.msra.mxu0 %v449
    %811 = vmatprep.subr.mxu0 %v454
    %812 = vmatpush1.msra.mxu0 %v453
    %813 = vmatprep.subr.mxu0 %v458
    %814 = vmatpush1.msra.mxu0 %v457
    %815 = vmatprep.mubr.f32.mxu0 %v328
    %816 = vmatmul.mubr.f32.gmra.mrb[0].mxu0 %v327
    %v817 = vpop.f32.mrb[0].mxu0
    %v818 = vadd.f32 %v600, %v817
    %v819 = vpop.f32.mrb[0].mxu0
    %v820 = vadd.f32 %v604, %v819
    %821 = vdwg.mxu0
    %822 = vmatprep.subr.mxu0 %v462
    %823 = vmatpush1.msra.mxu0 %v461
    %824 = vmatprep.subr.mxu0 %v466
    %825 = vmatpush1.msra.mxu0 %v465
    %826 = vmatprep.subr.mxu0 %v470
    %827 = vmatpush1.msra.mxu0 %v469
    %828 = vmatprep.subr.mxu0 %v474
    %829 = vmatpush1.msra.mxu0 %v473
    %830 = vmatprep.subr.mxu0 %v478
    %831 = vmatpush1.msra.mxu0 %v477
    %832 = vmatprep.subr.mxu0 %v482
    %833 = vmatpush1.msra.mxu0 %v481
    %834 = vmatprep.subr.mxu0 %v486
    %835 = vmatpush1.msra.mxu0 %v485
    %836 = vmatprep.subr.mxu0 %v490
    %837 = vmatpush1.msra.mxu0 %v489
    %838 = vmatprep.subr.mxu0 %v494
    %839 = vmatpush1.msra.mxu0 %v493
    %840 = vmatprep.subr.mxu0 %v498
    %841 = vmatpush1.msra.mxu0 %v497
    %842 = vmatprep.subr.mxu0 %v502
    %843 = vmatpush1.msra.mxu0 %v501
    %844 = vmatprep.subr.mxu0 %v506
    %845 = vmatpush1.msra.mxu0 %v505
    %846 = vmatprep.subr.mxu0 %v510
    %847 = vmatpush1.msra.mxu0 %v509
    %848 = vmatprep.subr.mxu0 %v514
    %849 = vmatpush1.msra.mxu0 %v513
    %850 = vmatprep.subr.mxu0 %v518
    %851 = vmatpush1.msra.mxu0 %v517
    %852 = vmatprep.subr.mxu0 %v522
    %853 = vmatpush1.msra.mxu0 %v521
    %854 = vmatprep.subr.mxu0 %v526
    %855 = vmatpush1.msra.mxu0 %v525
    %856 = vmatprep.subr.mxu0 %v530
    %857 = vmatpush1.msra.mxu0 %v529
    %858 = vmatprep.subr.mxu0 %v534
    %859 = vmatpush1.msra.mxu0 %v533
    %860 = vmatprep.subr.mxu0 %v538
    %861 = vmatpush1.msra.mxu0 %v537
    %862 = vmatprep.subr.mxu0 %v542
    %863 = vmatpush1.msra.mxu0 %v541
    %864 = vmatprep.subr.mxu0 %v546
    %865 = vmatpush1.msra.mxu0 %v545
    %866 = vmatprep.subr.mxu0 %v550
    %867 = vmatpush1.msra.mxu0 %v549
    %868 = vmatprep.subr.mxu0 %v554
    %869 = vmatpush1.msra.mxu0 %v553
    %870 = vmatprep.subr.mxu0 %v558
    %871 = vmatpush1.msra.mxu0 %v557
    %872 = vmatprep.subr.mxu0 %v562
    %873 = vmatpush1.msra.mxu0 %v561
    %874 = vmatprep.subr.mxu0 %v566
    %875 = vmatpush1.msra.mxu0 %v565
    %876 = vmatprep.subr.mxu0 %v570
    %877 = vmatpush1.msra.mxu0 %v569
    %878 = vmatprep.subr.mxu0 %v574
    %879 = vmatpush1.msra.mxu0 %v573
    %880 = vmatprep.subr.mxu0 %v578
    %881 = vmatpush1.msra.mxu0 %v577
    %882 = vmatprep.subr.mxu0 %v582
    %883 = vmatpush1.msra.mxu0 %v581
    %884 = vmatprep.subr.mxu0 %v586
    %885 = vmatpush1.msra.mxu0 %v585
    %886 = vmatprep.mubr.f32.mxu0 %v330
    %887 = vmatmul.mubr.f32.gmra.mrb[0].mxu0 %v329
    %v888 = vpop.f32.mrb[0].mxu0
    %v889 = vadd.f32 %v818, %v888
    %v890 = vpop.f32.mrb[0].mxu0
    %v891 = vadd.f32 %v820, %v890
    %892 = vdwg.mxu0
    %vm893 = vcmp.ge.f32.partialorder %v747, 0.0
    %vm894 = vcmp.ge.f32.partialorder %v749, 0.0
    %vm895 = vcmp.ge.f32.partialorder %v889, 0.0
    %vm896 = vcmp.ge.f32.partialorder %v891, 0.0
    %v897 = vmul.f32 %v747, 0.2
    %v898 = vmul.f32 %v749, 0.2
    %v899 = vmul.f32 %v889, 0.2
    %v900 = vmul.f32 %v891, 0.2
    %v901 = vsel %vm893, %v747, %v897
    %v902 = vsel %vm894, %v749, %v898
    %v903 = vsel %vm895, %v889, %v899
    %v904 = vsel %vm896, %v891, %v900
    %v905 = vmul.f32 %v901, 1.4142135
    %v906 = vmul.f32 %v902, 1.4142135
    %v907 = vmul.f32 %v903, 1.4142135
    %v908 = vmul.f32 %v904, 1.4142135
    %v909 = vld [vmem:[#allocation10] sm:$0xff]
    %v910 = vld [vmem:[#allocation10 + $0x8] sm:$0xff]
    %v911 = vld [vmem:[#allocation10 + $0x10] sm:$0xff]
    %v912 = vld [vmem:[#allocation10 + $0x18] sm:$0xff]
    %v913 = vld [vmem:[#allocation10 + $0x20] sm:$0xff]
    %v914 = vld [vmem:[#allocation10 + $0x28] sm:$0xff]
    %v915 = vld [vmem:[#allocation10 + $0x30] sm:$0xff]
    %v916 = vld [vmem:[#allocation10 + $0x38] sm:$0xff]
    %v917 = vld [vmem:[#allocation10 + $0x40] sm:$0xff]
    %v918 = vld [vmem:[#allocation10 + $0x48] sm:$0xff]
    %v919 = vld [vmem:[#allocation10 + $0x50] sm:$0xff]
    %v920 = vld [vmem:[#allocation10 + $0x58] sm:$0xff]
    %v921 = vld [vmem:[#allocation10 + $0x60] sm:$0xff]
    %v922 = vld [vmem:[#allocation10 + $0x68] sm:$0xff]
    %v923 = vld [vmem:[#allocation10 + $0x70] sm:$0xff]
    %v924 = vld [vmem:[#allocation10 + $0x78] sm:$0xff]
    %v925 = vld [vmem:[#allocation10 + $0x80] sm:$0xff]
    %v926 = vld [vmem:[#allocation10 + $0x88] sm:$0xff]
    %v927 = vld [vmem:[#allocation10 + $0x90] sm:$0xff]
    %v928 = vld [vmem:[#allocation10 + $0x98] sm:$0xff]
    %v929 = vld [vmem:[#allocation10 + $0xa0] sm:$0xff]
    %v930 = vld [vmem:[#allocation10 + $0xa8] sm:$0xff]
    %v931 = vld [vmem:[#allocation10 + $0xb0] sm:$0xff]
    %v932 = vld [vmem:[#allocation10 + $0xb8] sm:$0xff]
    %v933 = vld [vmem:[#allocation10 + $0xc0] sm:$0xff]
    %v934 = vld [vmem:[#allocation10 + $0xc8] sm:$0xff]
    %v935 = vld [vmem:[#allocation10 + $0xd0] sm:$0xff]
    %v936 = vld [vmem:[#allocation10 + $0xd8] sm:$0xff]
    %v937 = vld [vmem:[#allocation10 + $0xe0] sm:$0xff]
    %v938 = vld [vmem:[#allocation10 + $0xe8] sm:$0xff]
    %v939 = vld [vmem:[#allocation10 + $0xf0] sm:$0xff]
    %v940 = vld [vmem:[#allocation10 + $0xf8] sm:$0xff]
    %v941 = vld [vmem:[#allocation10 + $0x100] sm:$0xff]
    %v942 = vld [vmem:[#allocation10 + $0x108] sm:$0xff]
    %v943 = vld [vmem:[#allocation10 + $0x110] sm:$0xff]
    %v944 = vld [vmem:[#allocation10 + $0x118] sm:$0xff]
    %v945 = vld [vmem:[#allocation10 + $0x120] sm:$0xff]
    %v946 = vld [vmem:[#allocation10 + $0x128] sm:$0xff]
    %v947 = vld [vmem:[#allocation10 + $0x130] sm:$0xff]
    %v948 = vld [vmem:[#allocation10 + $0x138] sm:$0xff]
    %v949 = vld [vmem:[#allocation10 + $0x140] sm:$0xff]
    %v950 = vld [vmem:[#allocation10 + $0x148] sm:$0xff]
    %v951 = vld [vmem:[#allocation10 + $0x150] sm:$0xff]
    %v952 = vld [vmem:[#allocation10 + $0x158] sm:$0xff]
    %v953 = vld [vmem:[#allocation10 + $0x160] sm:$0xff]
    %v954 = vld [vmem:[#allocation10 + $0x168] sm:$0xff]
    %v955 = vld [vmem:[#allocation10 + $0x170] sm:$0xff]
    %v956 = vld [vmem:[#allocation10 + $0x178] sm:$0xff]
    %v957 = vld [vmem:[#allocation10 + $0x180] sm:$0xff]
    %v958 = vld [vmem:[#allocation10 + $0x188] sm:$0xff]
    %v959 = vld [vmem:[#allocation10 + $0x190] sm:$0xff]
    %v960 = vld [vmem:[#allocation10 + $0x198] sm:$0xff]
    %v961 = vld [vmem:[#allocation10 + $0x1a0] sm:$0xff]
    %v962 = vld [vmem:[#allocation10 + $0x1a8] sm:$0xff]
    %v963 = vld [vmem:[#allocation10 + $0x1b0] sm:$0xff]
    %v964 = vld [vmem:[#allocation10 + $0x1b8] sm:$0xff]
    %v965 = vld [vmem:[#allocation10 + $0x1c0] sm:$0xff]
    %v966 = vld [vmem:[#allocation10 + $0x1c8] sm:$0xff]
    %v967 = vld [vmem:[#allocation10 + $0x1d0] sm:$0xff]
    %v968 = vld [vmem:[#allocation10 + $0x1d8] sm:$0xff]
    %v969 = vld [vmem:[#allocation10 + $0x1e0] sm:$0xff]
    %v970 = vld [vmem:[#allocation10 + $0x1e8] sm:$0xff]
    %v971 = vld [vmem:[#allocation10 + $0x1f0] sm:$0xff]
    %v972 = vld [vmem:[#allocation10 + $0x1f8] sm:$0xff]
    %v973 = vld [vmem:[#allocation10 + $0x200] sm:$0xff]
    %v974 = vld [vmem:[#allocation10 + $0x208] sm:$0xff]
    %v975 = vld [vmem:[#allocation10 + $0x210] sm:$0xff]
    %v976 = vld [vmem:[#allocation10 + $0x218] sm:$0xff]
    %v977 = vld [vmem:[#allocation10 + $0x220] sm:$0xff]
    %v978 = vld [vmem:[#allocation10 + $0x228] sm:$0xff]
    %v979 = vld [vmem:[#allocation10 + $0x230] sm:$0xff]
    %v980 = vld [vmem:[#allocation10 + $0x238] sm:$0xff]
    %v981 = vld [vmem:[#allocation10 + $0x240] sm:$0xff]
    %v982 = vld [vmem:[#allocation10 + $0x248] sm:$0xff]
    %v983 = vld [vmem:[#allocation10 + $0x250] sm:$0xff]
    %v984 = vld [vmem:[#allocation10 + $0x258] sm:$0xff]
    %v985 = vld [vmem:[#allocation10 + $0x260] sm:$0xff]
    %v986 = vld [vmem:[#allocation10 + $0x268] sm:$0xff]
    %v987 = vld [vmem:[#allocation10 + $0x270] sm:$0xff]
    %v988 = vld [vmem:[#allocation10 + $0x278] sm:$0xff]
    %v989 = vld [vmem:[#allocation10 + $0x280] sm:$0xff]
    %v990 = vld [vmem:[#allocation10 + $0x288] sm:$0xff]
    %v991 = vld [vmem:[#allocation10 + $0x290] sm:$0xff]
    %v992 = vld [vmem:[#allocation10 + $0x298] sm:$0xff]
    %v993 = vld [vmem:[#allocation10 + $0x2a0] sm:$0xff]
    %v994 = vld [vmem:[#allocation10 + $0x2a8] sm:$0xff]
    %v995 = vld [vmem:[#allocation10 + $0x2b0] sm:$0xff]
    %v996 = vld [vmem:[#allocation10 + $0x2b8] sm:$0xff]
    %v997 = vld [vmem:[#allocation10 + $0x2c0] sm:$0xff]
    %v998 = vld [vmem:[#allocation10 + $0x2c8] sm:$0xff]
    %v999 = vld [vmem:[#allocation10 + $0x2d0] sm:$0xff]
    %v1000 = vld [vmem:[#allocation10 + $0x2d8] sm:$0xff]
    %v1001 = vld [vmem:[#allocation10 + $0x2e0] sm:$0xff]
    %v1002 = vld [vmem:[#allocation10 + $0x2e8] sm:$0xff]
    %v1003 = vld [vmem:[#allocation10 + $0x2f0] sm:$0xff]
    %v1004 = vld [vmem:[#allocation10 + $0x2f8] sm:$0xff]
    %v1005 = vld [vmem:[#allocation10 + $0x300] sm:$0xff]
    %v1006 = vld [vmem:[#allocation10 + $0x308] sm:$0xff]
    %v1007 = vld [vmem:[#allocation10 + $0x310] sm:$0xff]
    %v1008 = vld [vmem:[#allocation10 + $0x318] sm:$0xff]
    %v1009 = vld [vmem:[#allocation10 + $0x320] sm:$0xff]
    %v1010 = vld [vmem:[#allocation10 + $0x328] sm:$0xff]
    %v1011 = vld [vmem:[#allocation10 + $0x330] sm:$0xff]
    %v1012 = vld [vmem:[#allocation10 + $0x338] sm:$0xff]
    %v1013 = vld [vmem:[#allocation10 + $0x340] sm:$0xff]
    %v1014 = vld [vmem:[#allocation10 + $0x348] sm:$0xff]
    %v1015 = vld [vmem:[#allocation10 + $0x350] sm:$0xff]
    %v1016 = vld [vmem:[#allocation10 + $0x358] sm:$0xff]
    %v1017 = vld [vmem:[#allocation10 + $0x360] sm:$0xff]
    %v1018 = vld [vmem:[#allocation10 + $0x368] sm:$0xff]
    %v1019 = vld [vmem:[#allocation10 + $0x370] sm:$0xff]
    %v1020 = vld [vmem:[#allocation10 + $0x378] sm:$0xff]
    %v1021 = vld [vmem:[#allocation10 + $0x380] sm:$0xff]
    %v1022 = vld [vmem:[#allocation10 + $0x388] sm:$0xff]
    %v1023 = vld [vmem:[#allocation10 + $0x390] sm:$0xff]
    %v1024 = vld [vmem:[#allocation10 + $0x398] sm:$0xff]
    %v1025 = vld [vmem:[#allocation10 + $0x3a0] sm:$0xff]
    %v1026 = vld [vmem:[#allocation10 + $0x3a8] sm:$0xff]
    %v1027 = vld [vmem:[#allocation10 + $0x3b0] sm:$0xff]
    %v1028 = vld [vmem:[#allocation10 + $0x3b8] sm:$0xff]
    %v1029 = vld [vmem:[#allocation10 + $0x3c0] sm:$0xff]
    %v1030 = vld [vmem:[#allocation10 + $0x3c8] sm:$0xff]
    %v1031 = vld [vmem:[#allocation10 + $0x3d0] sm:$0xff]
    %v1032 = vld [vmem:[#allocation10 + $0x3d8] sm:$0xff]
    %v1033 = vld [vmem:[#allocation10 + $0x3e0] sm:$0xff]
    %v1034 = vld [vmem:[#allocation10 + $0x3e8] sm:$0xff]
    %v1035 = vld [vmem:[#allocation10 + $0x3f0] sm:$0xff]
    %v1036 = vld [vmem:[#allocation10 + $0x3f8] sm:$0xff]
    %v1037 = vld [vmem:[#allocation10 + $0x400] sm:$0xff]
    %v1038 = vld [vmem:[#allocation10 + $0x408] sm:$0xff]
    %v1039 = vld [vmem:[#allocation10 + $0x410] sm:$0xff]
    %v1040 = vld [vmem:[#allocation10 + $0x418] sm:$0xff]
    %v1041 = vld [vmem:[#allocation10 + $0x420] sm:$0xff]
    %v1042 = vld [vmem:[#allocation10 + $0x428] sm:$0xff]
    %v1043 = vld [vmem:[#allocation10 + $0x430] sm:$0xff]
    %v1044 = vld [vmem:[#allocation10 + $0x438] sm:$0xff]
    %v1045 = vld [vmem:[#allocation10 + $0x440] sm:$0xff]
    %v1046 = vld [vmem:[#allocation10 + $0x448] sm:$0xff]
    %v1047 = vld [vmem:[#allocation10 + $0x450] sm:$0xff]
    %v1048 = vld [vmem:[#allocation10 + $0x458] sm:$0xff]
    %v1049 = vld [vmem:[#allocation10 + $0x460] sm:$0xff]
    %v1050 = vld [vmem:[#allocation10 + $0x468] sm:$0xff]
    %v1051 = vld [vmem:[#allocation10 + $0x470] sm:$0xff]
    %v1052 = vld [vmem:[#allocation10 + $0x478] sm:$0xff]
    %v1053 = vld [vmem:[#allocation10 + $0x480] sm:$0xff]
    %v1054 = vld [vmem:[#allocation10 + $0x488] sm:$0xff]
    %v1055 = vld [vmem:[#allocation10 + $0x490] sm:$0xff]
    %v1056 = vld [vmem:[#allocation10 + $0x498] sm:$0xff]
    %v1057 = vld [vmem:[#allocation10 + $0x4a0] sm:$0xff]
    %v1058 = vld [vmem:[#allocation10 + $0x4a8] sm:$0xff]
    %v1059 = vld [vmem:[#allocation10 + $0x4b0] sm:$0xff]
    %v1060 = vld [vmem:[#allocation10 + $0x4b8] sm:$0xff]
    %v1061 = vld [vmem:[#allocation10 + $0x4c0] sm:$0xff]
    %v1062 = vld [vmem:[#allocation10 + $0x4c8] sm:$0xff]
    %v1063 = vld [vmem:[#allocation10 + $0x4d0] sm:$0xff]
    %v1064 = vld [vmem:[#allocation10 + $0x4d8] sm:$0xff]
    %v1065 = vld [vmem:[#allocation10 + $0x4e0] sm:$0xff]
    %v1066 = vld [vmem:[#allocation10 + $0x4e8] sm:$0xff]
    %v1067 = vld [vmem:[#allocation10 + $0x4f0] sm:$0xff]
    %v1068 = vld [vmem:[#allocation10 + $0x4f8] sm:$0xff]
    %v1069 = vld [vmem:[#allocation10 + $0x500] sm:$0xff]
    %v1070 = vld [vmem:[#allocation10 + $0x508] sm:$0xff]
    %v1071 = vld [vmem:[#allocation10 + $0x510] sm:$0xff]
    %v1072 = vld [vmem:[#allocation10 + $0x518] sm:$0xff]
    %v1073 = vld [vmem:[#allocation10 + $0x520] sm:$0xff]
    %v1074 = vld [vmem:[#allocation10 + $0x528] sm:$0xff]
    %v1075 = vld [vmem:[#allocation10 + $0x530] sm:$0xff]
    %v1076 = vld [vmem:[#allocation10 + $0x538] sm:$0xff]
    %v1077 = vld [vmem:[#allocation10 + $0x540] sm:$0xff]
    %v1078 = vld [vmem:[#allocation10 + $0x548] sm:$0xff]
    %v1079 = vld [vmem:[#allocation10 + $0x550] sm:$0xff]
    %v1080 = vld [vmem:[#allocation10 + $0x558] sm:$0xff]
    %v1081 = vld [vmem:[#allocation10 + $0x560] sm:$0xff]
    %v1082 = vld [vmem:[#allocation10 + $0x568] sm:$0xff]
    %v1083 = vld [vmem:[#allocation10 + $0x570] sm:$0xff]
    %v1084 = vld [vmem:[#allocation10 + $0x578] sm:$0xff]
    %v1085 = vld [vmem:[#allocation10 + $0x580] sm:$0xff]
    %v1086 = vld [vmem:[#allocation10 + $0x588] sm:$0xff]
    %v1087 = vld [vmem:[#allocation10 + $0x590] sm:$0xff]
    %v1088 = vld [vmem:[#allocation10 + $0x598] sm:$0xff]
    %v1089 = vld [vmem:[#allocation10 + $0x5a0] sm:$0xff]
    %v1090 = vld [vmem:[#allocation10 + $0x5a8] sm:$0xff]
    %v1091 = vld [vmem:[#allocation10 + $0x5b0] sm:$0xff]
    %v1092 = vld [vmem:[#allocation10 + $0x5b8] sm:$0xff]
    %v1093 = vld [vmem:[#allocation10 + $0x5c0] sm:$0xff]
    %v1094 = vld [vmem:[#allocation10 + $0x5c8] sm:$0xff]
    %v1095 = vld [vmem:[#allocation10 + $0x5d0] sm:$0xff]
    %v1096 = vld [vmem:[#allocation10 + $0x5d8] sm:$0xff]
    %v1097 = vld [vmem:[#allocation10 + $0x5e0] sm:$0xff]
    %v1098 = vld [vmem:[#allocation10 + $0x5e8] sm:$0xff]
    %v1099 = vld [vmem:[#allocation10 + $0x5f0] sm:$0xff]
    %v1100 = vld [vmem:[#allocation10 + $0x5f8] sm:$0xff]
    %v1101 = vld [vmem:[#allocation10 + $0x600] sm:$0xff]
    %v1102 = vld [vmem:[#allocation10 + $0x608] sm:$0xff]
    %v1103 = vld [vmem:[#allocation10 + $0x610] sm:$0xff]
    %v1104 = vld [vmem:[#allocation10 + $0x618] sm:$0xff]
    %v1105 = vld [vmem:[#allocation10 + $0x620] sm:$0xff]
    %v1106 = vld [vmem:[#allocation10 + $0x628] sm:$0xff]
    %v1107 = vld [vmem:[#allocation10 + $0x630] sm:$0xff]
    %v1108 = vld [vmem:[#allocation10 + $0x638] sm:$0xff]
    %v1109 = vld [vmem:[#allocation10 + $0x640] sm:$0xff]
    %v1110 = vld [vmem:[#allocation10 + $0x648] sm:$0xff]
    %v1111 = vld [vmem:[#allocation10 + $0x650] sm:$0xff]
    %v1112 = vld [vmem:[#allocation10 + $0x658] sm:$0xff]
    %v1113 = vld [vmem:[#allocation10 + $0x660] sm:$0xff]
    %v1114 = vld [vmem:[#allocation10 + $0x668] sm:$0xff]
    %v1115 = vld [vmem:[#allocation10 + $0x670] sm:$0xff]
    %v1116 = vld [vmem:[#allocation10 + $0x678] sm:$0xff]
    %v1117 = vld [vmem:[#allocation10 + $0x680] sm:$0xff]
    %v1118 = vld [vmem:[#allocation10 + $0x688] sm:$0xff]
    %v1119 = vld [vmem:[#allocation10 + $0x690] sm:$0xff]
    %v1120 = vld [vmem:[#allocation10 + $0x698] sm:$0xff]
    %v1121 = vld [vmem:[#allocation10 + $0x6a0] sm:$0xff]
    %v1122 = vld [vmem:[#allocation10 + $0x6a8] sm:$0xff]
    %v1123 = vld [vmem:[#allocation10 + $0x6b0] sm:$0xff]
    %v1124 = vld [vmem:[#allocation10 + $0x6b8] sm:$0xff]
    %v1125 = vld [vmem:[#allocation10 + $0x6c0] sm:$0xff]
    %v1126 = vld [vmem:[#allocation10 + $0x6c8] sm:$0xff]
    %v1127 = vld [vmem:[#allocation10 + $0x6d0] sm:$0xff]
    %v1128 = vld [vmem:[#allocation10 + $0x6d8] sm:$0xff]
    %v1129 = vld [vmem:[#allocation10 + $0x6e0] sm:$0xff]
    %v1130 = vld [vmem:[#allocation10 + $0x6e8] sm:$0xff]
    %v1131 = vld [vmem:[#allocation10 + $0x6f0] sm:$0xff]
    %v1132 = vld [vmem:[#allocation10 + $0x6f8] sm:$0xff]
    %v1133 = vld [vmem:[#allocation10 + $0x700] sm:$0xff]
    %v1134 = vld [vmem:[#allocation10 + $0x708] sm:$0xff]
    %v1135 = vld [vmem:[#allocation10 + $0x710] sm:$0xff]
    %v1136 = vld [vmem:[#allocation10 + $0x718] sm:$0xff]
    %v1137 = vld [vmem:[#allocation10 + $0x720] sm:$0xff]
    %v1138 = vld [vmem:[#allocation10 + $0x728] sm:$0xff]
    %v1139 = vld [vmem:[#allocation10 + $0x730] sm:$0xff]
    %v1140 = vld [vmem:[#allocation10 + $0x738] sm:$0xff]
    %v1141 = vld [vmem:[#allocation10 + $0x740] sm:$0xff]
    %v1142 = vld [vmem:[#allocation10 + $0x748] sm:$0xff]
    %v1143 = vld [vmem:[#allocation10 + $0x750] sm:$0xff]
    %v1144 = vld [vmem:[#allocation10 + $0x758] sm:$0xff]
    %v1145 = vld [vmem:[#allocation10 + $0x760] sm:$0xff]
    %v1146 = vld [vmem:[#allocation10 + $0x768] sm:$0xff]
    %v1147 = vld [vmem:[#allocation10 + $0x770] sm:$0xff]
    %v1148 = vld [vmem:[#allocation10 + $0x778] sm:$0xff]
    %v1149 = vld [vmem:[#allocation10 + $0x780] sm:$0xff]
    %v1150 = vld [vmem:[#allocation10 + $0x788] sm:$0xff]
    %v1151 = vld [vmem:[#allocation10 + $0x790] sm:$0xff]
    %v1152 = vld [vmem:[#allocation10 + $0x798] sm:$0xff]
    %v1153 = vld [vmem:[#allocation10 + $0x7a0] sm:$0xff]
    %v1154 = vld [vmem:[#allocation10 + $0x7a8] sm:$0xff]
    %v1155 = vld [vmem:[#allocation10 + $0x7b0] sm:$0xff]
    %v1156 = vld [vmem:[#allocation10 + $0x7b8] sm:$0xff]
    %v1157 = vld [vmem:[#allocation10 + $0x7c0] sm:$0xff]
    %v1158 = vld [vmem:[#allocation10 + $0x7c8] sm:$0xff]
    %v1159 = vld [vmem:[#allocation10 + $0x7d0] sm:$0xff]
    %v1160 = vld [vmem:[#allocation10 + $0x7d8] sm:$0xff]
    %v1161 = vld [vmem:[#allocation10 + $0x7e0] sm:$0xff]
    %v1162 = vld [vmem:[#allocation10 + $0x7e8] sm:$0xff]
    %v1163 = vld [vmem:[#allocation10 + $0x7f0] sm:$0xff]
    %v1164 = vld [vmem:[#allocation10 + $0x7f8] sm:$0xff]
    %v1165 = vld [vmem:[#allocation12] sm:$0xf]
    %v1167 = vlaneseq
    %v1168 = vshrl.u32 %v1167, 7
    %v1169 = vsub.s32 0, %v1168
    %v1170 = vrot.slane %v1165, %v1169
    %v1171 = vlaneseq
    %v1172 = vshrl.u32 %v1171, 7
    %v1173 = vsub.s32 1, %v1172
    %v1174 = vrot.slane %v1165, %v1173
    %v1175 = vlaneseq
    %v1176 = vshrl.u32 %v1175, 7
    %v1177 = vsub.s32 2, %v1176
    %v1178 = vrot.slane %v1165, %v1177
    %v1179 = vlaneseq
    %v1180 = vshrl.u32 %v1179, 7
    %v1181 = vsub.s32 3, %v1180
    %v1182 = vrot.slane %v1165, %v1181
    %1187 = vmatprep.subr.mxu0 %v910
    %1188 = vmatpush1.msra.mxu0 %v909
    %1189 = vmatprep.subr.mxu0 %v914
    %1190 = vmatpush1.msra.mxu0 %v913
    %1191 = vmatprep.subr.mxu0 %v918
    %1192 = vmatpush1.msra.mxu0 %v917
    %1193 = vmatprep.subr.mxu0 %v922
    %1194 = vmatpush1.msra.mxu0 %v921
    %1195 = vmatprep.subr.mxu0 %v926
    %1196 = vmatpush1.msra.mxu0 %v925
    %1197 = vmatprep.subr.mxu0 %v930
    %1198 = vmatpush1.msra.mxu0 %v929
    %1199 = vmatprep.subr.mxu0 %v934
    %1200 = vmatpush1.msra.mxu0 %v933
    %1201 = vmatprep.subr.mxu0 %v938
    %1202 = vmatpush1.msra.mxu0 %v937
    %1203 = vmatprep.subr.mxu0 %v942
    %1204 = vmatpush1.msra.mxu0 %v941
    %1205 = vmatprep.subr.mxu0 %v946
    %1206 = vmatpush1.msra.mxu0 %v945
    %1207 = vmatprep.subr.mxu0 %v950
    %1208 = vmatpush1.msra.mxu0 %v949
    %1209 = vmatprep.subr.mxu0 %v954
    %1210 = vmatpush1.msra.mxu0 %v953
    %1211 = vmatprep.subr.mxu0 %v958
    %1212 = vmatpush1.msra.mxu0 %v957
    %1213 = vmatprep.subr.mxu0 %v962
    %1214 = vmatpush1.msra.mxu0 %v961
    %1215 = vmatprep.subr.mxu0 %v966
    %1216 = vmatpush1.msra.mxu0 %v965
    %1217 = vmatprep.subr.mxu0 %v970
    %1218 = vmatpush1.msra.mxu0 %v969
    %1219 = vmatprep.subr.mxu0 %v974
    %1220 = vmatpush1.msra.mxu0 %v973
    %1221 = vmatprep.subr.mxu0 %v978
    %1222 = vmatpush1.msra.mxu0 %v977
    %1223 = vmatprep.subr.mxu0 %v982
    %1224 = vmatpush1.msra.mxu0 %v981
    %1225 = vmatprep.subr.mxu0 %v986
    %1226 = vmatpush1.msra.mxu0 %v985
    %1227 = vmatprep.subr.mxu0 %v990
    %1228 = vmatpush1.msra.mxu0 %v989
    %1229 = vmatprep.subr.mxu0 %v994
    %1230 = vmatpush1.msra.mxu0 %v993
    %1231 = vmatprep.subr.mxu0 %v998
    %1232 = vmatpush1.msra.mxu0 %v997
    %1233 = vmatprep.subr.mxu0 %v1002
    %1234 = vmatpush1.msra.mxu0 %v1001
    %1235 = vmatprep.subr.mxu0 %v1006
    %1236 = vmatpush1.msra.mxu0 %v1005
    %1237 = vmatprep.subr.mxu0 %v1010
    %1238 = vmatpush1.msra.mxu0 %v1009
    %1239 = vmatprep.subr.mxu0 %v1014
    %1240 = vmatpush1.msra.mxu0 %v1013
    %1241 = vmatprep.subr.mxu0 %v1018
    %1242 = vmatpush1.msra.mxu0 %v1017
    %1243 = vmatprep.subr.mxu0 %v1022
    %1244 = vmatpush1.msra.mxu0 %v1021
    %1245 = vmatprep.subr.mxu0 %v1026
    %1246 = vmatpush1.msra.mxu0 %v1025
    %1247 = vmatprep.subr.mxu0 %v1030
    %1248 = vmatpush1.msra.mxu0 %v1029
    %1249 = vmatprep.subr.mxu0 %v1034
    %1250 = vmatpush1.msra.mxu0 %v1033
    %1251 = vmatprep.mubr.f32.mxu0 %v906
    %1252 = vmatmul.mubr.f32.gmra.mrb[0].mxu0 %v905
    %v1253 = vpop.f32.mrb[0].mxu0
    %v1254 = vadd.f32 %v1170, %v1253
    %v1255 = vpop.f32.mrb[0].mxu0
    %v1256 = vadd.f32 %v1174, %v1255
    %1257 = vdwg.mxu0
    %1258 = vmatprep.subr.mxu0 %v1038
    %1259 = vmatpush1.msra.mxu0 %v1037
    %1260 = vmatprep.subr.mxu0 %v1042
    %1261 = vmatpush1.msra.mxu0 %v1041
    %1262 = vmatprep.subr.mxu0 %v1046
    %1263 = vmatpush1.msra.mxu0 %v1045
    %1264 = vmatprep.subr.mxu0 %v1050
    %1265 = vmatpush1.msra.mxu0 %v1049
    %1266 = vmatprep.subr.mxu0 %v1054
    %1267 = vmatpush1.msra.mxu0 %v1053
    %1268 = vmatprep.subr.mxu0 %v1058
    %1269 = vmatpush1.msra.mxu0 %v1057
    %1270 = vmatprep.subr.mxu0 %v1062
    %1271 = vmatpush1.msra.mxu0 %v1061
    %1272 = vmatprep.subr.mxu0 %v1066
    %1273 = vmatpush1.msra.mxu0 %v1065
    %1274 = vmatprep.subr.mxu0 %v1070
    %1275 = vmatpush1.msra.mxu0 %v1069
    %1276 = vmatprep.subr.mxu0 %v1074
    %1277 = vmatpush1.msra.mxu0 %v1073
    %1278 = vmatprep.subr.mxu0 %v1078
    %1279 = vmatpush1.msra.mxu0 %v1077
    %1280 = vmatprep.subr.mxu0 %v1082
    %1281 = vmatpush1.msra.mxu0 %v1081
    %1282 = vmatprep.subr.mxu0 %v1086
    %1283 = vmatpush1.msra.mxu0 %v1085
    %1284 = vmatprep.subr.mxu0 %v1090
    %1285 = vmatpush1.msra.mxu0 %v1089
    %1286 = vmatprep.subr.mxu0 %v1094
    %1287 = vmatpush1.msra.mxu0 %v1093
    %1288 = vmatprep.subr.mxu0 %v1098
    %1289 = vmatpush1.msra.mxu0 %v1097
    %1290 = vmatprep.subr.mxu0 %v1102
    %1291 = vmatpush1.msra.mxu0 %v1101
    %1292 = vmatprep.subr.mxu0 %v1106
    %1293 = vmatpush1.msra.mxu0 %v1105
    %1294 = vmatprep.subr.mxu0 %v1110
    %1295 = vmatpush1.msra.mxu0 %v1109
    %1296 = vmatprep.subr.mxu0 %v1114
    %1297 = vmatpush1.msra.mxu0 %v1113
    %1298 = vmatprep.subr.mxu0 %v1118
    %1299 = vmatpush1.msra.mxu0 %v1117
    %1300 = vmatprep.subr.mxu0 %v1122
    %1301 = vmatpush1.msra.mxu0 %v1121
    %1302 = vmatprep.subr.mxu0 %v1126
    %1303 = vmatpush1.msra.mxu0 %v1125
    %1304 = vmatprep.subr.mxu0 %v1130
    %1305 = vmatpush1.msra.mxu0 %v1129
    %1306 = vmatprep.subr.mxu0 %v1134
    %1307 = vmatpush1.msra.mxu0 %v1133
    %1308 = vmatprep.subr.mxu0 %v1138
    %1309 = vmatpush1.msra.mxu0 %v1137
    %1310 = vmatprep.subr.mxu0 %v1142
    %1311 = vmatpush1.msra.mxu0 %v1141
    %1312 = vmatprep.subr.mxu0 %v1146
    %1313 = vmatpush1.msra.mxu0 %v1145
    %1314 = vmatprep.subr.mxu0 %v1150
    %1315 = vmatpush1.msra.mxu0 %v1149
    %1316 = vmatprep.subr.mxu0 %v1154
    %1317 = vmatpush1.msra.mxu0 %v1153
    %1318 = vmatprep.subr.mxu0 %v1158
    %1319 = vmatpush1.msra.mxu0 %v1157
    %1320 = vmatprep.subr.mxu0 %v1162
    %1321 = vmatpush1.msra.mxu0 %v1161
    %1322 = vmatprep.mubr.f32.mxu0 %v908
    %1323 = vmatmul.mubr.f32.gmra.mrb[0].mxu0 %v907
    %v1324 = vpop.f32.mrb[0].mxu0
    %v1325 = vadd.f32 %v1254, %v1324
    %v1326 = vpop.f32.mrb[0].mxu0
    %v1327 = vadd.f32 %v1256, %v1326
    %1328 = vdwg.mxu0
    %1329 = vmatprep.subr.mxu0 %v912
    %1330 = vmatpush1.msra.mxu0 %v911
    %1331 = vmatprep.subr.mxu0 %v916
    %1332 = vmatpush1.msra.mxu0 %v915
    %1333 = vmatprep.subr.mxu0 %v920
    %1334 = vmatpush1.msra.mxu0 %v919
    %1335 = vmatprep.subr.mxu0 %v924
    %1336 = vmatpush1.msra.mxu0 %v923
    %1337 = vmatprep.subr.mxu0 %v928
    %1338 = vmatpush1.msra.mxu0 %v927
    %1339 = vmatprep.subr.mxu0 %v932
    %1340 = vmatpush1.msra.mxu0 %v931
    %1341 = vmatprep.subr.mxu0 %v936
    %1342 = vmatpush1.msra.mxu0 %v935
    %1343 = vmatprep.subr.mxu0 %v940
    %1344 = vmatpush1.msra.mxu0 %v939
    %1345 = vmatprep.subr.mxu0 %v944
    %1346 = vmatpush1.msra.mxu0 %v943
    %1347 = vmatprep.subr.mxu0 %v948
    %1348 = vmatpush1.msra.mxu0 %v947
    %1349 = vmatprep.subr.mxu0 %v952
    %1350 = vmatpush1.msra.mxu0 %v951
    %1351 = vmatprep.subr.mxu0 %v956
    %1352 = vmatpush1.msra.mxu0 %v955
    %1353 = vmatprep.subr.mxu0 %v960
    %1354 = vmatpush1.msra.mxu0 %v959
    %1355 = vmatprep.subr.mxu0 %v964
    %1356 = vmatpush1.msra.mxu0 %v963
    %1357 = vmatprep.subr.mxu0 %v968
    %1358 = vmatpush1.msra.mxu0 %v967
    %1359 = vmatprep.subr.mxu0 %v972
    %1360 = vmatpush1.msra.mxu0 %v971
    %1361 = vmatprep.subr.mxu0 %v976
    %1362 = vmatpush1.msra.mxu0 %v975
    %1363 = vmatprep.subr.mxu0 %v980
    %1364 = vmatpush1.msra.mxu0 %v979
    %1365 = vmatprep.subr.mxu0 %v984
    %1366 = vmatpush1.msra.mxu0 %v983
    %1367 = vmatprep.subr.mxu0 %v988
    %1368 = vmatpush1.msra.mxu0 %v987
    %1369 = vmatprep.subr.mxu0 %v992
    %1370 = vmatpush1.msra.mxu0 %v991
    %1371 = vmatprep.subr.mxu0 %v996
    %1372 = vmatpush1.msra.mxu0 %v995
    %1373 = vmatprep.subr.mxu0 %v1000
    %1374 = vmatpush1.msra.mxu0 %v999
    %1375 = vmatprep.subr.mxu0 %v1004
    %1376 = vmatpush1.msra.mxu0 %v1003
    %1377 = vmatprep.subr.mxu0 %v1008
    %1378 = vmatpush1.msra.mxu0 %v1007
    %1379 = vmatprep.subr.mxu0 %v1012
    %1380 = vmatpush1.msra.mxu0 %v1011
    %1381 = vmatprep.subr.mxu0 %v1016
    %1382 = vmatpush1.msra.mxu0 %v1015
    %1383 = vmatprep.subr.mxu0 %v1020
    %1384 = vmatpush1.msra.mxu0 %v1019
    %1385 = vmatprep.subr.mxu0 %v1024
    %1386 = vmatpush1.msra.mxu0 %v1023
    %1387 = vmatprep.subr.mxu0 %v1028
    %1388 = vmatpush1.msra.mxu0 %v1027
    %1389 = vmatprep.subr.mxu0 %v1032
    %1390 = vmatpush1.msra.mxu0 %v1031
    %1391 = vmatprep.subr.mxu0 %v1036
    %1392 = vmatpush1.msra.mxu0 %v1035
    %1393 = vmatprep.mubr.f32.mxu0 %v906
    %1394 = vmatmul.mubr.f32.gmra.mrb[0].mxu0 %v905
    %v1395 = vpop.f32.mrb[0].mxu0
    %v1396 = vadd.f32 %v1178, %v1395
    %v1397 = vpop.f32.mrb[0].mxu0
    %v1398 = vadd.f32 %v1182, %v1397
    %1399 = vdwg.mxu0
    %1400 = vmatprep.subr.mxu0 %v1040
    %1401 = vmatpush1.msra.mxu0 %v1039
    %1402 = vmatprep.subr.mxu0 %v1044
    %1403 = vmatpush1.msra.mxu0 %v1043
    %1404 = vmatprep.subr.mxu0 %v1048
    %1405 = vmatpush1.msra.mxu0 %v1047
    %1406 = vmatprep.subr.mxu0 %v1052
    %1407 = vmatpush1.msra.mxu0 %v1051
    %1408 = vmatprep.subr.mxu0 %v1056
    %1409 = vmatpush1.msra.mxu0 %v1055
    %1410 = vmatprep.subr.mxu0 %v1060
    %1411 = vmatpush1.msra.mxu0 %v1059
    %1412 = vmatprep.subr.mxu0 %v1064
    %1413 = vmatpush1.msra.mxu0 %v1063
    %1414 = vmatprep.subr.mxu0 %v1068
    %1415 = vmatpush1.msra.mxu0 %v1067
    %1416 = vmatprep.subr.mxu0 %v1072
    %1417 = vmatpush1.msra.mxu0 %v1071
    %1418 = vmatprep.subr.mxu0 %v1076
    %1419 = vmatpush1.msra.mxu0 %v1075
    %1420 = vmatprep.subr.mxu0 %v1080
    %1421 = vmatpush1.msra.mxu0 %v1079
    %1422 = vmatprep.subr.mxu0 %v1084
    %1423 = vmatpush1.msra.mxu0 %v1083
    %1424 = vmatprep.subr.mxu0 %v1088
    %1425 = vmatpush1.msra.mxu0 %v1087
    %1426 = vmatprep.subr.mxu0 %v1092
    %1427 = vmatpush1.msra.mxu0 %v1091
    %1428 = vmatprep.subr.mxu0 %v1096
    %1429 = vmatpush1.msra.mxu0 %v1095
    %1430 = vmatprep.subr.mxu0 %v1100
    %1431 = vmatpush1.msra.mxu0 %v1099
    %1432 = vmatprep.subr.mxu0 %v1104
    %1433 = vmatpush1.msra.mxu0 %v1103
    %1434 = vmatprep.subr.mxu0 %v1108
    %1435 = vmatpush1.msra.mxu0 %v1107
    %1436 = vmatprep.subr.mxu0 %v1112
    %1437 = vmatpush1.msra.mxu0 %v1111
    %1438 = vmatprep.subr.mxu0 %v1116
    %1439 = vmatpush1.msra.mxu0 %v1115
    %1440 = vmatprep.subr.mxu0 %v1120
    %1441 = vmatpush1.msra.mxu0 %v1119
    %1442 = vmatprep.subr.mxu0 %v1124
    %1443 = vmatpush1.msra.mxu0 %v1123
    %1444 = vmatprep.subr.mxu0 %v1128
    %1445 = vmatpush1.msra.mxu0 %v1127
    %1446 = vmatprep.subr.mxu0 %v1132
    %1447 = vmatpush1.msra.mxu0 %v1131
    %1448 = vmatprep.subr.mxu0 %v1136
    %1449 = vmatpush1.msra.mxu0 %v1135
    %1450 = vmatprep.subr.mxu0 %v1140
    %1451 = vmatpush1.msra.mxu0 %v1139
    %1452 = vmatprep.subr.mxu0 %v1144
    %1453 = vmatpush1.msra.mxu0 %v1143
    %1454 = vmatprep.subr.mxu0 %v1148
    %1455 = vmatpush1.msra.mxu0 %v1147
    %1456 = vmatprep.subr.mxu0 %v1152
    %1457 = vmatpush1.msra.mxu0 %v1151
    %1458 = vmatprep.subr.mxu0 %v1156
    %1459 = vmatpush1.msra.mxu0 %v1155
    %1460 = vmatprep.subr.mxu0 %v1160
    %1461 = vmatpush1.msra.mxu0 %v1159
    %1462 = vmatprep.subr.mxu0 %v1164
    %1463 = vmatpush1.msra.mxu0 %v1163
    %1464 = vmatprep.mubr.f32.mxu0 %v908
    %1465 = vmatmul.mubr.f32.gmra.mrb[0].mxu0 %v907
    %v1466 = vpop.f32.mrb[0].mxu0
    %v1467 = vadd.f32 %v1396, %v1466
    %v1468 = vpop.f32.mrb[0].mxu0
    %v1469 = vadd.f32 %v1398, %v1468
    %1470 = vdwg.mxu0
    %vm1471 = vcmp.ge.f32.partialorder %v1325, 0.0
    %vm1472 = vcmp.ge.f32.partialorder %v1327, 0.0
    %vm1473 = vcmp.ge.f32.partialorder %v1467, 0.0
    %vm1474 = vcmp.ge.f32.partialorder %v1469, 0.0
    %v1475 = vmul.f32 %v1325, 0.2
    %v1476 = vmul.f32 %v1327, 0.2
    %v1477 = vmul.f32 %v1467, 0.2
    %v1478 = vmul.f32 %v1469, 0.2
    %v1479 = vsel %vm1471, %v1325, %v1475
    %v1480 = vsel %vm1472, %v1327, %v1476
    %v1481 = vsel %vm1473, %v1467, %v1477
    %v1482 = vsel %vm1474, %v1469, %v1478
    %v1483 = vmul.f32 %v1479, 1.4142135
    %v1484 = vmul.f32 %v1480, 1.4142135
    %v1485 = vmul.f32 %v1481, 1.4142135
    %v1486 = vmul.f32 %v1482, 1.4142135
    %v1487 = vld [vmem:[#allocation13] sm:$0xff]
    %v1488 = vld [vmem:[#allocation13 + $0x8] sm:$0xff]
    %v1489 = vld [vmem:[#allocation13 + $0x10] sm:$0xff]
    %v1490 = vld [vmem:[#allocation13 + $0x18] sm:$0xff]
    %v1491 = vld [vmem:[#allocation13 + $0x20] sm:$0xff]
    %v1492 = vld [vmem:[#allocation13 + $0x28] sm:$0xff]
    %v1493 = vld [vmem:[#allocation13 + $0x30] sm:$0xff]
    %v1494 = vld [vmem:[#allocation13 + $0x38] sm:$0xff]
    %v1495 = vld [vmem:[#allocation13 + $0x40] sm:$0xff]
    %v1496 = vld [vmem:[#allocation13 + $0x48] sm:$0xff]
    %v1497 = vld [vmem:[#allocation13 + $0x50] sm:$0xff]
    %v1498 = vld [vmem:[#allocation13 + $0x58] sm:$0xff]
    %v1499 = vld [vmem:[#allocation13 + $0x60] sm:$0xff]
    %v1500 = vld [vmem:[#allocation13 + $0x68] sm:$0xff]
    %v1501 = vld [vmem:[#allocation13 + $0x70] sm:$0xff]
    %v1502 = vld [vmem:[#allocation13 + $0x78] sm:$0xff]
    %v1503 = vld [vmem:[#allocation13 + $0x80] sm:$0xff]
    %v1504 = vld [vmem:[#allocation13 + $0x88] sm:$0xff]
    %v1505 = vld [vmem:[#allocation13 + $0x90] sm:$0xff]
    %v1506 = vld [vmem:[#allocation13 + $0x98] sm:$0xff]
    %v1507 = vld [vmem:[#allocation13 + $0xa0] sm:$0xff]
    %v1508 = vld [vmem:[#allocation13 + $0xa8] sm:$0xff]
    %v1509 = vld [vmem:[#allocation13 + $0xb0] sm:$0xff]
    %v1510 = vld [vmem:[#allocation13 + $0xb8] sm:$0xff]
    %v1511 = vld [vmem:[#allocation13 + $0xc0] sm:$0xff]
    %v1512 = vld [vmem:[#allocation13 + $0xc8] sm:$0xff]
    %v1513 = vld [vmem:[#allocation13 + $0xd0] sm:$0xff]
    %v1514 = vld [vmem:[#allocation13 + $0xd8] sm:$0xff]
    %v1515 = vld [vmem:[#allocation13 + $0xe0] sm:$0xff]
    %v1516 = vld [vmem:[#allocation13 + $0xe8] sm:$0xff]
    %v1517 = vld [vmem:[#allocation13 + $0xf0] sm:$0xff]
    %v1518 = vld [vmem:[#allocation13 + $0xf8] sm:$0xff]
    %v1519 = vld [vmem:[#allocation13 + $0x100] sm:$0xff]
    %v1520 = vld [vmem:[#allocation13 + $0x108] sm:$0xff]
    %v1521 = vld [vmem:[#allocation13 + $0x110] sm:$0xff]
    %v1522 = vld [vmem:[#allocation13 + $0x118] sm:$0xff]
    %v1523 = vld [vmem:[#allocation13 + $0x120] sm:$0xff]
    %v1524 = vld [vmem:[#allocation13 + $0x128] sm:$0xff]
    %v1525 = vld [vmem:[#allocation13 + $0x130] sm:$0xff]
    %v1526 = vld [vmem:[#allocation13 + $0x138] sm:$0xff]
    %v1527 = vld [vmem:[#allocation13 + $0x140] sm:$0xff]
    %v1528 = vld [vmem:[#allocation13 + $0x148] sm:$0xff]
    %v1529 = vld [vmem:[#allocation13 + $0x150] sm:$0xff]
    %v1530 = vld [vmem:[#allocation13 + $0x158] sm:$0xff]
    %v1531 = vld [vmem:[#allocation13 + $0x160] sm:$0xff]
    %v1532 = vld [vmem:[#allocation13 + $0x168] sm:$0xff]
    %v1533 = vld [vmem:[#allocation13 + $0x170] sm:$0xff]
    %v1534 = vld [vmem:[#allocation13 + $0x178] sm:$0xff]
    %v1535 = vld [vmem:[#allocation13 + $0x180] sm:$0xff]
    %v1536 = vld [vmem:[#allocation13 + $0x188] sm:$0xff]
    %v1537 = vld [vmem:[#allocation13 + $0x190] sm:$0xff]
    %v1538 = vld [vmem:[#allocation13 + $0x198] sm:$0xff]
    %v1539 = vld [vmem:[#allocation13 + $0x1a0] sm:$0xff]
    %v1540 = vld [vmem:[#allocation13 + $0x1a8] sm:$0xff]
    %v1541 = vld [vmem:[#allocation13 + $0x1b0] sm:$0xff]
    %v1542 = vld [vmem:[#allocation13 + $0x1b8] sm:$0xff]
    %v1543 = vld [vmem:[#allocation13 + $0x1c0] sm:$0xff]
    %v1544 = vld [vmem:[#allocation13 + $0x1c8] sm:$0xff]
    %v1545 = vld [vmem:[#allocation13 + $0x1d0] sm:$0xff]
    %v1546 = vld [vmem:[#allocation13 + $0x1d8] sm:$0xff]
    %v1547 = vld [vmem:[#allocation13 + $0x1e0] sm:$0xff]
    %v1548 = vld [vmem:[#allocation13 + $0x1e8] sm:$0xff]
    %v1549 = vld [vmem:[#allocation13 + $0x1f0] sm:$0xff]
    %v1550 = vld [vmem:[#allocation13 + $0x1f8] sm:$0xff]
    %v1551 = vld [vmem:[#allocation13 + $0x200] sm:$0xff]
    %v1552 = vld [vmem:[#allocation13 + $0x208] sm:$0xff]
    %v1553 = vld [vmem:[#allocation13 + $0x210] sm:$0xff]
    %v1554 = vld [vmem:[#allocation13 + $0x218] sm:$0xff]
    %v1555 = vld [vmem:[#allocation13 + $0x220] sm:$0xff]
    %v1556 = vld [vmem:[#allocation13 + $0x228] sm:$0xff]
    %v1557 = vld [vmem:[#allocation13 + $0x230] sm:$0xff]
    %v1558 = vld [vmem:[#allocation13 + $0x238] sm:$0xff]
    %v1559 = vld [vmem:[#allocation13 + $0x240] sm:$0xff]
    %v1560 = vld [vmem:[#allocation13 + $0x248] sm:$0xff]
    %v1561 = vld [vmem:[#allocation13 + $0x250] sm:$0xff]
    %v1562 = vld [vmem:[#allocation13 + $0x258] sm:$0xff]
    %v1563 = vld [vmem:[#allocation13 + $0x260] sm:$0xff]
    %v1564 = vld [vmem:[#allocation13 + $0x268] sm:$0xff]
    %v1565 = vld [vmem:[#allocation13 + $0x270] sm:$0xff]
    %v1566 = vld [vmem:[#allocation13 + $0x278] sm:$0xff]
    %v1567 = vld [vmem:[#allocation13 + $0x280] sm:$0xff]
    %v1568 = vld [vmem:[#allocation13 + $0x288] sm:$0xff]
    %v1569 = vld [vmem:[#allocation13 + $0x290] sm:$0xff]
    %v1570 = vld [vmem:[#allocation13 + $0x298] sm:$0xff]
    %v1571 = vld [vmem:[#allocation13 + $0x2a0] sm:$0xff]
    %v1572 = vld [vmem:[#allocation13 + $0x2a8] sm:$0xff]
    %v1573 = vld [vmem:[#allocation13 + $0x2b0] sm:$0xff]
    %v1574 = vld [vmem:[#allocation13 + $0x2b8] sm:$0xff]
    %v1575 = vld [vmem:[#allocation13 + $0x2c0] sm:$0xff]
    %v1576 = vld [vmem:[#allocation13 + $0x2c8] sm:$0xff]
    %v1577 = vld [vmem:[#allocation13 + $0x2d0] sm:$0xff]
    %v1578 = vld [vmem:[#allocation13 + $0x2d8] sm:$0xff]
    %v1579 = vld [vmem:[#allocation13 + $0x2e0] sm:$0xff]
    %v1580 = vld [vmem:[#allocation13 + $0x2e8] sm:$0xff]
    %v1581 = vld [vmem:[#allocation13 + $0x2f0] sm:$0xff]
    %v1582 = vld [vmem:[#allocation13 + $0x2f8] sm:$0xff]
    %v1583 = vld [vmem:[#allocation13 + $0x300] sm:$0xff]
    %v1584 = vld [vmem:[#allocation13 + $0x308] sm:$0xff]
    %v1585 = vld [vmem:[#allocation13 + $0x310] sm:$0xff]
    %v1586 = vld [vmem:[#allocation13 + $0x318] sm:$0xff]
    %v1587 = vld [vmem:[#allocation13 + $0x320] sm:$0xff]
    %v1588 = vld [vmem:[#allocation13 + $0x328] sm:$0xff]
    %v1589 = vld [vmem:[#allocation13 + $0x330] sm:$0xff]
    %v1590 = vld [vmem:[#allocation13 + $0x338] sm:$0xff]
    %v1591 = vld [vmem:[#allocation13 + $0x340] sm:$0xff]
    %v1592 = vld [vmem:[#allocation13 + $0x348] sm:$0xff]
    %v1593 = vld [vmem:[#allocation13 + $0x350] sm:$0xff]
    %v1594 = vld [vmem:[#allocation13 + $0x358] sm:$0xff]
    %v1595 = vld [vmem:[#allocation13 + $0x360] sm:$0xff]
    %v1596 = vld [vmem:[#allocation13 + $0x368] sm:$0xff]
    %v1597 = vld [vmem:[#allocation13 + $0x370] sm:$0xff]
    %v1598 = vld [vmem:[#allocation13 + $0x378] sm:$0xff]
    %v1599 = vld [vmem:[#allocation13 + $0x380] sm:$0xff]
    %v1600 = vld [vmem:[#allocation13 + $0x388] sm:$0xff]
    %v1601 = vld [vmem:[#allocation13 + $0x390] sm:$0xff]
    %v1602 = vld [vmem:[#allocation13 + $0x398] sm:$0xff]
    %v1603 = vld [vmem:[#allocation13 + $0x3a0] sm:$0xff]
    %v1604 = vld [vmem:[#allocation13 + $0x3a8] sm:$0xff]
    %v1605 = vld [vmem:[#allocation13 + $0x3b0] sm:$0xff]
    %v1606 = vld [vmem:[#allocation13 + $0x3b8] sm:$0xff]
    %v1607 = vld [vmem:[#allocation13 + $0x3c0] sm:$0xff]
    %v1608 = vld [vmem:[#allocation13 + $0x3c8] sm:$0xff]
    %v1609 = vld [vmem:[#allocation13 + $0x3d0] sm:$0xff]
    %v1610 = vld [vmem:[#allocation13 + $0x3d8] sm:$0xff]
    %v1611 = vld [vmem:[#allocation13 + $0x3e0] sm:$0xff]
    %v1612 = vld [vmem:[#allocation13 + $0x3e8] sm:$0xff]
    %v1613 = vld [vmem:[#allocation13 + $0x3f0] sm:$0xff]
    %v1614 = vld [vmem:[#allocation13 + $0x3f8] sm:$0xff]
    %v1615 = vld [vmem:[#allocation13 + $0x400] sm:$0xff]
    %v1616 = vld [vmem:[#allocation13 + $0x408] sm:$0xff]
    %v1617 = vld [vmem:[#allocation13 + $0x410] sm:$0xff]
    %v1618 = vld [vmem:[#allocation13 + $0x418] sm:$0xff]
    %v1619 = vld [vmem:[#allocation13 + $0x420] sm:$0xff]
    %v1620 = vld [vmem:[#allocation13 + $0x428] sm:$0xff]
    %v1621 = vld [vmem:[#allocation13 + $0x430] sm:$0xff]
    %v1622 = vld [vmem:[#allocation13 + $0x438] sm:$0xff]
    %v1623 = vld [vmem:[#allocation13 + $0x440] sm:$0xff]
    %v1624 = vld [vmem:[#allocation13 + $0x448] sm:$0xff]
    %v1625 = vld [vmem:[#allocation13 + $0x450] sm:$0xff]
    %v1626 = vld [vmem:[#allocation13 + $0x458] sm:$0xff]
    %v1627 = vld [vmem:[#allocation13 + $0x460] sm:$0xff]
    %v1628 = vld [vmem:[#allocation13 + $0x468] sm:$0xff]
    %v1629 = vld [vmem:[#allocation13 + $0x470] sm:$0xff]
    %v1630 = vld [vmem:[#allocation13 + $0x478] sm:$0xff]
    %v1631 = vld [vmem:[#allocation13 + $0x480] sm:$0xff]
    %v1632 = vld [vmem:[#allocation13 + $0x488] sm:$0xff]
    %v1633 = vld [vmem:[#allocation13 + $0x490] sm:$0xff]
    %v1634 = vld [vmem:[#allocation13 + $0x498] sm:$0xff]
    %v1635 = vld [vmem:[#allocation13 + $0x4a0] sm:$0xff]
    %v1636 = vld [vmem:[#allocation13 + $0x4a8] sm:$0xff]
    %v1637 = vld [vmem:[#allocation13 + $0x4b0] sm:$0xff]
    %v1638 = vld [vmem:[#allocation13 + $0x4b8] sm:$0xff]
    %v1639 = vld [vmem:[#allocation13 + $0x4c0] sm:$0xff]
    %v1640 = vld [vmem:[#allocation13 + $0x4c8] sm:$0xff]
    %v1641 = vld [vmem:[#allocation13 + $0x4d0] sm:$0xff]
    %v1642 = vld [vmem:[#allocation13 + $0x4d8] sm:$0xff]
    %v1643 = vld [vmem:[#allocation13 + $0x4e0] sm:$0xff]
    %v1644 = vld [vmem:[#allocation13 + $0x4e8] sm:$0xff]
    %v1645 = vld [vmem:[#allocation13 + $0x4f0] sm:$0xff]
    %v1646 = vld [vmem:[#allocation13 + $0x4f8] sm:$0xff]
    %v1647 = vld [vmem:[#allocation13 + $0x500] sm:$0xff]
    %v1648 = vld [vmem:[#allocation13 + $0x508] sm:$0xff]
    %v1649 = vld [vmem:[#allocation13 + $0x510] sm:$0xff]
    %v1650 = vld [vmem:[#allocation13 + $0x518] sm:$0xff]
    %v1651 = vld [vmem:[#allocation13 + $0x520] sm:$0xff]
    %v1652 = vld [vmem:[#allocation13 + $0x528] sm:$0xff]
    %v1653 = vld [vmem:[#allocation13 + $0x530] sm:$0xff]
    %v1654 = vld [vmem:[#allocation13 + $0x538] sm:$0xff]
    %v1655 = vld [vmem:[#allocation13 + $0x540] sm:$0xff]
    %v1656 = vld [vmem:[#allocation13 + $0x548] sm:$0xff]
    %v1657 = vld [vmem:[#allocation13 + $0x550] sm:$0xff]
    %v1658 = vld [vmem:[#allocation13 + $0x558] sm:$0xff]
    %v1659 = vld [vmem:[#allocation13 + $0x560] sm:$0xff]
    %v1660 = vld [vmem:[#allocation13 + $0x568] sm:$0xff]
    %v1661 = vld [vmem:[#allocation13 + $0x570] sm:$0xff]
    %v1662 = vld [vmem:[#allocation13 + $0x578] sm:$0xff]
    %v1663 = vld [vmem:[#allocation13 + $0x580] sm:$0xff]
    %v1664 = vld [vmem:[#allocation13 + $0x588] sm:$0xff]
    %v1665 = vld [vmem:[#allocation13 + $0x590] sm:$0xff]
    %v1666 = vld [vmem:[#allocation13 + $0x598] sm:$0xff]
    %v1667 = vld [vmem:[#allocation13 + $0x5a0] sm:$0xff]
    %v1668 = vld [vmem:[#allocation13 + $0x5a8] sm:$0xff]
    %v1669 = vld [vmem:[#allocation13 + $0x5b0] sm:$0xff]
    %v1670 = vld [vmem:[#allocation13 + $0x5b8] sm:$0xff]
    %v1671 = vld [vmem:[#allocation13 + $0x5c0] sm:$0xff]
    %v1672 = vld [vmem:[#allocation13 + $0x5c8] sm:$0xff]
    %v1673 = vld [vmem:[#allocation13 + $0x5d0] sm:$0xff]
    %v1674 = vld [vmem:[#allocation13 + $0x5d8] sm:$0xff]
    %v1675 = vld [vmem:[#allocation13 + $0x5e0] sm:$0xff]
    %v1676 = vld [vmem:[#allocation13 + $0x5e8] sm:$0xff]
    %v1677 = vld [vmem:[#allocation13 + $0x5f0] sm:$0xff]
    %v1678 = vld [vmem:[#allocation13 + $0x5f8] sm:$0xff]
    %v1679 = vld [vmem:[#allocation13 + $0x600] sm:$0xff]
    %v1680 = vld [vmem:[#allocation13 + $0x608] sm:$0xff]
    %v1681 = vld [vmem:[#allocation13 + $0x610] sm:$0xff]
    %v1682 = vld [vmem:[#allocation13 + $0x618] sm:$0xff]
    %v1683 = vld [vmem:[#allocation13 + $0x620] sm:$0xff]
    %v1684 = vld [vmem:[#allocation13 + $0x628] sm:$0xff]
    %v1685 = vld [vmem:[#allocation13 + $0x630] sm:$0xff]
    %v1686 = vld [vmem:[#allocation13 + $0x638] sm:$0xff]
    %v1687 = vld [vmem:[#allocation13 + $0x640] sm:$0xff]
    %v1688 = vld [vmem:[#allocation13 + $0x648] sm:$0xff]
    %v1689 = vld [vmem:[#allocation13 + $0x650] sm:$0xff]
    %v1690 = vld [vmem:[#allocation13 + $0x658] sm:$0xff]
    %v1691 = vld [vmem:[#allocation13 + $0x660] sm:$0xff]
    %v1692 = vld [vmem:[#allocation13 + $0x668] sm:$0xff]
    %v1693 = vld [vmem:[#allocation13 + $0x670] sm:$0xff]
    %v1694 = vld [vmem:[#allocation13 + $0x678] sm:$0xff]
    %v1695 = vld [vmem:[#allocation13 + $0x680] sm:$0xff]
    %v1696 = vld [vmem:[#allocation13 + $0x688] sm:$0xff]
    %v1697 = vld [vmem:[#allocation13 + $0x690] sm:$0xff]
    %v1698 = vld [vmem:[#allocation13 + $0x698] sm:$0xff]
    %v1699 = vld [vmem:[#allocation13 + $0x6a0] sm:$0xff]
    %v1700 = vld [vmem:[#allocation13 + $0x6a8] sm:$0xff]
    %v1701 = vld [vmem:[#allocation13 + $0x6b0] sm:$0xff]
    %v1702 = vld [vmem:[#allocation13 + $0x6b8] sm:$0xff]
    %v1703 = vld [vmem:[#allocation13 + $0x6c0] sm:$0xff]
    %v1704 = vld [vmem:[#allocation13 + $0x6c8] sm:$0xff]
    %v1705 = vld [vmem:[#allocation13 + $0x6d0] sm:$0xff]
    %v1706 = vld [vmem:[#allocation13 + $0x6d8] sm:$0xff]
    %v1707 = vld [vmem:[#allocation13 + $0x6e0] sm:$0xff]
    %v1708 = vld [vmem:[#allocation13 + $0x6e8] sm:$0xff]
    %v1709 = vld [vmem:[#allocation13 + $0x6f0] sm:$0xff]
    %v1710 = vld [vmem:[#allocation13 + $0x6f8] sm:$0xff]
    %v1711 = vld [vmem:[#allocation13 + $0x700] sm:$0xff]
    %v1712 = vld [vmem:[#allocation13 + $0x708] sm:$0xff]
    %v1713 = vld [vmem:[#allocation13 + $0x710] sm:$0xff]
    %v1714 = vld [vmem:[#allocation13 + $0x718] sm:$0xff]
    %v1715 = vld [vmem:[#allocation13 + $0x720] sm:$0xff]
    %v1716 = vld [vmem:[#allocation13 + $0x728] sm:$0xff]
    %v1717 = vld [vmem:[#allocation13 + $0x730] sm:$0xff]
    %v1718 = vld [vmem:[#allocation13 + $0x738] sm:$0xff]
    %v1719 = vld [vmem:[#allocation13 + $0x740] sm:$0xff]
    %v1720 = vld [vmem:[#allocation13 + $0x748] sm:$0xff]
    %v1721 = vld [vmem:[#allocation13 + $0x750] sm:$0xff]
    %v1722 = vld [vmem:[#allocation13 + $0x758] sm:$0xff]
    %v1723 = vld [vmem:[#allocation13 + $0x760] sm:$0xff]
    %v1724 = vld [vmem:[#allocation13 + $0x768] sm:$0xff]
    %v1725 = vld [vmem:[#allocation13 + $0x770] sm:$0xff]
    %v1726 = vld [vmem:[#allocation13 + $0x778] sm:$0xff]
    %v1727 = vld [vmem:[#allocation13 + $0x780] sm:$0xff]
    %v1728 = vld [vmem:[#allocation13 + $0x788] sm:$0xff]
    %v1729 = vld [vmem:[#allocation13 + $0x790] sm:$0xff]
    %v1730 = vld [vmem:[#allocation13 + $0x798] sm:$0xff]
    %v1731 = vld [vmem:[#allocation13 + $0x7a0] sm:$0xff]
    %v1732 = vld [vmem:[#allocation13 + $0x7a8] sm:$0xff]
    %v1733 = vld [vmem:[#allocation13 + $0x7b0] sm:$0xff]
    %v1734 = vld [vmem:[#allocation13 + $0x7b8] sm:$0xff]
    %v1735 = vld [vmem:[#allocation13 + $0x7c0] sm:$0xff]
    %v1736 = vld [vmem:[#allocation13 + $0x7c8] sm:$0xff]
    %v1737 = vld [vmem:[#allocation13 + $0x7d0] sm:$0xff]
    %v1738 = vld [vmem:[#allocation13 + $0x7d8] sm:$0xff]
    %v1739 = vld [vmem:[#allocation13 + $0x7e0] sm:$0xff]
    %v1740 = vld [vmem:[#allocation13 + $0x7e8] sm:$0xff]
    %v1741 = vld [vmem:[#allocation13 + $0x7f0] sm:$0xff]
    %v1742 = vld [vmem:[#allocation13 + $0x7f8] sm:$0xff]
    %v1743 = vld [vmem:[#allocation15] sm:$0xf]
    %v1745 = vlaneseq
    %v1746 = vshrl.u32 %v1745, 7
    %v1747 = vsub.s32 0, %v1746
    %v1748 = vrot.slane %v1743, %v1747
    %v1749 = vlaneseq
    %v1750 = vshrl.u32 %v1749, 7
    %v1751 = vsub.s32 1, %v1750
    %v1752 = vrot.slane %v1743, %v1751
    %v1753 = vlaneseq
    %v1754 = vshrl.u32 %v1753, 7
    %v1755 = vsub.s32 2, %v1754
    %v1756 = vrot.slane %v1743, %v1755
    %v1757 = vlaneseq
    %v1758 = vshrl.u32 %v1757, 7
    %v1759 = vsub.s32 3, %v1758
    %v1760 = vrot.slane %v1743, %v1759
    %1765 = vmatprep.subr.mxu0 %v1488
    %1766 = vmatpush1.msra.mxu0 %v1487
    %1767 = vmatprep.subr.mxu0 %v1492
    %1768 = vmatpush1.msra.mxu0 %v1491
    %1769 = vmatprep.subr.mxu0 %v1496
    %1770 = vmatpush1.msra.mxu0 %v1495
    %1771 = vmatprep.subr.mxu0 %v1500
    %1772 = vmatpush1.msra.mxu0 %v1499
    %1773 = vmatprep.subr.mxu0 %v1504
    %1774 = vmatpush1.msra.mxu0 %v1503
    %1775 = vmatprep.subr.mxu0 %v1508
    %1776 = vmatpush1.msra.mxu0 %v1507
    %1777 = vmatprep.subr.mxu0 %v1512
    %1778 = vmatpush1.msra.mxu0 %v1511
    %1779 = vmatprep.subr.mxu0 %v1516
    %1780 = vmatpush1.msra.mxu0 %v1515
    %1781 = vmatprep.subr.mxu0 %v1520
    %1782 = vmatpush1.msra.mxu0 %v1519
    %1783 = vmatprep.subr.mxu0 %v1524
    %1784 = vmatpush1.msra.mxu0 %v1523
    %1785 = vmatprep.subr.mxu0 %v1528
    %1786 = vmatpush1.msra.mxu0 %v1527
    %1787 = vmatprep.subr.mxu0 %v1532
    %1788 = vmatpush1.msra.mxu0 %v1531
    %1789 = vmatprep.subr.mxu0 %v1536
    %1790 = vmatpush1.msra.mxu0 %v1535
    %1791 = vmatprep.subr.mxu0 %v1540
    %1792 = vmatpush1.msra.mxu0 %v1539
    %1793 = vmatprep.subr.mxu0 %v1544
    %1794 = vmatpush1.msra.mxu0 %v1543
    %1795 = vmatprep.subr.mxu0 %v1548
    %1796 = vmatpush1.msra.mxu0 %v1547
    %1797 = vmatprep.subr.mxu0 %v1552
    %1798 = vmatpush1.msra.mxu0 %v1551
    %1799 = vmatprep.subr.mxu0 %v1556
    %1800 = vmatpush1.msra.mxu0 %v1555
    %1801 = vmatprep.subr.mxu0 %v1560
    %1802 = vmatpush1.msra.mxu0 %v1559
    %1803 = vmatprep.subr.mxu0 %v1564
    %1804 = vmatpush1.msra.mxu0 %v1563
    %1805 = vmatprep.subr.mxu0 %v1568
    %1806 = vmatpush1.msra.mxu0 %v1567
    %1807 = vmatprep.subr.mxu0 %v1572
    %1808 = vmatpush1.msra.mxu0 %v1571
    %1809 = vmatprep.subr.mxu0 %v1576
    %1810 = vmatpush1.msra.mxu0 %v1575
    %1811 = vmatprep.subr.mxu0 %v1580
    %1812 = vmatpush1.msra.mxu0 %v1579
    %1813 = vmatprep.subr.mxu0 %v1584
    %1814 = vmatpush1.msra.mxu0 %v1583
    %1815 = vmatprep.subr.mxu0 %v1588
    %1816 = vmatpush1.msra.mxu0 %v1587
    %1817 = vmatprep.subr.mxu0 %v1592
    %1818 = vmatpush1.msra.mxu0 %v1591
    %1819 = vmatprep.subr.mxu0 %v1596
    %1820 = vmatpush1.msra.mxu0 %v1595
    %1821 = vmatprep.subr.mxu0 %v1600
    %1822 = vmatpush1.msra.mxu0 %v1599
    %1823 = vmatprep.subr.mxu0 %v1604
    %1824 = vmatpush1.msra.mxu0 %v1603
    %1825 = vmatprep.subr.mxu0 %v1608
    %1826 = vmatpush1.msra.mxu0 %v1607
    %1827 = vmatprep.subr.mxu0 %v1612
    %1828 = vmatpush1.msra.mxu0 %v1611
    %1829 = vmatprep.mubr.f32.mxu0 %v1484
    %1830 = vmatmul.mubr.f32.gmra.mrb[0].mxu0 %v1483
    %v1831 = vpop.f32.mrb[0].mxu0
    %v1832 = vadd.f32 %v1748, %v1831
    %v1833 = vpop.f32.mrb[0].mxu0
    %v1834 = vadd.f32 %v1752, %v1833
    %1835 = vdwg.mxu0
    %1836 = vmatprep.subr.mxu0 %v1616
    %1837 = vmatpush1.msra.mxu0 %v1615
    %1838 = vmatprep.subr.mxu0 %v1620
    %1839 = vmatpush1.msra.mxu0 %v1619
    %1840 = vmatprep.subr.mxu0 %v1624
    %1841 = vmatpush1.msra.mxu0 %v1623
    %1842 = vmatprep.subr.mxu0 %v1628
    %1843 = vmatpush1.msra.mxu0 %v1627
    %1844 = vmatprep.subr.mxu0 %v1632
    %1845 = vmatpush1.msra.mxu0 %v1631
    %1846 = vmatprep.subr.mxu0 %v1636
    %1847 = vmatpush1.msra.mxu0 %v1635
    %1848 = vmatprep.subr.mxu0 %v1640
    %1849 = vmatpush1.msra.mxu0 %v1639
    %1850 = vmatprep.subr.mxu0 %v1644
    %1851 = vmatpush1.msra.mxu0 %v1643
    %1852 = vmatprep.subr.mxu0 %v1648
    %1853 = vmatpush1.msra.mxu0 %v1647
    %1854 = vmatprep.subr.mxu0 %v1652
    %1855 = vmatpush1.msra.mxu0 %v1651
    %1856 = vmatprep.subr.mxu0 %v1656
    %1857 = vmatpush1.msra.mxu0 %v1655
    %1858 = vmatprep.subr.mxu0 %v1660
    %1859 = vmatpush1.msra.mxu0 %v1659
    %1860 = vmatprep.subr.mxu0 %v1664
    %1861 = vmatpush1.msra.mxu0 %v1663
    %1862 = vmatprep.subr.mxu0 %v1668
    %1863 = vmatpush1.msra.mxu0 %v1667
    %1864 = vmatprep.subr.mxu0 %v1672
    %1865 = vmatpush1.msra.mxu0 %v1671
    %1866 = vmatprep.subr.mxu0 %v1676
    %1867 = vmatpush1.msra.mxu0 %v1675
    %1868 = vmatprep.subr.mxu0 %v1680
    %1869 = vmatpush1.msra.mxu0 %v1679
    %1870 = vmatprep.subr.mxu0 %v1684
    %1871 = vmatpush1.msra.mxu0 %v1683
    %1872 = vmatprep.subr.mxu0 %v1688
    %1873 = vmatpush1.msra.mxu0 %v1687
    %1874 = vmatprep.subr.mxu0 %v1692
    %1875 = vmatpush1.msra.mxu0 %v1691
    %1876 = vmatprep.subr.mxu0 %v1696
    %1877 = vmatpush1.msra.mxu0 %v1695
    %1878 = vmatprep.subr.mxu0 %v1700
    %1879 = vmatpush1.msra.mxu0 %v1699
    %1880 = vmatprep.subr.mxu0 %v1704
    %1881 = vmatpush1.msra.mxu0 %v1703
    %1882 = vmatprep.subr.mxu0 %v1708
    %1883 = vmatpush1.msra.mxu0 %v1707
    %1884 = vmatprep.subr.mxu0 %v1712
    %1885 = vmatpush1.msra.mxu0 %v1711
    %1886 = vmatprep.subr.mxu0 %v1716
    %1887 = vmatpush1.msra.mxu0 %v1715
    %1888 = vmatprep.subr.mxu0 %v1720
    %1889 = vmatpush1.msra.mxu0 %v1719
    %1890 = vmatprep.subr.mxu0 %v1724
    %1891 = vmatpush1.msra.mxu0 %v1723
    %1892 = vmatprep.subr.mxu0 %v1728
    %1893 = vmatpush1.msra.mxu0 %v1727
    %1894 = vmatprep.subr.mxu0 %v1732
    %1895 = vmatpush1.msra.mxu0 %v1731
    %1896 = vmatprep.subr.mxu0 %v1736
    %1897 = vmatpush1.msra.mxu0 %v1735
    %1898 = vmatprep.subr.mxu0 %v1740
    %1899 = vmatpush1.msra.mxu0 %v1739
    %1900 = vmatprep.mubr.f32.mxu0 %v1486
    %1901 = vmatmul.mubr.f32.gmra.mrb[0].mxu0 %v1485
    %v1902 = vpop.f32.mrb[0].mxu0
    %v1903 = vadd.f32 %v1832, %v1902
    %v1904 = vpop.f32.mrb[0].mxu0
    %v1905 = vadd.f32 %v1834, %v1904
    %1906 = vdwg.mxu0
    %1907 = vmatprep.subr.mxu0 %v1490
    %1908 = vmatpush1.msra.mxu0 %v1489
    %1909 = vmatprep.subr.mxu0 %v1494
    %1910 = vmatpush1.msra.mxu0 %v1493
    %1911 = vmatprep.subr.mxu0 %v1498
    %1912 = vmatpush1.msra.mxu0 %v1497
    %1913 = vmatprep.subr.mxu0 %v1502
    %1914 = vmatpush1.msra.mxu0 %v1501
    %1915 = vmatprep.subr.mxu0 %v1506
    %1916 = vmatpush1.msra.mxu0 %v1505
    %1917 = vmatprep.subr.mxu0 %v1510
    %1918 = vmatpush1.msra.mxu0 %v1509
    %1919 = vmatprep.subr.mxu0 %v1514
    %1920 = vmatpush1.msra.mxu0 %v1513
    %1921 = vmatprep.subr.mxu0 %v1518
    %1922 = vmatpush1.msra.mxu0 %v1517
    %1923 = vmatprep.subr.mxu0 %v1522
    %1924 = vmatpush1.msra.mxu0 %v1521
    %1925 = vmatprep.subr.mxu0 %v1526
    %1926 = vmatpush1.msra.mxu0 %v1525
    %1927 = vmatprep.subr.mxu0 %v1530
    %1928 = vmatpush1.msra.mxu0 %v1529
    %1929 = vmatprep.subr.mxu0 %v1534
    %1930 = vmatpush1.msra.mxu0 %v1533
    %1931 = vmatprep.subr.mxu0 %v1538
    %1932 = vmatpush1.msra.mxu0 %v1537
    %1933 = vmatprep.subr.mxu0 %v1542
    %1934 = vmatpush1.msra.mxu0 %v1541
    %1935 = vmatprep.subr.mxu0 %v1546
    %1936 = vmatpush1.msra.mxu0 %v1545
    %1937 = vmatprep.subr.mxu0 %v1550
    %1938 = vmatpush1.msra.mxu0 %v1549
    %1939 = vmatprep.subr.mxu0 %v1554
    %1940 = vmatpush1.msra.mxu0 %v1553
    %1941 = vmatprep.subr.mxu0 %v1558
    %1942 = vmatpush1.msra.mxu0 %v1557
    %1943 = vmatprep.subr.mxu0 %v1562
    %1944 = vmatpush1.msra.mxu0 %v1561
    %1945 = vmatprep.subr.mxu0 %v1566
    %1946 = vmatpush1.msra.mxu0 %v1565
    %1947 = vmatprep.subr.mxu0 %v1570
    %1948 = vmatpush1.msra.mxu0 %v1569
    %1949 = vmatprep.subr.mxu0 %v1574
    %1950 = vmatpush1.msra.mxu0 %v1573
    %1951 = vmatprep.subr.mxu0 %v1578
    %1952 = vmatpush1.msra.mxu0 %v1577
    %1953 = vmatprep.subr.mxu0 %v1582
    %1954 = vmatpush1.msra.mxu0 %v1581
    %1955 = vmatprep.subr.mxu0 %v1586
    %1956 = vmatpush1.msra.mxu0 %v1585
    %1957 = vmatprep.subr.mxu0 %v1590
    %1958 = vmatpush1.msra.mxu0 %v1589
    %1959 = vmatprep.subr.mxu0 %v1594
    %1960 = vmatpush1.msra.mxu0 %v1593
    %1961 = vmatprep.subr.mxu0 %v1598
    %1962 = vmatpush1.msra.mxu0 %v1597
    %1963 = vmatprep.subr.mxu0 %v1602
    %1964 = vmatpush1.msra.mxu0 %v1601
    %1965 = vmatprep.subr.mxu0 %v1606
    %1966 = vmatpush1.msra.mxu0 %v1605
    %1967 = vmatprep.subr.mxu0 %v1610
    %1968 = vmatpush1.msra.mxu0 %v1609
    %1969 = vmatprep.subr.mxu0 %v1614
    %1970 = vmatpush1.msra.mxu0 %v1613
    %1971 = vmatprep.mubr.f32.mxu0 %v1484
    %1972 = vmatmul.mubr.f32.gmra.mrb[0].mxu0 %v1483
    %v1973 = vpop.f32.mrb[0].mxu0
    %v1974 = vadd.f32 %v1756, %v1973
    %v1975 = vpop.f32.mrb[0].mxu0
    %v1976 = vadd.f32 %v1760, %v1975
    %1977 = vdwg.mxu0
    %1978 = vmatprep.subr.mxu0 %v1618
    %1979 = vmatpush1.msra.mxu0 %v1617
    %1980 = vmatprep.subr.mxu0 %v1622
    %1981 = vmatpush1.msra.mxu0 %v1621
    %1982 = vmatprep.subr.mxu0 %v1626
    %1983 = vmatpush1.msra.mxu0 %v1625
    %1984 = vmatprep.subr.mxu0 %v1630
    %1985 = vmatpush1.msra.mxu0 %v1629
    %1986 = vmatprep.subr.mxu0 %v1634
    %1987 = vmatpush1.msra.mxu0 %v1633
    %1988 = vmatprep.subr.mxu0 %v1638
    %1989 = vmatpush1.msra.mxu0 %v1637
    %1990 = vmatprep.subr.mxu0 %v1642
    %1991 = vmatpush1.msra.mxu0 %v1641
    %1992 = vmatprep.subr.mxu0 %v1646
    %1993 = vmatpush1.msra.mxu0 %v1645
    %1994 = vmatprep.subr.mxu0 %v1650
    %1995 = vmatpush1.msra.mxu0 %v1649
    %1996 = vmatprep.subr.mxu0 %v1654
    %1997 = vmatpush1.msra.mxu0 %v1653
    %1998 = vmatprep.subr.mxu0 %v1658
    %1999 = vmatpush1.msra.mxu0 %v1657
    %2000 = vmatprep.subr.mxu0 %v1662
    %2001 = vmatpush1.msra.mxu0 %v1661
    %2002 = vmatprep.subr.mxu0 %v1666
    %2003 = vmatpush1.msra.mxu0 %v1665
    %2004 = vmatprep.subr.mxu0 %v1670
    %2005 = vmatpush1.msra.mxu0 %v1669
    %2006 = vmatprep.subr.mxu0 %v1674
    %2007 = vmatpush1.msra.mxu0 %v1673
    %2008 = vmatprep.subr.mxu0 %v1678
    %2009 = vmatpush1.msra.mxu0 %v1677
    %2010 = vmatprep.subr.mxu0 %v1682
    %2011 = vmatpush1.msra.mxu0 %v1681
    %2012 = vmatprep.subr.mxu0 %v1686
    %2013 = vmatpush1.msra.mxu0 %v1685
    %2014 = vmatprep.subr.mxu0 %v1690
    %2015 = vmatpush1.msra.mxu0 %v1689
    %2016 = vmatprep.subr.mxu0 %v1694
    %2017 = vmatpush1.msra.mxu0 %v1693
    %2018 = vmatprep.subr.mxu0 %v1698
    %2019 = vmatpush1.msra.mxu0 %v1697
    %2020 = vmatprep.subr.mxu0 %v1702
    %2021 = vmatpush1.msra.mxu0 %v1701
    %2022 = vmatprep.subr.mxu0 %v1706
    %2023 = vmatpush1.msra.mxu0 %v1705
    %2024 = vmatprep.subr.mxu0 %v1710
    %2025 = vmatpush1.msra.mxu0 %v1709
    %2026 = vmatprep.subr.mxu0 %v1714
    %2027 = vmatpush1.msra.mxu0 %v1713
    %2028 = vmatprep.subr.mxu0 %v1718
    %2029 = vmatpush1.msra.mxu0 %v1717
    %2030 = vmatprep.subr.mxu0 %v1722
    %2031 = vmatpush1.msra.mxu0 %v1721
    %2032 = vmatprep.subr.mxu0 %v1726
    %2033 = vmatpush1.msra.mxu0 %v1725
    %2034 = vmatprep.subr.mxu0 %v1730
    %2035 = vmatpush1.msra.mxu0 %v1729
    %2036 = vmatprep.subr.mxu0 %v1734
    %2037 = vmatpush1.msra.mxu0 %v1733
    %2038 = vmatprep.subr.mxu0 %v1738
    %2039 = vmatpush1.msra.mxu0 %v1737
    %2040 = vmatprep.subr.mxu0 %v1742
    %2041 = vmatpush1.msra.mxu0 %v1741
    %2042 = vmatprep.mubr.f32.mxu0 %v1486
    %2043 = vmatmul.mubr.f32.gmra.mrb[0].mxu0 %v1485
    %v2044 = vpop.f32.mrb[0].mxu0
    %v2045 = vadd.f32 %v1974, %v2044
    %v2046 = vpop.f32.mrb[0].mxu0
    %v2047 = vadd.f32 %v1976, %v2046
    %2048 = vdwg.mxu0
    %vm2049 = vcmp.ge.f32.partialorder %v1903, 0.0
    %vm2050 = vcmp.ge.f32.partialorder %v1905, 0.0
    %vm2051 = vcmp.ge.f32.partialorder %v2045, 0.0
    %vm2052 = vcmp.ge.f32.partialorder %v2047, 0.0
    %v2053 = vmul.f32 %v1903, 0.2
    %v2054 = vmul.f32 %v1905, 0.2
    %v2055 = vmul.f32 %v2045, 0.2
    %v2056 = vmul.f32 %v2047, 0.2
    %v2057 = vsel %vm2049, %v1903, %v2053
    %v2058 = vsel %vm2050, %v1905, %v2054
    %v2059 = vsel %vm2051, %v2045, %v2055
    %v2060 = vsel %vm2052, %v2047, %v2056
    %v2061 = vmul.f32 %v2057, 1.4142135
    %v2062 = vmul.f32 %v2058, 1.4142135
    %v2063 = vmul.f32 %v2059, 1.4142135
    %v2064 = vmul.f32 %v2060, 1.4142135
    %v2069 = vcombine.low %v2061, %v2062
    %v2070 = vcombine.low %v2063, %v2064
    %v2072 = vunpack.c.l.s4 1983009808
    %v2073 = vunpack.c.0.s8 %v2072
    %v2074 = vlaneseq
    %v2075 = vshrl.u32 %v2074, 7
    %v2076 = vsub.s32 %v2073, %v2075
    %v2077 = vrot.slane %v2069, %v2076
    %v2079 = vunpack.c.l.s4 1983009808
    %v2080 = vunpack.c.0.s8 %v2079
    %v2081 = vlaneseq
    %v2082 = vshrl.u32 %v2081, 7
    %v2083 = vsub.s32 %v2080, %v2082
    %v2084 = vrot.slane %v2070, %v2083
    %v2085 = vcombine.low %v2077, %v2084
    %2087 = vst [vmem:[%s9] sm:$0xff] %v2085
    // Predicated region
    $region74: #{hair_delta_generator.2} parent=1 // pred_check
      _
    $region75: #{hair_delta_generator.2} parent=1 // pred_check_branch
      %2089 = sbr.rel (0) target = $region77
    $region76: #{hair_delta_generator.2} parent=1 // pred_region
      _
    $region77: #{hair_delta_generator.2} parent=1 // pred_fallthru
      _
    // Predicated region
    $region78: #{hair_delta_generator.2} parent=1 // pred_check
      _
    $region79: #{hair_delta_generator.2} parent=1 // pred_check_branch
      %2091 = sbr.rel (0) target = $region81
    $region80: #{hair_delta_generator.2} parent=1 // pred_region
      _
    $region81: #{hair_delta_generator.2} parent=1 // pred_fallthru
      _
    %2092 = vsyncpa [#allocation3], 1
    %2093 = vsyncpa [#allocation5], 1
    %2094 = vsyncpa [#allocation8], 1
    %2095 = vsyncpa [#allocation11], 1
    %2096 = vsyncpa [#allocation14], 1

// kernel: hair_delta_generator.3
$region0: #{hair_delta_generator.3}
  #allocation0 [shape = 'u32[]', space=smem, size = 0x4, offset = 0x4, fixed_abs, tag = 'smem constant byte address 0x4 - core index']
  #allocation1 [shape = 'u32[144,128]{1,0:T(1,128)}', space=vmem, size = 0x12000, scoped, tag = 'internal scratch']
  %s0 = inlined_call_operand.vmem [shape: f32[2,512], index: 0, kind: input, shape index: {}]
  %s1 = inlined_call_operand.hbm [shape: bf16[512,9216], index: 1, kind: input, shape index: {}]
  %s2 = inlined_call_operand.hbm [shape: f32[1,9216], index: 2, kind: input, shape index: {}]
  %s3 = inlined_call_operand.hbm [shape: f32[2,9216], index: 3, kind: input, shape index: {}]
  %s4 = inlined_call_operand.hbm [shape: f32[2,9216], index: 4, kind: output, shape index: {0}]
  %s5 = inlined_call_operand.hbm [shape: f32[2,9216], index: 5, kind: output, shape index: {1}]
  %6 = xla_tuple %s4, %s5
  %s7 = sld [smem:[#allocation0]]
  $region69: #{hair_delta_generator.3} parent=0
    _
  %s9 = ssub.s32 1, %s7
  %s10 = scalar_select 0, %s9, %s7
  $region1: #{hair_delta_generator.3} parent=0
    #allocation2 [shape = 'u8[4718592]{0}', space=vmem, size = 0x480000, scoped, tag = 'input window, operand 1']
    #allocation3 [shape = 's32[2]{0}', space=sflag, size = 0x8, scoped, tag = 'scoped memory for hair_delta_generator.3']
    #allocation4 [shape = 's32[2]{0}', space=sflag, size = 0x8, scoped, tag = 'scoped memory for hair_delta_generator.3']
    #allocation5 [shape = 'u8[18432]{0}', space=vmem, size = 0x4800, scoped, tag = 'input window, operand 2']
    #allocation6 [shape = 's32[2]{0}', space=sflag, size = 0x8, scoped, tag = 'scoped memory for hair_delta_generator.3']
    #allocation7 [shape = 'u8[36864]{0}', space=vmem, size = 0x9000, scoped, tag = 'input window, operand 3']
    #allocation8 [shape = 'u8[36864]{0}', space=vmem, size = 0x9000, scoped, tag = 'output window, operand 0']
    #allocation9 [shape = 'u8[36864]{0}', space=vmem, size = 0x9000, scoped, tag = 'output window, operand 1']
    #allocation10 [shape = 's32[2]{0}', space=sflag, size = 0x8, scoped, tag = 'scoped memory for hair_delta_generator.3']
    %11 = vsyncpa [#allocation3], 0
    %s12 = scalar_lea.sflag [#allocation3], 1
    %13 = vsyncpa %s12, 0
    %14 = vsyncpa [#allocation6], 0
    %s15 = scalar_lea.sflag [#allocation6], 1
    %16 = vsyncpa %s15, 0
    %17 = vsyncpa [#allocation4], 0
    %s18 = scalar_lea.sflag [#allocation4], 1
    %19 = vsyncpa %s18, 0
    %20 = vsyncpa [#allocation10], 0
    %s21 = scalar_lea.sflag [#allocation10], 1
    %22 = vsyncpa %s21, 0
    loop: start=0, step=1, limit=6
    $region2: #{hair_delta_generator.3} parent=1 // loop_pre_header
      _
    $region3: #{hair_delta_generator.3} parent=1 // loop_header
      %s24 = sphi 0, %s28
      %p25 = scmp.ge.s32.totalorder %s24, 6
      %s32 = sphi 0, %s32
      %s34 = sphi 0, %s32
      %s35 = sphi 0, %s34
      %s49 = sphi 0, %s35
      %s55 = sphi 0, %s57
      %s58 = sphi 0, %s55
      %s59 = sphi 0, %s58
      %s75 = sphi 0, %s59
      %s81 = sphi 0, %s83
      %s84 = sphi 0, %s81
      %s85 = sphi 0, %s84
      %s101 = sphi 0, %s85
      %s107 = sphi 0, %s109
      %s110 = sphi 0, %s107
      %s111 = sphi 0, %s110
      %s127 = sphi 0, %s111
      %s133 = sphi 0, %s135
      %s136 = sphi 0, %s133
      %s137 = sphi 0, %s136
      %s153 = sphi 0, %s137
      %s159 = sphi 0, %s161
      %s162 = sphi 0, %s159
      %s163 = sphi 0, %s162
      %s179 = sphi 0, %s163
    $region4: #{hair_delta_generator.3} parent=1 // loop_header_branch
      %27 = sbr.rel (%p25) target = $region8
    $region5: #{hair_delta_generator.3} parent=1 // loop_body
      %s29 = ssub.s32 %s24, 1
      %s30 = ssub.s32 %s24, 2
      %s31 = sadd.s32 %s24, 1
      %s33 = sadd.s32 %s32, 1
      %p36 = scmp.eq.s32.totalorder %s24, 3
      %p37 = scmp.ne.s32.totalorder %s32, %s34
      %p38 = scmp.eq.s32.totalorder %s24, 0
      %p39 = por %p37, %p38
      %p40 = scmp.ne.s32.totalorder %s32, %s34
      %p41 = scmp.eq.s32.totalorder %s29, 3
      %p42 = por %p40, %p41
      %p43 = scmp.ne.s32.totalorder %s34, %s35
      %p44 = scmp.eq.s32.totalorder %s29, 0
      %p45 = por %p43, %p44
      %p46 = scmp.ne.s32.totalorder %s34, %s35
      %p47 = scmp.eq.s32.totalorder %s30, 3
      %p48 = por %p46, %p47
      %p50 = scmp.ne.s32.totalorder %s35, %s49
      %p51 = scmp.eq.s32.totalorder %s30, 0
      %p52 = por %p50, %p51
      %s53 = ssub.s32 %s24, %s31
      %p54 = scmp.eq.s32.totalorder %s53, 0
      %s56 = sadd.s32 %s55, 1
      %s57 = scalar_select %p54, %s55, %s56
      %p60 = pneg %p54
      %p61 = scmp.eq.s32.totalorder %s24, 3
      %p62 = por %p60, %p61
      %p63 = scmp.ne.s32.totalorder %s55, %s58
      %p64 = scmp.eq.s32.totalorder %s24, 0
      %p65 = por %p63, %p64
      %p66 = scmp.ne.s32.totalorder %s55, %s58
      %p67 = scmp.eq.s32.totalorder %s29, 3
      %p68 = por %p66, %p67
      %p69 = scmp.ne.s32.totalorder %s58, %s59
      %p70 = scmp.eq.s32.totalorder %s29, 0
      %p71 = por %p69, %p70
      %p72 = scmp.ne.s32.totalorder %s58, %s59
      %p73 = scmp.eq.s32.totalorder %s30, 3
      %p74 = por %p72, %p73
      %p76 = scmp.ne.s32.totalorder %s59, %s75
      %p77 = scmp.eq.s32.totalorder %s30, 0
      %p78 = por %p76, %p77
      %s79 = ssub.s32 %s24, %s31
      %p80 = scmp.eq.s32.totalorder %s79, 0
      %s82 = sadd.s32 %s81, 1
      %s83 = scalar_select %p80, %s81, %s82
      %p86 = pneg %p80
      %p87 = scmp.eq.s32.totalorder %s24, 3
      %p88 = por %p86, %p87
      %p89 = scmp.ne.s32.totalorder %s81, %s84
      %p90 = scmp.eq.s32.totalorder %s24, 0
      %p91 = por %p89, %p90
      %p92 = scmp.ne.s32.totalorder %s81, %s84
      %p93 = scmp.eq.s32.totalorder %s29, 3
      %p94 = por %p92, %p93
      %p95 = scmp.ne.s32.totalorder %s84, %s85
      %p96 = scmp.eq.s32.totalorder %s29, 0
      %p97 = por %p95, %p96
      %p98 = scmp.ne.s32.totalorder %s84, %s85
      %p99 = scmp.eq.s32.totalorder %s30, 3
      %p100 = por %p98, %p99
      %p102 = scmp.ne.s32.totalorder %s85, %s101
      %p103 = scmp.eq.s32.totalorder %s30, 0
      %p104 = por %p102, %p103
      %s105 = ssub.s32 %s24, %s31
      %p106 = scmp.eq.s32.totalorder %s105, 0
      %s108 = sadd.s32 %s107, 1
      %s109 = scalar_select %p106, %s107, %s108
      %p112 = pneg %p106
      %p113 = scmp.eq.s32.totalorder %s24, 3
      %p114 = por %p112, %p113
      %p115 = scmp.ne.s32.totalorder %s107, %s110
      %p116 = scmp.eq.s32.totalorder %s24, 0
      %p117 = por %p115, %p116
      %p118 = scmp.ne.s32.totalorder %s107, %s110
      %p119 = scmp.eq.s32.totalorder %s29, 3
      %p120 = por %p118, %p119
      %p121 = scmp.ne.s32.totalorder %s110, %s111
      %p122 = scmp.eq.s32.totalorder %s29, 0
      %p123 = por %p121, %p122
      %p124 = scmp.ne.s32.totalorder %s110, %s111
      %p125 = scmp.eq.s32.totalorder %s30, 3
      %p126 = por %p124, %p125
      %p128 = scmp.ne.s32.totalorder %s111, %s127
      %p129 = scmp.eq.s32.totalorder %s30, 0
      %p130 = por %p128, %p129
      %s131 = ssub.s32 %s24, %s31
      %p132 = scmp.eq.s32.totalorder %s131, 0
      %s134 = sadd.s32 %s133, 1
      %s135 = scalar_select %p132, %s133, %s134
      %p138 = pneg %p132
      %p139 = scmp.eq.s32.totalorder %s24, 3
      %p140 = por %p138, %p139
      %p141 = scmp.ne.s32.totalorder %s133, %s136
      %p142 = scmp.eq.s32.totalorder %s24, 0
      %p143 = por %p141, %p142
      %p144 = scmp.ne.s32.totalorder %s133, %s136
      %p145 = scmp.eq.s32.totalorder %s29, 3
      %p146 = por %p144, %p145
      %p147 = scmp.ne.s32.totalorder %s136, %s137
      %p148 = scmp.eq.s32.totalorder %s29, 0
      %p149 = por %p147, %p148
      %p150 = scmp.ne.s32.totalorder %s136, %s137
      %p151 = scmp.eq.s32.totalorder %s30, 3
      %p152 = por %p150, %p151
      %p154 = scmp.ne.s32.totalorder %s137, %s153
      %p155 = scmp.eq.s32.totalorder %s30, 0
      %p156 = por %p154, %p155
      %s157 = ssub.s32 %s24, %s31
      %p158 = scmp.eq.s32.totalorder %s157, 0
      %s160 = sadd.s32 %s159, 1
      %s161 = scalar_select %p158, %s159, %s160
      %p164 = pneg %p158
      %p165 = scmp.eq.s32.totalorder %s24, 3
      %p166 = por %p164, %p165
      %p167 = scmp.ne.s32.totalorder %s159, %s162
      %p168 = scmp.eq.s32.totalorder %s24, 0
      %p169 = por %p167, %p168
      %p170 = scmp.ne.s32.totalorder %s159, %s162
      %p171 = scmp.eq.s32.totalorder %s29, 3
      %p172 = por %p170, %p171
      %p173 = scmp.ne.s32.totalorder %s162, %s163
      %p174 = scmp.eq.s32.totalorder %s29, 0
      %p175 = por %p173, %p174
      %p176 = scmp.ne.s32.totalorder %s162, %s163
      %p177 = scmp.eq.s32.totalorder %s30, 3
      %p178 = por %p176, %p177
      %p180 = scmp.ne.s32.totalorder %s163, %s179
      %p181 = scmp.eq.s32.totalorder %s30, 0
      %p182 = por %p180, %p181
      %p183 = scmp.le.s32.totalorder 1, %s24
      %p184 = scmp.lt.s32.totalorder %s24, 5
      %p185 = pnand %p183, %p184
      %p186 = pneg %p185
      // Predicated region
      $region9: #{hair_delta_generator.3} parent=5 // pred_check
        _
      $region10: #{hair_delta_generator.3} parent=5 // pred_check_branch
        %188 = sbr.rel (%p185) target = $region12
      $region11: #{hair_delta_generator.3} parent=5 // pred_region
        %s189 = ssub.s32 %s24, 1
        // Predicated region
        $region13: #{hair_delta_generator.3} parent=11 // pred_check
          %p190 = pneg %p45
        $region14: #{hair_delta_generator.3} parent=11 // pred_check_branch
          %192 = sbr.rel (%p190) target = $region16
        $region15: #{hair_delta_generator.3} parent=11 // pred_region
          _
        $region16: #{hair_delta_generator.3} parent=11 // pred_fallthru
          _
      $region12: #{hair_delta_generator.3} parent=5 // pred_fallthru
        _
      %p193 = scmp.lt.s32.totalorder %s24, 4
      // Predicated region
      $region17: #{hair_delta_generator.3} parent=5 // pred_check
        %p194 = pneg %p193
      $region18: #{hair_delta_generator.3} parent=5 // pred_check_branch
        %196 = sbr.rel (%p194) target = $region20
      $region19: #{hair_delta_generator.3} parent=5 // pred_region
        // Predicated region
        $region21: #{hair_delta_generator.3} parent=19 // pred_check
          %p197 = pneg %p65
        $region22: #{hair_delta_generator.3} parent=19 // pred_check_branch
          %199 = sbr.rel (%p197) target = $region24
        $region23: #{hair_delta_generator.3} parent=19 // pred_region
          %s200 = sand.u32 %s55, 1
          %s201 = scalar_lea.sflag [#allocation3], %s200
          %s202 = sand.u32 %s55, 1
          %s203 = smul.addr %s202, 4608
          %s204 = scalar_lea.vmem [#allocation2], %s203
          %s205 = smul.u32 18, %s24
          %s207 = ssub.s32 73728, 73728
          %208 = vsyncadd %s201, %s207
          %s209 = smul.addr %s205, 64
          %s210 = scalar_lea.hbm %s1, %s209
          %s211 = sshll.u32 %s204, 4
          %s212 = int_to_ptr.vmem [resolvable:$true] %s211
          %217 = dma.hbm_to_vmem [thread:$0]  %s210, 73728, %s212, %s201, 4608, 1152, 72
        $region24: #{hair_delta_generator.3} parent=19 // pred_fallthru
          _
        // Predicated region
        $region25: #{hair_delta_generator.3} parent=19 // pred_check
          %p218 = pneg %p91
        $region26: #{hair_delta_generator.3} parent=19 // pred_check_branch
          %220 = sbr.rel (%p218) target = $region28
        $region27: #{hair_delta_generator.3} parent=19 // pred_region
          %s221 = sand.u32 %s24, 1
          %s222 = scalar_lea.sflag [#allocation6], %s221
          %s223 = sand.u32 %s81, 1
          %s224 = smul.addr %s223, 18
          %s225 = scalar_lea.vmem [#allocation5], %s224
          %s226 = smul.u32 18, %s24
          %s228 = ssub.s32 288, 288
          %229 = vsyncadd %s222, %s228
          %s230 = smul.addr %s226, 16
          %s231 = scalar_lea.hbm %s2, %s230
          %s233 = sshll.u32 %s225, 4
          %s234 = int_to_ptr.vmem [resolvable:$true] %s233
          %236 = dma.hbm_to_vmem [thread:$0]  %s231, 288, %s234, %s222
        $region28: #{hair_delta_generator.3} parent=19 // pred_fallthru
          _
        // Predicated region
        $region29: #{hair_delta_generator.3} parent=19 // pred_check
          %p237 = pneg %p117
        $region30: #{hair_delta_generator.3} parent=19 // pred_check_branch
          %239 = sbr.rel (%p237) target = $region32
        $region31: #{hair_delta_generator.3} parent=19 // pred_region
          %s240 = sand.u32 %s24, 1
          %s241 = scalar_lea.sflag [#allocation6], %s240
          %s242 = sand.u32 %s107, 1
          %s243 = smul.addr %s242, 36
          %s244 = scalar_lea.vmem [#allocation7], %s243
          %s245 = smul.u32 18, %s24
          %s247 = ssub.s32 576, 576
          %248 = vsyncadd %s241, %s247
          %s249 = smul.addr %s245, 32
          %s250 = scalar_lea.hbm %s3, %s249
          %s252 = sshll.u32 %s244, 4
          %s253 = int_to_ptr.vmem [resolvable:$true] %s252
          %255 = dma.hbm_to_vmem [thread:$0]  %s250, 576, %s253, %s241
        $region32: #{hair_delta_generator.3} parent=19 // pred_fallthru
          _
      $region20: #{hair_delta_generator.3} parent=5 // pred_fallthru
        _
      %p256 = scmp.le.s32.totalorder 1, %s24
      %p257 = scmp.lt.s32.totalorder %s24, 5
      %p258 = pnand %p256, %p257
      %p259 = pneg %p258
      // Predicated region
      $region33: #{hair_delta_generator.3} parent=5 // pred_check
        _
      $region34: #{hair_delta_generator.3} parent=5 // pred_check_branch
        %261 = sbr.rel (%p258) target = $region36
      $region35: #{hair_delta_generator.3} parent=5 // pred_region
        %s262 = ssub.s32 %s24, 1
        %s263 = sand.u32 %s58, 1
        %s264 = scalar_lea.sflag [#allocation3], %s263
        %s265 = sand.u32 %s58, 1
        %s266 = smul.addr %s265, 4608
        %s267 = scalar_lea.vmem [#allocation2], %s266
        // Predicated region
        $region37: #{hair_delta_generator.3} parent=35 // pred_check
          %p268 = pneg %p71
        $region38: #{hair_delta_generator.3} parent=35 // pred_check_branch
          %270 = sbr.rel (%p268) target = $region40
        $region39: #{hair_delta_generator.3} parent=35 // pred_region
          %271 = dma.done %s264, 73728
        $region40: #{hair_delta_generator.3} parent=35 // pred_fallthru
          _
        %s272 = sand.u32 %s29, 1
        %s273 = scalar_lea.sflag [#allocation6], %s272
        %s274 = sand.u32 %s84, 1
        %s275 = smul.addr %s274, 18
        %s276 = scalar_lea.vmem [#allocation5], %s275
        // Predicated region
        $region41: #{hair_delta_generator.3} parent=35 // pred_check
          %p277 = pneg %p97
        $region42: #{hair_delta_generator.3} parent=35 // pred_check_branch
          %279 = sbr.rel (%p277) target = $region44
        $region43: #{hair_delta_generator.3} parent=35 // pred_region
          %280 = dma.done %s273, 288
        $region44: #{hair_delta_generator.3} parent=35 // pred_fallthru
          _
        %s281 = sand.u32 %s29, 1
        %s282 = scalar_lea.sflag [#allocation6], %s281
        %s283 = sand.u32 %s110, 1
        %s284 = smul.addr %s283, 36
        %s285 = scalar_lea.vmem [#allocation7], %s284
        // Predicated region
        $region45: #{hair_delta_generator.3} parent=35 // pred_check
          %p286 = pneg %p123
        $region46: #{hair_delta_generator.3} parent=35 // pred_check_branch
          %288 = sbr.rel (%p286) target = $region48
        $region47: #{hair_delta_generator.3} parent=35 // pred_region
          %289 = dma.done %s282, 576
        $region48: #{hair_delta_generator.3} parent=35 // pred_fallthru
          _
        %p290 = pneg %p45
        %p291 = pneg %p42
        %s292 = sand.u32 %s58, 1
        %s293 = scalar_lea.sflag [#allocation3], %s292
        %s294 = sand.u32 %s58, 1
        %s295 = smul.addr %s294, 4608
        %s296 = scalar_lea.vmem [#allocation2], %s295
        %p297 = pneg %p71
        %p298 = pneg %p68
        %s299 = sand.u32 %s29, 1
        %s300 = scalar_lea.sflag [#allocation6], %s299
        %s301 = sand.u32 %s84, 1
        %s302 = smul.addr %s301, 18
        %s303 = scalar_lea.vmem [#allocation5], %s302
        %p304 = pneg %p97
        %p305 = pneg %p94
        %s306 = sand.u32 %s29, 1
        %s307 = scalar_lea.sflag [#allocation6], %s306
        %s308 = sand.u32 %s110, 1
        %s309 = smul.addr %s308, 36
        %s310 = scalar_lea.vmem [#allocation7], %s309
        %p311 = pneg %p123
        %p312 = pneg %p120
        %p313 = pneg %p149
        %p314 = pneg %p146
        %s315 = sand.u32 %s136, 1
        %s316 = scalar_lea.sflag [#allocation4], %s315
        %s317 = sand.u32 %s136, 1
        %s318 = smul.addr %s317, 36
        %s319 = scalar_lea.vmem [#allocation8], %s318
        %p320 = pneg %p175
        %p321 = pneg %p172
        %s322 = sand.u32 %s162, 1
        %s323 = scalar_lea.sflag [#allocation10], %s322
        %s324 = sand.u32 %s162, 1
        %s325 = smul.addr %s324, 36
        %s326 = scalar_lea.vmem [#allocation9], %s325
        %s327 = smul.u32 18, %s29
        %s328 = smul.u32 18, %s29
        %s329 = smul.u32 18, %s29
        %s330 = smul.u32 18, %s29
        %s331 = smul.u32 18, %s29
        %v332 = vld [vmem:[%s0] sm:$0xff]
        %v334 = vcombine.high %v332, %v332
        %v336 = vunpack.c.l.s4 1983009808
        %v337 = vunpack.c.0.s8 %v336
        %v338 = vlaneseq
        %v339 = vshrl.u32 %v338, 7
        %v340 = vsub.s32 %v337, %v339
        %v341 = vrot.slane %v332, %v340
        %v343 = vunpack.c.l.s4 1983009808
        %v344 = vunpack.c.0.s8 %v343
        %v345 = vlaneseq
        %v346 = vshrl.u32 %v345, 7
        %v347 = vsub.s32 %v344, %v346
        %v348 = vrot.slane %v334, %v347
        %v349 = vcombine.high %v341, %v341
        %v350 = vcombine.high %v348, %v348
        %v355 = vpack.c.bf16 %v341, %v341
        %v356 = vpack.c.bf16 %v349, %v349
        %v357 = vpack.c.bf16 %v348, %v348
        %v358 = vpack.c.bf16 %v350, %v350
        %v359 = vld [vmem:[%s267] sm:$0xff]
        %v360 = vld [vmem:[%s267 + $0x8] sm:$0xff]
        %v361 = vld [vmem:[%s267 + $0x10] sm:$0xff]
        %v362 = vld [vmem:[%s267 + $0x18] sm:$0xff]
        %v363 = vld [vmem:[%s267 + $0x20] sm:$0xff]
        %v364 = vld [vmem:[%s267 + $0x28] sm:$0xff]
        %v365 = vld [vmem:[%s267 + $0x30] sm:$0xff]
        %v366 = vld [vmem:[%s267 + $0x38] sm:$0xff]
        %v367 = vld [vmem:[%s267 + $0x40] sm:$0xff]
        %v368 = vld [vmem:[%s267 + $0x48] sm:$0xff]
        %v369 = vld [vmem:[%s267 + $0x50] sm:$0xff]
        %v370 = vld [vmem:[%s267 + $0x58] sm:$0xff]
        %v371 = vld [vmem:[%s267 + $0x60] sm:$0xff]
        %v372 = vld [vmem:[%s267 + $0x68] sm:$0xff]
        %v373 = vld [vmem:[%s267 + $0x70] sm:$0xff]
        %v374 = vld [vmem:[%s267 + $0x78] sm:$0xff]
        %v375 = vld [vmem:[%s267 + $0x80] sm:$0xff]
        %v376 = vld [vmem:[%s267 + $0x88] sm:$0xff]
        %v377 = vld [vmem:[%s267 + $0x90] sm:$0xff]
        %v378 = vld [vmem:[%s267 + $0x98] sm:$0xff]
        %v379 = vld [vmem:[%s267 + $0xa0] sm:$0xff]
        %v380 = vld [vmem:[%s267 + $0xa8] sm:$0xff]
        %v381 = vld [vmem:[%s267 + $0xb0] sm:$0xff]
        %v382 = vld [vmem:[%s267 + $0xb8] sm:$0xff]
        %v383 = vld [vmem:[%s267 + $0xc0] sm:$0xff]
        %v384 = vld [vmem:[%s267 + $0xc8] sm:$0xff]
        %v385 = vld [vmem:[%s267 + $0xd0] sm:$0xff]
        %v386 = vld [vmem:[%s267 + $0xd8] sm:$0xff]
        %v387 = vld [vmem:[%s267 + $0xe0] sm:$0xff]
        %v388 = vld [vmem:[%s267 + $0xe8] sm:$0xff]
        %v389 = vld [vmem:[%s267 + $0xf0] sm:$0xff]
        %v390 = vld [vmem:[%s267 + $0xf8] sm:$0xff]
        %v391 = vld [vmem:[%s267 + $0x100] sm:$0xff]
        %v392 = vld [vmem:[%s267 + $0x108] sm:$0xff]
        %v393 = vld [vmem:[%s267 + $0x110] sm:$0xff]
        %v394 = vld [vmem:[%s267 + $0x118] sm:$0xff]
        %v395 = vld [vmem:[%s267 + $0x120] sm:$0xff]
        %v396 = vld [vmem:[%s267 + $0x128] sm:$0xff]
        %v397 = vld [vmem:[%s267 + $0x130] sm:$0xff]
        %v398 = vld [vmem:[%s267 + $0x138] sm:$0xff]
        %v399 = vld [vmem:[%s267 + $0x140] sm:$0xff]
        %v400 = vld [vmem:[%s267 + $0x148] sm:$0xff]
        %v401 = vld [vmem:[%s267 + $0x150] sm:$0xff]
        %v402 = vld [vmem:[%s267 + $0x158] sm:$0xff]
        %v403 = vld [vmem:[%s267 + $0x160] sm:$0xff]
        %v404 = vld [vmem:[%s267 + $0x168] sm:$0xff]
        %v405 = vld [vmem:[%s267 + $0x170] sm:$0xff]
        %v406 = vld [vmem:[%s267 + $0x178] sm:$0xff]
        %v407 = vld [vmem:[%s267 + $0x180] sm:$0xff]
        %v408 = vld [vmem:[%s267 + $0x188] sm:$0xff]
        %v409 = vld [vmem:[%s267 + $0x190] sm:$0xff]
        %v410 = vld [vmem:[%s267 + $0x198] sm:$0xff]
        %v411 = vld [vmem:[%s267 + $0x1a0] sm:$0xff]
        %v412 = vld [vmem:[%s267 + $0x1a8] sm:$0xff]
        %v413 = vld [vmem:[%s267 + $0x1b0] sm:$0xff]
        %v414 = vld [vmem:[%s267 + $0x1b8] sm:$0xff]
        %v415 = vld [vmem:[%s267 + $0x1c0] sm:$0xff]
        %v416 = vld [vmem:[%s267 + $0x1c8] sm:$0xff]
        %v417 = vld [vmem:[%s267 + $0x1d0] sm:$0xff]
        %v418 = vld [vmem:[%s267 + $0x1d8] sm:$0xff]
        %v419 = vld [vmem:[%s267 + $0x1e0] sm:$0xff]
        %v420 = vld [vmem:[%s267 + $0x1e8] sm:$0xff]
        %v421 = vld [vmem:[%s267 + $0x1f0] sm:$0xff]
        %v422 = vld [vmem:[%s267 + $0x1f8] sm:$0xff]
        %v423 = vld [vmem:[%s267 + $0x200] sm:$0xff]
        %v424 = vld [vmem:[%s267 + $0x208] sm:$0xff]
        %v425 = vld [vmem:[%s267 + $0x210] sm:$0xff]
        %v426 = vld [vmem:[%s267 + $0x218] sm:$0xff]
        %v427 = vld [vmem:[%s267 + $0x220] sm:$0xff]
        %v428 = vld [vmem:[%s267 + $0x228] sm:$0xff]
        %v429 = vld [vmem:[%s267 + $0x230] sm:$0xff]
        %v430 = vld [vmem:[%s267 + $0x238] sm:$0xff]
        %v431 = vld [vmem:[%s267 + $0x240] sm:$0xff]
        %v432 = vld [vmem:[%s267 + $0x248] sm:$0xff]
        %v433 = vld [vmem:[%s267 + $0x250] sm:$0xff]
        %v434 = vld [vmem:[%s267 + $0x258] sm:$0xff]
        %v435 = vld [vmem:[%s267 + $0x260] sm:$0xff]
        %v436 = vld [vmem:[%s267 + $0x268] sm:$0xff]
        %v437 = vld [vmem:[%s267 + $0x270] sm:$0xff]
        %v438 = vld [vmem:[%s267 + $0x278] sm:$0xff]
        %v439 = vld [vmem:[%s267 + $0x280] sm:$0xff]
        %v440 = vld [vmem:[%s267 + $0x288] sm:$0xff]
        %v441 = vld [vmem:[%s267 + $0x290] sm:$0xff]
        %v442 = vld [vmem:[%s267 + $0x298] sm:$0xff]
        %v443 = vld [vmem:[%s267 + $0x2a0] sm:$0xff]
        %v444 = vld [vmem:[%s267 + $0x2a8] sm:$0xff]
        %v445 = vld [vmem:[%s267 + $0x2b0] sm:$0xff]
        %v446 = vld [vmem:[%s267 + $0x2b8] sm:$0xff]
        %v447 = vld [vmem:[%s267 + $0x2c0] sm:$0xff]
        %v448 = vld [vmem:[%s267 + $0x2c8] sm:$0xff]
        %v449 = vld [vmem:[%s267 + $0x2d0] sm:$0xff]
        %v450 = vld [vmem:[%s267 + $0x2d8] sm:$0xff]
        %v451 = vld [vmem:[%s267 + $0x2e0] sm:$0xff]
        %v452 = vld [vmem:[%s267 + $0x2e8] sm:$0xff]
        %v453 = vld [vmem:[%s267 + $0x2f0] sm:$0xff]
        %v454 = vld [vmem:[%s267 + $0x2f8] sm:$0xff]
        %v455 = vld [vmem:[%s267 + $0x300] sm:$0xff]
        %v456 = vld [vmem:[%s267 + $0x308] sm:$0xff]
        %v457 = vld [vmem:[%s267 + $0x310] sm:$0xff]
        %v458 = vld [vmem:[%s267 + $0x318] sm:$0xff]
        %v459 = vld [vmem:[%s267 + $0x320] sm:$0xff]
        %v460 = vld [vmem:[%s267 + $0x328] sm:$0xff]
        %v461 = vld [vmem:[%s267 + $0x330] sm:$0xff]
        %v462 = vld [vmem:[%s267 + $0x338] sm:$0xff]
        %v463 = vld [vmem:[%s267 + $0x340] sm:$0xff]
        %v464 = vld [vmem:[%s267 + $0x348] sm:$0xff]
        %v465 = vld [vmem:[%s267 + $0x350] sm:$0xff]
        %v466 = vld [vmem:[%s267 + $0x358] sm:$0xff]
        %v467 = vld [vmem:[%s267 + $0x360] sm:$0xff]
        %v468 = vld [vmem:[%s267 + $0x368] sm:$0xff]
        %v469 = vld [vmem:[%s267 + $0x370] sm:$0xff]
        %v470 = vld [vmem:[%s267 + $0x378] sm:$0xff]
        %v471 = vld [vmem:[%s267 + $0x380] sm:$0xff]
        %v472 = vld [vmem:[%s267 + $0x388] sm:$0xff]
        %v473 = vld [vmem:[%s267 + $0x390] sm:$0xff]
        %v474 = vld [vmem:[%s267 + $0x398] sm:$0xff]
        %v475 = vld [vmem:[%s267 + $0x3a0] sm:$0xff]
        %v476 = vld [vmem:[%s267 + $0x3a8] sm:$0xff]
        %v477 = vld [vmem:[%s267 + $0x3b0] sm:$0xff]
        %v478 = vld [vmem:[%s267 + $0x3b8] sm:$0xff]
        %v479 = vld [vmem:[%s267 + $0x3c0] sm:$0xff]
        %v480 = vld [vmem:[%s267 + $0x3c8] sm:$0xff]
        %v481 = vld [vmem:[%s267 + $0x3d0] sm:$0xff]
        %v482 = vld [vmem:[%s267 + $0x3d8] sm:$0xff]
        %v483 = vld [vmem:[%s267 + $0x3e0] sm:$0xff]
        %v484 = vld [vmem:[%s267 + $0x3e8] sm:$0xff]
        %v485 = vld [vmem:[%s267 + $0x3f0] sm:$0xff]
        %v486 = vld [vmem:[%s267 + $0x3f8] sm:$0xff]
        %v487 = vld [vmem:[%s267 + $0x400] sm:$0xff]
        %v488 = vld [vmem:[%s267 + $0x408] sm:$0xff]
        %v489 = vld [vmem:[%s267 + $0x410] sm:$0xff]
        %v490 = vld [vmem:[%s267 + $0x418] sm:$0xff]
        %v491 = vld [vmem:[%s267 + $0x420] sm:$0xff]
        %v492 = vld [vmem:[%s267 + $0x428] sm:$0xff]
        %v493 = vld [vmem:[%s267 + $0x430] sm:$0xff]
        %v494 = vld [vmem:[%s267 + $0x438] sm:$0xff]
        %v495 = vld [vmem:[%s267 + $0x440] sm:$0xff]
        %v496 = vld [vmem:[%s267 + $0x448] sm:$0xff]
        %v497 = vld [vmem:[%s267 + $0x450] sm:$0xff]
        %v498 = vld [vmem:[%s267 + $0x458] sm:$0xff]
        %v499 = vld [vmem:[%s267 + $0x460] sm:$0xff]
        %v500 = vld [vmem:[%s267 + $0x468] sm:$0xff]
        %v501 = vld [vmem:[%s267 + $0x470] sm:$0xff]
        %v502 = vld [vmem:[%s267 + $0x478] sm:$0xff]
        %v503 = vld [vmem:[%s267 + $0x480] sm:$0xff]
        %v504 = vld [vmem:[%s267 + $0x488] sm:$0xff]
        %v505 = vld [vmem:[%s267 + $0x490] sm:$0xff]
        %v506 = vld [vmem:[%s267 + $0x498] sm:$0xff]
        %v507 = vld [vmem:[%s267 + $0x4a0] sm:$0xff]
        %v508 = vld [vmem:[%s267 + $0x4a8] sm:$0xff]
        %v509 = vld [vmem:[%s267 + $0x4b0] sm:$0xff]
        %v510 = vld [vmem:[%s267 + $0x4b8] sm:$0xff]
        %v511 = vld [vmem:[%s267 + $0x4c0] sm:$0xff]
        %v512 = vld [vmem:[%s267 + $0x4c8] sm:$0xff]
        %v513 = vld [vmem:[%s267 + $0x4d0] sm:$0xff]
        %v514 = vld [vmem:[%s267 + $0x4d8] sm:$0xff]
        %v515 = vld [vmem:[%s267 + $0x4e0] sm:$0xff]
        %v516 = vld [vmem:[%s267 + $0x4e8] sm:$0xff]
        %v517 = vld [vmem:[%s267 + $0x4f0] sm:$0xff]
        %v518 = vld [vmem:[%s267 + $0x4f8] sm:$0xff]
        %v519 = vld [vmem:[%s267 + $0x500] sm:$0xff]
        %v520 = vld [vmem:[%s267 + $0x508] sm:$0xff]
        %v521 = vld [vmem:[%s267 + $0x510] sm:$0xff]
        %v522 = vld [vmem:[%s267 + $0x518] sm:$0xff]
        %v523 = vld [vmem:[%s267 + $0x520] sm:$0xff]
        %v524 = vld [vmem:[%s267 + $0x528] sm:$0xff]
        %v525 = vld [vmem:[%s267 + $0x530] sm:$0xff]
        %v526 = vld [vmem:[%s267 + $0x538] sm:$0xff]
        %v527 = vld [vmem:[%s267 + $0x540] sm:$0xff]
        %v528 = vld [vmem:[%s267 + $0x548] sm:$0xff]
        %v529 = vld [vmem:[%s267 + $0x550] sm:$0xff]
        %v530 = vld [vmem:[%s267 + $0x558] sm:$0xff]
        %v531 = vld [vmem:[%s267 + $0x560] sm:$0xff]
        %v532 = vld [vmem:[%s267 + $0x568] sm:$0xff]
        %v533 = vld [vmem:[%s267 + $0x570] sm:$0xff]
        %v534 = vld [vmem:[%s267 + $0x578] sm:$0xff]
        %v535 = vld [vmem:[%s267 + $0x580] sm:$0xff]
        %v536 = vld [vmem:[%s267 + $0x588] sm:$0xff]
        %v537 = vld [vmem:[%s267 + $0x590] sm:$0xff]
        %v538 = vld [vmem:[%s267 + $0x598] sm:$0xff]
        %v539 = vld [vmem:[%s267 + $0x5a0] sm:$0xff]
        %v540 = vld [vmem:[%s267 + $0x5a8] sm:$0xff]
        %v541 = vld [vmem:[%s267 + $0x5b0] sm:$0xff]
        %v542 = vld [vmem:[%s267 + $0x5b8] sm:$0xff]
        %v543 = vld [vmem:[%s267 + $0x5c0] sm:$0xff]
        %v544 = vld [vmem:[%s267 + $0x5c8] sm:$0xff]
        %v545 = vld [vmem:[%s267 + $0x5d0] sm:$0xff]
        %v546 = vld [vmem:[%s267 + $0x5d8] sm:$0xff]
        %v547 = vld [vmem:[%s267 + $0x5e0] sm:$0xff]
        %v548 = vld [vmem:[%s267 + $0x5e8] sm:$0xff]
        %v549 = vld [vmem:[%s267 + $0x5f0] sm:$0xff]
        %v550 = vld [vmem:[%s267 + $0x5f8] sm:$0xff]
        %v551 = vld [vmem:[%s267 + $0x600] sm:$0xff]
        %v552 = vld [vmem:[%s267 + $0x608] sm:$0xff]
        %v553 = vld [vmem:[%s267 + $0x610] sm:$0xff]
        %v554 = vld [vmem:[%s267 + $0x618] sm:$0xff]
        %v555 = vld [vmem:[%s267 + $0x620] sm:$0xff]
        %v556 = vld [vmem:[%s267 + $0x628] sm:$0xff]
        %v557 = vld [vmem:[%s267 + $0x630] sm:$0xff]
        %v558 = vld [vmem:[%s267 + $0x638] sm:$0xff]
        %v559 = vld [vmem:[%s267 + $0x640] sm:$0xff]
        %v560 = vld [vmem:[%s267 + $0x648] sm:$0xff]
        %v561 = vld [vmem:[%s267 + $0x650] sm:$0xff]
        %v562 = vld [vmem:[%s267 + $0x658] sm:$0xff]
        %v563 = vld [vmem:[%s267 + $0x660] sm:$0xff]
        %v564 = vld [vmem:[%s267 + $0x668] sm:$0xff]
        %v565 = vld [vmem:[%s267 + $0x670] sm:$0xff]
        %v566 = vld [vmem:[%s267 + $0x678] sm:$0xff]
        %v567 = vld [vmem:[%s267 + $0x680] sm:$0xff]
        %v568 = vld [vmem:[%s267 + $0x688] sm:$0xff]
        %v569 = vld [vmem:[%s267 + $0x690] sm:$0xff]
        %v570 = vld [vmem:[%s267 + $0x698] sm:$0xff]
        %v571 = vld [vmem:[%s267 + $0x6a0] sm:$0xff]
        %v572 = vld [vmem:[%s267 + $0x6a8] sm:$0xff]
        %v573 = vld [vmem:[%s267 + $0x6b0] sm:$0xff]
        %v574 = vld [vmem:[%s267 + $0x6b8] sm:$0xff]
        %v575 = vld [vmem:[%s267 + $0x6c0] sm:$0xff]
        %v576 = vld [vmem:[%s267 + $0x6c8] sm:$0xff]
        %v577 = vld [vmem:[%s267 + $0x6d0] sm:$0xff]
        %v578 = vld [vmem:[%s267 + $0x6d8] sm:$0xff]
        %v579 = vld [vmem:[%s267 + $0x6e0] sm:$0xff]
        %v580 = vld [vmem:[%s267 + $0x6e8] sm:$0xff]
        %v581 = vld [vmem:[%s267 + $0x6f0] sm:$0xff]
        %v582 = vld [vmem:[%s267 + $0x6f8] sm:$0xff]
        %v583 = vld [vmem:[%s267 + $0x700] sm:$0xff]
        %v584 = vld [vmem:[%s267 + $0x708] sm:$0xff]
        %v585 = vld [vmem:[%s267 + $0x710] sm:$0xff]
        %v586 = vld [vmem:[%s267 + $0x718] sm:$0xff]
        %v587 = vld [vmem:[%s267 + $0x720] sm:$0xff]
        %v588 = vld [vmem:[%s267 + $0x728] sm:$0xff]
        %v589 = vld [vmem:[%s267 + $0x730] sm:$0xff]
        %v590 = vld [vmem:[%s267 + $0x738] sm:$0xff]
        %v591 = vld [vmem:[%s267 + $0x740] sm:$0xff]
        %v592 = vld [vmem:[%s267 + $0x748] sm:$0xff]
        %v593 = vld [vmem:[%s267 + $0x750] sm:$0xff]
        %v594 = vld [vmem:[%s267 + $0x758] sm:$0xff]
        %v595 = vld [vmem:[%s267 + $0x760] sm:$0xff]
        %v596 = vld [vmem:[%s267 + $0x768] sm:$0xff]
        %v597 = vld [vmem:[%s267 + $0x770] sm:$0xff]
        %v598 = vld [vmem:[%s267 + $0x778] sm:$0xff]
        %v599 = vld [vmem:[%s267 + $0x780] sm:$0xff]
        %v600 = vld [vmem:[%s267 + $0x788] sm:$0xff]
        %v601 = vld [vmem:[%s267 + $0x790] sm:$0xff]
        %v602 = vld [vmem:[%s267 + $0x798] sm:$0xff]
        %v603 = vld [vmem:[%s267 + $0x7a0] sm:$0xff]
        %v604 = vld [vmem:[%s267 + $0x7a8] sm:$0xff]
        %v605 = vld [vmem:[%s267 + $0x7b0] sm:$0xff]
        %v606 = vld [vmem:[%s267 + $0x7b8] sm:$0xff]
        %v607 = vld [vmem:[%s267 + $0x7c0] sm:$0xff]
        %v608 = vld [vmem:[%s267 + $0x7c8] sm:$0xff]
        %v609 = vld [vmem:[%s267 + $0x7d0] sm:$0xff]
        %v610 = vld [vmem:[%s267 + $0x7d8] sm:$0xff]
        %v611 = vld [vmem:[%s267 + $0x7e0] sm:$0xff]
        %v612 = vld [vmem:[%s267 + $0x7e8] sm:$0xff]
        %v613 = vld [vmem:[%s267 + $0x7f0] sm:$0xff]
        %v614 = vld [vmem:[%s267 + $0x7f8] sm:$0xff]
        %v615 = vld [vmem:[%s267 + $0x800] sm:$0xff]
        %v616 = vld [vmem:[%s267 + $0x808] sm:$0xff]
        %v617 = vld [vmem:[%s267 + $0x810] sm:$0xff]
        %v618 = vld [vmem:[%s267 + $0x818] sm:$0xff]
        %v619 = vld [vmem:[%s267 + $0x820] sm:$0xff]
        %v620 = vld [vmem:[%s267 + $0x828] sm:$0xff]
        %v621 = vld [vmem:[%s267 + $0x830] sm:$0xff]
        %v622 = vld [vmem:[%s267 + $0x838] sm:$0xff]
        %v623 = vld [vmem:[%s267 + $0x840] sm:$0xff]
        %v624 = vld [vmem:[%s267 + $0x848] sm:$0xff]
        %v625 = vld [vmem:[%s267 + $0x850] sm:$0xff]
        %v626 = vld [vmem:[%s267 + $0x858] sm:$0xff]
        %v627 = vld [vmem:[%s267 + $0x860] sm:$0xff]
        %v628 = vld [vmem:[%s267 + $0x868] sm:$0xff]
        %v629 = vld [vmem:[%s267 + $0x870] sm:$0xff]
        %v630 = vld [vmem:[%s267 + $0x878] sm:$0xff]
        %v631 = vld [vmem:[%s267 + $0x880] sm:$0xff]
        %v632 = vld [vmem:[%s267 + $0x888] sm:$0xff]
        %v633 = vld [vmem:[%s267 + $0x890] sm:$0xff]
        %v634 = vld [vmem:[%s267 + $0x898] sm:$0xff]
        %v635 = vld [vmem:[%s267 + $0x8a0] sm:$0xff]
        %v636 = vld [vmem:[%s267 + $0x8a8] sm:$0xff]
        %v637 = vld [vmem:[%s267 + $0x8b0] sm:$0xff]
        %v638 = vld [vmem:[%s267 + $0x8b8] sm:$0xff]
        %v639 = vld [vmem:[%s267 + $0x8c0] sm:$0xff]
        %v640 = vld [vmem:[%s267 + $0x8c8] sm:$0xff]
        %v641 = vld [vmem:[%s267 + $0x8d0] sm:$0xff]
        %v642 = vld [vmem:[%s267 + $0x8d8] sm:$0xff]
        %v643 = vld [vmem:[%s267 + $0x8e0] sm:$0xff]
        %v644 = vld [vmem:[%s267 + $0x8e8] sm:$0xff]
        %v645 = vld [vmem:[%s267 + $0x8f0] sm:$0xff]
        %v646 = vld [vmem:[%s267 + $0x8f8] sm:$0xff]
        %v647 = vld [vmem:[%s267 + $0x900] sm:$0xff]
        %v648 = vld [vmem:[%s267 + $0x908] sm:$0xff]
        %v649 = vld [vmem:[%s267 + $0x910] sm:$0xff]
        %v650 = vld [vmem:[%s267 + $0x918] sm:$0xff]
        %v651 = vld [vmem:[%s267 + $0x920] sm:$0xff]
        %v652 = vld [vmem:[%s267 + $0x928] sm:$0xff]
        %v653 = vld [vmem:[%s267 + $0x930] sm:$0xff]
        %v654 = vld [vmem:[%s267 + $0x938] sm:$0xff]
        %v655 = vld [vmem:[%s267 + $0x940] sm:$0xff]
        %v656 = vld [vmem:[%s267 + $0x948] sm:$0xff]
        %v657 = vld [vmem:[%s267 + $0x950] sm:$0xff]
        %v658 = vld [vmem:[%s267 + $0x958] sm:$0xff]
        %v659 = vld [vmem:[%s267 + $0x960] sm:$0xff]
        %v660 = vld [vmem:[%s267 + $0x968] sm:$0xff]
        %v661 = vld [vmem:[%s267 + $0x970] sm:$0xff]
        %v662 = vld [vmem:[%s267 + $0x978] sm:$0xff]
        %v663 = vld [vmem:[%s267 + $0x980] sm:$0xff]
        %v664 = vld [vmem:[%s267 + $0x988] sm:$0xff]
        %v665 = vld [vmem:[%s267 + $0x990] sm:$0xff]
        %v666 = vld [vmem:[%s267 + $0x998] sm:$0xff]
        %v667 = vld [vmem:[%s267 + $0x9a0] sm:$0xff]
        %v668 = vld [vmem:[%s267 + $0x9a8] sm:$0xff]
        %v669 = vld [vmem:[%s267 + $0x9b0] sm:$0xff]
        %v670 = vld [vmem:[%s267 + $0x9b8] sm:$0xff]
        %v671 = vld [vmem:[%s267 + $0x9c0] sm:$0xff]
        %v672 = vld [vmem:[%s267 + $0x9c8] sm:$0xff]
        %v673 = vld [vmem:[%s267 + $0x9d0] sm:$0xff]
        %v674 = vld [vmem:[%s267 + $0x9d8] sm:$0xff]
        %v675 = vld [vmem:[%s267 + $0x9e0] sm:$0xff]
        %v676 = vld [vmem:[%s267 + $0x9e8] sm:$0xff]
        %v677 = vld [vmem:[%s267 + $0x9f0] sm:$0xff]
        %v678 = vld [vmem:[%s267 + $0x9f8] sm:$0xff]
        %v679 = vld [vmem:[%s267 + $0xa00] sm:$0xff]
        %v680 = vld [vmem:[%s267 + $0xa08] sm:$0xff]
        %v681 = vld [vmem:[%s267 + $0xa10] sm:$0xff]
        %v682 = vld [vmem:[%s267 + $0xa18] sm:$0xff]
        %v683 = vld [vmem:[%s267 + $0xa20] sm:$0xff]
        %v684 = vld [vmem:[%s267 + $0xa28] sm:$0xff]
        %v685 = vld [vmem:[%s267 + $0xa30] sm:$0xff]
        %v686 = vld [vmem:[%s267 + $0xa38] sm:$0xff]
        %v687 = vld [vmem:[%s267 + $0xa40] sm:$0xff]
        %v688 = vld [vmem:[%s267 + $0xa48] sm:$0xff]
        %v689 = vld [vmem:[%s267 + $0xa50] sm:$0xff]
        %v690 = vld [vmem:[%s267 + $0xa58] sm:$0xff]
        %v691 = vld [vmem:[%s267 + $0xa60] sm:$0xff]
        %v692 = vld [vmem:[%s267 + $0xa68] sm:$0xff]
        %v693 = vld [vmem:[%s267 + $0xa70] sm:$0xff]
        %v694 = vld [vmem:[%s267 + $0xa78] sm:$0xff]
        %v695 = vld [vmem:[%s267 + $0xa80] sm:$0xff]
        %v696 = vld [vmem:[%s267 + $0xa88] sm:$0xff]
        %v697 = vld [vmem:[%s267 + $0xa90] sm:$0xff]
        %v698 = vld [vmem:[%s267 + $0xa98] sm:$0xff]
        %v699 = vld [vmem:[%s267 + $0xaa0] sm:$0xff]
        %v700 = vld [vmem:[%s267 + $0xaa8] sm:$0xff]
        %v701 = vld [vmem:[%s267 + $0xab0] sm:$0xff]
        %v702 = vld [vmem:[%s267 + $0xab8] sm:$0xff]
        %v703 = vld [vmem:[%s267 + $0xac0] sm:$0xff]
        %v704 = vld [vmem:[%s267 + $0xac8] sm:$0xff]
        %v705 = vld [vmem:[%s267 + $0xad0] sm:$0xff]
        %v706 = vld [vmem:[%s267 + $0xad8] sm:$0xff]
        %v707 = vld [vmem:[%s267 + $0xae0] sm:$0xff]
        %v708 = vld [vmem:[%s267 + $0xae8] sm:$0xff]
        %v709 = vld [vmem:[%s267 + $0xaf0] sm:$0xff]
        %v710 = vld [vmem:[%s267 + $0xaf8] sm:$0xff]
        %v711 = vld [vmem:[%s267 + $0xb00] sm:$0xff]
        %v712 = vld [vmem:[%s267 + $0xb08] sm:$0xff]
        %v713 = vld [vmem:[%s267 + $0xb10] sm:$0xff]
        %v714 = vld [vmem:[%s267 + $0xb18] sm:$0xff]
        %v715 = vld [vmem:[%s267 + $0xb20] sm:$0xff]
        %v716 = vld [vmem:[%s267 + $0xb28] sm:$0xff]
        %v717 = vld [vmem:[%s267 + $0xb30] sm:$0xff]
        %v718 = vld [vmem:[%s267 + $0xb38] sm:$0xff]
        %v719 = vld [vmem:[%s267 + $0xb40] sm:$0xff]
        %v720 = vld [vmem:[%s267 + $0xb48] sm:$0xff]
        %v721 = vld [vmem:[%s267 + $0xb50] sm:$0xff]
        %v722 = vld [vmem:[%s267 + $0xb58] sm:$0xff]
        %v723 = vld [vmem:[%s267 + $0xb60] sm:$0xff]
        %v724 = vld [vmem:[%s267 + $0xb68] sm:$0xff]
        %v725 = vld [vmem:[%s267 + $0xb70] sm:$0xff]
        %v726 = vld [vmem:[%s267 + $0xb78] sm:$0xff]
        %v727 = vld [vmem:[%s267 + $0xb80] sm:$0xff]
        %v728 = vld [vmem:[%s267 + $0xb88] sm:$0xff]
        %v729 = vld [vmem:[%s267 + $0xb90] sm:$0xff]
        %v730 = vld [vmem:[%s267 + $0xb98] sm:$0xff]
        %v731 = vld [vmem:[%s267 + $0xba0] sm:$0xff]
        %v732 = vld [vmem:[%s267 + $0xba8] sm:$0xff]
        %v733 = vld [vmem:[%s267 + $0xbb0] sm:$0xff]
        %v734 = vld [vmem:[%s267 + $0xbb8] sm:$0xff]
        %v735 = vld [vmem:[%s267 + $0xbc0] sm:$0xff]
        %v736 = vld [vmem:[%s267 + $0xbc8] sm:$0xff]
        %v737 = vld [vmem:[%s267 + $0xbd0] sm:$0xff]
        %v738 = vld [vmem:[%s267 + $0xbd8] sm:$0xff]
        %v739 = vld [vmem:[%s267 + $0xbe0] sm:$0xff]
        %v740 = vld [vmem:[%s267 + $0xbe8] sm:$0xff]
        %v741 = vld [vmem:[%s267 + $0xbf0] sm:$0xff]
        %v742 = vld [vmem:[%s267 + $0xbf8] sm:$0xff]
        %v743 = vld [vmem:[%s267 + $0xc00] sm:$0xff]
        %v744 = vld [vmem:[%s267 + $0xc08] sm:$0xff]
        %v745 = vld [vmem:[%s267 + $0xc10] sm:$0xff]
        %v746 = vld [vmem:[%s267 + $0xc18] sm:$0xff]
        %v747 = vld [vmem:[%s267 + $0xc20] sm:$0xff]
        %v748 = vld [vmem:[%s267 + $0xc28] sm:$0xff]
        %v749 = vld [vmem:[%s267 + $0xc30] sm:$0xff]
        %v750 = vld [vmem:[%s267 + $0xc38] sm:$0xff]
        %v751 = vld [vmem:[%s267 + $0xc40] sm:$0xff]
        %v752 = vld [vmem:[%s267 + $0xc48] sm:$0xff]
        %v753 = vld [vmem:[%s267 + $0xc50] sm:$0xff]
        %v754 = vld [vmem:[%s267 + $0xc58] sm:$0xff]
        %v755 = vld [vmem:[%s267 + $0xc60] sm:$0xff]
        %v756 = vld [vmem:[%s267 + $0xc68] sm:$0xff]
        %v757 = vld [vmem:[%s267 + $0xc70] sm:$0xff]
        %v758 = vld [vmem:[%s267 + $0xc78] sm:$0xff]
        %v759 = vld [vmem:[%s267 + $0xc80] sm:$0xff]
        %v760 = vld [vmem:[%s267 + $0xc88] sm:$0xff]
        %v761 = vld [vmem:[%s267 + $0xc90] sm:$0xff]
        %v762 = vld [vmem:[%s267 + $0xc98] sm:$0xff]
        %v763 = vld [vmem:[%s267 + $0xca0] sm:$0xff]
        %v764 = vld [vmem:[%s267 + $0xca8] sm:$0xff]
        %v765 = vld [vmem:[%s267 + $0xcb0] sm:$0xff]
        %v766 = vld [vmem:[%s267 + $0xcb8] sm:$0xff]
        %v767 = vld [vmem:[%s267 + $0xcc0] sm:$0xff]
        %v768 = vld [vmem:[%s267 + $0xcc8] sm:$0xff]
        %v769 = vld [vmem:[%s267 + $0xcd0] sm:$0xff]
        %v770 = vld [vmem:[%s267 + $0xcd8] sm:$0xff]
        %v771 = vld [vmem:[%s267 + $0xce0] sm:$0xff]
        %v772 = vld [vmem:[%s267 + $0xce8] sm:$0xff]
        %v773 = vld [vmem:[%s267 + $0xcf0] sm:$0xff]
        %v774 = vld [vmem:[%s267 + $0xcf8] sm:$0xff]
        %v775 = vld [vmem:[%s267 + $0xd00] sm:$0xff]
        %v776 = vld [vmem:[%s267 + $0xd08] sm:$0xff]
        %v777 = vld [vmem:[%s267 + $0xd10] sm:$0xff]
        %v778 = vld [vmem:[%s267 + $0xd18] sm:$0xff]
        %v779 = vld [vmem:[%s267 + $0xd20] sm:$0xff]
        %v780 = vld [vmem:[%s267 + $0xd28] sm:$0xff]
        %v781 = vld [vmem:[%s267 + $0xd30] sm:$0xff]
        %v782 = vld [vmem:[%s267 + $0xd38] sm:$0xff]
        %v783 = vld [vmem:[%s267 + $0xd40] sm:$0xff]
        %v784 = vld [vmem:[%s267 + $0xd48] sm:$0xff]
        %v785 = vld [vmem:[%s267 + $0xd50] sm:$0xff]
        %v786 = vld [vmem:[%s267 + $0xd58] sm:$0xff]
        %v787 = vld [vmem:[%s267 + $0xd60] sm:$0xff]
        %v788 = vld [vmem:[%s267 + $0xd68] sm:$0xff]
        %v789 = vld [vmem:[%s267 + $0xd70] sm:$0xff]
        %v790 = vld [vmem:[%s267 + $0xd78] sm:$0xff]
        %v791 = vld [vmem:[%s267 + $0xd80] sm:$0xff]
        %v792 = vld [vmem:[%s267 + $0xd88] sm:$0xff]
        %v793 = vld [vmem:[%s267 + $0xd90] sm:$0xff]
        %v794 = vld [vmem:[%s267 + $0xd98] sm:$0xff]
        %v795 = vld [vmem:[%s267 + $0xda0] sm:$0xff]
        %v796 = vld [vmem:[%s267 + $0xda8] sm:$0xff]
        %v797 = vld [vmem:[%s267 + $0xdb0] sm:$0xff]
        %v798 = vld [vmem:[%s267 + $0xdb8] sm:$0xff]
        %v799 = vld [vmem:[%s267 + $0xdc0] sm:$0xff]
        %v800 = vld [vmem:[%s267 + $0xdc8] sm:$0xff]
        %v801 = vld [vmem:[%s267 + $0xdd0] sm:$0xff]
        %v802 = vld [vmem:[%s267 + $0xdd8] sm:$0xff]
        %v803 = vld [vmem:[%s267 + $0xde0] sm:$0xff]
        %v804 = vld [vmem:[%s267 + $0xde8] sm:$0xff]
        %v805 = vld [vmem:[%s267 + $0xdf0] sm:$0xff]
        %v806 = vld [vmem:[%s267 + $0xdf8] sm:$0xff]
        %v807 = vld [vmem:[%s267 + $0xe00] sm:$0xff]
        %v808 = vld [vmem:[%s267 + $0xe08] sm:$0xff]
        %v809 = vld [vmem:[%s267 + $0xe10] sm:$0xff]
        %v810 = vld [vmem:[%s267 + $0xe18] sm:$0xff]
        %v811 = vld [vmem:[%s267 + $0xe20] sm:$0xff]
        %v812 = vld [vmem:[%s267 + $0xe28] sm:$0xff]
        %v813 = vld [vmem:[%s267 + $0xe30] sm:$0xff]
        %v814 = vld [vmem:[%s267 + $0xe38] sm:$0xff]
        %v815 = vld [vmem:[%s267 + $0xe40] sm:$0xff]
        %v816 = vld [vmem:[%s267 + $0xe48] sm:$0xff]
        %v817 = vld [vmem:[%s267 + $0xe50] sm:$0xff]
        %v818 = vld [vmem:[%s267 + $0xe58] sm:$0xff]
        %v819 = vld [vmem:[%s267 + $0xe60] sm:$0xff]
        %v820 = vld [vmem:[%s267 + $0xe68] sm:$0xff]
        %v821 = vld [vmem:[%s267 + $0xe70] sm:$0xff]
        %v822 = vld [vmem:[%s267 + $0xe78] sm:$0xff]
        %v823 = vld [vmem:[%s267 + $0xe80] sm:$0xff]
        %v824 = vld [vmem:[%s267 + $0xe88] sm:$0xff]
        %v825 = vld [vmem:[%s267 + $0xe90] sm:$0xff]
        %v826 = vld [vmem:[%s267 + $0xe98] sm:$0xff]
        %v827 = vld [vmem:[%s267 + $0xea0] sm:$0xff]
        %v828 = vld [vmem:[%s267 + $0xea8] sm:$0xff]
        %v829 = vld [vmem:[%s267 + $0xeb0] sm:$0xff]
        %v830 = vld [vmem:[%s267 + $0xeb8] sm:$0xff]
        %v831 = vld [vmem:[%s267 + $0xec0] sm:$0xff]
        %v832 = vld [vmem:[%s267 + $0xec8] sm:$0xff]
        %v833 = vld [vmem:[%s267 + $0xed0] sm:$0xff]
        %v834 = vld [vmem:[%s267 + $0xed8] sm:$0xff]
        %v835 = vld [vmem:[%s267 + $0xee0] sm:$0xff]
        %v836 = vld [vmem:[%s267 + $0xee8] sm:$0xff]
        %v837 = vld [vmem:[%s267 + $0xef0] sm:$0xff]
        %v838 = vld [vmem:[%s267 + $0xef8] sm:$0xff]
        %v839 = vld [vmem:[%s267 + $0xf00] sm:$0xff]
        %v840 = vld [vmem:[%s267 + $0xf08] sm:$0xff]
        %v841 = vld [vmem:[%s267 + $0xf10] sm:$0xff]
        %v842 = vld [vmem:[%s267 + $0xf18] sm:$0xff]
        %v843 = vld [vmem:[%s267 + $0xf20] sm:$0xff]
        %v844 = vld [vmem:[%s267 + $0xf28] sm:$0xff]
        %v845 = vld [vmem:[%s267 + $0xf30] sm:$0xff]
        %v846 = vld [vmem:[%s267 + $0xf38] sm:$0xff]
        %v847 = vld [vmem:[%s267 + $0xf40] sm:$0xff]
        %v848 = vld [vmem:[%s267 + $0xf48] sm:$0xff]
        %v849 = vld [vmem:[%s267 + $0xf50] sm:$0xff]
        %v850 = vld [vmem:[%s267 + $0xf58] sm:$0xff]
        %v851 = vld [vmem:[%s267 + $0xf60] sm:$0xff]
        %v852 = vld [vmem:[%s267 + $0xf68] sm:$0xff]
        %v853 = vld [vmem:[%s267 + $0xf70] sm:$0xff]
        %v854 = vld [vmem:[%s267 + $0xf78] sm:$0xff]
        %v855 = vld [vmem:[%s267 + $0xf80] sm:$0xff]
        %v856 = vld [vmem:[%s267 + $0xf88] sm:$0xff]
        %v857 = vld [vmem:[%s267 + $0xf90] sm:$0xff]
        %v858 = vld [vmem:[%s267 + $0xf98] sm:$0xff]
        %v859 = vld [vmem:[%s267 + $0xfa0] sm:$0xff]
        %v860 = vld [vmem:[%s267 + $0xfa8] sm:$0xff]
        %v861 = vld [vmem:[%s267 + $0xfb0] sm:$0xff]
        %v862 = vld [vmem:[%s267 + $0xfb8] sm:$0xff]
        %v863 = vld [vmem:[%s267 + $0xfc0] sm:$0xff]
        %v864 = vld [vmem:[%s267 + $0xfc8] sm:$0xff]
        %v865 = vld [vmem:[%s267 + $0xfd0] sm:$0xff]
        %v866 = vld [vmem:[%s267 + $0xfd8] sm:$0xff]
        %v867 = vld [vmem:[%s267 + $0xfe0] sm:$0xff]
        %v868 = vld [vmem:[%s267 + $0xfe8] sm:$0xff]
        %v869 = vld [vmem:[%s267 + $0xff0] sm:$0xff]
        %v870 = vld [vmem:[%s267 + $0xff8] sm:$0xff]
        %v871 = vld [vmem:[%s267 + $0x1000] sm:$0xff]
        %v872 = vld [vmem:[%s267 + $0x1008] sm:$0xff]
        %v873 = vld [vmem:[%s267 + $0x1010] sm:$0xff]
        %v874 = vld [vmem:[%s267 + $0x1018] sm:$0xff]
        %v875 = vld [vmem:[%s267 + $0x1020] sm:$0xff]
        %v876 = vld [vmem:[%s267 + $0x1028] sm:$0xff]
        %v877 = vld [vmem:[%s267 + $0x1030] sm:$0xff]
        %v878 = vld [vmem:[%s267 + $0x1038] sm:$0xff]
        %v879 = vld [vmem:[%s267 + $0x1040] sm:$0xff]
        %v880 = vld [vmem:[%s267 + $0x1048] sm:$0xff]
        %v881 = vld [vmem:[%s267 + $0x1050] sm:$0xff]
        %v882 = vld [vmem:[%s267 + $0x1058] sm:$0xff]
        %v883 = vld [vmem:[%s267 + $0x1060] sm:$0xff]
        %v884 = vld [vmem:[%s267 + $0x1068] sm:$0xff]
        %v885 = vld [vmem:[%s267 + $0x1070] sm:$0xff]
        %v886 = vld [vmem:[%s267 + $0x1078] sm:$0xff]
        %v887 = vld [vmem:[%s267 + $0x1080] sm:$0xff]
        %v888 = vld [vmem:[%s267 + $0x1088] sm:$0xff]
        %v889 = vld [vmem:[%s267 + $0x1090] sm:$0xff]
        %v890 = vld [vmem:[%s267 + $0x1098] sm:$0xff]
        %v891 = vld [vmem:[%s267 + $0x10a0] sm:$0xff]
        %v892 = vld [vmem:[%s267 + $0x10a8] sm:$0xff]
        %v893 = vld [vmem:[%s267 + $0x10b0] sm:$0xff]
        %v894 = vld [vmem:[%s267 + $0x10b8] sm:$0xff]
        %v895 = vld [vmem:[%s267 + $0x10c0] sm:$0xff]
        %v896 = vld [vmem:[%s267 + $0x10c8] sm:$0xff]
        %v897 = vld [vmem:[%s267 + $0x10d0] sm:$0xff]
        %v898 = vld [vmem:[%s267 + $0x10d8] sm:$0xff]
        %v899 = vld [vmem:[%s267 + $0x10e0] sm:$0xff]
        %v900 = vld [vmem:[%s267 + $0x10e8] sm:$0xff]
        %v901 = vld [vmem:[%s267 + $0x10f0] sm:$0xff]
        %v902 = vld [vmem:[%s267 + $0x10f8] sm:$0xff]
        %v903 = vld [vmem:[%s267 + $0x1100] sm:$0xff]
        %v904 = vld [vmem:[%s267 + $0x1108] sm:$0xff]
        %v905 = vld [vmem:[%s267 + $0x1110] sm:$0xff]
        %v906 = vld [vmem:[%s267 + $0x1118] sm:$0xff]
        %v907 = vld [vmem:[%s267 + $0x1120] sm:$0xff]
        %v908 = vld [vmem:[%s267 + $0x1128] sm:$0xff]
        %v909 = vld [vmem:[%s267 + $0x1130] sm:$0xff]
        %v910 = vld [vmem:[%s267 + $0x1138] sm:$0xff]
        %v911 = vld [vmem:[%s267 + $0x1140] sm:$0xff]
        %v912 = vld [vmem:[%s267 + $0x1148] sm:$0xff]
        %v913 = vld [vmem:[%s267 + $0x1150] sm:$0xff]
        %v914 = vld [vmem:[%s267 + $0x1158] sm:$0xff]
        %v915 = vld [vmem:[%s267 + $0x1160] sm:$0xff]
        %v916 = vld [vmem:[%s267 + $0x1168] sm:$0xff]
        %v917 = vld [vmem:[%s267 + $0x1170] sm:$0xff]
        %v918 = vld [vmem:[%s267 + $0x1178] sm:$0xff]
        %v919 = vld [vmem:[%s267 + $0x1180] sm:$0xff]
        %v920 = vld [vmem:[%s267 + $0x1188] sm:$0xff]
        %v921 = vld [vmem:[%s267 + $0x1190] sm:$0xff]
        %v922 = vld [vmem:[%s267 + $0x1198] sm:$0xff]
        %v923 = vld [vmem:[%s267 + $0x11a0] sm:$0xff]
        %v924 = vld [vmem:[%s267 + $0x11a8] sm:$0xff]
        %v925 = vld [vmem:[%s267 + $0x11b0] sm:$0xff]
        %v926 = vld [vmem:[%s267 + $0x11b8] sm:$0xff]
        %v927 = vld [vmem:[%s267 + $0x11c0] sm:$0xff]
        %v928 = vld [vmem:[%s267 + $0x11c8] sm:$0xff]
        %v929 = vld [vmem:[%s267 + $0x11d0] sm:$0xff]
        %v930 = vld [vmem:[%s267 + $0x11d8] sm:$0xff]
        %v931 = vld [vmem:[%s267 + $0x11e0] sm:$0xff]
        %v932 = vld [vmem:[%s267 + $0x11e8] sm:$0xff]
        %v933 = vld [vmem:[%s267 + $0x11f0] sm:$0xff]
        %v934 = vld [vmem:[%s267 + $0x11f8] sm:$0xff]
        %v935 = vld [vmem:[%s276] sm:$0xff]
        %v936 = vld [vmem:[%s276 + $0x8] sm:$0xff]
        %v937 = vld [vmem:[%s276 + $0x10] sm:$0x3]
        %v941 = vlaneseq
        %v942 = vshrl.u32 %v941, 7
        %v943 = vsub.s32 0, %v942
        %v944 = vrot.slane %v935, %v943
        %v945 = vlaneseq
        %v946 = vshrl.u32 %v945, 7
        %v947 = vsub.s32 1, %v946
        %v948 = vrot.slane %v935, %v947
        %v949 = vlaneseq
        %v950 = vshrl.u32 %v949, 7
        %v951 = vsub.s32 2, %v950
        %v952 = vrot.slane %v935, %v951
        %v953 = vlaneseq
        %v954 = vshrl.u32 %v953, 7
        %v955 = vsub.s32 3, %v954
        %v956 = vrot.slane %v935, %v955
        %v957 = vlaneseq
        %v958 = vshrl.u32 %v957, 7
        %v959 = vsub.s32 4, %v958
        %v960 = vrot.slane %v935, %v959
        %v961 = vlaneseq
        %v962 = vshrl.u32 %v961, 7
        %v963 = vsub.s32 5, %v962
        %v964 = vrot.slane %v935, %v963
        %v965 = vlaneseq
        %v966 = vshrl.u32 %v965, 7
        %v967 = vsub.s32 6, %v966
        %v968 = vrot.slane %v935, %v967
        %v969 = vlaneseq
        %v970 = vshrl.u32 %v969, 7
        %v971 = vsub.s32 7, %v970
        %v972 = vrot.slane %v935, %v971
        %v973 = vlaneseq
        %v974 = vshrl.u32 %v973, 7
        %v975 = vsub.s32 0, %v974
        %v976 = vrot.slane %v936, %v975
        %v977 = vlaneseq
        %v978 = vshrl.u32 %v977, 7
        %v979 = vsub.s32 1, %v978
        %v980 = vrot.slane %v936, %v979
        %v981 = vlaneseq
        %v982 = vshrl.u32 %v981, 7
        %v983 = vsub.s32 2, %v982
        %v984 = vrot.slane %v936, %v983
        %v985 = vlaneseq
        %v986 = vshrl.u32 %v985, 7
        %v987 = vsub.s32 3, %v986
        %v988 = vrot.slane %v936, %v987
        %v989 = vlaneseq
        %v990 = vshrl.u32 %v989, 7
        %v991 = vsub.s32 4, %v990
        %v992 = vrot.slane %v936, %v991
        %v993 = vlaneseq
        %v994 = vshrl.u32 %v993, 7
        %v995 = vsub.s32 5, %v994
        %v996 = vrot.slane %v936, %v995
        %v997 = vlaneseq
        %v998 = vshrl.u32 %v997, 7
        %v999 = vsub.s32 6, %v998
        %v1000 = vrot.slane %v936, %v999
        %v1001 = vlaneseq
        %v1002 = vshrl.u32 %v1001, 7
        %v1003 = vsub.s32 7, %v1002
        %v1004 = vrot.slane %v936, %v1003
        %v1005 = vlaneseq
        %v1006 = vshrl.u32 %v1005, 7
        %v1007 = vsub.s32 0, %v1006
        %v1008 = vrot.slane %v937, %v1007
        %v1009 = vlaneseq
        %v1010 = vshrl.u32 %v1009, 7
        %v1011 = vsub.s32 1, %v1010
        %v1012 = vrot.slane %v937, %v1011
        %v1607 = vunpack.c.l.b16 %v359
        %v1608 = vunpack.c.h.b16 %v359
        %v1609 = vunpack.c.l.b16 %v360
        %v1610 = vunpack.c.h.b16 %v360
        %v1611 = vunpack.c.l.b16 %v361
        %v1612 = vunpack.c.h.b16 %v361
        %v1613 = vunpack.c.l.b16 %v362
        %v1614 = vunpack.c.h.b16 %v362
        %v1615 = vunpack.c.l.b16 %v363
        %v1616 = vunpack.c.h.b16 %v363
        %v1617 = vunpack.c.l.b16 %v364
        %v1618 = vunpack.c.h.b16 %v364
        %v1619 = vunpack.c.l.b16 %v365
        %v1620 = vunpack.c.h.b16 %v365
        %v1621 = vunpack.c.l.b16 %v366
        %v1622 = vunpack.c.h.b16 %v366
        %v1623 = vunpack.c.l.b16 %v367
        %v1624 = vunpack.c.h.b16 %v367
        %v1625 = vunpack.c.l.b16 %v368
        %v1626 = vunpack.c.h.b16 %v368
        %v1627 = vunpack.c.l.b16 %v369
        %v1628 = vunpack.c.h.b16 %v369
        %v1629 = vunpack.c.l.b16 %v370
        %v1630 = vunpack.c.h.b16 %v370
        %v1631 = vunpack.c.l.b16 %v371
        %v1632 = vunpack.c.h.b16 %v371
        %v1633 = vunpack.c.l.b16 %v372
        %v1634 = vunpack.c.h.b16 %v372
        %v1635 = vunpack.c.l.b16 %v373
        %v1636 = vunpack.c.h.b16 %v373
        %v1637 = vunpack.c.l.b16 %v374
        %v1638 = vunpack.c.h.b16 %v374
        %v1639 = vunpack.c.l.b16 %v375
        %v1640 = vunpack.c.h.b16 %v375
        %v1641 = vunpack.c.l.b16 %v376
        %v1642 = vunpack.c.h.b16 %v376
        %v1643 = vunpack.c.l.b16 %v377
        %v1644 = vunpack.c.h.b16 %v377
        %v1645 = vunpack.c.l.b16 %v378
        %v1646 = vunpack.c.h.b16 %v378
        %v1647 = vunpack.c.l.b16 %v379
        %v1648 = vunpack.c.h.b16 %v379
        %v1649 = vunpack.c.l.b16 %v380
        %v1650 = vunpack.c.h.b16 %v380
        %v1651 = vunpack.c.l.b16 %v381
        %v1652 = vunpack.c.h.b16 %v381
        %v1653 = vunpack.c.l.b16 %v382
        %v1654 = vunpack.c.h.b16 %v382
        %v1655 = vunpack.c.l.b16 %v383
        %v1656 = vunpack.c.h.b16 %v383
        %v1657 = vunpack.c.l.b16 %v384
        %v1658 = vunpack.c.h.b16 %v384
        %v1659 = vunpack.c.l.b16 %v385
        %v1660 = vunpack.c.h.b16 %v385
        %v1661 = vunpack.c.l.b16 %v386
        %v1662 = vunpack.c.h.b16 %v386
        %v1663 = vunpack.c.l.b16 %v387
        %v1664 = vunpack.c.h.b16 %v387
        %v1665 = vunpack.c.l.b16 %v388
        %v1666 = vunpack.c.h.b16 %v388
        %v1667 = vunpack.c.l.b16 %v389
        %v1668 = vunpack.c.h.b16 %v389
        %v1669 = vunpack.c.l.b16 %v390
        %v1670 = vunpack.c.h.b16 %v390
        %v1671 = vunpack.c.l.b16 %v391
        %v1672 = vunpack.c.h.b16 %v391
        %v1673 = vunpack.c.l.b16 %v392
        %v1674 = vunpack.c.h.b16 %v392
        %v1675 = vunpack.c.l.b16 %v393
        %v1676 = vunpack.c.h.b16 %v393
        %v1677 = vunpack.c.l.b16 %v394
        %v1678 = vunpack.c.h.b16 %v394
        %v1679 = vunpack.c.l.b16 %v395
        %v1680 = vunpack.c.h.b16 %v395
        %v1681 = vunpack.c.l.b16 %v396
        %v1682 = vunpack.c.h.b16 %v396
        %v1683 = vunpack.c.l.b16 %v397
        %v1684 = vunpack.c.h.b16 %v397
        %v1685 = vunpack.c.l.b16 %v398
        %v1686 = vunpack.c.h.b16 %v398
        %v1687 = vunpack.c.l.b16 %v399
        %v1688 = vunpack.c.h.b16 %v399
        %v1689 = vunpack.c.l.b16 %v400
        %v1690 = vunpack.c.h.b16 %v400
        %v1691 = vunpack.c.l.b16 %v401
        %v1692 = vunpack.c.h.b16 %v401
        %v1693 = vunpack.c.l.b16 %v402
        %v1694 = vunpack.c.h.b16 %v402
        %v1695 = vunpack.c.l.b16 %v403
        %v1696 = vunpack.c.h.b16 %v403
        %v1697 = vunpack.c.l.b16 %v404
        %v1698 = vunpack.c.h.b16 %v404
        %v1699 = vunpack.c.l.b16 %v405
        %v1700 = vunpack.c.h.b16 %v405
        %v1701 = vunpack.c.l.b16 %v406
        %v1702 = vunpack.c.h.b16 %v406
        %v1703 = vunpack.c.l.b16 %v407
        %v1704 = vunpack.c.h.b16 %v407
        %v1705 = vunpack.c.l.b16 %v408
        %v1706 = vunpack.c.h.b16 %v408
        %v1707 = vunpack.c.l.b16 %v409
        %v1708 = vunpack.c.h.b16 %v409
        %v1709 = vunpack.c.l.b16 %v410
        %v1710 = vunpack.c.h.b16 %v410
        %v1711 = vunpack.c.l.b16 %v411
        %v1712 = vunpack.c.h.b16 %v411
        %v1713 = vunpack.c.l.b16 %v412
        %v1714 = vunpack.c.h.b16 %v412
        %v1715 = vunpack.c.l.b16 %v413
        %v1716 = vunpack.c.h.b16 %v413
        %v1717 = vunpack.c.l.b16 %v414
        %v1718 = vunpack.c.h.b16 %v414
        %v1719 = vunpack.c.l.b16 %v415
        %v1720 = vunpack.c.h.b16 %v415
        %v1721 = vunpack.c.l.b16 %v416
        %v1722 = vunpack.c.h.b16 %v416
        %v1723 = vunpack.c.l.b16 %v417
        %v1724 = vunpack.c.h.b16 %v417
        %v1725 = vunpack.c.l.b16 %v418
        %v1726 = vunpack.c.h.b16 %v418
        %v1727 = vunpack.c.l.b16 %v419
        %v1728 = vunpack.c.h.b16 %v419
        %v1729 = vunpack.c.l.b16 %v420
        %v1730 = vunpack.c.h.b16 %v420
        %v1731 = vunpack.c.l.b16 %v421
        %v1732 = vunpack.c.h.b16 %v421
        %v1733 = vunpack.c.l.b16 %v422
        %v1734 = vunpack.c.h.b16 %v422
        %v1735 = vunpack.c.l.b16 %v423
        %v1736 = vunpack.c.h.b16 %v423
        %v1737 = vunpack.c.l.b16 %v424
        %v1738 = vunpack.c.h.b16 %v424
        %v1739 = vunpack.c.l.b16 %v425
        %v1740 = vunpack.c.h.b16 %v425
        %v1741 = vunpack.c.l.b16 %v426
        %v1742 = vunpack.c.h.b16 %v426
        %v1743 = vunpack.c.l.b16 %v427
        %v1744 = vunpack.c.h.b16 %v427
        %v1745 = vunpack.c.l.b16 %v428
        %v1746 = vunpack.c.h.b16 %v428
        %v1747 = vunpack.c.l.b16 %v429
        %v1748 = vunpack.c.h.b16 %v429
        %v1749 = vunpack.c.l.b16 %v430
        %v1750 = vunpack.c.h.b16 %v430
        %v1751 = vunpack.c.l.b16 %v431
        %v1752 = vunpack.c.h.b16 %v431
        %v1753 = vunpack.c.l.b16 %v432
        %v1754 = vunpack.c.h.b16 %v432
        %v1755 = vunpack.c.l.b16 %v433
        %v1756 = vunpack.c.h.b16 %v433
        %v1757 = vunpack.c.l.b16 %v434
        %v1758 = vunpack.c.h.b16 %v434
        %v1759 = vunpack.c.l.b16 %v435
        %v1760 = vunpack.c.h.b16 %v435
        %v1761 = vunpack.c.l.b16 %v436
        %v1762 = vunpack.c.h.b16 %v436
        %v1763 = vunpack.c.l.b16 %v437
        %v1764 = vunpack.c.h.b16 %v437
        %v1765 = vunpack.c.l.b16 %v438
        %v1766 = vunpack.c.h.b16 %v438
        %v1767 = vunpack.c.l.b16 %v439
        %v1768 = vunpack.c.h.b16 %v439
        %v1769 = vunpack.c.l.b16 %v440
        %v1770 = vunpack.c.h.b16 %v440
        %v1771 = vunpack.c.l.b16 %v441
        %v1772 = vunpack.c.h.b16 %v441
        %v1773 = vunpack.c.l.b16 %v442
        %v1774 = vunpack.c.h.b16 %v442
        %v1775 = vunpack.c.l.b16 %v443
        %v1776 = vunpack.c.h.b16 %v443
        %v1777 = vunpack.c.l.b16 %v444
        %v1778 = vunpack.c.h.b16 %v444
        %v1779 = vunpack.c.l.b16 %v445
        %v1780 = vunpack.c.h.b16 %v445
        %v1781 = vunpack.c.l.b16 %v446
        %v1782 = vunpack.c.h.b16 %v446
        %v1783 = vunpack.c.l.b16 %v447
        %v1784 = vunpack.c.h.b16 %v447
        %v1785 = vunpack.c.l.b16 %v448
        %v1786 = vunpack.c.h.b16 %v448
        %v1787 = vunpack.c.l.b16 %v449
        %v1788 = vunpack.c.h.b16 %v449
        %v1789 = vunpack.c.l.b16 %v450
        %v1790 = vunpack.c.h.b16 %v450
        %v1791 = vunpack.c.l.b16 %v451
        %v1792 = vunpack.c.h.b16 %v451
        %v1793 = vunpack.c.l.b16 %v452
        %v1794 = vunpack.c.h.b16 %v452
        %v1795 = vunpack.c.l.b16 %v453
        %v1796 = vunpack.c.h.b16 %v453
        %v1797 = vunpack.c.l.b16 %v454
        %v1798 = vunpack.c.h.b16 %v454
        %v1799 = vunpack.c.l.b16 %v455
        %v1800 = vunpack.c.h.b16 %v455
        %v1801 = vunpack.c.l.b16 %v456
        %v1802 = vunpack.c.h.b16 %v456
        %v1803 = vunpack.c.l.b16 %v457
        %v1804 = vunpack.c.h.b16 %v457
        %v1805 = vunpack.c.l.b16 %v458
        %v1806 = vunpack.c.h.b16 %v458
        %v1807 = vunpack.c.l.b16 %v459
        %v1808 = vunpack.c.h.b16 %v459
        %v1809 = vunpack.c.l.b16 %v460
        %v1810 = vunpack.c.h.b16 %v460
        %v1811 = vunpack.c.l.b16 %v461
        %v1812 = vunpack.c.h.b16 %v461
        %v1813 = vunpack.c.l.b16 %v462
        %v1814 = vunpack.c.h.b16 %v462
        %v1815 = vunpack.c.l.b16 %v463
        %v1816 = vunpack.c.h.b16 %v463
        %v1817 = vunpack.c.l.b16 %v464
        %v1818 = vunpack.c.h.b16 %v464
        %v1819 = vunpack.c.l.b16 %v465
        %v1820 = vunpack.c.h.b16 %v465
        %v1821 = vunpack.c.l.b16 %v466
        %v1822 = vunpack.c.h.b16 %v466
        %v1823 = vunpack.c.l.b16 %v467
        %v1824 = vunpack.c.h.b16 %v467
        %v1825 = vunpack.c.l.b16 %v468
        %v1826 = vunpack.c.h.b16 %v468
        %v1827 = vunpack.c.l.b16 %v469
        %v1828 = vunpack.c.h.b16 %v469
        %v1829 = vunpack.c.l.b16 %v470
        %v1830 = vunpack.c.h.b16 %v470
        %v1831 = vunpack.c.l.b16 %v471
        %v1832 = vunpack.c.h.b16 %v471
        %v1833 = vunpack.c.l.b16 %v472
        %v1834 = vunpack.c.h.b16 %v472
        %v1835 = vunpack.c.l.b16 %v473
        %v1836 = vunpack.c.h.b16 %v473
        %v1837 = vunpack.c.l.b16 %v474
        %v1838 = vunpack.c.h.b16 %v474
        %v1839 = vunpack.c.l.b16 %v475
        %v1840 = vunpack.c.h.b16 %v475
        %v1841 = vunpack.c.l.b16 %v476
        %v1842 = vunpack.c.h.b16 %v476
        %v1843 = vunpack.c.l.b16 %v477
        %v1844 = vunpack.c.h.b16 %v477
        %v1845 = vunpack.c.l.b16 %v478
        %v1846 = vunpack.c.h.b16 %v478
        %v1847 = vunpack.c.l.b16 %v479
        %v1848 = vunpack.c.h.b16 %v479
        %v1849 = vunpack.c.l.b16 %v480
        %v1850 = vunpack.c.h.b16 %v480
        %v1851 = vunpack.c.l.b16 %v481
        %v1852 = vunpack.c.h.b16 %v481
        %v1853 = vunpack.c.l.b16 %v482
        %v1854 = vunpack.c.h.b16 %v482
        %v1855 = vunpack.c.l.b16 %v483
        %v1856 = vunpack.c.h.b16 %v483
        %v1857 = vunpack.c.l.b16 %v484
        %v1858 = vunpack.c.h.b16 %v484
        %v1859 = vunpack.c.l.b16 %v485
        %v1860 = vunpack.c.h.b16 %v485
        %v1861 = vunpack.c.l.b16 %v486
        %v1862 = vunpack.c.h.b16 %v486
        %v1863 = vunpack.c.l.b16 %v487
        %v1864 = vunpack.c.h.b16 %v487
        %v1865 = vunpack.c.l.b16 %v488
        %v1866 = vunpack.c.h.b16 %v488
        %v1867 = vunpack.c.l.b16 %v489
        %v1868 = vunpack.c.h.b16 %v489
        %v1869 = vunpack.c.l.b16 %v490
        %v1870 = vunpack.c.h.b16 %v490
        %v1871 = vunpack.c.l.b16 %v491
        %v1872 = vunpack.c.h.b16 %v491
        %v1873 = vunpack.c.l.b16 %v492
        %v1874 = vunpack.c.h.b16 %v492
        %v1875 = vunpack.c.l.b16 %v493
        %v1876 = vunpack.c.h.b16 %v493
        %v1877 = vunpack.c.l.b16 %v494
        %v1878 = vunpack.c.h.b16 %v494
        %v1879 = vunpack.c.l.b16 %v495
        %v1880 = vunpack.c.h.b16 %v495
        %v1881 = vunpack.c.l.b16 %v496
        %v1882 = vunpack.c.h.b16 %v496
        %v1883 = vunpack.c.l.b16 %v497
        %v1884 = vunpack.c.h.b16 %v497
        %v1885 = vunpack.c.l.b16 %v498
        %v1886 = vunpack.c.h.b16 %v498
        %v1887 = vunpack.c.l.b16 %v499
        %v1888 = vunpack.c.h.b16 %v499
        %v1889 = vunpack.c.l.b16 %v500
        %v1890 = vunpack.c.h.b16 %v500
        %v1891 = vunpack.c.l.b16 %v501
        %v1892 = vunpack.c.h.b16 %v501
        %v1893 = vunpack.c.l.b16 %v502
        %v1894 = vunpack.c.h.b16 %v502
        %v1895 = vunpack.c.l.b16 %v503
        %v1896 = vunpack.c.h.b16 %v503
        %v1897 = vunpack.c.l.b16 %v504
        %v1898 = vunpack.c.h.b16 %v504
        %v1899 = vunpack.c.l.b16 %v505
        %v1900 = vunpack.c.h.b16 %v505
        %v1901 = vunpack.c.l.b16 %v506
        %v1902 = vunpack.c.h.b16 %v506
        %v1903 = vunpack.c.l.b16 %v507
        %v1904 = vunpack.c.h.b16 %v507
        %v1905 = vunpack.c.l.b16 %v508
        %v1906 = vunpack.c.h.b16 %v508
        %v1907 = vunpack.c.l.b16 %v509
        %v1908 = vunpack.c.h.b16 %v509
        %v1909 = vunpack.c.l.b16 %v510
        %v1910 = vunpack.c.h.b16 %v510
        %v1911 = vunpack.c.l.b16 %v511
        %v1912 = vunpack.c.h.b16 %v511
        %v1913 = vunpack.c.l.b16 %v512
        %v1914 = vunpack.c.h.b16 %v512
        %v1915 = vunpack.c.l.b16 %v513
        %v1916 = vunpack.c.h.b16 %v513
        %v1917 = vunpack.c.l.b16 %v514
        %v1918 = vunpack.c.h.b16 %v514
        %v1919 = vunpack.c.l.b16 %v515
        %v1920 = vunpack.c.h.b16 %v515
        %v1921 = vunpack.c.l.b16 %v516
        %v1922 = vunpack.c.h.b16 %v516
        %v1923 = vunpack.c.l.b16 %v517
        %v1924 = vunpack.c.h.b16 %v517
        %v1925 = vunpack.c.l.b16 %v518
        %v1926 = vunpack.c.h.b16 %v518
        %v1927 = vunpack.c.l.b16 %v519
        %v1928 = vunpack.c.h.b16 %v519
        %v1929 = vunpack.c.l.b16 %v520
        %v1930 = vunpack.c.h.b16 %v520
        %v1931 = vunpack.c.l.b16 %v521
        %v1932 = vunpack.c.h.b16 %v521
        %v1933 = vunpack.c.l.b16 %v522
        %v1934 = vunpack.c.h.b16 %v522
        %v1935 = vunpack.c.l.b16 %v523
        %v1936 = vunpack.c.h.b16 %v523
        %v1937 = vunpack.c.l.b16 %v524
        %v1938 = vunpack.c.h.b16 %v524
        %v1939 = vunpack.c.l.b16 %v525
        %v1940 = vunpack.c.h.b16 %v525
        %v1941 = vunpack.c.l.b16 %v526
        %v1942 = vunpack.c.h.b16 %v526
        %v1943 = vunpack.c.l.b16 %v527
        %v1944 = vunpack.c.h.b16 %v527
        %v1945 = vunpack.c.l.b16 %v528
        %v1946 = vunpack.c.h.b16 %v528
        %v1947 = vunpack.c.l.b16 %v529
        %v1948 = vunpack.c.h.b16 %v529
        %v1949 = vunpack.c.l.b16 %v530
        %v1950 = vunpack.c.h.b16 %v530
        %v1951 = vunpack.c.l.b16 %v531
        %v1952 = vunpack.c.h.b16 %v531
        %v1953 = vunpack.c.l.b16 %v532
        %v1954 = vunpack.c.h.b16 %v532
        %v1955 = vunpack.c.l.b16 %v533
        %v1956 = vunpack.c.h.b16 %v533
        %v1957 = vunpack.c.l.b16 %v534
        %v1958 = vunpack.c.h.b16 %v534
        %v1959 = vunpack.c.l.b16 %v535
        %v1960 = vunpack.c.h.b16 %v535
        %v1961 = vunpack.c.l.b16 %v536
        %v1962 = vunpack.c.h.b16 %v536
        %v1963 = vunpack.c.l.b16 %v537
        %v1964 = vunpack.c.h.b16 %v537
        %v1965 = vunpack.c.l.b16 %v538
        %v1966 = vunpack.c.h.b16 %v538
        %v1967 = vunpack.c.l.b16 %v539
        %v1968 = vunpack.c.h.b16 %v539
        %v1969 = vunpack.c.l.b16 %v540
        %v1970 = vunpack.c.h.b16 %v540
        %v1971 = vunpack.c.l.b16 %v541
        %v1972 = vunpack.c.h.b16 %v541
        %v1973 = vunpack.c.l.b16 %v542
        %v1974 = vunpack.c.h.b16 %v542
        %v1975 = vunpack.c.l.b16 %v543
        %v1976 = vunpack.c.h.b16 %v543
        %v1977 = vunpack.c.l.b16 %v544
        %v1978 = vunpack.c.h.b16 %v544
        %v1979 = vunpack.c.l.b16 %v545
        %v1980 = vunpack.c.h.b16 %v545
        %v1981 = vunpack.c.l.b16 %v546
        %v1982 = vunpack.c.h.b16 %v546
        %v1983 = vunpack.c.l.b16 %v547
        %v1984 = vunpack.c.h.b16 %v547
        %v1985 = vunpack.c.l.b16 %v548
        %v1986 = vunpack.c.h.b16 %v548
        %v1987 = vunpack.c.l.b16 %v549
        %v1988 = vunpack.c.h.b16 %v549
        %v1989 = vunpack.c.l.b16 %v550
        %v1990 = vunpack.c.h.b16 %v550
        %v1991 = vunpack.c.l.b16 %v551
        %v1992 = vunpack.c.h.b16 %v551
        %v1993 = vunpack.c.l.b16 %v552
        %v1994 = vunpack.c.h.b16 %v552
        %v1995 = vunpack.c.l.b16 %v553
        %v1996 = vunpack.c.h.b16 %v553
        %v1997 = vunpack.c.l.b16 %v554
        %v1998 = vunpack.c.h.b16 %v554
        %v1999 = vunpack.c.l.b16 %v555
        %v2000 = vunpack.c.h.b16 %v555
        %v2001 = vunpack.c.l.b16 %v556
        %v2002 = vunpack.c.h.b16 %v556
        %v2003 = vunpack.c.l.b16 %v557
        %v2004 = vunpack.c.h.b16 %v557
        %v2005 = vunpack.c.l.b16 %v558
        %v2006 = vunpack.c.h.b16 %v558
        %v2007 = vunpack.c.l.b16 %v559
        %v2008 = vunpack.c.h.b16 %v559
        %v2009 = vunpack.c.l.b16 %v560
        %v2010 = vunpack.c.h.b16 %v560
        %v2011 = vunpack.c.l.b16 %v561
        %v2012 = vunpack.c.h.b16 %v561
        %v2013 = vunpack.c.l.b16 %v562
        %v2014 = vunpack.c.h.b16 %v562
        %v2015 = vunpack.c.l.b16 %v563
        %v2016 = vunpack.c.h.b16 %v563
        %v2017 = vunpack.c.l.b16 %v564
        %v2018 = vunpack.c.h.b16 %v564
        %v2019 = vunpack.c.l.b16 %v565
        %v2020 = vunpack.c.h.b16 %v565
        %v2021 = vunpack.c.l.b16 %v566
        %v2022 = vunpack.c.h.b16 %v566
        %v2023 = vunpack.c.l.b16 %v567
        %v2024 = vunpack.c.h.b16 %v567
        %v2025 = vunpack.c.l.b16 %v568
        %v2026 = vunpack.c.h.b16 %v568
        %v2027 = vunpack.c.l.b16 %v569
        %v2028 = vunpack.c.h.b16 %v569
        %v2029 = vunpack.c.l.b16 %v570
        %v2030 = vunpack.c.h.b16 %v570
        %v2031 = vunpack.c.l.b16 %v571
        %v2032 = vunpack.c.h.b16 %v571
        %v2033 = vunpack.c.l.b16 %v572
        %v2034 = vunpack.c.h.b16 %v572
        %v2035 = vunpack.c.l.b16 %v573
        %v2036 = vunpack.c.h.b16 %v573
        %v2037 = vunpack.c.l.b16 %v574
        %v2038 = vunpack.c.h.b16 %v574
        %v2039 = vunpack.c.l.b16 %v575
        %v2040 = vunpack.c.h.b16 %v575
        %v2041 = vunpack.c.l.b16 %v576
        %v2042 = vunpack.c.h.b16 %v576
        %v2043 = vunpack.c.l.b16 %v577
        %v2044 = vunpack.c.h.b16 %v577
        %v2045 = vunpack.c.l.b16 %v578
        %v2046 = vunpack.c.h.b16 %v578
        %v2047 = vunpack.c.l.b16 %v579
        %v2048 = vunpack.c.h.b16 %v579
        %v2049 = vunpack.c.l.b16 %v580
        %v2050 = vunpack.c.h.b16 %v580
        %v2051 = vunpack.c.l.b16 %v581
        %v2052 = vunpack.c.h.b16 %v581
        %v2053 = vunpack.c.l.b16 %v582
        %v2054 = vunpack.c.h.b16 %v582
        %v2055 = vunpack.c.l.b16 %v583
        %v2056 = vunpack.c.h.b16 %v583
        %v2057 = vunpack.c.l.b16 %v584
        %v2058 = vunpack.c.h.b16 %v584
        %v2059 = vunpack.c.l.b16 %v585
        %v2060 = vunpack.c.h.b16 %v585
        %v2061 = vunpack.c.l.b16 %v586
        %v2062 = vunpack.c.h.b16 %v586
        %v2063 = vunpack.c.l.b16 %v587
        %v2064 = vunpack.c.h.b16 %v587
        %v2065 = vunpack.c.l.b16 %v588
        %v2066 = vunpack.c.h.b16 %v588
        %v2067 = vunpack.c.l.b16 %v589
        %v2068 = vunpack.c.h.b16 %v589
        %v2069 = vunpack.c.l.b16 %v590
        %v2070 = vunpack.c.h.b16 %v590
        %v2071 = vunpack.c.l.b16 %v591
        %v2072 = vunpack.c.h.b16 %v591
        %v2073 = vunpack.c.l.b16 %v592
        %v2074 = vunpack.c.h.b16 %v592
        %v2075 = vunpack.c.l.b16 %v593
        %v2076 = vunpack.c.h.b16 %v593
        %v2077 = vunpack.c.l.b16 %v594
        %v2078 = vunpack.c.h.b16 %v594
        %v2079 = vunpack.c.l.b16 %v595
        %v2080 = vunpack.c.h.b16 %v595
        %v2081 = vunpack.c.l.b16 %v596
        %v2082 = vunpack.c.h.b16 %v596
        %v2083 = vunpack.c.l.b16 %v597
        %v2084 = vunpack.c.h.b16 %v597
        %v2085 = vunpack.c.l.b16 %v598
        %v2086 = vunpack.c.h.b16 %v598
        %v2087 = vunpack.c.l.b16 %v599
        %v2088 = vunpack.c.h.b16 %v599
        %v2089 = vunpack.c.l.b16 %v600
        %v2090 = vunpack.c.h.b16 %v600
        %v2091 = vunpack.c.l.b16 %v601
        %v2092 = vunpack.c.h.b16 %v601
        %v2093 = vunpack.c.l.b16 %v602
        %v2094 = vunpack.c.h.b16 %v602
        %v2095 = vunpack.c.l.b16 %v603
        %v2096 = vunpack.c.h.b16 %v603
        %v2097 = vunpack.c.l.b16 %v604
        %v2098 = vunpack.c.h.b16 %v604
        %v2099 = vunpack.c.l.b16 %v605
        %v2100 = vunpack.c.h.b16 %v605
        %v2101 = vunpack.c.l.b16 %v606
        %v2102 = vunpack.c.h.b16 %v606
        %v2103 = vunpack.c.l.b16 %v607
        %v2104 = vunpack.c.h.b16 %v607
        %v2105 = vunpack.c.l.b16 %v608
        %v2106 = vunpack.c.h.b16 %v608
        %v2107 = vunpack.c.l.b16 %v609
        %v2108 = vunpack.c.h.b16 %v609
        %v2109 = vunpack.c.l.b16 %v610
        %v2110 = vunpack.c.h.b16 %v610
        %v2111 = vunpack.c.l.b16 %v611
        %v2112 = vunpack.c.h.b16 %v611
        %v2113 = vunpack.c.l.b16 %v612
        %v2114 = vunpack.c.h.b16 %v612
        %v2115 = vunpack.c.l.b16 %v613
        %v2116 = vunpack.c.h.b16 %v613
        %v2117 = vunpack.c.l.b16 %v614
        %v2118 = vunpack.c.h.b16 %v614
        %v2119 = vunpack.c.l.b16 %v615
        %v2120 = vunpack.c.h.b16 %v615
        %v2121 = vunpack.c.l.b16 %v616
        %v2122 = vunpack.c.h.b16 %v616
        %v2123 = vunpack.c.l.b16 %v617
        %v2124 = vunpack.c.h.b16 %v617
        %v2125 = vunpack.c.l.b16 %v618
        %v2126 = vunpack.c.h.b16 %v618
        %v2127 = vunpack.c.l.b16 %v619
        %v2128 = vunpack.c.h.b16 %v619
        %v2129 = vunpack.c.l.b16 %v620
        %v2130 = vunpack.c.h.b16 %v620
        %v2131 = vunpack.c.l.b16 %v621
        %v2132 = vunpack.c.h.b16 %v621
        %v2133 = vunpack.c.l.b16 %v622
        %v2134 = vunpack.c.h.b16 %v622
        %v2135 = vunpack.c.l.b16 %v623
        %v2136 = vunpack.c.h.b16 %v623
        %v2137 = vunpack.c.l.b16 %v624
        %v2138 = vunpack.c.h.b16 %v624
        %v2139 = vunpack.c.l.b16 %v625
        %v2140 = vunpack.c.h.b16 %v625
        %v2141 = vunpack.c.l.b16 %v626
        %v2142 = vunpack.c.h.b16 %v626
        %v2143 = vunpack.c.l.b16 %v627
        %v2144 = vunpack.c.h.b16 %v627
        %v2145 = vunpack.c.l.b16 %v628
        %v2146 = vunpack.c.h.b16 %v628
        %v2147 = vunpack.c.l.b16 %v629
        %v2148 = vunpack.c.h.b16 %v629
        %v2149 = vunpack.c.l.b16 %v630
        %v2150 = vunpack.c.h.b16 %v630
        %v2151 = vunpack.c.l.b16 %v631
        %v2152 = vunpack.c.h.b16 %v631
        %v2153 = vunpack.c.l.b16 %v632
        %v2154 = vunpack.c.h.b16 %v632
        %v2155 = vunpack.c.l.b16 %v633
        %v2156 = vunpack.c.h.b16 %v633
        %v2157 = vunpack.c.l.b16 %v634
        %v2158 = vunpack.c.h.b16 %v634
        %v2159 = vunpack.c.l.b16 %v635
        %v2160 = vunpack.c.h.b16 %v635
        %v2161 = vunpack.c.l.b16 %v636
        %v2162 = vunpack.c.h.b16 %v636
        %v2163 = vunpack.c.l.b16 %v637
        %v2164 = vunpack.c.h.b16 %v637
        %v2165 = vunpack.c.l.b16 %v638
        %v2166 = vunpack.c.h.b16 %v638
        %v2167 = vunpack.c.l.b16 %v639
        %v2168 = vunpack.c.h.b16 %v639
        %v2169 = vunpack.c.l.b16 %v640
        %v2170 = vunpack.c.h.b16 %v640
        %v2171 = vunpack.c.l.b16 %v641
        %v2172 = vunpack.c.h.b16 %v641
        %v2173 = vunpack.c.l.b16 %v642
        %v2174 = vunpack.c.h.b16 %v642
        %v2175 = vunpack.c.l.b16 %v643
        %v2176 = vunpack.c.h.b16 %v643
        %v2177 = vunpack.c.l.b16 %v644
        %v2178 = vunpack.c.h.b16 %v644
        %v2179 = vunpack.c.l.b16 %v645
        %v2180 = vunpack.c.h.b16 %v645
        %v2181 = vunpack.c.l.b16 %v646
        %v2182 = vunpack.c.h.b16 %v646
        %v2183 = vunpack.c.l.b16 %v647
        %v2184 = vunpack.c.h.b16 %v647
        %v2185 = vunpack.c.l.b16 %v648
        %v2186 = vunpack.c.h.b16 %v648
        %v2187 = vunpack.c.l.b16 %v649
        %v2188 = vunpack.c.h.b16 %v649
        %v2189 = vunpack.c.l.b16 %v650
        %v2190 = vunpack.c.h.b16 %v650
        %v2191 = vunpack.c.l.b16 %v651
        %v2192 = vunpack.c.h.b16 %v651
        %v2193 = vunpack.c.l.b16 %v652
        %v2194 = vunpack.c.h.b16 %v652
        %v2195 = vunpack.c.l.b16 %v653
        %v2196 = vunpack.c.h.b16 %v653
        %v2197 = vunpack.c.l.b16 %v654
        %v2198 = vunpack.c.h.b16 %v654
        %v2199 = vunpack.c.l.b16 %v655
        %v2200 = vunpack.c.h.b16 %v655
        %v2201 = vunpack.c.l.b16 %v656
        %v2202 = vunpack.c.h.b16 %v656
        %v2203 = vunpack.c.l.b16 %v657
        %v2204 = vunpack.c.h.b16 %v657
        %v2205 = vunpack.c.l.b16 %v658
        %v2206 = vunpack.c.h.b16 %v658
        %v2207 = vunpack.c.l.b16 %v659
        %v2208 = vunpack.c.h.b16 %v659
        %v2209 = vunpack.c.l.b16 %v660
        %v2210 = vunpack.c.h.b16 %v660
        %v2211 = vunpack.c.l.b16 %v661
        %v2212 = vunpack.c.h.b16 %v661
        %v2213 = vunpack.c.l.b16 %v662
        %v2214 = vunpack.c.h.b16 %v662
        %v2215 = vunpack.c.l.b16 %v663
        %v2216 = vunpack.c.h.b16 %v663
        %v2217 = vunpack.c.l.b16 %v664
        %v2218 = vunpack.c.h.b16 %v664
        %v2219 = vunpack.c.l.b16 %v665
        %v2220 = vunpack.c.h.b16 %v665
        %v2221 = vunpack.c.l.b16 %v666
        %v2222 = vunpack.c.h.b16 %v666
        %v2223 = vunpack.c.l.b16 %v667
        %v2224 = vunpack.c.h.b16 %v667
        %v2225 = vunpack.c.l.b16 %v668
        %v2226 = vunpack.c.h.b16 %v668
        %v2227 = vunpack.c.l.b16 %v669
        %v2228 = vunpack.c.h.b16 %v669
        %v2229 = vunpack.c.l.b16 %v670
        %v2230 = vunpack.c.h.b16 %v670
        %v2231 = vunpack.c.l.b16 %v671
        %v2232 = vunpack.c.h.b16 %v671
        %v2233 = vunpack.c.l.b16 %v672
        %v2234 = vunpack.c.h.b16 %v672
        %v2235 = vunpack.c.l.b16 %v673
        %v2236 = vunpack.c.h.b16 %v673
        %v2237 = vunpack.c.l.b16 %v674
        %v2238 = vunpack.c.h.b16 %v674
        %v2239 = vunpack.c.l.b16 %v675
        %v2240 = vunpack.c.h.b16 %v675
        %v2241 = vunpack.c.l.b16 %v676
        %v2242 = vunpack.c.h.b16 %v676
        %v2243 = vunpack.c.l.b16 %v677
        %v2244 = vunpack.c.h.b16 %v677
        %v2245 = vunpack.c.l.b16 %v678
        %v2246 = vunpack.c.h.b16 %v678
        %v2247 = vunpack.c.l.b16 %v679
        %v2248 = vunpack.c.h.b16 %v679
        %v2249 = vunpack.c.l.b16 %v680
        %v2250 = vunpack.c.h.b16 %v680
        %v2251 = vunpack.c.l.b16 %v681
        %v2252 = vunpack.c.h.b16 %v681
        %v2253 = vunpack.c.l.b16 %v682
        %v2254 = vunpack.c.h.b16 %v682
        %v2255 = vunpack.c.l.b16 %v683
        %v2256 = vunpack.c.h.b16 %v683
        %v2257 = vunpack.c.l.b16 %v684
        %v2258 = vunpack.c.h.b16 %v684
        %v2259 = vunpack.c.l.b16 %v685
        %v2260 = vunpack.c.h.b16 %v685
        %v2261 = vunpack.c.l.b16 %v686
        %v2262 = vunpack.c.h.b16 %v686
        %v2263 = vunpack.c.l.b16 %v687
        %v2264 = vunpack.c.h.b16 %v687
        %v2265 = vunpack.c.l.b16 %v688
        %v2266 = vunpack.c.h.b16 %v688
        %v2267 = vunpack.c.l.b16 %v689
        %v2268 = vunpack.c.h.b16 %v689
        %v2269 = vunpack.c.l.b16 %v690
        %v2270 = vunpack.c.h.b16 %v690
        %v2271 = vunpack.c.l.b16 %v691
        %v2272 = vunpack.c.h.b16 %v691
        %v2273 = vunpack.c.l.b16 %v692
        %v2274 = vunpack.c.h.b16 %v692
        %v2275 = vunpack.c.l.b16 %v693
        %v2276 = vunpack.c.h.b16 %v693
        %v2277 = vunpack.c.l.b16 %v694
        %v2278 = vunpack.c.h.b16 %v694
        %v2279 = vunpack.c.l.b16 %v695
        %v2280 = vunpack.c.h.b16 %v695
        %v2281 = vunpack.c.l.b16 %v696
        %v2282 = vunpack.c.h.b16 %v696
        %v2283 = vunpack.c.l.b16 %v697
        %v2284 = vunpack.c.h.b16 %v697
        %v2285 = vunpack.c.l.b16 %v698
        %v2286 = vunpack.c.h.b16 %v698
        %v2287 = vunpack.c.l.b16 %v699
        %v2288 = vunpack.c.h.b16 %v699
        %v2289 = vunpack.c.l.b16 %v700
        %v2290 = vunpack.c.h.b16 %v700
        %v2291 = vunpack.c.l.b16 %v701
        %v2292 = vunpack.c.h.b16 %v701
        %v2293 = vunpack.c.l.b16 %v702
        %v2294 = vunpack.c.h.b16 %v702
        %v2295 = vunpack.c.l.b16 %v703
        %v2296 = vunpack.c.h.b16 %v703
        %v2297 = vunpack.c.l.b16 %v704
        %v2298 = vunpack.c.h.b16 %v704
        %v2299 = vunpack.c.l.b16 %v705
        %v2300 = vunpack.c.h.b16 %v705
        %v2301 = vunpack.c.l.b16 %v706
        %v2302 = vunpack.c.h.b16 %v706
        %v2303 = vunpack.c.l.b16 %v707
        %v2304 = vunpack.c.h.b16 %v707
        %v2305 = vunpack.c.l.b16 %v708
        %v2306 = vunpack.c.h.b16 %v708
        %v2307 = vunpack.c.l.b16 %v709
        %v2308 = vunpack.c.h.b16 %v709
        %v2309 = vunpack.c.l.b16 %v710
        %v2310 = vunpack.c.h.b16 %v710
        %v2311 = vunpack.c.l.b16 %v711
        %v2312 = vunpack.c.h.b16 %v711
        %v2313 = vunpack.c.l.b16 %v712
        %v2314 = vunpack.c.h.b16 %v712
        %v2315 = vunpack.c.l.b16 %v713
        %v2316 = vunpack.c.h.b16 %v713
        %v2317 = vunpack.c.l.b16 %v714
        %v2318 = vunpack.c.h.b16 %v714
        %v2319 = vunpack.c.l.b16 %v715
        %v2320 = vunpack.c.h.b16 %v715
        %v2321 = vunpack.c.l.b16 %v716
        %v2322 = vunpack.c.h.b16 %v716
        %v2323 = vunpack.c.l.b16 %v717
        %v2324 = vunpack.c.h.b16 %v717
        %v2325 = vunpack.c.l.b16 %v718
        %v2326 = vunpack.c.h.b16 %v718
        %v2327 = vunpack.c.l.b16 %v719
        %v2328 = vunpack.c.h.b16 %v719
        %v2329 = vunpack.c.l.b16 %v720
        %v2330 = vunpack.c.h.b16 %v720
        %v2331 = vunpack.c.l.b16 %v721
        %v2332 = vunpack.c.h.b16 %v721
        %v2333 = vunpack.c.l.b16 %v722
        %v2334 = vunpack.c.h.b16 %v722
        %v2335 = vunpack.c.l.b16 %v723
        %v2336 = vunpack.c.h.b16 %v723
        %v2337 = vunpack.c.l.b16 %v724
        %v2338 = vunpack.c.h.b16 %v724
        %v2339 = vunpack.c.l.b16 %v725
        %v2340 = vunpack.c.h.b16 %v725
        %v2341 = vunpack.c.l.b16 %v726
        %v2342 = vunpack.c.h.b16 %v726
        %v2343 = vunpack.c.l.b16 %v727
        %v2344 = vunpack.c.h.b16 %v727
        %v2345 = vunpack.c.l.b16 %v728
        %v2346 = vunpack.c.h.b16 %v728
        %v2347 = vunpack.c.l.b16 %v729
        %v2348 = vunpack.c.h.b16 %v729
        %v2349 = vunpack.c.l.b16 %v730
        %v2350 = vunpack.c.h.b16 %v730
        %v2351 = vunpack.c.l.b16 %v731
        %v2352 = vunpack.c.h.b16 %v731
        %v2353 = vunpack.c.l.b16 %v732
        %v2354 = vunpack.c.h.b16 %v732
        %v2355 = vunpack.c.l.b16 %v733
        %v2356 = vunpack.c.h.b16 %v733
        %v2357 = vunpack.c.l.b16 %v734
        %v2358 = vunpack.c.h.b16 %v734
        %v2359 = vunpack.c.l.b16 %v735
        %v2360 = vunpack.c.h.b16 %v735
        %v2361 = vunpack.c.l.b16 %v736
        %v2362 = vunpack.c.h.b16 %v736
        %v2363 = vunpack.c.l.b16 %v737
        %v2364 = vunpack.c.h.b16 %v737
        %v2365 = vunpack.c.l.b16 %v738
        %v2366 = vunpack.c.h.b16 %v738
        %v2367 = vunpack.c.l.b16 %v739
        %v2368 = vunpack.c.h.b16 %v739
        %v2369 = vunpack.c.l.b16 %v740
        %v2370 = vunpack.c.h.b16 %v740
        %v2371 = vunpack.c.l.b16 %v741
        %v2372 = vunpack.c.h.b16 %v741
        %v2373 = vunpack.c.l.b16 %v742
        %v2374 = vunpack.c.h.b16 %v742
        %v2375 = vunpack.c.l.b16 %v743
        %v2376 = vunpack.c.h.b16 %v743
        %v2377 = vunpack.c.l.b16 %v744
        %v2378 = vunpack.c.h.b16 %v744
        %v2379 = vunpack.c.l.b16 %v745
        %v2380 = vunpack.c.h.b16 %v745
        %v2381 = vunpack.c.l.b16 %v746
        %v2382 = vunpack.c.h.b16 %v746
        %v2383 = vunpack.c.l.b16 %v747
        %v2384 = vunpack.c.h.b16 %v747
        %v2385 = vunpack.c.l.b16 %v748
        %v2386 = vunpack.c.h.b16 %v748
        %v2387 = vunpack.c.l.b16 %v749
        %v2388 = vunpack.c.h.b16 %v749
        %v2389 = vunpack.c.l.b16 %v750
        %v2390 = vunpack.c.h.b16 %v750
        %v2391 = vunpack.c.l.b16 %v751
        %v2392 = vunpack.c.h.b16 %v751
        %v2393 = vunpack.c.l.b16 %v752
        %v2394 = vunpack.c.h.b16 %v752
        %v2395 = vunpack.c.l.b16 %v753
        %v2396 = vunpack.c.h.b16 %v753
        %v2397 = vunpack.c.l.b16 %v754
        %v2398 = vunpack.c.h.b16 %v754
        %v2399 = vunpack.c.l.b16 %v755
        %v2400 = vunpack.c.h.b16 %v755
        %v2401 = vunpack.c.l.b16 %v756
        %v2402 = vunpack.c.h.b16 %v756
        %v2403 = vunpack.c.l.b16 %v757
        %v2404 = vunpack.c.h.b16 %v757
        %v2405 = vunpack.c.l.b16 %v758
        %v2406 = vunpack.c.h.b16 %v758
        %v2407 = vunpack.c.l.b16 %v759
        %v2408 = vunpack.c.h.b16 %v759
        %v2409 = vunpack.c.l.b16 %v760
        %v2410 = vunpack.c.h.b16 %v760
        %v2411 = vunpack.c.l.b16 %v761
        %v2412 = vunpack.c.h.b16 %v761
        %v2413 = vunpack.c.l.b16 %v762
        %v2414 = vunpack.c.h.b16 %v762
        %v2415 = vunpack.c.l.b16 %v763
        %v2416 = vunpack.c.h.b16 %v763
        %v2417 = vunpack.c.l.b16 %v764
        %v2418 = vunpack.c.h.b16 %v764
        %v2419 = vunpack.c.l.b16 %v765
        %v2420 = vunpack.c.h.b16 %v765
        %v2421 = vunpack.c.l.b16 %v766
        %v2422 = vunpack.c.h.b16 %v766
        %v2423 = vunpack.c.l.b16 %v767
        %v2424 = vunpack.c.h.b16 %v767
        %v2425 = vunpack.c.l.b16 %v768
        %v2426 = vunpack.c.h.b16 %v768
        %v2427 = vunpack.c.l.b16 %v769
        %v2428 = vunpack.c.h.b16 %v769
        %v2429 = vunpack.c.l.b16 %v770
        %v2430 = vunpack.c.h.b16 %v770
        %v2431 = vunpack.c.l.b16 %v771
        %v2432 = vunpack.c.h.b16 %v771
        %v2433 = vunpack.c.l.b16 %v772
        %v2434 = vunpack.c.h.b16 %v772
        %v2435 = vunpack.c.l.b16 %v773
        %v2436 = vunpack.c.h.b16 %v773
        %v2437 = vunpack.c.l.b16 %v774
        %v2438 = vunpack.c.h.b16 %v774
        %v2439 = vunpack.c.l.b16 %v775
        %v2440 = vunpack.c.h.b16 %v775
        %v2441 = vunpack.c.l.b16 %v776
        %v2442 = vunpack.c.h.b16 %v776
        %v2443 = vunpack.c.l.b16 %v777
        %v2444 = vunpack.c.h.b16 %v777
        %v2445 = vunpack.c.l.b16 %v778
        %v2446 = vunpack.c.h.b16 %v778
        %v2447 = vunpack.c.l.b16 %v779
        %v2448 = vunpack.c.h.b16 %v779
        %v2449 = vunpack.c.l.b16 %v780
        %v2450 = vunpack.c.h.b16 %v780
        %v2451 = vunpack.c.l.b16 %v781
        %v2452 = vunpack.c.h.b16 %v781
        %v2453 = vunpack.c.l.b16 %v782
        %v2454 = vunpack.c.h.b16 %v782
        %v2455 = vunpack.c.l.b16 %v783
        %v2456 = vunpack.c.h.b16 %v783
        %v2457 = vunpack.c.l.b16 %v784
        %v2458 = vunpack.c.h.b16 %v784
        %v2459 = vunpack.c.l.b16 %v785
        %v2460 = vunpack.c.h.b16 %v785
        %v2461 = vunpack.c.l.b16 %v786
        %v2462 = vunpack.c.h.b16 %v786
        %v2463 = vunpack.c.l.b16 %v787
        %v2464 = vunpack.c.h.b16 %v787
        %v2465 = vunpack.c.l.b16 %v788
        %v2466 = vunpack.c.h.b16 %v788
        %v2467 = vunpack.c.l.b16 %v789
        %v2468 = vunpack.c.h.b16 %v789
        %v2469 = vunpack.c.l.b16 %v790
        %v2470 = vunpack.c.h.b16 %v790
        %v2471 = vunpack.c.l.b16 %v791
        %v2472 = vunpack.c.h.b16 %v791
        %v2473 = vunpack.c.l.b16 %v792
        %v2474 = vunpack.c.h.b16 %v792
        %v2475 = vunpack.c.l.b16 %v793
        %v2476 = vunpack.c.h.b16 %v793
        %v2477 = vunpack.c.l.b16 %v794
        %v2478 = vunpack.c.h.b16 %v794
        %v2479 = vunpack.c.l.b16 %v795
        %v2480 = vunpack.c.h.b16 %v795
        %v2481 = vunpack.c.l.b16 %v796
        %v2482 = vunpack.c.h.b16 %v796
        %v2483 = vunpack.c.l.b16 %v797
        %v2484 = vunpack.c.h.b16 %v797
        %v2485 = vunpack.c.l.b16 %v798
        %v2486 = vunpack.c.h.b16 %v798
        %v2487 = vunpack.c.l.b16 %v799
        %v2488 = vunpack.c.h.b16 %v799
        %v2489 = vunpack.c.l.b16 %v800
        %v2490 = vunpack.c.h.b16 %v800
        %v2491 = vunpack.c.l.b16 %v801
        %v2492 = vunpack.c.h.b16 %v801
        %v2493 = vunpack.c.l.b16 %v802
        %v2494 = vunpack.c.h.b16 %v802
        %v2495 = vunpack.c.l.b16 %v803
        %v2496 = vunpack.c.h.b16 %v803
        %v2497 = vunpack.c.l.b16 %v804
        %v2498 = vunpack.c.h.b16 %v804
        %v2499 = vunpack.c.l.b16 %v805
        %v2500 = vunpack.c.h.b16 %v805
        %v2501 = vunpack.c.l.b16 %v806
        %v2502 = vunpack.c.h.b16 %v806
        %v2503 = vunpack.c.l.b16 %v807
        %v2504 = vunpack.c.h.b16 %v807
        %v2505 = vunpack.c.l.b16 %v808
        %v2506 = vunpack.c.h.b16 %v808
        %v2507 = vunpack.c.l.b16 %v809
        %v2508 = vunpack.c.h.b16 %v809
        %v2509 = vunpack.c.l.b16 %v810
        %v2510 = vunpack.c.h.b16 %v810
        %v2511 = vunpack.c.l.b16 %v811
        %v2512 = vunpack.c.h.b16 %v811
        %v2513 = vunpack.c.l.b16 %v812
        %v2514 = vunpack.c.h.b16 %v812
        %v2515 = vunpack.c.l.b16 %v813
        %v2516 = vunpack.c.h.b16 %v813
        %v2517 = vunpack.c.l.b16 %v814
        %v2518 = vunpack.c.h.b16 %v814
        %v2519 = vunpack.c.l.b16 %v815
        %v2520 = vunpack.c.h.b16 %v815
        %v2521 = vunpack.c.l.b16 %v816
        %v2522 = vunpack.c.h.b16 %v816
        %v2523 = vunpack.c.l.b16 %v817
        %v2524 = vunpack.c.h.b16 %v817
        %v2525 = vunpack.c.l.b16 %v818
        %v2526 = vunpack.c.h.b16 %v818
        %v2527 = vunpack.c.l.b16 %v819
        %v2528 = vunpack.c.h.b16 %v819
        %v2529 = vunpack.c.l.b16 %v820
        %v2530 = vunpack.c.h.b16 %v820
        %v2531 = vunpack.c.l.b16 %v821
        %v2532 = vunpack.c.h.b16 %v821
        %v2533 = vunpack.c.l.b16 %v822
        %v2534 = vunpack.c.h.b16 %v822
        %v2535 = vunpack.c.l.b16 %v823
        %v2536 = vunpack.c.h.b16 %v823
        %v2537 = vunpack.c.l.b16 %v824
        %v2538 = vunpack.c.h.b16 %v824
        %v2539 = vunpack.c.l.b16 %v825
        %v2540 = vunpack.c.h.b16 %v825
        %v2541 = vunpack.c.l.b16 %v826
        %v2542 = vunpack.c.h.b16 %v826
        %v2543 = vunpack.c.l.b16 %v827
        %v2544 = vunpack.c.h.b16 %v827
        %v2545 = vunpack.c.l.b16 %v828
        %v2546 = vunpack.c.h.b16 %v828
        %v2547 = vunpack.c.l.b16 %v829
        %v2548 = vunpack.c.h.b16 %v829
        %v2549 = vunpack.c.l.b16 %v830
        %v2550 = vunpack.c.h.b16 %v830
        %v2551 = vunpack.c.l.b16 %v831
        %v2552 = vunpack.c.h.b16 %v831
        %v2553 = vunpack.c.l.b16 %v832
        %v2554 = vunpack.c.h.b16 %v832
        %v2555 = vunpack.c.l.b16 %v833
        %v2556 = vunpack.c.h.b16 %v833
        %v2557 = vunpack.c.l.b16 %v834
        %v2558 = vunpack.c.h.b16 %v834
        %v2559 = vunpack.c.l.b16 %v835
        %v2560 = vunpack.c.h.b16 %v835
        %v2561 = vunpack.c.l.b16 %v836
        %v2562 = vunpack.c.h.b16 %v836
        %v2563 = vunpack.c.l.b16 %v837
        %v2564 = vunpack.c.h.b16 %v837
        %v2565 = vunpack.c.l.b16 %v838
        %v2566 = vunpack.c.h.b16 %v838
        %v2567 = vunpack.c.l.b16 %v839
        %v2568 = vunpack.c.h.b16 %v839
        %v2569 = vunpack.c.l.b16 %v840
        %v2570 = vunpack.c.h.b16 %v840
        %v2571 = vunpack.c.l.b16 %v841
        %v2572 = vunpack.c.h.b16 %v841
        %v2573 = vunpack.c.l.b16 %v842
        %v2574 = vunpack.c.h.b16 %v842
        %v2575 = vunpack.c.l.b16 %v843
        %v2576 = vunpack.c.h.b16 %v843
        %v2577 = vunpack.c.l.b16 %v844
        %v2578 = vunpack.c.h.b16 %v844
        %v2579 = vunpack.c.l.b16 %v845
        %v2580 = vunpack.c.h.b16 %v845
        %v2581 = vunpack.c.l.b16 %v846
        %v2582 = vunpack.c.h.b16 %v846
        %v2583 = vunpack.c.l.b16 %v847
        %v2584 = vunpack.c.h.b16 %v847
        %v2585 = vunpack.c.l.b16 %v848
        %v2586 = vunpack.c.h.b16 %v848
        %v2587 = vunpack.c.l.b16 %v849
        %v2588 = vunpack.c.h.b16 %v849
        %v2589 = vunpack.c.l.b16 %v850
        %v2590 = vunpack.c.h.b16 %v850
        %v2591 = vunpack.c.l.b16 %v851
        %v2592 = vunpack.c.h.b16 %v851
        %v2593 = vunpack.c.l.b16 %v852
        %v2594 = vunpack.c.h.b16 %v852
        %v2595 = vunpack.c.l.b16 %v853
        %v2596 = vunpack.c.h.b16 %v853
        %v2597 = vunpack.c.l.b16 %v854
        %v2598 = vunpack.c.h.b16 %v854
        %v2599 = vunpack.c.l.b16 %v855
        %v2600 = vunpack.c.h.b16 %v855
        %v2601 = vunpack.c.l.b16 %v856
        %v2602 = vunpack.c.h.b16 %v856
        %v2603 = vunpack.c.l.b16 %v857
        %v2604 = vunpack.c.h.b16 %v857
        %v2605 = vunpack.c.l.b16 %v858
        %v2606 = vunpack.c.h.b16 %v858
        %v2607 = vunpack.c.l.b16 %v859
        %v2608 = vunpack.c.h.b16 %v859
        %v2609 = vunpack.c.l.b16 %v860
        %v2610 = vunpack.c.h.b16 %v860
        %v2611 = vunpack.c.l.b16 %v861
        %v2612 = vunpack.c.h.b16 %v861
        %v2613 = vunpack.c.l.b16 %v862
        %v2614 = vunpack.c.h.b16 %v862
        %v2615 = vunpack.c.l.b16 %v863
        %v2616 = vunpack.c.h.b16 %v863
        %v2617 = vunpack.c.l.b16 %v864
        %v2618 = vunpack.c.h.b16 %v864
        %v2619 = vunpack.c.l.b16 %v865
        %v2620 = vunpack.c.h.b16 %v865
        %v2621 = vunpack.c.l.b16 %v866
        %v2622 = vunpack.c.h.b16 %v866
        %v2623 = vunpack.c.l.b16 %v867
        %v2624 = vunpack.c.h.b16 %v867
        %v2625 = vunpack.c.l.b16 %v868
        %v2626 = vunpack.c.h.b16 %v868
        %v2627 = vunpack.c.l.b16 %v869
        %v2628 = vunpack.c.h.b16 %v869
        %v2629 = vunpack.c.l.b16 %v870
        %v2630 = vunpack.c.h.b16 %v870
        %v2631 = vunpack.c.l.b16 %v871
        %v2632 = vunpack.c.h.b16 %v871
        %v2633 = vunpack.c.l.b16 %v872
        %v2634 = vunpack.c.h.b16 %v872
        %v2635 = vunpack.c.l.b16 %v873
        %v2636 = vunpack.c.h.b16 %v873
        %v2637 = vunpack.c.l.b16 %v874
        %v2638 = vunpack.c.h.b16 %v874
        %v2639 = vunpack.c.l.b16 %v875
        %v2640 = vunpack.c.h.b16 %v875
        %v2641 = vunpack.c.l.b16 %v876
        %v2642 = vunpack.c.h.b16 %v876
        %v2643 = vunpack.c.l.b16 %v877
        %v2644 = vunpack.c.h.b16 %v877
        %v2645 = vunpack.c.l.b16 %v878
        %v2646 = vunpack.c.h.b16 %v878
        %v2647 = vunpack.c.l.b16 %v879
        %v2648 = vunpack.c.h.b16 %v879
        %v2649 = vunpack.c.l.b16 %v880
        %v2650 = vunpack.c.h.b16 %v880
        %v2651 = vunpack.c.l.b16 %v881
        %v2652 = vunpack.c.h.b16 %v881
        %v2653 = vunpack.c.l.b16 %v882
        %v2654 = vunpack.c.h.b16 %v882
        %v2655 = vunpack.c.l.b16 %v883
        %v2656 = vunpack.c.h.b16 %v883
        %v2657 = vunpack.c.l.b16 %v884
        %v2658 = vunpack.c.h.b16 %v884
        %v2659 = vunpack.c.l.b16 %v885
        %v2660 = vunpack.c.h.b16 %v885
        %v2661 = vunpack.c.l.b16 %v886
        %v2662 = vunpack.c.h.b16 %v886
        %v2663 = vunpack.c.l.b16 %v887
        %v2664 = vunpack.c.h.b16 %v887
        %v2665 = vunpack.c.l.b16 %v888
        %v2666 = vunpack.c.h.b16 %v888
        %v2667 = vunpack.c.l.b16 %v889
        %v2668 = vunpack.c.h.b16 %v889
        %v2669 = vunpack.c.l.b16 %v890
        %v2670 = vunpack.c.h.b16 %v890
        %v2671 = vunpack.c.l.b16 %v891
        %v2672 = vunpack.c.h.b16 %v891
        %v2673 = vunpack.c.l.b16 %v892
        %v2674 = vunpack.c.h.b16 %v892
        %v2675 = vunpack.c.l.b16 %v893
        %v2676 = vunpack.c.h.b16 %v893
        %v2677 = vunpack.c.l.b16 %v894
        %v2678 = vunpack.c.h.b16 %v894
        %v2679 = vunpack.c.l.b16 %v895
        %v2680 = vunpack.c.h.b16 %v895
        %v2681 = vunpack.c.l.b16 %v896
        %v2682 = vunpack.c.h.b16 %v896
        %v2683 = vunpack.c.l.b16 %v897
        %v2684 = vunpack.c.h.b16 %v897
        %v2685 = vunpack.c.l.b16 %v898
        %v2686 = vunpack.c.h.b16 %v898
        %v2687 = vunpack.c.l.b16 %v899
        %v2688 = vunpack.c.h.b16 %v899
        %v2689 = vunpack.c.l.b16 %v900
        %v2690 = vunpack.c.h.b16 %v900
        %v2691 = vunpack.c.l.b16 %v901
        %v2692 = vunpack.c.h.b16 %v901
        %v2693 = vunpack.c.l.b16 %v902
        %v2694 = vunpack.c.h.b16 %v902
        %v2695 = vunpack.c.l.b16 %v903
        %v2696 = vunpack.c.h.b16 %v903
        %v2697 = vunpack.c.l.b16 %v904
        %v2698 = vunpack.c.h.b16 %v904
        %v2699 = vunpack.c.l.b16 %v905
        %v2700 = vunpack.c.h.b16 %v905
        %v2701 = vunpack.c.l.b16 %v906
        %v2702 = vunpack.c.h.b16 %v906
        %v2703 = vunpack.c.l.b16 %v907
        %v2704 = vunpack.c.h.b16 %v907
        %v2705 = vunpack.c.l.b16 %v908
        %v2706 = vunpack.c.h.b16 %v908
        %v2707 = vunpack.c.l.b16 %v909
        %v2708 = vunpack.c.h.b16 %v909
        %v2709 = vunpack.c.l.b16 %v910
        %v2710 = vunpack.c.h.b16 %v910
        %v2711 = vunpack.c.l.b16 %v911
        %v2712 = vunpack.c.h.b16 %v911
        %v2713 = vunpack.c.l.b16 %v912
        %v2714 = vunpack.c.h.b16 %v912
        %v2715 = vunpack.c.l.b16 %v913
        %v2716 = vunpack.c.h.b16 %v913
        %v2717 = vunpack.c.l.b16 %v914
        %v2718 = vunpack.c.h.b16 %v914
        %v2719 = vunpack.c.l.b16 %v915
        %v2720 = vunpack.c.h.b16 %v915
        %v2721 = vunpack.c.l.b16 %v916
        %v2722 = vunpack.c.h.b16 %v916
        %v2723 = vunpack.c.l.b16 %v917
        %v2724 = vunpack.c.h.b16 %v917
        %v2725 = vunpack.c.l.b16 %v918
        %v2726 = vunpack.c.h.b16 %v918
        %v2727 = vunpack.c.l.b16 %v919
        %v2728 = vunpack.c.h.b16 %v919
        %v2729 = vunpack.c.l.b16 %v920
        %v2730 = vunpack.c.h.b16 %v920
        %v2731 = vunpack.c.l.b16 %v921
        %v2732 = vunpack.c.h.b16 %v921
        %v2733 = vunpack.c.l.b16 %v922
        %v2734 = vunpack.c.h.b16 %v922
        %v2735 = vunpack.c.l.b16 %v923
        %v2736 = vunpack.c.h.b16 %v923
        %v2737 = vunpack.c.l.b16 %v924
        %v2738 = vunpack.c.h.b16 %v924
        %v2739 = vunpack.c.l.b16 %v925
        %v2740 = vunpack.c.h.b16 %v925
        %v2741 = vunpack.c.l.b16 %v926
        %v2742 = vunpack.c.h.b16 %v926
        %v2743 = vunpack.c.l.b16 %v927
        %v2744 = vunpack.c.h.b16 %v927
        %v2745 = vunpack.c.l.b16 %v928
        %v2746 = vunpack.c.h.b16 %v928
        %v2747 = vunpack.c.l.b16 %v929
        %v2748 = vunpack.c.h.b16 %v929
        %v2749 = vunpack.c.l.b16 %v930
        %v2750 = vunpack.c.h.b16 %v930
        %v2751 = vunpack.c.l.b16 %v931
        %v2752 = vunpack.c.h.b16 %v931
        %v2753 = vunpack.c.l.b16 %v932
        %v2754 = vunpack.c.h.b16 %v932
        %v2755 = vunpack.c.l.b16 %v933
        %v2756 = vunpack.c.h.b16 %v933
        %v2757 = vunpack.c.l.b16 %v934
        %v2758 = vunpack.c.h.b16 %v934
        %v2759 = vpack.c.b16 %v1625, %v1607
        %v2760 = vpack.c.b16 %v1626, %v1608
        %v2761 = vpack.c.b16 %v1627, %v1609
        %v2762 = vpack.c.b16 %v1628, %v1610
        %v2763 = vpack.c.b16 %v1629, %v1611
        %v2764 = vpack.c.b16 %v1630, %v1612
        %v2765 = vpack.c.b16 %v1631, %v1613
        %v2766 = vpack.c.b16 %v1632, %v1614
        %v2767 = vpack.c.b16 %v1633, %v1615
        %v2768 = vpack.c.b16 %v1634, %v1616
        %v2769 = vpack.c.b16 %v1635, %v1617
        %v2770 = vpack.c.b16 %v1636, %v1618
        %v2771 = vpack.c.b16 %v1637, %v1619
        %v2772 = vpack.c.b16 %v1638, %v1620
        %v2773 = vpack.c.b16 %v1639, %v1621
        %v2774 = vpack.c.b16 %v1640, %v1622
        %v2775 = vpack.c.b16 %v1641, %v1623
        %v2776 = vpack.c.b16 %v1642, %v1624
        %v2777 = vpack.c.b16 %v1661, %v1643
        %v2778 = vpack.c.b16 %v1662, %v1644
        %v2779 = vpack.c.b16 %v1663, %v1645
        %v2780 = vpack.c.b16 %v1664, %v1646
        %v2781 = vpack.c.b16 %v1665, %v1647
        %v2782 = vpack.c.b16 %v1666, %v1648
        %v2783 = vpack.c.b16 %v1667, %v1649
        %v2784 = vpack.c.b16 %v1668, %v1650
        %v2785 = vpack.c.b16 %v1669, %v1651
        %v2786 = vpack.c.b16 %v1670, %v1652
        %v2787 = vpack.c.b16 %v1671, %v1653
        %v2788 = vpack.c.b16 %v1672, %v1654
        %v2789 = vpack.c.b16 %v1673, %v1655
        %v2790 = vpack.c.b16 %v1674, %v1656
        %v2791 = vpack.c.b16 %v1675, %v1657
        %v2792 = vpack.c.b16 %v1676, %v1658
        %v2793 = vpack.c.b16 %v1677, %v1659
        %v2794 = vpack.c.b16 %v1678, %v1660
        %v2795 = vpack.c.b16 %v1697, %v1679
        %v2796 = vpack.c.b16 %v1698, %v1680
        %v2797 = vpack.c.b16 %v1699, %v1681
        %v2798 = vpack.c.b16 %v1700, %v1682
        %v2799 = vpack.c.b16 %v1701, %v1683
        %v2800 = vpack.c.b16 %v1702, %v1684
        %v2801 = vpack.c.b16 %v1703, %v1685
        %v2802 = vpack.c.b16 %v1704, %v1686
        %v2803 = vpack.c.b16 %v1705, %v1687
        %v2804 = vpack.c.b16 %v1706, %v1688
        %v2805 = vpack.c.b16 %v1707, %v1689
        %v2806 = vpack.c.b16 %v1708, %v1690
        %v2807 = vpack.c.b16 %v1709, %v1691
        %v2808 = vpack.c.b16 %v1710, %v1692
        %v2809 = vpack.c.b16 %v1711, %v1693
        %v2810 = vpack.c.b16 %v1712, %v1694
        %v2811 = vpack.c.b16 %v1713, %v1695
        %v2812 = vpack.c.b16 %v1714, %v1696
        %v2813 = vpack.c.b16 %v1733, %v1715
        %v2814 = vpack.c.b16 %v1734, %v1716
        %v2815 = vpack.c.b16 %v1735, %v1717
        %v2816 = vpack.c.b16 %v1736, %v1718
        %v2817 = vpack.c.b16 %v1737, %v1719
        %v2818 = vpack.c.b16 %v1738, %v1720
        %v2819 = vpack.c.b16 %v1739, %v1721
        %v2820 = vpack.c.b16 %v1740, %v1722
        %v2821 = vpack.c.b16 %v1741, %v1723
        %v2822 = vpack.c.b16 %v1742, %v1724
        %v2823 = vpack.c.b16 %v1743, %v1725
        %v2824 = vpack.c.b16 %v1744, %v1726
        %v2825 = vpack.c.b16 %v1745, %v1727
        %v2826 = vpack.c.b16 %v1746, %v1728
        %v2827 = vpack.c.b16 %v1747, %v1729
        %v2828 = vpack.c.b16 %v1748, %v1730
        %v2829 = vpack.c.b16 %v1749, %v1731
        %v2830 = vpack.c.b16 %v1750, %v1732
        %v2831 = vpack.c.b16 %v1769, %v1751
        %v2832 = vpack.c.b16 %v1770, %v1752
        %v2833 = vpack.c.b16 %v1771, %v1753
        %v2834 = vpack.c.b16 %v1772, %v1754
        %v2835 = vpack.c.b16 %v1773, %v1755
        %v2836 = vpack.c.b16 %v1774, %v1756
        %v2837 = vpack.c.b16 %v1775, %v1757
        %v2838 = vpack.c.b16 %v1776, %v1758
        %v2839 = vpack.c.b16 %v1777, %v1759
        %v2840 = vpack.c.b16 %v1778, %v1760
        %v2841 = vpack.c.b16 %v1779, %v1761
        %v2842 = vpack.c.b16 %v1780, %v1762
        %v2843 = vpack.c.b16 %v1781, %v1763
        %v2844 = vpack.c.b16 %v1782, %v1764
        %v2845 = vpack.c.b16 %v1783, %v1765
        %v2846 = vpack.c.b16 %v1784, %v1766
        %v2847 = vpack.c.b16 %v1785, %v1767
        %v2848 = vpack.c.b16 %v1786, %v1768
        %v2849 = vpack.c.b16 %v1805, %v1787
        %v2850 = vpack.c.b16 %v1806, %v1788
        %v2851 = vpack.c.b16 %v1807, %v1789
        %v2852 = vpack.c.b16 %v1808, %v1790
        %v2853 = vpack.c.b16 %v1809, %v1791
        %v2854 = vpack.c.b16 %v1810, %v1792
        %v2855 = vpack.c.b16 %v1811, %v1793
        %v2856 = vpack.c.b16 %v1812, %v1794
        %v2857 = vpack.c.b16 %v1813, %v1795
        %v2858 = vpack.c.b16 %v1814, %v1796
        %v2859 = vpack.c.b16 %v1815, %v1797
        %v2860 = vpack.c.b16 %v1816, %v1798
        %v2861 = vpack.c.b16 %v1817, %v1799
        %v2862 = vpack.c.b16 %v1818, %v1800
        %v2863 = vpack.c.b16 %v1819, %v1801
        %v2864 = vpack.c.b16 %v1820, %v1802
        %v2865 = vpack.c.b16 %v1821, %v1803
        %v2866 = vpack.c.b16 %v1822, %v1804
        %v2867 = vpack.c.b16 %v1841, %v1823
        %v2868 = vpack.c.b16 %v1842, %v1824
        %v2869 = vpack.c.b16 %v1843, %v1825
        %v2870 = vpack.c.b16 %v1844, %v1826
        %v2871 = vpack.c.b16 %v1845, %v1827
        %v2872 = vpack.c.b16 %v1846, %v1828
        %v2873 = vpack.c.b16 %v1847, %v1829
        %v2874 = vpack.c.b16 %v1848, %v1830
        %v2875 = vpack.c.b16 %v1849, %v1831
        %v2876 = vpack.c.b16 %v1850, %v1832
        %v2877 = vpack.c.b16 %v1851, %v1833
        %v2878 = vpack.c.b16 %v1852, %v1834
        %v2879 = vpack.c.b16 %v1853, %v1835
        %v2880 = vpack.c.b16 %v1854, %v1836
        %v2881 = vpack.c.b16 %v1855, %v1837
        %v2882 = vpack.c.b16 %v1856, %v1838
        %v2883 = vpack.c.b16 %v1857, %v1839
        %v2884 = vpack.c.b16 %v1858, %v1840
        %v2885 = vpack.c.b16 %v1877, %v1859
        %v2886 = vpack.c.b16 %v1878, %v1860
        %v2887 = vpack.c.b16 %v1879, %v1861
        %v2888 = vpack.c.b16 %v1880, %v1862
        %v2889 = vpack.c.b16 %v1881, %v1863
        %v2890 = vpack.c.b16 %v1882, %v1864
        %v2891 = vpack.c.b16 %v1883, %v1865
        %v2892 = vpack.c.b16 %v1884, %v1866
        %v2893 = vpack.c.b16 %v1885, %v1867
        %v2894 = vpack.c.b16 %v1886, %v1868
        %v2895 = vpack.c.b16 %v1887, %v1869
        %v2896 = vpack.c.b16 %v1888, %v1870
        %v2897 = vpack.c.b16 %v1889, %v1871
        %v2898 = vpack.c.b16 %v1890, %v1872
        %v2899 = vpack.c.b16 %v1891, %v1873
        %v2900 = vpack.c.b16 %v1892, %v1874
        %v2901 = vpack.c.b16 %v1893, %v1875
        %v2902 = vpack.c.b16 %v1894, %v1876
        %v2903 = vpack.c.b16 %v1913, %v1895
        %v2904 = vpack.c.b16 %v1914, %v1896
        %v2905 = vpack.c.b16 %v1915, %v1897
        %v2906 = vpack.c.b16 %v1916, %v1898
        %v2907 = vpack.c.b16 %v1917, %v1899
        %v2908 = vpack.c.b16 %v1918, %v1900
        %v2909 = vpack.c.b16 %v1919, %v1901
        %v2910 = vpack.c.b16 %v1920, %v1902
        %v2911 = vpack.c.b16 %v1921, %v1903
        %v2912 = vpack.c.b16 %v1922, %v1904
        %v2913 = vpack.c.b16 %v1923, %v1905
        %v2914 = vpack.c.b16 %v1924, %v1906
        %v2915 = vpack.c.b16 %v1925, %v1907
        %v2916 = vpack.c.b16 %v1926, %v1908
        %v2917 = vpack.c.b16 %v1927, %v1909
        %v2918 = vpack.c.b16 %v1928, %v1910
        %v2919 = vpack.c.b16 %v1929, %v1911
        %v2920 = vpack.c.b16 %v1930, %v1912
        %v2921 = vpack.c.b16 %v1949, %v1931
        %v2922 = vpack.c.b16 %v1950, %v1932
        %v2923 = vpack.c.b16 %v1951, %v1933
        %v2924 = vpack.c.b16 %v1952, %v1934
        %v2925 = vpack.c.b16 %v1953, %v1935
        %v2926 = vpack.c.b16 %v1954, %v1936
        %v2927 = vpack.c.b16 %v1955, %v1937
        %v2928 = vpack.c.b16 %v1956, %v1938
        %v2929 = vpack.c.b16 %v1957, %v1939
        %v2930 = vpack.c.b16 %v1958, %v1940
        %v2931 = vpack.c.b16 %v1959, %v1941
        %v2932 = vpack.c.b16 %v1960, %v1942
        %v2933 = vpack.c.b16 %v1961, %v1943
        %v2934 = vpack.c.b16 %v1962, %v1944
        %v2935 = vpack.c.b16 %v1963, %v1945
        %v2936 = vpack.c.b16 %v1964, %v1946
        %v2937 = vpack.c.b16 %v1965, %v1947
        %v2938 = vpack.c.b16 %v1966, %v1948
        %v2939 = vpack.c.b16 %v1985, %v1967
        %v2940 = vpack.c.b16 %v1986, %v1968
        %v2941 = vpack.c.b16 %v1987, %v1969
        %v2942 = vpack.c.b16 %v1988, %v1970
        %v2943 = vpack.c.b16 %v1989, %v1971
        %v2944 = vpack.c.b16 %v1990, %v1972
        %v2945 = vpack.c.b16 %v1991, %v1973
        %v2946 = vpack.c.b16 %v1992, %v1974
        %v2947 = vpack.c.b16 %v1993, %v1975
        %v2948 = vpack.c.b16 %v1994, %v1976
        %v2949 = vpack.c.b16 %v1995, %v1977
        %v2950 = vpack.c.b16 %v1996, %v1978
        %v2951 = vpack.c.b16 %v1997, %v1979
        %v2952 = vpack.c.b16 %v1998, %v1980
        %v2953 = vpack.c.b16 %v1999, %v1981
        %v2954 = vpack.c.b16 %v2000, %v1982
        %v2955 = vpack.c.b16 %v2001, %v1983
        %v2956 = vpack.c.b16 %v2002, %v1984
        %v2957 = vpack.c.b16 %v2021, %v2003
        %v2958 = vpack.c.b16 %v2022, %v2004
        %v2959 = vpack.c.b16 %v2023, %v2005
        %v2960 = vpack.c.b16 %v2024, %v2006
        %v2961 = vpack.c.b16 %v2025, %v2007
        %v2962 = vpack.c.b16 %v2026, %v2008
        %v2963 = vpack.c.b16 %v2027, %v2009
        %v2964 = vpack.c.b16 %v2028, %v2010
        %v2965 = vpack.c.b16 %v2029, %v2011
        %v2966 = vpack.c.b16 %v2030, %v2012
        %v2967 = vpack.c.b16 %v2031, %v2013
        %v2968 = vpack.c.b16 %v2032, %v2014
        %v2969 = vpack.c.b16 %v2033, %v2015
        %v2970 = vpack.c.b16 %v2034, %v2016
        %v2971 = vpack.c.b16 %v2035, %v2017
        %v2972 = vpack.c.b16 %v2036, %v2018
        %v2973 = vpack.c.b16 %v2037, %v2019
        %v2974 = vpack.c.b16 %v2038, %v2020
        %v2975 = vpack.c.b16 %v2057, %v2039
        %v2976 = vpack.c.b16 %v2058, %v2040
        %v2977 = vpack.c.b16 %v2059, %v2041
        %v2978 = vpack.c.b16 %v2060, %v2042
        %v2979 = vpack.c.b16 %v2061, %v2043
        %v2980 = vpack.c.b16 %v2062, %v2044
        %v2981 = vpack.c.b16 %v2063, %v2045
        %v2982 = vpack.c.b16 %v2064, %v2046
        %v2983 = vpack.c.b16 %v2065, %v2047
        %v2984 = vpack.c.b16 %v2066, %v2048
        %v2985 = vpack.c.b16 %v2067, %v2049
        %v2986 = vpack.c.b16 %v2068, %v2050
        %v2987 = vpack.c.b16 %v2069, %v2051
        %v2988 = vpack.c.b16 %v2070, %v2052
        %v2989 = vpack.c.b16 %v2071, %v2053
        %v2990 = vpack.c.b16 %v2072, %v2054
        %v2991 = vpack.c.b16 %v2073, %v2055
        %v2992 = vpack.c.b16 %v2074, %v2056
        %v2993 = vpack.c.b16 %v2093, %v2075
        %v2994 = vpack.c.b16 %v2094, %v2076
        %v2995 = vpack.c.b16 %v2095, %v2077
        %v2996 = vpack.c.b16 %v2096, %v2078
        %v2997 = vpack.c.b16 %v2097, %v2079
        %v2998 = vpack.c.b16 %v2098, %v2080
        %v2999 = vpack.c.b16 %v2099, %v2081
        %v3000 = vpack.c.b16 %v2100, %v2082
        %v3001 = vpack.c.b16 %v2101, %v2083
        %v3002 = vpack.c.b16 %v2102, %v2084
        %v3003 = vpack.c.b16 %v2103, %v2085
        %v3004 = vpack.c.b16 %v2104, %v2086
        %v3005 = vpack.c.b16 %v2105, %v2087
        %v3006 = vpack.c.b16 %v2106, %v2088
        %v3007 = vpack.c.b16 %v2107, %v2089
        %v3008 = vpack.c.b16 %v2108, %v2090
        %v3009 = vpack.c.b16 %v2109, %v2091
        %v3010 = vpack.c.b16 %v2110, %v2092
        %v3011 = vpack.c.b16 %v2129, %v2111
        %v3012 = vpack.c.b16 %v2130, %v2112
        %v3013 = vpack.c.b16 %v2131, %v2113
        %v3014 = vpack.c.b16 %v2132, %v2114
        %v3015 = vpack.c.b16 %v2133, %v2115
        %v3016 = vpack.c.b16 %v2134, %v2116
        %v3017 = vpack.c.b16 %v2135, %v2117
        %v3018 = vpack.c.b16 %v2136, %v2118
        %v3019 = vpack.c.b16 %v2137, %v2119
        %v3020 = vpack.c.b16 %v2138, %v2120
        %v3021 = vpack.c.b16 %v2139, %v2121
        %v3022 = vpack.c.b16 %v2140, %v2122
        %v3023 = vpack.c.b16 %v2141, %v2123
        %v3024 = vpack.c.b16 %v2142, %v2124
        %v3025 = vpack.c.b16 %v2143, %v2125
        %v3026 = vpack.c.b16 %v2144, %v2126
        %v3027 = vpack.c.b16 %v2145, %v2127
        %v3028 = vpack.c.b16 %v2146, %v2128
        %v3029 = vpack.c.b16 %v2165, %v2147
        %v3030 = vpack.c.b16 %v2166, %v2148
        %v3031 = vpack.c.b16 %v2167, %v2149
        %v3032 = vpack.c.b16 %v2168, %v2150
        %v3033 = vpack.c.b16 %v2169, %v2151
        %v3034 = vpack.c.b16 %v2170, %v2152
        %v3035 = vpack.c.b16 %v2171, %v2153
        %v3036 = vpack.c.b16 %v2172, %v2154
        %v3037 = vpack.c.b16 %v2173, %v2155
        %v3038 = vpack.c.b16 %v2174, %v2156
        %v3039 = vpack.c.b16 %v2175, %v2157
        %v3040 = vpack.c.b16 %v2176, %v2158
        %v3041 = vpack.c.b16 %v2177, %v2159
        %v3042 = vpack.c.b16 %v2178, %v2160
        %v3043 = vpack.c.b16 %v2179, %v2161
        %v3044 = vpack.c.b16 %v2180, %v2162
        %v3045 = vpack.c.b16 %v2181, %v2163
        %v3046 = vpack.c.b16 %v2182, %v2164
        %v3047 = vpack.c.b16 %v2201, %v2183
        %v3048 = vpack.c.b16 %v2202, %v2184
        %v3049 = vpack.c.b16 %v2203, %v2185
        %v3050 = vpack.c.b16 %v2204, %v2186
        %v3051 = vpack.c.b16 %v2205, %v2187
        %v3052 = vpack.c.b16 %v2206, %v2188
        %v3053 = vpack.c.b16 %v2207, %v2189
        %v3054 = vpack.c.b16 %v2208, %v2190
        %v3055 = vpack.c.b16 %v2209, %v2191
        %v3056 = vpack.c.b16 %v2210, %v2192
        %v3057 = vpack.c.b16 %v2211, %v2193
        %v3058 = vpack.c.b16 %v2212, %v2194
        %v3059 = vpack.c.b16 %v2213, %v2195
        %v3060 = vpack.c.b16 %v2214, %v2196
        %v3061 = vpack.c.b16 %v2215, %v2197
        %v3062 = vpack.c.b16 %v2216, %v2198
        %v3063 = vpack.c.b16 %v2217, %v2199
        %v3064 = vpack.c.b16 %v2218, %v2200
        %v3065 = vpack.c.b16 %v2237, %v2219
        %v3066 = vpack.c.b16 %v2238, %v2220
        %v3067 = vpack.c.b16 %v2239, %v2221
        %v3068 = vpack.c.b16 %v2240, %v2222
        %v3069 = vpack.c.b16 %v2241, %v2223
        %v3070 = vpack.c.b16 %v2242, %v2224
        %v3071 = vpack.c.b16 %v2243, %v2225
        %v3072 = vpack.c.b16 %v2244, %v2226
        %v3073 = vpack.c.b16 %v2245, %v2227
        %v3074 = vpack.c.b16 %v2246, %v2228
        %v3075 = vpack.c.b16 %v2247, %v2229
        %v3076 = vpack.c.b16 %v2248, %v2230
        %v3077 = vpack.c.b16 %v2249, %v2231
        %v3078 = vpack.c.b16 %v2250, %v2232
        %v3079 = vpack.c.b16 %v2251, %v2233
        %v3080 = vpack.c.b16 %v2252, %v2234
        %v3081 = vpack.c.b16 %v2253, %v2235
        %v3082 = vpack.c.b16 %v2254, %v2236
        %v3083 = vpack.c.b16 %v2273, %v2255
        %v3084 = vpack.c.b16 %v2274, %v2256
        %v3085 = vpack.c.b16 %v2275, %v2257
        %v3086 = vpack.c.b16 %v2276, %v2258
        %v3087 = vpack.c.b16 %v2277, %v2259
        %v3088 = vpack.c.b16 %v2278, %v2260
        %v3089 = vpack.c.b16 %v2279, %v2261
        %v3090 = vpack.c.b16 %v2280, %v2262
        %v3091 = vpack.c.b16 %v2281, %v2263
        %v3092 = vpack.c.b16 %v2282, %v2264
        %v3093 = vpack.c.b16 %v2283, %v2265
        %v3094 = vpack.c.b16 %v2284, %v2266
        %v3095 = vpack.c.b16 %v2285, %v2267
        %v3096 = vpack.c.b16 %v2286, %v2268
        %v3097 = vpack.c.b16 %v2287, %v2269
        %v3098 = vpack.c.b16 %v2288, %v2270
        %v3099 = vpack.c.b16 %v2289, %v2271
        %v3100 = vpack.c.b16 %v2290, %v2272
        %v3101 = vpack.c.b16 %v2309, %v2291
        %v3102 = vpack.c.b16 %v2310, %v2292
        %v3103 = vpack.c.b16 %v2311, %v2293
        %v3104 = vpack.c.b16 %v2312, %v2294
        %v3105 = vpack.c.b16 %v2313, %v2295
        %v3106 = vpack.c.b16 %v2314, %v2296
        %v3107 = vpack.c.b16 %v2315, %v2297
        %v3108 = vpack.c.b16 %v2316, %v2298
        %v3109 = vpack.c.b16 %v2317, %v2299
        %v3110 = vpack.c.b16 %v2318, %v2300
        %v3111 = vpack.c.b16 %v2319, %v2301
        %v3112 = vpack.c.b16 %v2320, %v2302
        %v3113 = vpack.c.b16 %v2321, %v2303
        %v3114 = vpack.c.b16 %v2322, %v2304
        %v3115 = vpack.c.b16 %v2323, %v2305
        %v3116 = vpack.c.b16 %v2324, %v2306
        %v3117 = vpack.c.b16 %v2325, %v2307
        %v3118 = vpack.c.b16 %v2326, %v2308
        %v3119 = vpack.c.b16 %v2345, %v2327
        %v3120 = vpack.c.b16 %v2346, %v2328
        %v3121 = vpack.c.b16 %v2347, %v2329
        %v3122 = vpack.c.b16 %v2348, %v2330
        %v3123 = vpack.c.b16 %v2349, %v2331
        %v3124 = vpack.c.b16 %v2350, %v2332
        %v3125 = vpack.c.b16 %v2351, %v2333
        %v3126 = vpack.c.b16 %v2352, %v2334
        %v3127 = vpack.c.b16 %v2353, %v2335
        %v3128 = vpack.c.b16 %v2354, %v2336
        %v3129 = vpack.c.b16 %v2355, %v2337
        %v3130 = vpack.c.b16 %v2356, %v2338
        %v3131 = vpack.c.b16 %v2357, %v2339
        %v3132 = vpack.c.b16 %v2358, %v2340
        %v3133 = vpack.c.b16 %v2359, %v2341
        %v3134 = vpack.c.b16 %v2360, %v2342
        %v3135 = vpack.c.b16 %v2361, %v2343
        %v3136 = vpack.c.b16 %v2362, %v2344
        %v3137 = vpack.c.b16 %v2381, %v2363
        %v3138 = vpack.c.b16 %v2382, %v2364
        %v3139 = vpack.c.b16 %v2383, %v2365
        %v3140 = vpack.c.b16 %v2384, %v2366
        %v3141 = vpack.c.b16 %v2385, %v2367
        %v3142 = vpack.c.b16 %v2386, %v2368
        %v3143 = vpack.c.b16 %v2387, %v2369
        %v3144 = vpack.c.b16 %v2388, %v2370
        %v3145 = vpack.c.b16 %v2389, %v2371
        %v3146 = vpack.c.b16 %v2390, %v2372
        %v3147 = vpack.c.b16 %v2391, %v2373
        %v3148 = vpack.c.b16 %v2392, %v2374
        %v3149 = vpack.c.b16 %v2393, %v2375
        %v3150 = vpack.c.b16 %v2394, %v2376
        %v3151 = vpack.c.b16 %v2395, %v2377
        %v3152 = vpack.c.b16 %v2396, %v2378
        %v3153 = vpack.c.b16 %v2397, %v2379
        %v3154 = vpack.c.b16 %v2398, %v2380
        %v3155 = vpack.c.b16 %v2417, %v2399
        %v3156 = vpack.c.b16 %v2418, %v2400
        %v3157 = vpack.c.b16 %v2419, %v2401
        %v3158 = vpack.c.b16 %v2420, %v2402
        %v3159 = vpack.c.b16 %v2421, %v2403
        %v3160 = vpack.c.b16 %v2422, %v2404
        %v3161 = vpack.c.b16 %v2423, %v2405
        %v3162 = vpack.c.b16 %v2424, %v2406
        %v3163 = vpack.c.b16 %v2425, %v2407
        %v3164 = vpack.c.b16 %v2426, %v2408
        %v3165 = vpack.c.b16 %v2427, %v2409
        %v3166 = vpack.c.b16 %v2428, %v2410
        %v3167 = vpack.c.b16 %v2429, %v2411
        %v3168 = vpack.c.b16 %v2430, %v2412
        %v3169 = vpack.c.b16 %v2431, %v2413
        %v3170 = vpack.c.b16 %v2432, %v2414
        %v3171 = vpack.c.b16 %v2433, %v2415
        %v3172 = vpack.c.b16 %v2434, %v2416
        %v3173 = vpack.c.b16 %v2453, %v2435
        %v3174 = vpack.c.b16 %v2454, %v2436
        %v3175 = vpack.c.b16 %v2455, %v2437
        %v3176 = vpack.c.b16 %v2456, %v2438
        %v3177 = vpack.c.b16 %v2457, %v2439
        %v3178 = vpack.c.b16 %v2458, %v2440
        %v3179 = vpack.c.b16 %v2459, %v2441
        %v3180 = vpack.c.b16 %v2460, %v2442
        %v3181 = vpack.c.b16 %v2461, %v2443
        %v3182 = vpack.c.b16 %v2462, %v2444
        %v3183 = vpack.c.b16 %v2463, %v2445
        %v3184 = vpack.c.b16 %v2464, %v2446
        %v3185 = vpack.c.b16 %v2465, %v2447
        %v3186 = vpack.c.b16 %v2466, %v2448
        %v3187 = vpack.c.b16 %v2467, %v2449
        %v3188 = vpack.c.b16 %v2468, %v2450
        %v3189 = vpack.c.b16 %v2469, %v2451
        %v3190 = vpack.c.b16 %v2470, %v2452
        %v3191 = vpack.c.b16 %v2489, %v2471
        %v3192 = vpack.c.b16 %v2490, %v2472
        %v3193 = vpack.c.b16 %v2491, %v2473
        %v3194 = vpack.c.b16 %v2492, %v2474
        %v3195 = vpack.c.b16 %v2493, %v2475
        %v3196 = vpack.c.b16 %v2494, %v2476
        %v3197 = vpack.c.b16 %v2495, %v2477
        %v3198 = vpack.c.b16 %v2496, %v2478
        %v3199 = vpack.c.b16 %v2497, %v2479
        %v3200 = vpack.c.b16 %v2498, %v2480
        %v3201 = vpack.c.b16 %v2499, %v2481
        %v3202 = vpack.c.b16 %v2500, %v2482
        %v3203 = vpack.c.b16 %v2501, %v2483
        %v3204 = vpack.c.b16 %v2502, %v2484
        %v3205 = vpack.c.b16 %v2503, %v2485
        %v3206 = vpack.c.b16 %v2504, %v2486
        %v3207 = vpack.c.b16 %v2505, %v2487
        %v3208 = vpack.c.b16 %v2506, %v2488
        %v3209 = vpack.c.b16 %v2525, %v2507
        %v3210 = vpack.c.b16 %v2526, %v2508
        %v3211 = vpack.c.b16 %v2527, %v2509
        %v3212 = vpack.c.b16 %v2528, %v2510
        %v3213 = vpack.c.b16 %v2529, %v2511
        %v3214 = vpack.c.b16 %v2530, %v2512
        %v3215 = vpack.c.b16 %v2531, %v2513
        %v3216 = vpack.c.b16 %v2532, %v2514
        %v3217 = vpack.c.b16 %v2533, %v2515
        %v3218 = vpack.c.b16 %v2534, %v2516
        %v3219 = vpack.c.b16 %v2535, %v2517
        %v3220 = vpack.c.b16 %v2536, %v2518
        %v3221 = vpack.c.b16 %v2537, %v2519
        %v3222 = vpack.c.b16 %v2538, %v2520
        %v3223 = vpack.c.b16 %v2539, %v2521
        %v3224 = vpack.c.b16 %v2540, %v2522
        %v3225 = vpack.c.b16 %v2541, %v2523
        %v3226 = vpack.c.b16 %v2542, %v2524
        %v3227 = vpack.c.b16 %v2561, %v2543
        %v3228 = vpack.c.b16 %v2562, %v2544
        %v3229 = vpack.c.b16 %v2563, %v2545
        %v3230 = vpack.c.b16 %v2564, %v2546
        %v3231 = vpack.c.b16 %v2565, %v2547
        %v3232 = vpack.c.b16 %v2566, %v2548
        %v3233 = vpack.c.b16 %v2567, %v2549
        %v3234 = vpack.c.b16 %v2568, %v2550
        %v3235 = vpack.c.b16 %v2569, %v2551
        %v3236 = vpack.c.b16 %v2570, %v2552
        %v3237 = vpack.c.b16 %v2571, %v2553
        %v3238 = vpack.c.b16 %v2572, %v2554
        %v3239 = vpack.c.b16 %v2573, %v2555
        %v3240 = vpack.c.b16 %v2574, %v2556
        %v3241 = vpack.c.b16 %v2575, %v2557
        %v3242 = vpack.c.b16 %v2576, %v2558
        %v3243 = vpack.c.b16 %v2577, %v2559
        %v3244 = vpack.c.b16 %v2578, %v2560
        %v3245 = vpack.c.b16 %v2597, %v2579
        %v3246 = vpack.c.b16 %v2598, %v2580
        %v3247 = vpack.c.b16 %v2599, %v2581
        %v3248 = vpack.c.b16 %v2600, %v2582
        %v3249 = vpack.c.b16 %v2601, %v2583
        %v3250 = vpack.c.b16 %v2602, %v2584
        %v3251 = vpack.c.b16 %v2603, %v2585
        %v3252 = vpack.c.b16 %v2604, %v2586
        %v3253 = vpack.c.b16 %v2605, %v2587
        %v3254 = vpack.c.b16 %v2606, %v2588
        %v3255 = vpack.c.b16 %v2607, %v2589
        %v3256 = vpack.c.b16 %v2608, %v2590
        %v3257 = vpack.c.b16 %v2609, %v2591
        %v3258 = vpack.c.b16 %v2610, %v2592
        %v3259 = vpack.c.b16 %v2611, %v2593
        %v3260 = vpack.c.b16 %v2612, %v2594
        %v3261 = vpack.c.b16 %v2613, %v2595
        %v3262 = vpack.c.b16 %v2614, %v2596
        %v3263 = vpack.c.b16 %v2633, %v2615
        %v3264 = vpack.c.b16 %v2634, %v2616
        %v3265 = vpack.c.b16 %v2635, %v2617
        %v3266 = vpack.c.b16 %v2636, %v2618
        %v3267 = vpack.c.b16 %v2637, %v2619
        %v3268 = vpack.c.b16 %v2638, %v2620
        %v3269 = vpack.c.b16 %v2639, %v2621
        %v3270 = vpack.c.b16 %v2640, %v2622
        %v3271 = vpack.c.b16 %v2641, %v2623
        %v3272 = vpack.c.b16 %v2642, %v2624
        %v3273 = vpack.c.b16 %v2643, %v2625
        %v3274 = vpack.c.b16 %v2644, %v2626
        %v3275 = vpack.c.b16 %v2645, %v2627
        %v3276 = vpack.c.b16 %v2646, %v2628
        %v3277 = vpack.c.b16 %v2647, %v2629
        %v3278 = vpack.c.b16 %v2648, %v2630
        %v3279 = vpack.c.b16 %v2649, %v2631
        %v3280 = vpack.c.b16 %v2650, %v2632
        %v3281 = vpack.c.b16 %v2669, %v2651
        %v3282 = vpack.c.b16 %v2670, %v2652
        %v3283 = vpack.c.b16 %v2671, %v2653
        %v3284 = vpack.c.b16 %v2672, %v2654
        %v3285 = vpack.c.b16 %v2673, %v2655
        %v3286 = vpack.c.b16 %v2674, %v2656
        %v3287 = vpack.c.b16 %v2675, %v2657
        %v3288 = vpack.c.b16 %v2676, %v2658
        %v3289 = vpack.c.b16 %v2677, %v2659
        %v3290 = vpack.c.b16 %v2678, %v2660
        %v3291 = vpack.c.b16 %v2679, %v2661
        %v3292 = vpack.c.b16 %v2680, %v2662
        %v3293 = vpack.c.b16 %v2681, %v2663
        %v3294 = vpack.c.b16 %v2682, %v2664
        %v3295 = vpack.c.b16 %v2683, %v2665
        %v3296 = vpack.c.b16 %v2684, %v2666
        %v3297 = vpack.c.b16 %v2685, %v2667
        %v3298 = vpack.c.b16 %v2686, %v2668
        %v3299 = vpack.c.b16 %v2705, %v2687
        %v3300 = vpack.c.b16 %v2706, %v2688
        %v3301 = vpack.c.b16 %v2707, %v2689
        %v3302 = vpack.c.b16 %v2708, %v2690
        %v3303 = vpack.c.b16 %v2709, %v2691
        %v3304 = vpack.c.b16 %v2710, %v2692
        %v3305 = vpack.c.b16 %v2711, %v2693
        %v3306 = vpack.c.b16 %v2712, %v2694
        %v3307 = vpack.c.b16 %v2713, %v2695
        %v3308 = vpack.c.b16 %v2714, %v2696
        %v3309 = vpack.c.b16 %v2715, %v2697
        %v3310 = vpack.c.b16 %v2716, %v2698
        %v3311 = vpack.c.b16 %v2717, %v2699
        %v3312 = vpack.c.b16 %v2718, %v2700
        %v3313 = vpack.c.b16 %v2719, %v2701
        %v3314 = vpack.c.b16 %v2720, %v2702
        %v3315 = vpack.c.b16 %v2721, %v2703
        %v3316 = vpack.c.b16 %v2722, %v2704
        %v3317 = vpack.c.b16 %v2741, %v2723
        %v3318 = vpack.c.b16 %v2742, %v2724
        %v3319 = vpack.c.b16 %v2743, %v2725
        %v3320 = vpack.c.b16 %v2744, %v2726
        %v3321 = vpack.c.b16 %v2745, %v2727
        %v3322 = vpack.c.b16 %v2746, %v2728
        %v3323 = vpack.c.b16 %v2747, %v2729
        %v3324 = vpack.c.b16 %v2748, %v2730
        %v3325 = vpack.c.b16 %v2749, %v2731
        %v3326 = vpack.c.b16 %v2750, %v2732
        %v3327 = vpack.c.b16 %v2751, %v2733
        %v3328 = vpack.c.b16 %v2752, %v2734
        %v3329 = vpack.c.b16 %v2753, %v2735
        %v3330 = vpack.c.b16 %v2754, %v2736
        %v3331 = vpack.c.b16 %v2755, %v2737
        %v3332 = vpack.c.b16 %v2756, %v2738
        %v3333 = vpack.c.b16 %v2757, %v2739
        %v3334 = vpack.c.b16 %v2758, %v2740
        %3911 = vmatprep.subr.bf16.mxu0 %v2760
        %3912 = vmatpush1.bf16.msra.mxu0 %v2759
        %3913 = vmatprep.subr.bf16.mxu0 %v2778
        %3914 = vmatpush1.bf16.msra.mxu0 %v2777
        %3915 = vmatprep.subr.bf16.mxu0 %v2796
        %3916 = vmatpush1.bf16.msra.mxu0 %v2795
        %3917 = vmatprep.subr.bf16.mxu0 %v2814
        %3918 = vmatpush1.bf16.msra.mxu0 %v2813
        %3919 = vmatprep.subr.bf16.mxu0 %v2832
        %3920 = vmatpush1.bf16.msra.mxu0 %v2831
        %3921 = vmatprep.subr.bf16.mxu0 %v2850
        %3922 = vmatpush1.bf16.msra.mxu0 %v2849
        %3923 = vmatprep.subr.bf16.mxu0 %v2868
        %3924 = vmatpush1.bf16.msra.mxu0 %v2867
        %3925 = vmatprep.subr.bf16.mxu0 %v2886
        %3926 = vmatpush1.bf16.msra.mxu0 %v2885
        %3927 = vmatprep.subr.bf16.mxu0 %v2904
        %3928 = vmatpush1.bf16.msra.mxu0 %v2903
        %3929 = vmatprep.subr.bf16.mxu0 %v2922
        %3930 = vmatpush1.bf16.msra.mxu0 %v2921
        %3931 = vmatprep.subr.bf16.mxu0 %v2940
        %3932 = vmatpush1.bf16.msra.mxu0 %v2939
        %3933 = vmatprep.subr.bf16.mxu0 %v2958
        %3934 = vmatpush1.bf16.msra.mxu0 %v2957
        %3935 = vmatprep.subr.bf16.mxu0 %v2976
        %3936 = vmatpush1.bf16.msra.mxu0 %v2975
        %3937 = vmatprep.subr.bf16.mxu0 %v2994
        %3938 = vmatpush1.bf16.msra.mxu0 %v2993
        %3939 = vmatprep.subr.bf16.mxu0 %v3012
        %3940 = vmatpush1.bf16.msra.mxu0 %v3011
        %3941 = vmatprep.subr.bf16.mxu0 %v3030
        %3942 = vmatpush1.bf16.msra.mxu0 %v3029
        %3943 = vmatprep.mubr.bf16.mxu0 %v356
        %3944 = vmatmul.mubr.bf16.gmra.mrb[0].mxu0 %v355
        %v3945 = vpop.f32.mrb[0].mxu0
        %v3946 = vadd.f32 %v944, %v3945
        %v3947 = vpop.f32.mrb[0].mxu0
        %v3948 = vadd.f32 %v948, %v3947
        %v3949 = vpop.f32.mrb[0].mxu0
        %v3950 = vpop.f32.mrb[0].mxu0
        %3951 = vdwg.mxu0
        %3952 = vmatprep.subr.bf16.mxu0 %v3048
        %3953 = vmatpush1.bf16.msra.mxu0 %v3047
        %3954 = vmatprep.subr.bf16.mxu0 %v3066
        %3955 = vmatpush1.bf16.msra.mxu0 %v3065
        %3956 = vmatprep.subr.bf16.mxu0 %v3084
        %3957 = vmatpush1.bf16.msra.mxu0 %v3083
        %3958 = vmatprep.subr.bf16.mxu0 %v3102
        %3959 = vmatpush1.bf16.msra.mxu0 %v3101
        %3960 = vmatprep.subr.bf16.mxu0 %v3120
        %3961 = vmatpush1.bf16.msra.mxu0 %v3119
        %3962 = vmatprep.subr.bf16.mxu0 %v3138
        %3963 = vmatpush1.bf16.msra.mxu0 %v3137
        %3964 = vmatprep.subr.bf16.mxu0 %v3156
        %3965 = vmatpush1.bf16.msra.mxu0 %v3155
        %3966 = vmatprep.subr.bf16.mxu0 %v3174
        %3967 = vmatpush1.bf16.msra.mxu0 %v3173
        %3968 = vmatprep.subr.bf16.mxu0 %v3192
        %3969 = vmatpush1.bf16.msra.mxu0 %v3191
        %3970 = vmatprep.subr.bf16.mxu0 %v3210
        %3971 = vmatpush1.bf16.msra.mxu0 %v3209
        %3972 = vmatprep.subr.bf16.mxu0 %v3228
        %3973 = vmatpush1.bf16.msra.mxu0 %v3227
        %3974 = vmatprep.subr.bf16.mxu0 %v3246
        %3975 = vmatpush1.bf16.msra.mxu0 %v3245
        %3976 = vmatprep.subr.bf16.mxu0 %v3264
        %3977 = vmatpush1.bf16.msra.mxu0 %v3263
        %3978 = vmatprep.subr.bf16.mxu0 %v3282
        %3979 = vmatpush1.bf16.msra.mxu0 %v3281
        %3980 = vmatprep.subr.bf16.mxu0 %v3300
        %3981 = vmatpush1.bf16.msra.mxu0 %v3299
        %3982 = vmatprep.subr.bf16.mxu0 %v3318
        %3983 = vmatpush1.bf16.msra.mxu0 %v3317
        %3984 = vmatprep.mubr.bf16.mxu0 %v358
        %3985 = vmatmul.mubr.bf16.gmra.mrb[0].mxu0 %v357
        %v3986 = vpop.f32.mrb[0].mxu0
        %v3987 = vadd.f32 %v3946, %v3986
        %v3988 = vpop.f32.mrb[0].mxu0
        %v3989 = vadd.f32 %v3948, %v3988
        %v3990 = vpop.f32.mrb[0].mxu0
        %v3991 = vpop.f32.mrb[0].mxu0
        %3992 = vdwg.mxu0
        %3993 = vmatprep.subr.bf16.mxu0 %v2762
        %3994 = vmatpush1.bf16.msra.mxu0 %v2761
        %3995 = vmatprep.subr.bf16.mxu0 %v2780
        %3996 = vmatpush1.bf16.msra.mxu0 %v2779
        %3997 = vmatprep.subr.bf16.mxu0 %v2798
        %3998 = vmatpush1.bf16.msra.mxu0 %v2797
        %3999 = vmatprep.subr.bf16.mxu0 %v2816
        %4000 = vmatpush1.bf16.msra.mxu0 %v2815
        %4001 = vmatprep.subr.bf16.mxu0 %v2834
        %4002 = vmatpush1.bf16.msra.mxu0 %v2833
        %4003 = vmatprep.subr.bf16.mxu0 %v2852
        %4004 = vmatpush1.bf16.msra.mxu0 %v2851
        %4005 = vmatprep.subr.bf16.mxu0 %v2870
        %4006 = vmatpush1.bf16.msra.mxu0 %v2869
        %4007 = vmatprep.subr.bf16.mxu0 %v2888
        %4008 = vmatpush1.bf16.msra.mxu0 %v2887
        %4009 = vmatprep.subr.bf16.mxu0 %v2906
        %4010 = vmatpush1.bf16.msra.mxu0 %v2905
        %4011 = vmatprep.subr.bf16.mxu0 %v2924
        %4012 = vmatpush1.bf16.msra.mxu0 %v2923
        %4013 = vmatprep.subr.bf16.mxu0 %v2942
        %4014 = vmatpush1.bf16.msra.mxu0 %v2941
        %4015 = vmatprep.subr.bf16.mxu0 %v2960
        %4016 = vmatpush1.bf16.msra.mxu0 %v2959
        %4017 = vmatprep.subr.bf16.mxu0 %v2978
        %4018 = vmatpush1.bf16.msra.mxu0 %v2977
        %4019 = vmatprep.subr.bf16.mxu0 %v2996
        %4020 = vmatpush1.bf16.msra.mxu0 %v2995
        %4021 = vmatprep.subr.bf16.mxu0 %v3014
        %4022 = vmatpush1.bf16.msra.mxu0 %v3013
        %4023 = vmatprep.subr.bf16.mxu0 %v3032
        %4024 = vmatpush1.bf16.msra.mxu0 %v3031
        %4025 = vmatprep.mubr.bf16.mxu0 %v356
        %4026 = vmatmul.mubr.bf16.gmra.mrb[0].mxu0 %v355
        %v4027 = vpop.f32.mrb[0].mxu0
        %v4028 = vadd.f32 %v952, %v4027
        %v4029 = vpop.f32.mrb[0].mxu0
        %v4030 = vadd.f32 %v956, %v4029
        %v4031 = vpop.f32.mrb[0].mxu0
        %v4032 = vpop.f32.mrb[0].mxu0
        %4033 = vdwg.mxu0
        %4034 = vmatprep.subr.bf16.mxu0 %v3050
        %4035 = vmatpush1.bf16.msra.mxu0 %v3049
        %4036 = vmatprep.subr.bf16.mxu0 %v3068
        %4037 = vmatpush1.bf16.msra.mxu0 %v3067
        %4038 = vmatprep.subr.bf16.mxu0 %v3086
        %4039 = vmatpush1.bf16.msra.mxu0 %v3085
        %4040 = vmatprep.subr.bf16.mxu0 %v3104
        %4041 = vmatpush1.bf16.msra.mxu0 %v3103
        %4042 = vmatprep.subr.bf16.mxu0 %v3122
        %4043 = vmatpush1.bf16.msra.mxu0 %v3121
        %4044 = vmatprep.subr.bf16.mxu0 %v3140
        %4045 = vmatpush1.bf16.msra.mxu0 %v3139
        %4046 = vmatprep.subr.bf16.mxu0 %v3158
        %4047 = vmatpush1.bf16.msra.mxu0 %v3157
        %4048 = vmatprep.subr.bf16.mxu0 %v3176
        %4049 = vmatpush1.bf16.msra.mxu0 %v3175
        %4050 = vmatprep.subr.bf16.mxu0 %v3194
        %4051 = vmatpush1.bf16.msra.mxu0 %v3193
        %4052 = vmatprep.subr.bf16.mxu0 %v3212
        %4053 = vmatpush1.bf16.msra.mxu0 %v3211
        %4054 = vmatprep.subr.bf16.mxu0 %v3230
        %4055 = vmatpush1.bf16.msra.mxu0 %v3229
        %4056 = vmatprep.subr.bf16.mxu0 %v3248
        %4057 = vmatpush1.bf16.msra.mxu0 %v3247
        %4058 = vmatprep.subr.bf16.mxu0 %v3266
        %4059 = vmatpush1.bf16.msra.mxu0 %v3265
        %4060 = vmatprep.subr.bf16.mxu0 %v3284
        %4061 = vmatpush1.bf16.msra.mxu0 %v3283
        %4062 = vmatprep.subr.bf16.mxu0 %v3302
        %4063 = vmatpush1.bf16.msra.mxu0 %v3301
        %4064 = vmatprep.subr.bf16.mxu0 %v3320
        %4065 = vmatpush1.bf16.msra.mxu0 %v3319
        %4066 = vmatprep.mubr.bf16.mxu0 %v358
        %4067 = vmatmul.mubr.bf16.gmra.mrb[0].mxu0 %v357
        %v4068 = vpop.f32.mrb[0].mxu0
        %v4069 = vadd.f32 %v4028, %v4068
        %v4070 = vpop.f32.mrb[0].mxu0
        %v4071 = vadd.f32 %v4030, %v4070
        %v4072 = vpop.f32.mrb[0].mxu0
        %v4073 = vpop.f32.mrb[0].mxu0
        %4074 = vdwg.mxu0
        %4075 = vmatprep.subr.bf16.mxu0 %v2764
        %4076 = vmatpush1.bf16.msra.mxu0 %v2763
        %4077 = vmatprep.subr.bf16.mxu0 %v2782
        %4078 = vmatpush1.bf16.msra.mxu0 %v2781
        %4079 = vmatprep.subr.bf16.mxu0 %v2800
        %4080 = vmatpush1.bf16.msra.mxu0 %v2799
        %4081 = vmatprep.subr.bf16.mxu0 %v2818
        %4082 = vmatpush1.bf16.msra.mxu0 %v2817
        %4083 = vmatprep.subr.bf16.mxu0 %v2836
        %4084 = vmatpush1.bf16.msra.mxu0 %v2835
        %4085 = vmatprep.subr.bf16.mxu0 %v2854
        %4086 = vmatpush1.bf16.msra.mxu0 %v2853
        %4087 = vmatprep.subr.bf16.mxu0 %v2872
        %4088 = vmatpush1.bf16.msra.mxu0 %v2871
        %4089 = vmatprep.subr.bf16.mxu0 %v2890
        %4090 = vmatpush1.bf16.msra.mxu0 %v2889
        %4091 = vmatprep.subr.bf16.mxu0 %v2908
        %4092 = vmatpush1.bf16.msra.mxu0 %v2907
        %4093 = vmatprep.subr.bf16.mxu0 %v2926
        %4094 = vmatpush1.bf16.msra.mxu0 %v2925
        %4095 = vmatprep.subr.bf16.mxu0 %v2944
        %4096 = vmatpush1.bf16.msra.mxu0 %v2943
        %4097 = vmatprep.subr.bf16.mxu0 %v2962
        %4098 = vmatpush1.bf16.msra.mxu0 %v2961
        %4099 = vmatprep.subr.bf16.mxu0 %v2980
        %4100 = vmatpush1.bf16.msra.mxu0 %v2979
        %4101 = vmatprep.subr.bf16.mxu0 %v2998
        %4102 = vmatpush1.bf16.msra.mxu0 %v2997
        %4103 = vmatprep.subr.bf16.mxu0 %v3016
        %4104 = vmatpush1.bf16.msra.mxu0 %v3015
        %4105 = vmatprep.subr.bf16.mxu0 %v3034
        %4106 = vmatpush1.bf16.msra.mxu0 %v3033
        %4107 = vmatprep.mubr.bf16.mxu0 %v356
        %4108 = vmatmul.mubr.bf16.gmra.mrb[0].mxu0 %v355
        %v4109 = vpop.f32.mrb[0].mxu0
        %v4110 = vadd.f32 %v960, %v4109
        %v4111 = vpop.f32.mrb[0].mxu0
        %v4112 = vadd.f32 %v964, %v4111
        %v4113 = vpop.f32.mrb[0].mxu0
        %v4114 = vpop.f32.mrb[0].mxu0
        %4115 = vdwg.mxu0
        %4116 = vmatprep.subr.bf16.mxu0 %v3052
        %4117 = vmatpush1.bf16.msra.mxu0 %v3051
        %4118 = vmatprep.subr.bf16.mxu0 %v3070
        %4119 = vmatpush1.bf16.msra.mxu0 %v3069
        %4120 = vmatprep.subr.bf16.mxu0 %v3088
        %4121 = vmatpush1.bf16.msra.mxu0 %v3087
        %4122 = vmatprep.subr.bf16.mxu0 %v3106
        %4123 = vmatpush1.bf16.msra.mxu0 %v3105
        %4124 = vmatprep.subr.bf16.mxu0 %v3124
        %4125 = vmatpush1.bf16.msra.mxu0 %v3123
        %4126 = vmatprep.subr.bf16.mxu0 %v3142
        %4127 = vmatpush1.bf16.msra.mxu0 %v3141
        %4128 = vmatprep.subr.bf16.mxu0 %v3160
        %4129 = vmatpush1.bf16.msra.mxu0 %v3159
        %4130 = vmatprep.subr.bf16.mxu0 %v3178
        %4131 = vmatpush1.bf16.msra.mxu0 %v3177
        %4132 = vmatprep.subr.bf16.mxu0 %v3196
        %4133 = vmatpush1.bf16.msra.mxu0 %v3195
        %4134 = vmatprep.subr.bf16.mxu0 %v3214
        %4135 = vmatpush1.bf16.msra.mxu0 %v3213
        %4136 = vmatprep.subr.bf16.mxu0 %v3232
        %4137 = vmatpush1.bf16.msra.mxu0 %v3231
        %4138 = vmatprep.subr.bf16.mxu0 %v3250
        %4139 = vmatpush1.bf16.msra.mxu0 %v3249
        %4140 = vmatprep.subr.bf16.mxu0 %v3268
        %4141 = vmatpush1.bf16.msra.mxu0 %v3267
        %4142 = vmatprep.subr.bf16.mxu0 %v3286
        %4143 = vmatpush1.bf16.msra.mxu0 %v3285
        %4144 = vmatprep.subr.bf16.mxu0 %v3304
        %4145 = vmatpush1.bf16.msra.mxu0 %v3303
        %4146 = vmatprep.subr.bf16.mxu0 %v3322
        %4147 = vmatpush1.bf16.msra.mxu0 %v3321
        %4148 = vmatprep.mubr.bf16.mxu0 %v358
        %4149 = vmatmul.mubr.bf16.gmra.mrb[0].mxu0 %v357
        %v4150 = vpop.f32.mrb[0].mxu0
        %v4151 = vadd.f32 %v4110, %v4150
        %v4152 = vpop.f32.mrb[0].mxu0
        %v4153 = vadd.f32 %v4112, %v4152
        %v4154 = vpop.f32.mrb[0].mxu0
        %v4155 = vpop.f32.mrb[0].mxu0
        %4156 = vdwg.mxu0
        %4157 = vmatprep.subr.bf16.mxu0 %v2766
        %4158 = vmatpush1.bf16.msra.mxu0 %v2765
        %4159 = vmatprep.subr.bf16.mxu0 %v2784
        %4160 = vmatpush1.bf16.msra.mxu0 %v2783
        %4161 = vmatprep.subr.bf16.mxu0 %v2802
        %4162 = vmatpush1.bf16.msra.mxu0 %v2801
        %4163 = vmatprep.subr.bf16.mxu0 %v2820
        %4164 = vmatpush1.bf16.msra.mxu0 %v2819
        %4165 = vmatprep.subr.bf16.mxu0 %v2838
        %4166 = vmatpush1.bf16.msra.mxu0 %v2837
        %4167 = vmatprep.subr.bf16.mxu0 %v2856
        %4168 = vmatpush1.bf16.msra.mxu0 %v2855
        %4169 = vmatprep.subr.bf16.mxu0 %v2874
        %4170 = vmatpush1.bf16.msra.mxu0 %v2873
        %4171 = vmatprep.subr.bf16.mxu0 %v2892
        %4172 = vmatpush1.bf16.msra.mxu0 %v2891
        %4173 = vmatprep.subr.bf16.mxu0 %v2910
        %4174 = vmatpush1.bf16.msra.mxu0 %v2909
        %4175 = vmatprep.subr.bf16.mxu0 %v2928
        %4176 = vmatpush1.bf16.msra.mxu0 %v2927
        %4177 = vmatprep.subr.bf16.mxu0 %v2946
        %4178 = vmatpush1.bf16.msra.mxu0 %v2945
        %4179 = vmatprep.subr.bf16.mxu0 %v2964
        %4180 = vmatpush1.bf16.msra.mxu0 %v2963
        %4181 = vmatprep.subr.bf16.mxu0 %v2982
        %4182 = vmatpush1.bf16.msra.mxu0 %v2981
        %4183 = vmatprep.subr.bf16.mxu0 %v3000
        %4184 = vmatpush1.bf16.msra.mxu0 %v2999
        %4185 = vmatprep.subr.bf16.mxu0 %v3018
        %4186 = vmatpush1.bf16.msra.mxu0 %v3017
        %4187 = vmatprep.subr.bf16.mxu0 %v3036
        %4188 = vmatpush1.bf16.msra.mxu0 %v3035
        %4189 = vmatprep.mubr.bf16.mxu0 %v356
        %4190 = vmatmul.mubr.bf16.gmra.mrb[0].mxu0 %v355
        %v4191 = vpop.f32.mrb[0].mxu0
        %v4192 = vadd.f32 %v968, %v4191
        %v4193 = vpop.f32.mrb[0].mxu0
        %v4194 = vadd.f32 %v972, %v4193
        %v4195 = vpop.f32.mrb[0].mxu0
        %v4196 = vpop.f32.mrb[0].mxu0
        %4197 = vdwg.mxu0
        %4198 = vmatprep.subr.bf16.mxu0 %v3054
        %4199 = vmatpush1.bf16.msra.mxu0 %v3053
        %4200 = vmatprep.subr.bf16.mxu0 %v3072
        %4201 = vmatpush1.bf16.msra.mxu0 %v3071
        %4202 = vmatprep.subr.bf16.mxu0 %v3090
        %4203 = vmatpush1.bf16.msra.mxu0 %v3089
        %4204 = vmatprep.subr.bf16.mxu0 %v3108
        %4205 = vmatpush1.bf16.msra.mxu0 %v3107
        %4206 = vmatprep.subr.bf16.mxu0 %v3126
        %4207 = vmatpush1.bf16.msra.mxu0 %v3125
        %4208 = vmatprep.subr.bf16.mxu0 %v3144
        %4209 = vmatpush1.bf16.msra.mxu0 %v3143
        %4210 = vmatprep.subr.bf16.mxu0 %v3162
        %4211 = vmatpush1.bf16.msra.mxu0 %v3161
        %4212 = vmatprep.subr.bf16.mxu0 %v3180
        %4213 = vmatpush1.bf16.msra.mxu0 %v3179
        %4214 = vmatprep.subr.bf16.mxu0 %v3198
        %4215 = vmatpush1.bf16.msra.mxu0 %v3197
        %4216 = vmatprep.subr.bf16.mxu0 %v3216
        %4217 = vmatpush1.bf16.msra.mxu0 %v3215
        %4218 = vmatprep.subr.bf16.mxu0 %v3234
        %4219 = vmatpush1.bf16.msra.mxu0 %v3233
        %4220 = vmatprep.subr.bf16.mxu0 %v3252
        %4221 = vmatpush1.bf16.msra.mxu0 %v3251
        %4222 = vmatprep.subr.bf16.mxu0 %v3270
        %4223 = vmatpush1.bf16.msra.mxu0 %v3269
        %4224 = vmatprep.subr.bf16.mxu0 %v3288
        %4225 = vmatpush1.bf16.msra.mxu0 %v3287
        %4226 = vmatprep.subr.bf16.mxu0 %v3306
        %4227 = vmatpush1.bf16.msra.mxu0 %v3305
        %4228 = vmatprep.subr.bf16.mxu0 %v3324
        %4229 = vmatpush1.bf16.msra.mxu0 %v3323
        %4230 = vmatprep.mubr.bf16.mxu0 %v358
        %4231 = vmatmul.mubr.bf16.gmra.mrb[0].mxu0 %v357
        %v4232 = vpop.f32.mrb[0].mxu0
        %v4233 = vadd.f32 %v4192, %v4232
        %v4234 = vpop.f32.mrb[0].mxu0
        %v4235 = vadd.f32 %v4194, %v4234
        %v4236 = vpop.f32.mrb[0].mxu0
        %v4237 = vpop.f32.mrb[0].mxu0
        %4238 = vdwg.mxu0
        %4239 = vmatprep.subr.bf16.mxu0 %v2768
        %4240 = vmatpush1.bf16.msra.mxu0 %v2767
        %4241 = vmatprep.subr.bf16.mxu0 %v2786
        %4242 = vmatpush1.bf16.msra.mxu0 %v2785
        %4243 = vmatprep.subr.bf16.mxu0 %v2804
        %4244 = vmatpush1.bf16.msra.mxu0 %v2803
        %4245 = vmatprep.subr.bf16.mxu0 %v2822
        %4246 = vmatpush1.bf16.msra.mxu0 %v2821
        %4247 = vmatprep.subr.bf16.mxu0 %v2840
        %4248 = vmatpush1.bf16.msra.mxu0 %v2839
        %4249 = vmatprep.subr.bf16.mxu0 %v2858
        %4250 = vmatpush1.bf16.msra.mxu0 %v2857
        %4251 = vmatprep.subr.bf16.mxu0 %v2876
        %4252 = vmatpush1.bf16.msra.mxu0 %v2875
        %4253 = vmatprep.subr.bf16.mxu0 %v2894
        %4254 = vmatpush1.bf16.msra.mxu0 %v2893
        %4255 = vmatprep.subr.bf16.mxu0 %v2912
        %4256 = vmatpush1.bf16.msra.mxu0 %v2911
        %4257 = vmatprep.subr.bf16.mxu0 %v2930
        %4258 = vmatpush1.bf16.msra.mxu0 %v2929
        %4259 = vmatprep.subr.bf16.mxu0 %v2948
        %4260 = vmatpush1.bf16.msra.mxu0 %v2947
        %4261 = vmatprep.subr.bf16.mxu0 %v2966
        %4262 = vmatpush1.bf16.msra.mxu0 %v2965
        %4263 = vmatprep.subr.bf16.mxu0 %v2984
        %4264 = vmatpush1.bf16.msra.mxu0 %v2983
        %4265 = vmatprep.subr.bf16.mxu0 %v3002
        %4266 = vmatpush1.bf16.msra.mxu0 %v3001
        %4267 = vmatprep.subr.bf16.mxu0 %v3020
        %4268 = vmatpush1.bf16.msra.mxu0 %v3019
        %4269 = vmatprep.subr.bf16.mxu0 %v3038
        %4270 = vmatpush1.bf16.msra.mxu0 %v3037
        %4271 = vmatprep.mubr.bf16.mxu0 %v356
        %4272 = vmatmul.mubr.bf16.gmra.mrb[0].mxu0 %v355
        %v4273 = vpop.f32.mrb[0].mxu0
        %v4274 = vadd.f32 %v976, %v4273
        %v4275 = vpop.f32.mrb[0].mxu0
        %v4276 = vadd.f32 %v980, %v4275
        %v4277 = vpop.f32.mrb[0].mxu0
        %v4278 = vpop.f32.mrb[0].mxu0
        %4279 = vdwg.mxu0
        %4280 = vmatprep.subr.bf16.mxu0 %v3056
        %4281 = vmatpush1.bf16.msra.mxu0 %v3055
        %4282 = vmatprep.subr.bf16.mxu0 %v3074
        %4283 = vmatpush1.bf16.msra.mxu0 %v3073
        %4284 = vmatprep.subr.bf16.mxu0 %v3092
        %4285 = vmatpush1.bf16.msra.mxu0 %v3091
        %4286 = vmatprep.subr.bf16.mxu0 %v3110
        %4287 = vmatpush1.bf16.msra.mxu0 %v3109
        %4288 = vmatprep.subr.bf16.mxu0 %v3128
        %4289 = vmatpush1.bf16.msra.mxu0 %v3127
        %4290 = vmatprep.subr.bf16.mxu0 %v3146
        %4291 = vmatpush1.bf16.msra.mxu0 %v3145
        %4292 = vmatprep.subr.bf16.mxu0 %v3164
        %4293 = vmatpush1.bf16.msra.mxu0 %v3163
        %4294 = vmatprep.subr.bf16.mxu0 %v3182
        %4295 = vmatpush1.bf16.msra.mxu0 %v3181
        %4296 = vmatprep.subr.bf16.mxu0 %v3200
        %4297 = vmatpush1.bf16.msra.mxu0 %v3199
        %4298 = vmatprep.subr.bf16.mxu0 %v3218
        %4299 = vmatpush1.bf16.msra.mxu0 %v3217
        %4300 = vmatprep.subr.bf16.mxu0 %v3236
        %4301 = vmatpush1.bf16.msra.mxu0 %v3235
        %4302 = vmatprep.subr.bf16.mxu0 %v3254
        %4303 = vmatpush1.bf16.msra.mxu0 %v3253
        %4304 = vmatprep.subr.bf16.mxu0 %v3272
        %4305 = vmatpush1.bf16.msra.mxu0 %v3271
        %4306 = vmatprep.subr.bf16.mxu0 %v3290
        %4307 = vmatpush1.bf16.msra.mxu0 %v3289
        %4308 = vmatprep.subr.bf16.mxu0 %v3308
        %4309 = vmatpush1.bf16.msra.mxu0 %v3307
        %4310 = vmatprep.subr.bf16.mxu0 %v3326
        %4311 = vmatpush1.bf16.msra.mxu0 %v3325
        %4312 = vmatprep.mubr.bf16.mxu0 %v358
        %4313 = vmatmul.mubr.bf16.gmra.mrb[0].mxu0 %v357
        %v4314 = vpop.f32.mrb[0].mxu0
        %v4315 = vadd.f32 %v4274, %v4314
        %v4316 = vpop.f32.mrb[0].mxu0
        %v4317 = vadd.f32 %v4276, %v4316
        %v4318 = vpop.f32.mrb[0].mxu0
        %v4319 = vpop.f32.mrb[0].mxu0
        %4320 = vdwg.mxu0
        %4321 = vmatprep.subr.bf16.mxu0 %v2770
        %4322 = vmatpush1.bf16.msra.mxu0 %v2769
        %4323 = vmatprep.subr.bf16.mxu0 %v2788
        %4324 = vmatpush1.bf16.msra.mxu0 %v2787
        %4325 = vmatprep.subr.bf16.mxu0 %v2806
        %4326 = vmatpush1.bf16.msra.mxu0 %v2805
        %4327 = vmatprep.subr.bf16.mxu0 %v2824
        %4328 = vmatpush1.bf16.msra.mxu0 %v2823
        %4329 = vmatprep.subr.bf16.mxu0 %v2842
        %4330 = vmatpush1.bf16.msra.mxu0 %v2841
        %4331 = vmatprep.subr.bf16.mxu0 %v2860
        %4332 = vmatpush1.bf16.msra.mxu0 %v2859
        %4333 = vmatprep.subr.bf16.mxu0 %v2878
        %4334 = vmatpush1.bf16.msra.mxu0 %v2877
        %4335 = vmatprep.subr.bf16.mxu0 %v2896
        %4336 = vmatpush1.bf16.msra.mxu0 %v2895
        %4337 = vmatprep.subr.bf16.mxu0 %v2914
        %4338 = vmatpush1.bf16.msra.mxu0 %v2913
        %4339 = vmatprep.subr.bf16.mxu0 %v2932
        %4340 = vmatpush1.bf16.msra.mxu0 %v2931
        %4341 = vmatprep.subr.bf16.mxu0 %v2950
        %4342 = vmatpush1.bf16.msra.mxu0 %v2949
        %4343 = vmatprep.subr.bf16.mxu0 %v2968
        %4344 = vmatpush1.bf16.msra.mxu0 %v2967
        %4345 = vmatprep.subr.bf16.mxu0 %v2986
        %4346 = vmatpush1.bf16.msra.mxu0 %v2985
        %4347 = vmatprep.subr.bf16.mxu0 %v3004
        %4348 = vmatpush1.bf16.msra.mxu0 %v3003
        %4349 = vmatprep.subr.bf16.mxu0 %v3022
        %4350 = vmatpush1.bf16.msra.mxu0 %v3021
        %4351 = vmatprep.subr.bf16.mxu0 %v3040
        %4352 = vmatpush1.bf16.msra.mxu0 %v3039
        %4353 = vmatprep.mubr.bf16.mxu0 %v356
        %4354 = vmatmul.mubr.bf16.gmra.mrb[0].mxu0 %v355
        %v4355 = vpop.f32.mrb[0].mxu0
        %v4356 = vadd.f32 %v984, %v4355
        %v4357 = vpop.f32.mrb[0].mxu0
        %v4358 = vadd.f32 %v988, %v4357
        %v4359 = vpop.f32.mrb[0].mxu0
        %v4360 = vpop.f32.mrb[0].mxu0
        %4361 = vdwg.mxu0
        %4362 = vmatprep.subr.bf16.mxu0 %v3058
        %4363 = vmatpush1.bf16.msra.mxu0 %v3057
        %4364 = vmatprep.subr.bf16.mxu0 %v3076
        %4365 = vmatpush1.bf16.msra.mxu0 %v3075
        %4366 = vmatprep.subr.bf16.mxu0 %v3094
        %4367 = vmatpush1.bf16.msra.mxu0 %v3093
        %4368 = vmatprep.subr.bf16.mxu0 %v3112
        %4369 = vmatpush1.bf16.msra.mxu0 %v3111
        %4370 = vmatprep.subr.bf16.mxu0 %v3130
        %4371 = vmatpush1.bf16.msra.mxu0 %v3129
        %4372 = vmatprep.subr.bf16.mxu0 %v3148
        %4373 = vmatpush1.bf16.msra.mxu0 %v3147
        %4374 = vmatprep.subr.bf16.mxu0 %v3166
        %4375 = vmatpush1.bf16.msra.mxu0 %v3165
        %4376 = vmatprep.subr.bf16.mxu0 %v3184
        %4377 = vmatpush1.bf16.msra.mxu0 %v3183
        %4378 = vmatprep.subr.bf16.mxu0 %v3202
        %4379 = vmatpush1.bf16.msra.mxu0 %v3201
        %4380 = vmatprep.subr.bf16.mxu0 %v3220
        %4381 = vmatpush1.bf16.msra.mxu0 %v3219
        %4382 = vmatprep.subr.bf16.mxu0 %v3238
        %4383 = vmatpush1.bf16.msra.mxu0 %v3237
        %4384 = vmatprep.subr.bf16.mxu0 %v3256
        %4385 = vmatpush1.bf16.msra.mxu0 %v3255
        %4386 = vmatprep.subr.bf16.mxu0 %v3274
        %4387 = vmatpush1.bf16.msra.mxu0 %v3273
        %4388 = vmatprep.subr.bf16.mxu0 %v3292
        %4389 = vmatpush1.bf16.msra.mxu0 %v3291
        %4390 = vmatprep.subr.bf16.mxu0 %v3310
        %4391 = vmatpush1.bf16.msra.mxu0 %v3309
        %4392 = vmatprep.subr.bf16.mxu0 %v3328
        %4393 = vmatpush1.bf16.msra.mxu0 %v3327
        %4394 = vmatprep.mubr.bf16.mxu0 %v358
        %4395 = vmatmul.mubr.bf16.gmra.mrb[0].mxu0 %v357
        %v4396 = vpop.f32.mrb[0].mxu0
        %v4397 = vadd.f32 %v4356, %v4396
        %v4398 = vpop.f32.mrb[0].mxu0
        %v4399 = vadd.f32 %v4358, %v4398
        %v4400 = vpop.f32.mrb[0].mxu0
        %v4401 = vpop.f32.mrb[0].mxu0
        %4402 = vdwg.mxu0
        %4403 = vmatprep.subr.bf16.mxu0 %v2772
        %4404 = vmatpush1.bf16.msra.mxu0 %v2771
        %4405 = vmatprep.subr.bf16.mxu0 %v2790
        %4406 = vmatpush1.bf16.msra.mxu0 %v2789
        %4407 = vmatprep.subr.bf16.mxu0 %v2808
        %4408 = vmatpush1.bf16.msra.mxu0 %v2807
        %4409 = vmatprep.subr.bf16.mxu0 %v2826
        %4410 = vmatpush1.bf16.msra.mxu0 %v2825
        %4411 = vmatprep.subr.bf16.mxu0 %v2844
        %4412 = vmatpush1.bf16.msra.mxu0 %v2843
        %4413 = vmatprep.subr.bf16.mxu0 %v2862
        %4414 = vmatpush1.bf16.msra.mxu0 %v2861
        %4415 = vmatprep.subr.bf16.mxu0 %v2880
        %4416 = vmatpush1.bf16.msra.mxu0 %v2879
        %4417 = vmatprep.subr.bf16.mxu0 %v2898
        %4418 = vmatpush1.bf16.msra.mxu0 %v2897
        %4419 = vmatprep.subr.bf16.mxu0 %v2916
        %4420 = vmatpush1.bf16.msra.mxu0 %v2915
        %4421 = vmatprep.subr.bf16.mxu0 %v2934
        %4422 = vmatpush1.bf16.msra.mxu0 %v2933
        %4423 = vmatprep.subr.bf16.mxu0 %v2952
        %4424 = vmatpush1.bf16.msra.mxu0 %v2951
        %4425 = vmatprep.subr.bf16.mxu0 %v2970
        %4426 = vmatpush1.bf16.msra.mxu0 %v2969
        %4427 = vmatprep.subr.bf16.mxu0 %v2988
        %4428 = vmatpush1.bf16.msra.mxu0 %v2987
        %4429 = vmatprep.subr.bf16.mxu0 %v3006
        %4430 = vmatpush1.bf16.msra.mxu0 %v3005
        %4431 = vmatprep.subr.bf16.mxu0 %v3024
        %4432 = vmatpush1.bf16.msra.mxu0 %v3023
        %4433 = vmatprep.subr.bf16.mxu0 %v3042
        %4434 = vmatpush1.bf16.msra.mxu0 %v3041
        %4435 = vmatprep.mubr.bf16.mxu0 %v356
        %4436 = vmatmul.mubr.bf16.gmra.mrb[0].mxu0 %v355
        %v4437 = vpop.f32.mrb[0].mxu0
        %v4438 = vadd.f32 %v992, %v4437
        %v4439 = vpop.f32.mrb[0].mxu0
        %v4440 = vadd.f32 %v996, %v4439
        %v4441 = vpop.f32.mrb[0].mxu0
        %v4442 = vpop.f32.mrb[0].mxu0
        %4443 = vdwg.mxu0
        %4444 = vmatprep.subr.bf16.mxu0 %v3060
        %4445 = vmatpush1.bf16.msra.mxu0 %v3059
        %4446 = vmatprep.subr.bf16.mxu0 %v3078
        %4447 = vmatpush1.bf16.msra.mxu0 %v3077
        %4448 = vmatprep.subr.bf16.mxu0 %v3096
        %4449 = vmatpush1.bf16.msra.mxu0 %v3095
        %4450 = vmatprep.subr.bf16.mxu0 %v3114
        %4451 = vmatpush1.bf16.msra.mxu0 %v3113
        %4452 = vmatprep.subr.bf16.mxu0 %v3132
        %4453 = vmatpush1.bf16.msra.mxu0 %v3131
        %4454 = vmatprep.subr.bf16.mxu0 %v3150
        %4455 = vmatpush1.bf16.msra.mxu0 %v3149
        %4456 = vmatprep.subr.bf16.mxu0 %v3168
        %4457 = vmatpush1.bf16.msra.mxu0 %v3167
        %4458 = vmatprep.subr.bf16.mxu0 %v3186
        %4459 = vmatpush1.bf16.msra.mxu0 %v3185
        %4460 = vmatprep.subr.bf16.mxu0 %v3204
        %4461 = vmatpush1.bf16.msra.mxu0 %v3203
        %4462 = vmatprep.subr.bf16.mxu0 %v3222
        %4463 = vmatpush1.bf16.msra.mxu0 %v3221
        %4464 = vmatprep.subr.bf16.mxu0 %v3240
        %4465 = vmatpush1.bf16.msra.mxu0 %v3239
        %4466 = vmatprep.subr.bf16.mxu0 %v3258
        %4467 = vmatpush1.bf16.msra.mxu0 %v3257
        %4468 = vmatprep.subr.bf16.mxu0 %v3276
        %4469 = vmatpush1.bf16.msra.mxu0 %v3275
        %4470 = vmatprep.subr.bf16.mxu0 %v3294
        %4471 = vmatpush1.bf16.msra.mxu0 %v3293
        %4472 = vmatprep.subr.bf16.mxu0 %v3312
        %4473 = vmatpush1.bf16.msra.mxu0 %v3311
        %4474 = vmatprep.subr.bf16.mxu0 %v3330
        %4475 = vmatpush1.bf16.msra.mxu0 %v3329
        %4476 = vmatprep.mubr.bf16.mxu0 %v358
        %4477 = vmatmul.mubr.bf16.gmra.mrb[0].mxu0 %v357
        %v4478 = vpop.f32.mrb[0].mxu0
        %v4479 = vadd.f32 %v4438, %v4478
        %v4480 = vpop.f32.mrb[0].mxu0
        %v4481 = vadd.f32 %v4440, %v4480
        %v4482 = vpop.f32.mrb[0].mxu0
        %v4483 = vpop.f32.mrb[0].mxu0
        %4484 = vdwg.mxu0
        %4485 = vmatprep.subr.bf16.mxu0 %v2774
        %4486 = vmatpush1.bf16.msra.mxu0 %v2773
        %4487 = vmatprep.subr.bf16.mxu0 %v2792
        %4488 = vmatpush1.bf16.msra.mxu0 %v2791
        %4489 = vmatprep.subr.bf16.mxu0 %v2810
        %4490 = vmatpush1.bf16.msra.mxu0 %v2809
        %4491 = vmatprep.subr.bf16.mxu0 %v2828
        %4492 = vmatpush1.bf16.msra.mxu0 %v2827
        %4493 = vmatprep.subr.bf16.mxu0 %v2846
        %4494 = vmatpush1.bf16.msra.mxu0 %v2845
        %4495 = vmatprep.subr.bf16.mxu0 %v2864
        %4496 = vmatpush1.bf16.msra.mxu0 %v2863
        %4497 = vmatprep.subr.bf16.mxu0 %v2882
        %4498 = vmatpush1.bf16.msra.mxu0 %v2881
        %4499 = vmatprep.subr.bf16.mxu0 %v2900
        %4500 = vmatpush1.bf16.msra.mxu0 %v2899
        %4501 = vmatprep.subr.bf16.mxu0 %v2918
        %4502 = vmatpush1.bf16.msra.mxu0 %v2917
        %4503 = vmatprep.subr.bf16.mxu0 %v2936
        %4504 = vmatpush1.bf16.msra.mxu0 %v2935
        %4505 = vmatprep.subr.bf16.mxu0 %v2954
        %4506 = vmatpush1.bf16.msra.mxu0 %v2953
        %4507 = vmatprep.subr.bf16.mxu0 %v2972
        %4508 = vmatpush1.bf16.msra.mxu0 %v2971
        %4509 = vmatprep.subr.bf16.mxu0 %v2990
        %4510 = vmatpush1.bf16.msra.mxu0 %v2989
        %4511 = vmatprep.subr.bf16.mxu0 %v3008
        %4512 = vmatpush1.bf16.msra.mxu0 %v3007
        %4513 = vmatprep.subr.bf16.mxu0 %v3026
        %4514 = vmatpush1.bf16.msra.mxu0 %v3025
        %4515 = vmatprep.subr.bf16.mxu0 %v3044
        %4516 = vmatpush1.bf16.msra.mxu0 %v3043
        %4517 = vmatprep.mubr.bf16.mxu0 %v356
        %4518 = vmatmul.mubr.bf16.gmra.mrb[0].mxu0 %v355
        %v4519 = vpop.f32.mrb[0].mxu0
        %v4520 = vadd.f32 %v1000, %v4519
        %v4521 = vpop.f32.mrb[0].mxu0
        %v4522 = vadd.f32 %v1004, %v4521
        %v4523 = vpop.f32.mrb[0].mxu0
        %v4524 = vpop.f32.mrb[0].mxu0
        %4525 = vdwg.mxu0
        %4526 = vmatprep.subr.bf16.mxu0 %v3062
        %4527 = vmatpush1.bf16.msra.mxu0 %v3061
        %4528 = vmatprep.subr.bf16.mxu0 %v3080
        %4529 = vmatpush1.bf16.msra.mxu0 %v3079
        %4530 = vmatprep.subr.bf16.mxu0 %v3098
        %4531 = vmatpush1.bf16.msra.mxu0 %v3097
        %4532 = vmatprep.subr.bf16.mxu0 %v3116
        %4533 = vmatpush1.bf16.msra.mxu0 %v3115
        %4534 = vmatprep.subr.bf16.mxu0 %v3134
        %4535 = vmatpush1.bf16.msra.mxu0 %v3133
        %4536 = vmatprep.subr.bf16.mxu0 %v3152
        %4537 = vmatpush1.bf16.msra.mxu0 %v3151
        %4538 = vmatprep.subr.bf16.mxu0 %v3170
        %4539 = vmatpush1.bf16.msra.mxu0 %v3169
        %4540 = vmatprep.subr.bf16.mxu0 %v3188
        %4541 = vmatpush1.bf16.msra.mxu0 %v3187
        %4542 = vmatprep.subr.bf16.mxu0 %v3206
        %4543 = vmatpush1.bf16.msra.mxu0 %v3205
        %4544 = vmatprep.subr.bf16.mxu0 %v3224
        %4545 = vmatpush1.bf16.msra.mxu0 %v3223
        %4546 = vmatprep.subr.bf16.mxu0 %v3242
        %4547 = vmatpush1.bf16.msra.mxu0 %v3241
        %4548 = vmatprep.subr.bf16.mxu0 %v3260
        %4549 = vmatpush1.bf16.msra.mxu0 %v3259
        %4550 = vmatprep.subr.bf16.mxu0 %v3278
        %4551 = vmatpush1.bf16.msra.mxu0 %v3277
        %4552 = vmatprep.subr.bf16.mxu0 %v3296
        %4553 = vmatpush1.bf16.msra.mxu0 %v3295
        %4554 = vmatprep.subr.bf16.mxu0 %v3314
        %4555 = vmatpush1.bf16.msra.mxu0 %v3313
        %4556 = vmatprep.subr.bf16.mxu0 %v3332
        %4557 = vmatpush1.bf16.msra.mxu0 %v3331
        %4558 = vmatprep.mubr.bf16.mxu0 %v358
        %4559 = vmatmul.mubr.bf16.gmra.mrb[0].mxu0 %v357
        %v4560 = vpop.f32.mrb[0].mxu0
        %v4561 = vadd.f32 %v4520, %v4560
        %v4562 = vpop.f32.mrb[0].mxu0
        %v4563 = vadd.f32 %v4522, %v4562
        %v4564 = vpop.f32.mrb[0].mxu0
        %v4565 = vpop.f32.mrb[0].mxu0
        %4566 = vdwg.mxu0
        %4567 = vmatprep.subr.bf16.mxu0 %v2776
        %4568 = vmatpush1.bf16.msra.mxu0 %v2775
        %4569 = vmatprep.subr.bf16.mxu0 %v2794
        %4570 = vmatpush1.bf16.msra.mxu0 %v2793
        %4571 = vmatprep.subr.bf16.mxu0 %v2812
        %4572 = vmatpush1.bf16.msra.mxu0 %v2811
        %4573 = vmatprep.subr.bf16.mxu0 %v2830
        %4574 = vmatpush1.bf16.msra.mxu0 %v2829
        %4575 = vmatprep.subr.bf16.mxu0 %v2848
        %4576 = vmatpush1.bf16.msra.mxu0 %v2847
        %4577 = vmatprep.subr.bf16.mxu0 %v2866
        %4578 = vmatpush1.bf16.msra.mxu0 %v2865
        %4579 = vmatprep.subr.bf16.mxu0 %v2884
        %4580 = vmatpush1.bf16.msra.mxu0 %v2883
        %4581 = vmatprep.subr.bf16.mxu0 %v2902
        %4582 = vmatpush1.bf16.msra.mxu0 %v2901
        %4583 = vmatprep.subr.bf16.mxu0 %v2920
        %4584 = vmatpush1.bf16.msra.mxu0 %v2919
        %4585 = vmatprep.subr.bf16.mxu0 %v2938
        %4586 = vmatpush1.bf16.msra.mxu0 %v2937
        %4587 = vmatprep.subr.bf16.mxu0 %v2956
        %4588 = vmatpush1.bf16.msra.mxu0 %v2955
        %4589 = vmatprep.subr.bf16.mxu0 %v2974
        %4590 = vmatpush1.bf16.msra.mxu0 %v2973
        %4591 = vmatprep.subr.bf16.mxu0 %v2992
        %4592 = vmatpush1.bf16.msra.mxu0 %v2991
        %4593 = vmatprep.subr.bf16.mxu0 %v3010
        %4594 = vmatpush1.bf16.msra.mxu0 %v3009
        %4595 = vmatprep.subr.bf16.mxu0 %v3028
        %4596 = vmatpush1.bf16.msra.mxu0 %v3027
        %4597 = vmatprep.subr.bf16.mxu0 %v3046
        %4598 = vmatpush1.bf16.msra.mxu0 %v3045
        %4599 = vmatprep.mubr.bf16.mxu0 %v356
        %4600 = vmatmul.mubr.bf16.gmra.mrb[0].mxu0 %v355
        %v4601 = vpop.f32.mrb[0].mxu0
        %v4602 = vadd.f32 %v1008, %v4601
        %v4603 = vpop.f32.mrb[0].mxu0
        %v4604 = vadd.f32 %v1012, %v4603
        %v4605 = vpop.f32.mrb[0].mxu0
        %v4606 = vpop.f32.mrb[0].mxu0
        %4607 = vdwg.mxu0
        %4608 = vmatprep.subr.bf16.mxu0 %v3064
        %4609 = vmatpush1.bf16.msra.mxu0 %v3063
        %4610 = vmatprep.subr.bf16.mxu0 %v3082
        %4611 = vmatpush1.bf16.msra.mxu0 %v3081
        %4612 = vmatprep.subr.bf16.mxu0 %v3100
        %4613 = vmatpush1.bf16.msra.mxu0 %v3099
        %4614 = vmatprep.subr.bf16.mxu0 %v3118
        %4615 = vmatpush1.bf16.msra.mxu0 %v3117
        %4616 = vmatprep.subr.bf16.mxu0 %v3136
        %4617 = vmatpush1.bf16.msra.mxu0 %v3135
        %4618 = vmatprep.subr.bf16.mxu0 %v3154
        %4619 = vmatpush1.bf16.msra.mxu0 %v3153
        %4620 = vmatprep.subr.bf16.mxu0 %v3172
        %4621 = vmatpush1.bf16.msra.mxu0 %v3171
        %4622 = vmatprep.subr.bf16.mxu0 %v3190
        %4623 = vmatpush1.bf16.msra.mxu0 %v3189
        %4624 = vmatprep.subr.bf16.mxu0 %v3208
        %4625 = vmatpush1.bf16.msra.mxu0 %v3207
        %4626 = vmatprep.subr.bf16.mxu0 %v3226
        %4627 = vmatpush1.bf16.msra.mxu0 %v3225
        %4628 = vmatprep.subr.bf16.mxu0 %v3244
        %4629 = vmatpush1.bf16.msra.mxu0 %v3243
        %4630 = vmatprep.subr.bf16.mxu0 %v3262
        %4631 = vmatpush1.bf16.msra.mxu0 %v3261
        %4632 = vmatprep.subr.bf16.mxu0 %v3280
        %4633 = vmatpush1.bf16.msra.mxu0 %v3279
        %4634 = vmatprep.subr.bf16.mxu0 %v3298
        %4635 = vmatpush1.bf16.msra.mxu0 %v3297
        %4636 = vmatprep.subr.bf16.mxu0 %v3316
        %4637 = vmatpush1.bf16.msra.mxu0 %v3315
        %4638 = vmatprep.subr.bf16.mxu0 %v3334
        %4639 = vmatpush1.bf16.msra.mxu0 %v3333
        %4640 = vmatprep.mubr.bf16.mxu0 %v358
        %4641 = vmatmul.mubr.bf16.gmra.mrb[0].mxu0 %v357
        %v4642 = vpop.f32.mrb[0].mxu0
        %v4643 = vadd.f32 %v4602, %v4642
        %v4644 = vpop.f32.mrb[0].mxu0
        %v4645 = vadd.f32 %v4604, %v4644
        %v4646 = vpop.f32.mrb[0].mxu0
        %v4647 = vpop.f32.mrb[0].mxu0
        %4648 = vdwg.mxu0
        %v4667 = vcombine.low %v3987, %v3989
        %v4668 = vcombine.low %v4069, %v4071
        %v4670 = vunpack.c.l.s4 1983009808
        %v4671 = vunpack.c.0.s8 %v4670
        %v4672 = vlaneseq
        %v4673 = vshrl.u32 %v4672, 7
        %v4674 = vsub.s32 %v4671, %v4673
        %v4675 = vrot.slane %v4667, %v4674
        %v4677 = vunpack.c.l.s4 1983009808
        %v4678 = vunpack.c.0.s8 %v4677
        %v4679 = vlaneseq
        %v4680 = vshrl.u32 %v4679, 7
        %v4681 = vsub.s32 %v4678, %v4680
        %v4682 = vrot.slane %v4668, %v4681
        %v4683 = vcombine.low %v4675, %v4682
        %v4684 = vcombine.low %v4151, %v4153
        %v4685 = vcombine.low %v4233, %v4235
        %v4687 = vunpack.c.l.s4 1983009808
        %v4688 = vunpack.c.0.s8 %v4687
        %v4689 = vlaneseq
        %v4690 = vshrl.u32 %v4689, 7
        %v4691 = vsub.s32 %v4688, %v4690
        %v4692 = vrot.slane %v4684, %v4691
        %v4694 = vunpack.c.l.s4 1983009808
        %v4695 = vunpack.c.0.s8 %v4694
        %v4696 = vlaneseq
        %v4697 = vshrl.u32 %v4696, 7
        %v4698 = vsub.s32 %v4695, %v4697
        %v4699 = vrot.slane %v4685, %v4698
        %v4700 = vcombine.low %v4692, %v4699
        %v4701 = vcombine.low %v4315, %v4317
        %v4702 = vcombine.low %v4397, %v4399
        %v4704 = vunpack.c.l.s4 1983009808
        %v4705 = vunpack.c.0.s8 %v4704
        %v4706 = vlaneseq
        %v4707 = vshrl.u32 %v4706, 7
        %v4708 = vsub.s32 %v4705, %v4707
        %v4709 = vrot.slane %v4701, %v4708
        %v4711 = vunpack.c.l.s4 1983009808
        %v4712 = vunpack.c.0.s8 %v4711
        %v4713 = vlaneseq
        %v4714 = vshrl.u32 %v4713, 7
        %v4715 = vsub.s32 %v4712, %v4714
        %v4716 = vrot.slane %v4702, %v4715
        %v4717 = vcombine.low %v4709, %v4716
        %v4718 = vcombine.low %v4479, %v4481
        %v4719 = vcombine.low %v4561, %v4563
        %v4721 = vunpack.c.l.s4 1983009808
        %v4722 = vunpack.c.0.s8 %v4721
        %v4723 = vlaneseq
        %v4724 = vshrl.u32 %v4723, 7
        %v4725 = vsub.s32 %v4722, %v4724
        %v4726 = vrot.slane %v4718, %v4725
        %v4728 = vunpack.c.l.s4 1983009808
        %v4729 = vunpack.c.0.s8 %v4728
        %v4730 = vlaneseq
        %v4731 = vshrl.u32 %v4730, 7
        %v4732 = vsub.s32 %v4729, %v4731
        %v4733 = vrot.slane %v4719, %v4732
        %v4734 = vcombine.low %v4726, %v4733
        %v4735 = vcombine.low %v4643, %v4645
        %v4737 = vunpack.c.l.s4 1983009808
        %v4738 = vunpack.c.0.s8 %v4737
        %v4739 = vlaneseq
        %v4740 = vshrl.u32 %v4739, 7
        %v4741 = vsub.s32 %v4738, %v4740
        %v4742 = vrot.slane %v4735, %v4741
        %4748 = vst [vmem:[%s326] sm:$0xff] %v4683
        %4749 = vst [vmem:[%s326 + $0x8] sm:$0xff] %v4700
        %4750 = vst [vmem:[%s326 + $0x10] sm:$0xff] %v4717
        %4751 = vst [vmem:[%s326 + $0x18] sm:$0xff] %v4734
        %4752 = vst [vmem:[%s326 + $0x20] sm:$0xf] %v4742
        %v4753 = vld [vmem:[%s285] sm:$0xff]
        %v4754 = vld [vmem:[%s285 + $0x8] sm:$0xff]
        %v4755 = vld [vmem:[%s285 + $0x10] sm:$0xff]
        %v4756 = vld [vmem:[%s285 + $0x18] sm:$0xff]
        %v4757 = vld [vmem:[%s285 + $0x20] sm:$0xf]
        %v4758 = vadd.f32 %v4753, %v4683
        %v4759 = vadd.f32 %v4754, %v4700
        %v4760 = vadd.f32 %v4755, %v4717
        %v4761 = vadd.f32 %v4756, %v4734
        %v4762 = vadd.f32 %v4757, %v4742
        %4763 = vst [vmem:[%s319] sm:$0xff] %v4758
        %4764 = vst [vmem:[%s319 + $0x8] sm:$0xff] %v4759
        %4765 = vst [vmem:[%s319 + $0x10] sm:$0xff] %v4760
        %4766 = vst [vmem:[%s319 + $0x18] sm:$0xff] %v4761
        %4767 = vst [vmem:[%s319 + $0x20] sm:$0xf] %v4762
        %s4768 = sand.u32 %s136, 1
        %s4769 = scalar_lea.sflag [#allocation4], %s4768
        %s4770 = sand.u32 %s136, 1
        %s4771 = smul.addr %s4770, 36
        %s4772 = scalar_lea.vmem [#allocation8], %s4771
        %s4773 = sand.u32 %s162, 1
        %s4774 = scalar_lea.sflag [#allocation10], %s4773
        %s4775 = sand.u32 %s162, 1
        %s4776 = smul.addr %s4775, 36
        %s4777 = scalar_lea.vmem [#allocation9], %s4776
        // Predicated region
        $region49: #{hair_delta_generator.3} parent=35 // pred_check
          %p4778 = pneg %p146
        $region50: #{hair_delta_generator.3} parent=35 // pred_check_branch
          %4780 = sbr.rel (%p4778) target = $region52
        $region51: #{hair_delta_generator.3} parent=35 // pred_region
          %s4781 = smul.u32 18, %s29
          %s4783 = ssub.s32 576, 576
          %4784 = vsyncadd %s4769, %s4783
          %s4785 = smul.addr %s4781, 32
          %s4786 = scalar_lea.hbm %s4, %s4785
          %s4788 = sshll.u32 %s4772, 4
          %s4789 = int_to_ptr.vmem [resolvable:$true] %s4788
          %4791 = dma.vmem_to_hbm [thread:$0]  %s4789, 576, %s4786, %s4769
        $region52: #{hair_delta_generator.3} parent=35 // pred_fallthru
          _
        // Predicated region
        $region53: #{hair_delta_generator.3} parent=35 // pred_check
          %p4792 = pneg %p172
        $region54: #{hair_delta_generator.3} parent=35 // pred_check_branch
          %4794 = sbr.rel (%p4792) target = $region56
        $region55: #{hair_delta_generator.3} parent=35 // pred_region
          %s4795 = smul.u32 18, %s29
          %s4797 = ssub.s32 576, 576
          %4798 = vsyncadd %s4774, %s4797
          %s4799 = smul.addr %s4795, 32
          %s4800 = scalar_lea.hbm %s5, %s4799
          %s4802 = sshll.u32 %s4777, 4
          %s4803 = int_to_ptr.vmem [resolvable:$true] %s4802
          %4805 = dma.vmem_to_hbm [thread:$0]  %s4803, 576, %s4800, %s4774
        $region56: #{hair_delta_generator.3} parent=35 // pred_fallthru
          _
      $region36: #{hair_delta_generator.3} parent=5 // pred_fallthru
        _
      %p4806 = scmp.le.s32.totalorder 2, %s24
      // Predicated region
      $region57: #{hair_delta_generator.3} parent=5 // pred_check
        %p4807 = pneg %p4806
      $region58: #{hair_delta_generator.3} parent=5 // pred_check_branch
        %4809 = sbr.rel (%p4807) target = $region60
      $region59: #{hair_delta_generator.3} parent=5 // pred_region
        %s4810 = ssub.s32 %s24, 2
        // Predicated region
        $region61: #{hair_delta_generator.3} parent=59 // pred_check
          %p4811 = pneg %p152
        $region62: #{hair_delta_generator.3} parent=59 // pred_check_branch
          %4813 = sbr.rel (%p4811) target = $region64
        $region63: #{hair_delta_generator.3} parent=59 // pred_region
          %s4814 = sand.u32 %s137, 1
          %s4815 = scalar_lea.sflag [#allocation4], %s4814
          %s4816 = sand.u32 %s137, 1
          %s4817 = smul.addr %s4816, 36
          %s4818 = scalar_lea.vmem [#allocation8], %s4817
          %4819 = dma.done %s4815, 576
        $region64: #{hair_delta_generator.3} parent=59 // pred_fallthru
          _
        // Predicated region
        $region65: #{hair_delta_generator.3} parent=59 // pred_check
          %p4820 = pneg %p178
        $region66: #{hair_delta_generator.3} parent=59 // pred_check_branch
          %4822 = sbr.rel (%p4820) target = $region68
        $region67: #{hair_delta_generator.3} parent=59 // pred_region
          %s4823 = sand.u32 %s163, 1
          %s4824 = scalar_lea.sflag [#allocation10], %s4823
          %s4825 = sand.u32 %s163, 1
          %s4826 = smul.addr %s4825, 36
          %s4827 = scalar_lea.vmem [#allocation9], %s4826
          %4828 = dma.done %s4824, 576
        $region68: #{hair_delta_generator.3} parent=59 // pred_fallthru
          _
      $region60: #{hair_delta_generator.3} parent=5 // pred_fallthru
        _
    $region6: #{hair_delta_generator.3} parent=1 // loop_footer
      %s28 = sadd.s32 1, %s24
    $region7: #{hair_delta_generator.3} parent=1 // loop_footer_branch
      %23 = sbr.rel target = $region3
    $region8: #{hair_delta_generator.3} parent=1 // loop_exit
      _
    %4829 = vsyncpa [#allocation3], 1
    %s4830 = scalar_lea.sflag [#allocation3], 1
    %4831 = vsyncpa %s4830, 1
    %4832 = vsyncpa [#allocation6], 1
    %s4833 = scalar_lea.sflag [#allocation6], 1
    %4834 = vsyncpa %s4833, 1
    %4835 = vsyncpa [#allocation4], 1
    %s4836 = scalar_lea.sflag [#allocation4], 1
    %4837 = vsyncpa %s4836, 1
    %4838 = vsyncpa [#allocation10], 1
    %s4839 = scalar_lea.sflag [#allocation10], 1
    %4840 = vsyncpa %s4839, 1

</llo_original>
